<compile_context>
chip_gen: v6e
topology: v6e:2x2x1
jax: 0.10.0
libtpu: 0.0.40
codegen_flags: <defaults>
</compile_context>

<pallas_src>
import functools

import jax
import jax.numpy as jnp
import numpy as np
from jax import lax
from jax.experimental import pallas as pl
from jax.experimental.pallas import tpu as pltpu

EPS = 1e-5
LANE = 128
_VMEM_LIMIT = 32 * 1024 * 1024
_TAPS = tuple((dy, dx) for dy in range(3) for dx in range(3))


def _round_up(v, m):
    return (v + m - 1) // m * m


# ----------------------------------------------------------------------------
# In-kernel helpers
# ----------------------------------------------------------------------------
def _conv3x3_acc(get_view, w_ref, h, w, ci, co):
    """3x3 same-conv as 9 accumulated matmuls.

    get_view(dy, dx) must return the (h, w, ci) shifted view of the padded
    activation; w_ref is (9*ci, co), tap-major.  Returns (h*w, co) f32.
    """
    acc = jnp.zeros((h * w, co), jnp.float32)
    for t, (dy, dx) in enumerate(_TAPS):
        v = get_view(dy, dx).reshape(h * w, ci)
        acc = acc + jnp.dot(v, w_ref[t * ci:(t + 1) * ci, :],
                            preferred_element_type=jnp.float32)
    return acc


def _accumulate_stats(stats_ref, acc):
    """Accumulate per-channel [sum; sum_of_squares] across the batch grid."""
    @pl.when(pl.program_id(0) == 0)
    def _():
        stats_ref[...] = jnp.zeros_like(stats_ref)

    s = jnp.sum(acc, axis=0, keepdims=True)
    sq = jnp.sum(acc * acc, axis=0, keepdims=True)
    stats_ref[...] += jnp.concatenate([s, sq], axis=0)


# ----------------------------------------------------------------------------
# Pallas kernels (grid over the batch dimension)
# ----------------------------------------------------------------------------
def conv1_stats_kernel(xp_ref, w_ref, y_ref, stats_ref, *, h, w, ci, co):
    """y1_raw = conv1(x) (no bias); accumulate bn1 statistics."""
    acc = _conv3x3_acc(lambda dy, dx: xp_ref[0, dy:dy + h, dx:dx + w, :],
                       w_ref, h, w, ci, co)
    y_ref[0] = acc
    _accumulate_stats(stats_ref, acc)


def bn1_conv2_stats_kernel(y1_ref, scale_ref, shift_ref, w_ref,
                           y2_ref, stats_ref, pad_ref, *, h, w, co):
    """a = relu(bn1(y1_raw)); y2_raw = conv2(a); accumulate bn2 statistics."""
    a = jnp.maximum(y1_ref[0] * scale_ref[...] + shift_ref[...], 0.0)
    # Build the spatially-padded tile in VMEM scratch (zero border).
    pad_ref[...] = jnp.zeros_like(pad_ref)
    pad_ref[1:h + 1, 1:w + 1, :] = a.reshape(h, w, co)
    acc = _conv3x3_acc(lambda dy, dx: pad_ref[dy:dy + h, dx:dx + w, :],
                       w_ref, h, w, co, co)
    y2_ref[0] = acc
    _accumulate_stats(stats_ref, acc)


def bn2_shortcut_relu_kernel(y2_ref, xp_ref, scale_ref, shift_ref,
                             w3_ref, b3_ref, o_ref, *, h, w, ci):
    """out = relu(bn2(y2_raw) + x @ w3 + b3)."""
    y = y2_ref[0] * scale_ref[...] + shift_ref[...]
    xin = xp_ref[0, 1:h + 1, 1:w + 1, :].reshape(h * w, ci)
    sc = jnp.dot(xin, w3_ref[...],
                 preferred_element_type=jnp.float32) + b3_ref[...]
    o_ref[0] = jnp.maximum(y + sc, 0.0)


# ----------------------------------------------------------------------------
# Host-side glue
# ----------------------------------------------------------------------------
def _fold_bn(stats, gamma, beta, m):
    """Fold batch statistics into a per-channel (scale, shift) FMA."""
    mean = stats[0] / m
    var = stats[1] / m - mean * mean          # biased variance
    scale = gamma * lax.rsqrt(var + EPS)
    shift = beta - mean * scale
    return scale.reshape(1, -1), shift.reshape(1, -1)


@jax.jit
def residual_forward(x_nchw, params):
    """Pallas implementation of Residual.forward.  x_nchw: (N, Cin, H, W)."""
    x = jnp.transpose(x_nchw, (0, 2, 3, 1)).astype(jnp.float32)   # NHWC
    n, h, w, cin = x.shape
    cout = params["w1"].shape[-1]
    ci = _round_up(cin, LANE)
    co = _round_up(cout, LANE)
    hw = h * w
    m = n * hw

    # Spatially + channel padded input; shared by conv1 and the 1x1 shortcut.
    xp = jnp.pad(x, ((0, 0), (1, 1), (1, 1), (0, ci - cin)))

    # Weights / BN params, zero-padded to lane-dense channel counts.
    # Conv biases b1/b2 are intentionally dropped (cancelled by BN mean).
    w1 = jnp.pad(params["w1"],
                 ((0, 0), (0, 0), (0, ci - cin), (0, co - cout))
                 ).reshape(9 * ci, co)
    w2 = jnp.pad(params["w2"],
                 ((0, 0), (0, 0), (0, co - cout), (0, co - cout))
                 ).reshape(9 * co, co)
    w3 = jnp.pad(params["w3"], ((0, ci - cin), (0, co - cout)))
    b3 = jnp.pad(params["b3"], (0, co - cout)).reshape(1, co)
    g1 = jnp.pad(params["g1"], (0, co - cout))
    be1 = jnp.pad(params["be1"], (0, co - cout))
    g2 = jnp.pad(params["g2"], (0, co - cout))
    be2 = jnp.pad(params["be2"], (0, co - cout))

    # ---- stage 1: conv1 + bn1 statistics ----------------------------------
    y1_raw, stats1 = pl.pallas_call(
        functools.partial(conv1_stats_kernel, h=h, w=w, ci=ci, co=co),
        grid=(n,),
        in_specs=[
            pl.BlockSpec((1, h + 2, w + 2, ci), lambda b: (b, 0, 0, 0)),
            pl.BlockSpec((9 * ci, co), lambda b: (0, 0)),
        ],
        out_specs=[
            pl.BlockSpec((1, hw, co), lambda b: (b, 0, 0)),
            pl.BlockSpec((2, co), lambda b: (0, 0)),
        ],
        out_shape=[
            jax.ShapeDtypeStruct((n, hw, co), jnp.float32),
            jax.ShapeDtypeStruct((2, co), jnp.float32),
        ],
        compiler_params=pltpu.CompilerParams(
            dimension_semantics=("arbitrary",),
            vmem_limit_bytes=_VMEM_LIMIT),
    )(xp, w1)
    scale1, shift1 = _fold_bn(stats1, g1, be1, m)

    # ---- stage 2: bn1 + relu + conv2 + bn2 statistics ----------------------
    y2_raw, stats2 = pl.pallas_call(
        functools.partial(bn1_conv2_stats_kernel, h=h, w=w, co=co),
        grid=(n,),
        in_specs=[
            pl.BlockSpec((1, hw, co), lambda b: (b, 0, 0)),
            pl.BlockSpec((1, co), lambda b: (0, 0)),
            pl.BlockSpec((1, co), lambda b: (0, 0)),
            pl.BlockSpec((9 * co, co), lambda b: (0, 0)),
        ],
        out_specs=[
            pl.BlockSpec((1, hw, co), lambda b: (b, 0, 0)),
            pl.BlockSpec((2, co), lambda b: (0, 0)),
        ],
        out_shape=[
            jax.ShapeDtypeStruct((n, hw, co), jnp.float32),
            jax.ShapeDtypeStruct((2, co), jnp.float32),
        ],
        scratch_shapes=[pltpu.VMEM((h + 2, w + 2, co), jnp.float32)],
        compiler_params=pltpu.CompilerParams(
            dimension_semantics=("arbitrary",),
            vmem_limit_bytes=_VMEM_LIMIT),
    )(y1_raw, scale1, shift1, w2)
    scale2, shift2 = _fold_bn(stats2, g2, be2, m)

    # ---- stage 3: bn2 + 1x1 shortcut + add + relu --------------------------
    out = pl.pallas_call(
        functools.partial(bn2_shortcut_relu_kernel, h=h, w=w, ci=ci),
        grid=(n,),
        in_specs=[
            pl.BlockSpec((1, hw, co), lambda b: (b, 0, 0)),
            pl.BlockSpec((1, h + 2, w + 2, ci), lambda b: (b, 0, 0, 0)),
            pl.BlockSpec((1, co), lambda b: (0, 0)),
            pl.BlockSpec((1, co), lambda b: (0, 0)),
            pl.BlockSpec((ci, co), lambda b: (0, 0)),
            pl.BlockSpec((1, co), lambda b: (0, 0)),
        ],
        out_specs=pl.BlockSpec((1, hw, co), lambda b: (b, 0, 0)),
        out_shape=jax.ShapeDtypeStruct((n, hw, co), jnp.float32),
        compiler_params=pltpu.CompilerParams(
            dimension_semantics=("parallel",),     # megacore-friendly on v7x
            vmem_limit_bytes=_VMEM_LIMIT),
    )(y2_raw, xp, scale2, shift2, w3, b3)

    out = out.reshape(n, h, w, co)[..., :cout]
    return jnp.transpose(out, (0, 3, 1, 2))        # back to NCHW


# ----------------------------------------------------------------------------
# Pure-JAX reference (for verification only; mirrors PyTorch exactly, incl.
# the conv biases before BN that the kernel drops as dead work).
# ----------------------------------------------------------------------------
def _bn_train(y, g, be):
    mean = jnp.mean(y, axis=(0, 1, 2))
    var = jnp.mean(jnp.square(y - mean), axis=(0, 1, 2))
    return (y - mean) * lax.rsqrt(var + EPS) * g + be


def reference_forward(x_nchw, params):
    x = jnp.transpose(x_nchw, (0, 2, 3, 1)).astype(jnp.float32)
    dn = ("NHWC", "HWIO", "NHWC")
    y = lax.conv_general_dilated(x, params["w1"], (1, 1), "SAME",
                                 dimension_numbers=dn) + params["b1"]
    y = jnp.maximum(_bn_train(y, params["g1"], params["be1"]), 0.0)
    y = lax.conv_general_dilated(y, params["w2"], (1, 1), "SAME",
                                 dimension_numbers=dn) + params["b2"]
    y = _bn_train(y, params["g2"], params["be2"])
    sc = lax.conv_general_dilated(x, params["w3"][None, None], (1, 1), "SAME",
                                  dimension_numbers=dn) + params["b3"]
    out = jnp.maximum(y + sc, 0.0)
    return jnp.transpose(out, (0, 3, 1, 2))


# ----------------------------------------------------------------------------
# Driver
# ----------------------------------------------------------------------------
if __name__ == "__main__":
    N, Cin, Cout, H, W = 2, 4, 8, 16, 16   # Residual(use_1x1conv=True, stride=1)

    key = jax.random.PRNGKey(0)
    ks = jax.random.split(key, 11)
    params = {
        # conv weights generated directly in HWIO layout (synthetic init)
        "w1": 0.1 * jax.random.normal(ks[0], (3, 3, Cin, Cout), jnp.float32),
        "b1": 0.1 * jax.random.normal(ks[1], (Cout,), jnp.float32),
        "w2": 0.1 * jax.random.normal(ks[2], (3, 3, Cout, Cout), jnp.float32),
        "b2": 0.1 * jax.random.normal(ks[3], (Cout,), jnp.float32),
        "w3": 0.1 * jax.random.normal(ks[4], (Cin, Cout), jnp.float32),
        "b3": 0.1 * jax.random.normal(ks[5], (Cout,), jnp.float32),
        "g1": 1.0 + 0.1 * jax.random.normal(ks[6], (Cout,), jnp.float32),
        "be1": 0.1 * jax.random.normal(ks[7], (Cout,), jnp.float32),
        "g2": 1.0 + 0.1 * jax.random.normal(ks[8], (Cout,), jnp.float32),
        "be2": 0.1 * jax.random.normal(ks[9], (Cout,), jnp.float32),
    }
    x = jax.random.normal(ks[10], (N, Cin, H, W), jnp.float32)

    out = jax.block_until_ready(residual_forward(x, params))
    ref = jax.block_until_ready(reference_forward(x, params))
    np.testing.assert_allclose(np.asarray(out), np.asarray(ref),
                               rtol=1e-3, atol=1e-3)
    assert out.shape == (N, Cout, H, W)

    print("KERNEL_OK")
</pallas_src>

<mosaic_0001>
module attributes {stable_mosaic.version = 11 : i64} {
  func.func @conv1_stats_kernel(%arg0: i32, %arg1: memref<1x18x18x128xf32, #tpu.memory_space<vmem>>, %arg2: memref<1152x128xf32, #tpu.memory_space<vmem>>, %arg3: memref<1x256x128xf32, #tpu.memory_space<vmem>>, %arg4: memref<2x128xf32, #tpu.memory_space<vmem>>) attributes {dimension_semantics = [#tpu.dimension_semantics<arbitrary>], iteration_bounds = array<i64: 2>, scalar_prefetch = 0 : i64, scratch_operands = 0 : i64, tpu.core_type = #tpu.core_type<tc>, window_params = [{transform_indices = @transform_0, window_bounds = array<i64: 1, 18, 18, 128>}, {pipeline_mode = #tpu.pipeline_mode<synchronous>, transform_indices = @transform_1, window_bounds = array<i64: 1152, 128>}, {transform_indices = @transform_2, window_bounds = array<i64: 1, 256, 128>}, {pipeline_mode = #tpu.pipeline_mode<synchronous>, transform_indices = @transform_3, window_bounds = array<i64: 2, 128>}]} {
    %cst = arith.constant 0.000000e+00 : f32
    %0 = vector.broadcast %cst : f32 to vector<256x128xf32>
    %c0 = arith.constant 0 : index
    %c0_0 = arith.constant 0 : index
    %c0_1 = arith.constant 0 : index
    %c0_2 = arith.constant 0 : index
    %1 = vector.load %arg1[%c0, %c0_0, %c0_1, %c0_2] : memref<1x18x18x128xf32, #tpu.memory_space<vmem>>, vector<1x16x16x128xf32>
    %2 = vector.shape_cast %1 : vector<1x16x16x128xf32> to vector<16x16x128xf32>
    %3 = vector.shape_cast %2 : vector<16x16x128xf32> to vector<256x128xf32>
    %c0_3 = arith.constant 0 : index
    %c0_4 = arith.constant 0 : index
    %4 = vector.load %arg2[%c0_3, %c0_4] : memref<1152x128xf32, #tpu.memory_space<vmem>>, vector<128x128xf32>
    %cst_5 = arith.constant dense<0.000000e+00> : vector<256x128xf32>
    %5 = tpu.matmul %3, %4, %cst_5 {dimension_numbers = #tpu.dot_dimension_numbers<[1], [0], [0], [1], [0, 0, 1, 1], [], []>} : vector<256x128xf32>, vector<128x128xf32>, vector<256x128xf32> -> vector<256x128xf32>
    %6 = arith.addf %0, %5 : vector<256x128xf32>
    %c0_6 = arith.constant 0 : index
    %c0_7 = arith.constant 0 : index
    %c1 = arith.constant 1 : index
    %c0_8 = arith.constant 0 : index
    %7 = vector.load %arg1[%c0_6, %c0_7, %c1, %c0_8] : memref<1x18x18x128xf32, #tpu.memory_space<vmem>>, vector<1x16x16x128xf32>
    %8 = vector.shape_cast %7 : vector<1x16x16x128xf32> to vector<16x16x128xf32>
    %9 = vector.shape_cast %8 : vector<16x16x128xf32> to vector<256x128xf32>
    %c128 = arith.constant 128 : index
    %c0_9 = arith.constant 0 : index
    %10 = vector.load %arg2[%c128, %c0_9] : memref<1152x128xf32, #tpu.memory_space<vmem>>, vector<128x128xf32>
    %cst_10 = arith.constant dense<0.000000e+00> : vector<256x128xf32>
    %11 = tpu.matmul %9, %10, %cst_10 {dimension_numbers = #tpu.dot_dimension_numbers<[1], [0], [0], [1], [0, 0, 1, 1], [], []>} : vector<256x128xf32>, vector<128x128xf32>, vector<256x128xf32> -> vector<256x128xf32>
    %12 = arith.addf %6, %11 : vector<256x128xf32>
    %c0_11 = arith.constant 0 : index
    %c0_12 = arith.constant 0 : index
    %c2 = arith.constant 2 : index
    %c0_13 = arith.constant 0 : index
    %13 = vector.load %arg1[%c0_11, %c0_12, %c2, %c0_13] : memref<1x18x18x128xf32, #tpu.memory_space<vmem>>, vector<1x16x16x128xf32>
    %14 = vector.shape_cast %13 : vector<1x16x16x128xf32> to vector<16x16x128xf32>
    %15 = vector.shape_cast %14 : vector<16x16x128xf32> to vector<256x128xf32>
    %c256 = arith.constant 256 : index
    %c0_14 = arith.constant 0 : index
    %16 = vector.load %arg2[%c256, %c0_14] : memref<1152x128xf32, #tpu.memory_space<vmem>>, vector<128x128xf32>
    %cst_15 = arith.constant dense<0.000000e+00> : vector<256x128xf32>
    %17 = tpu.matmul %15, %16, %cst_15 {dimension_numbers = #tpu.dot_dimension_numbers<[1], [0], [0], [1], [0, 0, 1, 1], [], []>} : vector<256x128xf32>, vector<128x128xf32>, vector<256x128xf32> -> vector<256x128xf32>
    %18 = arith.addf %12, %17 : vector<256x128xf32>
    %c0_16 = arith.constant 0 : index
    %c1_17 = arith.constant 1 : index
    %c0_18 = arith.constant 0 : index
    %c0_19 = arith.constant 0 : index
    %19 = vector.load %arg1[%c0_16, %c1_17, %c0_18, %c0_19] : memref<1x18x18x128xf32, #tpu.memory_space<vmem>>, vector<1x16x16x128xf32>
    %20 = vector.shape_cast %19 : vector<1x16x16x128xf32> to vector<16x16x128xf32>
    %21 = vector.shape_cast %20 : vector<16x16x128xf32> to vector<256x128xf32>
    %c384 = arith.constant 384 : index
    %c0_20 = arith.constant 0 : index
    %22 = vector.load %arg2[%c384, %c0_20] : memref<1152x128xf32, #tpu.memory_space<vmem>>, vector<128x128xf32>
    %cst_21 = arith.constant dense<0.000000e+00> : vector<256x128xf32>
    %23 = tpu.matmul %21, %22, %cst_21 {dimension_numbers = #tpu.dot_dimension_numbers<[1], [0], [0], [1], [0, 0, 1, 1], [], []>} : vector<256x128xf32>, vector<128x128xf32>, vector<256x128xf32> -> vector<256x128xf32>
    %24 = arith.addf %18, %23 : vector<256x128xf32>
    %c0_22 = arith.constant 0 : index
    %c1_23 = arith.constant 1 : index
    %c1_24 = arith.constant 1 : index
    %c0_25 = arith.constant 0 : index
    %25 = vector.load %arg1[%c0_22, %c1_23, %c1_24, %c0_25] : memref<1x18x18x128xf32, #tpu.memory_space<vmem>>, vector<1x16x16x128xf32>
    %26 = vector.shape_cast %25 : vector<1x16x16x128xf32> to vector<16x16x128xf32>
    %27 = vector.shape_cast %26 : vector<16x16x128xf32> to vector<256x128xf32>
    %c512 = arith.constant 512 : index
    %c0_26 = arith.constant 0 : index
    %28 = vector.load %arg2[%c512, %c0_26] : memref<1152x128xf32, #tpu.memory_space<vmem>>, vector<128x128xf32>
    %cst_27 = arith.constant dense<0.000000e+00> : vector<256x128xf32>
    %29 = tpu.matmul %27, %28, %cst_27 {dimension_numbers = #tpu.dot_dimension_numbers<[1], [0], [0], [1], [0, 0, 1, 1], [], []>} : vector<256x128xf32>, vector<128x128xf32>, vector<256x128xf32> -> vector<256x128xf32>
    %30 = arith.addf %24, %29 : vector<256x128xf32>
    %c0_28 = arith.constant 0 : index
    %c1_29 = arith.constant 1 : index
    %c2_30 = arith.constant 2 : index
    %c0_31 = arith.constant 0 : index
    %31 = vector.load %arg1[%c0_28, %c1_29, %c2_30, %c0_31] : memref<1x18x18x128xf32, #tpu.memory_space<vmem>>, vector<1x16x16x128xf32>
    %32 = vector.shape_cast %31 : vector<1x16x16x128xf32> to vector<16x16x128xf32>
    %33 = vector.shape_cast %32 : vector<16x16x128xf32> to vector<256x128xf32>
    %c640 = arith.constant 640 : index
    %c0_32 = arith.constant 0 : index
    %34 = vector.load %arg2[%c640, %c0_32] : memref<1152x128xf32, #tpu.memory_space<vmem>>, vector<128x128xf32>
    %cst_33 = arith.constant dense<0.000000e+00> : vector<256x128xf32>
    %35 = tpu.matmul %33, %34, %cst_33 {dimension_numbers = #tpu.dot_dimension_numbers<[1], [0], [0], [1], [0, 0, 1, 1], [], []>} : vector<256x128xf32>, vector<128x128xf32>, vector<256x128xf32> -> vector<256x128xf32>
    %36 = arith.addf %30, %35 : vector<256x128xf32>
    %c0_34 = arith.constant 0 : index
    %c2_35 = arith.constant 2 : index
    %c0_36 = arith.constant 0 : index
    %c0_37 = arith.constant 0 : index
    %37 = vector.load %arg1[%c0_34, %c2_35, %c0_36, %c0_37] : memref<1x18x18x128xf32, #tpu.memory_space<vmem>>, vector<1x16x16x128xf32>
    %38 = vector.shape_cast %37 : vector<1x16x16x128xf32> to vector<16x16x128xf32>
    %39 = vector.shape_cast %38 : vector<16x16x128xf32> to vector<256x128xf32>
    %c768 = arith.constant 768 : index
    %c0_38 = arith.constant 0 : index
    %40 = vector.load %arg2[%c768, %c0_38] : memref<1152x128xf32, #tpu.memory_space<vmem>>, vector<128x128xf32>
    %cst_39 = arith.constant dense<0.000000e+00> : vector<256x128xf32>
    %41 = tpu.matmul %39, %40, %cst_39 {dimension_numbers = #tpu.dot_dimension_numbers<[1], [0], [0], [1], [0, 0, 1, 1], [], []>} : vector<256x128xf32>, vector<128x128xf32>, vector<256x128xf32> -> vector<256x128xf32>
    %42 = arith.addf %36, %41 : vector<256x128xf32>
    %c0_40 = arith.constant 0 : index
    %c2_41 = arith.constant 2 : index
    %c1_42 = arith.constant 1 : index
    %c0_43 = arith.constant 0 : index
    %43 = vector.load %arg1[%c0_40, %c2_41, %c1_42, %c0_43] : memref<1x18x18x128xf32, #tpu.memory_space<vmem>>, vector<1x16x16x128xf32>
    %44 = vector.shape_cast %43 : vector<1x16x16x128xf32> to vector<16x16x128xf32>
    %45 = vector.shape_cast %44 : vector<16x16x128xf32> to vector<256x128xf32>
    %c896 = arith.constant 896 : index
    %c0_44 = arith.constant 0 : index
    %46 = vector.load %arg2[%c896, %c0_44] : memref<1152x128xf32, #tpu.memory_space<vmem>>, vector<128x128xf32>
    %cst_45 = arith.constant dense<0.000000e+00> : vector<256x128xf32>
    %47 = tpu.matmul %45, %46, %cst_45 {dimension_numbers = #tpu.dot_dimension_numbers<[1], [0], [0], [1], [0, 0, 1, 1], [], []>} : vector<256x128xf32>, vector<128x128xf32>, vector<256x128xf32> -> vector<256x128xf32>
    %48 = arith.addf %42, %47 : vector<256x128xf32>
    %c0_46 = arith.constant 0 : index
    %c2_47 = arith.constant 2 : index
    %c2_48 = arith.constant 2 : index
    %c0_49 = arith.constant 0 : index
    %49 = vector.load %arg1[%c0_46, %c2_47, %c2_48, %c0_49] : memref<1x18x18x128xf32, #tpu.memory_space<vmem>>, vector<1x16x16x128xf32>
    %50 = vector.shape_cast %49 : vector<1x16x16x128xf32> to vector<16x16x128xf32>
    %51 = vector.shape_cast %50 : vector<16x16x128xf32> to vector<256x128xf32>
    %c1024 = arith.constant 1024 : index
    %c0_50 = arith.constant 0 : index
    %52 = vector.load %arg2[%c1024, %c0_50] : memref<1152x128xf32, #tpu.memory_space<vmem>>, vector<128x128xf32>
    %cst_51 = arith.constant dense<0.000000e+00> : vector<256x128xf32>
    %53 = tpu.matmul %51, %52, %cst_51 {dimension_numbers = #tpu.dot_dimension_numbers<[1], [0], [0], [1], [0, 0, 1, 1], [], []>} : vector<256x128xf32>, vector<128x128xf32>, vector<256x128xf32> -> vector<256x128xf32>
    %54 = arith.addf %48, %53 : vector<256x128xf32>
    %c0_52 = arith.constant 0 : index
    %c0_53 = arith.constant 0 : index
    %c0_54 = arith.constant 0 : index
    %55 = vector.load %arg3[%c0_52, %c0_53, %c0_54] : memref<1x256x128xf32, #tpu.memory_space<vmem>>, vector<1x256x128xf32>
    %56 = vector.shape_cast %55 : vector<1x256x128xf32> to vector<256x128xf32>
    %57 = vector.shape_cast %54 : vector<256x128xf32> to vector<1x256x128xf32>
    tpu.vector_store %arg3[%c0_52, %c0_53, %c0_54], %57 {strides = array<i32>} : memref<1x256x128xf32, #tpu.memory_space<vmem>>, vector<1x256x128xf32>,
    %c0_i32 = arith.constant 0 : i32
    %58 = arith.cmpi eq, %arg0, %c0_i32 : i32
    %59 = arith.extui %58 : i1 to i32
    %c0_i32_55 = arith.constant 0 : i32
    %60 = arith.cmpi ne, %59, %c0_i32_55 : i32
    scf.if %60 {
      %cst_62 = arith.constant 0.000000e+00 : f32
      %70 = vector.broadcast %cst_62 : f32 to vector<2x128xf32>
      %c0_63 = arith.constant 0 : index
      %c0_64 = arith.constant 0 : index
      %71 = vector.load %arg4[%c0_63, %c0_64] : memref<2x128xf32, #tpu.memory_space<vmem>>, vector<2x128xf32>
      tpu.vector_store %arg4[%c0_63, %c0_64], %70 {strides = array<i32>} : memref<2x128xf32, #tpu.memory_space<vmem>>, vector<2x128xf32>,
    } else {
    }
    %cst_56 = arith.constant dense<0.000000e+00> : vector<128xf32>
    %61 = vector.multi_reduction <add>, %54, %cst_56 [0] : vector<256x128xf32> to vector<128xf32>
    %62 = vector.shape_cast %61 : vector<128xf32> to vector<1x128xf32>
    %63 = arith.mulf %54, %54 : vector<256x128xf32>
    %cst_57 = arith.constant dense<0.000000e+00> : vector<128xf32>
    %64 = vector.multi_reduction <add>, %63, %cst_57 [0] : vector<256x128xf32> to vector<128xf32>
    %65 = vector.shape_cast %64 : vector<128xf32> to vector<1x128xf32>
    %c0_58 = arith.constant 0 : index
    %c0_59 = arith.constant 0 : index
    %66 = vector.load %arg4[%c0_58, %c0_59] : memref<2x128xf32, #tpu.memory_space<vmem>>, vector<2x128xf32>
    %67 = tpu.concatenate %62, %65 in 0 : vector<1x128xf32>, vector<1x128xf32> -> vector<2x128xf32>
    %68 = arith.addf %66, %67 : vector<2x128xf32>
    %c0_60 = arith.constant 0 : index
    %c0_61 = arith.constant 0 : index
    %69 = vector.load %arg4[%c0_60, %c0_61] : memref<2x128xf32, #tpu.memory_space<vmem>>, vector<2x128xf32>
    tpu.vector_store %arg4[%c0_60, %c0_61], %68 {strides = array<i32>} : memref<2x128xf32, #tpu.memory_space<vmem>>, vector<2x128xf32>,
    return
  }
  func.func @transform_0(%arg0: i32) -> (i32, i32, i32, i32) {
    %c0_i32 = arith.constant 0 : i32
    %c0_i32_0 = arith.constant 0 : i32
    %c0_i32_1 = arith.constant 0 : i32
    %c0_i32_2 = arith.constant 0 : i32
    return %arg0, %c0_i32, %c0_i32_0, %c0_i32_1 : i32, i32, i32, i32
  }
  func.func @transform_1(%arg0: i32) -> (i32, i32) {
    %c0_i32 = arith.constant 0 : i32
    %c0_i32_0 = arith.constant 0 : i32
    %c0_i32_1 = arith.constant 0 : i32
    return %c0_i32, %c0_i32_0 : i32, i32
  }
  func.func @transform_2(%arg0: i32) -> (i32, i32, i32) {
    %c0_i32 = arith.constant 0 : i32
    %c0_i32_0 = arith.constant 0 : i32
    %c0_i32_1 = arith.constant 0 : i32
    return %arg0, %c0_i32, %c0_i32_0 : i32, i32, i32
  }
  func.func @transform_3(%arg0: i32) -> (i32, i32) {
    %c0_i32 = arith.constant 0 : i32
    %c0_i32_0 = arith.constant 0 : i32
    %c0_i32_1 = arith.constant 0 : i32
    return %c0_i32, %c0_i32_0 : i32, i32
  }
}

module attributes {stable_mosaic.version = 11 : i64} {
  func.func @bn1_conv2_stats_kernel(%arg0: i32, %arg1: memref<1x256x128xf32, #tpu.memory_space<vmem>>, %arg2: memref<1x128xf32, #tpu.memory_space<vmem>>, %arg3: memref<1x128xf32, #tpu.memory_space<vmem>>, %arg4: memref<1152x128xf32, #tpu.memory_space<vmem>>, %arg5: memref<1x256x128xf32, #tpu.memory_space<vmem>>, %arg6: memref<2x128xf32, #tpu.memory_space<vmem>>, %arg7: memref<18x18x128xf32, #tpu.memory_space<vmem>>) attributes {dimension_semantics = [#tpu.dimension_semantics<arbitrary>], iteration_bounds = array<i64: 2>, scalar_prefetch = 0 : i64, scratch_operands = 1 : i64, tpu.core_type = #tpu.core_type<tc>, window_params = [{transform_indices = @transform_0, window_bounds = array<i64: 1, 256, 128>}, {pipeline_mode = #tpu.pipeline_mode<synchronous>, transform_indices = @transform_1, window_bounds = array<i64: 1, 128>}, {pipeline_mode = #tpu.pipeline_mode<synchronous>, transform_indices = @transform_2, window_bounds = array<i64: 1, 128>}, {pipeline_mode = #tpu.pipeline_mode<synchronous>, transform_indices = @transform_3, window_bounds = array<i64: 1152, 128>}, {transform_indices = @transform_4, window_bounds = array<i64: 1, 256, 128>}, {pipeline_mode = #tpu.pipeline_mode<synchronous>, transform_indices = @transform_5, window_bounds = array<i64: 2, 128>}]} {
    %c0 = arith.constant 0 : index
    %c0_0 = arith.constant 0 : index
    %c0_1 = arith.constant 0 : index
    %0 = vector.load %arg1[%c0, %c0_0, %c0_1] : memref<1x256x128xf32, #tpu.memory_space<vmem>>, vector<1x256x128xf32>
    %1 = vector.shape_cast %0 : vector<1x256x128xf32> to vector<256x128xf32>
    %c0_2 = arith.constant 0 : index
    %c0_3 = arith.constant 0 : index
    %2 = vector.load %arg2[%c0_2, %c0_3] : memref<1x128xf32, #tpu.memory_space<vmem>>, vector<1x128xf32>
    %3 = vector.broadcast %2 : vector<1x128xf32> to vector<256x128xf32>
    %4 = arith.mulf %1, %3 : vector<256x128xf32>
    %c0_4 = arith.constant 0 : index
    %c0_5 = arith.constant 0 : index
    %5 = vector.load %arg3[%c0_4, %c0_5] : memref<1x128xf32, #tpu.memory_space<vmem>>, vector<1x128xf32>
    %6 = vector.broadcast %5 : vector<1x128xf32> to vector<256x128xf32>
    %7 = arith.addf %4, %6 : vector<256x128xf32>
    %cst = arith.constant 0.000000e+00 : f32
    %8 = vector.broadcast %cst : f32 to vector<256x128xf32>
    %9 = arith.maximumf %7, %8 : vector<256x128xf32>
    %cst_6 = arith.constant 0.000000e+00 : f32
    %10 = vector.broadcast %cst_6 : f32 to vector<18x18x128xf32>
    %c0_7 = arith.constant 0 : index
    %c0_8 = arith.constant 0 : index
    %c0_9 = arith.constant 0 : index
    %11 = vector.load %arg7[%c0_7, %c0_8, %c0_9] : memref<18x18x128xf32, #tpu.memory_space<vmem>>, vector<18x18x128xf32>
    tpu.vector_store %arg7[%c0_7, %c0_8, %c0_9], %10 {strides = array<i32>} : memref<18x18x128xf32, #tpu.memory_space<vmem>>, vector<18x18x128xf32>,
    %12 = vector.shape_cast %9 : vector<256x128xf32> to vector<16x16x128xf32>
    %c1 = arith.constant 1 : index
    %c1_10 = arith.constant 1 : index
    %c0_11 = arith.constant 0 : index
    %13 = vector.load %arg7[%c1, %c1_10, %c0_11] : memref<18x18x128xf32, #tpu.memory_space<vmem>>, vector<16x16x128xf32>
    tpu.vector_store %arg7[%c1, %c1_10, %c0_11], %12 {strides = array<i32>} : memref<18x18x128xf32, #tpu.memory_space<vmem>>, vector<16x16x128xf32>,
    %cst_12 = arith.constant 0.000000e+00 : f32
    %14 = vector.broadcast %cst_12 : f32 to vector<256x128xf32>
    %c0_13 = arith.constant 0 : index
    %c0_14 = arith.constant 0 : index
    %c0_15 = arith.constant 0 : index
    %15 = vector.load %arg7[%c0_13, %c0_14, %c0_15] : memref<18x18x128xf32, #tpu.memory_space<vmem>>, vector<16x16x128xf32>
    %16 = vector.shape_cast %15 : vector<16x16x128xf32> to vector<256x128xf32>
    %c0_16 = arith.constant 0 : index
    %c0_17 = arith.constant 0 : index
    %17 = vector.load %arg4[%c0_16, %c0_17] : memref<1152x128xf32, #tpu.memory_space<vmem>>, vector<128x128xf32>
    %cst_18 = arith.constant dense<0.000000e+00> : vector<256x128xf32>
    %18 = tpu.matmul %16, %17, %cst_18 {dimension_numbers = #tpu.dot_dimension_numbers<[1], [0], [0], [1], [0, 0, 1, 1], [], []>} : vector<256x128xf32>, vector<128x128xf32>, vector<256x128xf32> -> vector<256x128xf32>
    %19 = arith.addf %14, %18 : vector<256x128xf32>
    %c0_19 = arith.constant 0 : index
    %c1_20 = arith.constant 1 : index
    %c0_21 = arith.constant 0 : index
    %20 = vector.load %arg7[%c0_19, %c1_20, %c0_21] : memref<18x18x128xf32, #tpu.memory_space<vmem>>, vector<16x16x128xf32>
    %21 = vector.shape_cast %20 : vector<16x16x128xf32> to vector<256x128xf32>
    %c128 = arith.constant 128 : index
    %c0_22 = arith.constant 0 : index
    %22 = vector.load %arg4[%c128, %c0_22] : memref<1152x128xf32, #tpu.memory_space<vmem>>, vector<128x128xf32>
    %cst_23 = arith.constant dense<0.000000e+00> : vector<256x128xf32>
    %23 = tpu.matmul %21, %22, %cst_23 {dimension_numbers = #tpu.dot_dimension_numbers<[1], [0], [0], [1], [0, 0, 1, 1], [], []>} : vector<256x128xf32>, vector<128x128xf32>, vector<256x128xf32> -> vector<256x128xf32>
    %24 = arith.addf %19, %23 : vector<256x128xf32>
    %c0_24 = arith.constant 0 : index
    %c2 = arith.constant 2 : index
    %c0_25 = arith.constant 0 : index
    %25 = vector.load %arg7[%c0_24, %c2, %c0_25] : memref<18x18x128xf32, #tpu.memory_space<vmem>>, vector<16x16x128xf32>
    %26 = vector.shape_cast %25 : vector<16x16x128xf32> to vector<256x128xf32>
    %c256 = arith.constant 256 : index
    %c0_26 = arith.constant 0 : index
    %27 = vector.load %arg4[%c256, %c0_26] : memref<1152x128xf32, #tpu.memory_space<vmem>>, vector<128x128xf32>
    %cst_27 = arith.constant dense<0.000000e+00> : vector<256x128xf32>
    %28 = tpu.matmul %26, %27, %cst_27 {dimension_numbers = #tpu.dot_dimension_numbers<[1], [0], [0], [1], [0, 0, 1, 1], [], []>} : vector<256x128xf32>, vector<128x128xf32>, vector<256x128xf32> -> vector<256x128xf32>
    %29 = arith.addf %24, %28 : vector<256x128xf32>
    %c1_28 = arith.constant 1 : index
    %c0_29 = arith.constant 0 : index
    %c0_30 = arith.constant 0 : index
    %30 = vector.load %arg7[%c1_28, %c0_29, %c0_30] : memref<18x18x128xf32, #tpu.memory_space<vmem>>, vector<16x16x128xf32>
    %31 = vector.shape_cast %30 : vector<16x16x128xf32> to vector<256x128xf32>
    %c384 = arith.constant 384 : index
    %c0_31 = arith.constant 0 : index
    %32 = vector.load %arg4[%c384, %c0_31] : memref<1152x128xf32, #tpu.memory_space<vmem>>, vector<128x128xf32>
    %cst_32 = arith.constant dense<0.000000e+00> : vector<256x128xf32>
    %33 = tpu.matmul %31, %32, %cst_32 {dimension_numbers = #tpu.dot_dimension_numbers<[1], [0], [0], [1], [0, 0, 1, 1], [], []>} : vector<256x128xf32>, vector<128x128xf32>, vector<256x128xf32> -> vector<256x128xf32>
    %34 = arith.addf %29, %33 : vector<256x128xf32>
    %c1_33 = arith.constant 1 : index
    %c1_34 = arith.constant 1 : index
    %c0_35 = arith.constant 0 : index
    %35 = vector.load %arg7[%c1_33, %c1_34, %c0_35] : memref<18x18x128xf32, #tpu.memory_space<vmem>>, vector<16x16x128xf32>
    %36 = vector.shape_cast %35 : vector<16x16x128xf32> to vector<256x128xf32>
    %c512 = arith.constant 512 : index
    %c0_36 = arith.constant 0 : index
    %37 = vector.load %arg4[%c512, %c0_36] : memref<1152x128xf32, #tpu.memory_space<vmem>>, vector<128x128xf32>
    %cst_37 = arith.constant dense<0.000000e+00> : vector<256x128xf32>
    %38 = tpu.matmul %36, %37, %cst_37 {dimension_numbers = #tpu.dot_dimension_numbers<[1], [0], [0], [1], [0, 0, 1, 1], [], []>} : vector<256x128xf32>, vector<128x128xf32>, vector<256x128xf32> -> vector<256x128xf32>
    %39 = arith.addf %34, %38 : vector<256x128xf32>
    %c1_38 = arith.constant 1 : index
    %c2_39 = arith.constant 2 : index
    %c0_40 = arith.constant 0 : index
    %40 = vector.load %arg7[%c1_38, %c2_39, %c0_40] : memref<18x18x128xf32, #tpu.memory_space<vmem>>, vector<16x16x128xf32>
    %41 = vector.shape_cast %40 : vector<16x16x128xf32> to vector<256x128xf32>
    %c640 = arith.constant 640 : index
    %c0_41 = arith.constant 0 : index
    %42 = vector.load %arg4[%c640, %c0_41] : memref<1152x128xf32, #tpu.memory_space<vmem>>, vector<128x128xf32>
    %cst_42 = arith.constant dense<0.000000e+00> : vector<256x128xf32>
    %43 = tpu.matmul %41, %42, %cst_42 {dimension_numbers = #tpu.dot_dimension_numbers<[1], [0], [0], [1], [0, 0, 1, 1], [], []>} : vector<256x128xf32>, vector<128x128xf32>, vector<256x128xf32> -> vector<256x128xf32>
    %44 = arith.addf %39, %43 : vector<256x128xf32>
    %c2_43 = arith.constant 2 : index
    %c0_44 = arith.constant 0 : index
    %c0_45 = arith.constant 0 : index
    %45 = vector.load %arg7[%c2_43, %c0_44, %c0_45] : memref<18x18x128xf32, #tpu.memory_space<vmem>>, vector<16x16x128xf32>
    %46 = vector.shape_cast %45 : vector<16x16x128xf32> to vector<256x128xf32>
    %c768 = arith.constant 768 : index
    %c0_46 = arith.constant 0 : index
    %47 = vector.load %arg4[%c768, %c0_46] : memref<1152x128xf32, #tpu.memory_space<vmem>>, vector<128x128xf32>
    %cst_47 = arith.constant dense<0.000000e+00> : vector<256x128xf32>
    %48 = tpu.matmul %46, %47, %cst_47 {dimension_numbers = #tpu.dot_dimension_numbers<[1], [0], [0], [1], [0, 0, 1, 1], [], []>} : vector<256x128xf32>, vector<128x128xf32>, vector<256x128xf32> -> vector<256x128xf32>
    %49 = arith.addf %44, %48 : vector<256x128xf32>
    %c2_48 = arith.constant 2 : index
    %c1_49 = arith.constant 1 : index
    %c0_50 = arith.constant 0 : index
    %50 = vector.load %arg7[%c2_48, %c1_49, %c0_50] : memref<18x18x128xf32, #tpu.memory_space<vmem>>, vector<16x16x128xf32>
    %51 = vector.shape_cast %50 : vector<16x16x128xf32> to vector<256x128xf32>
    %c896 = arith.constant 896 : index
    %c0_51 = arith.constant 0 : index
    %52 = vector.load %arg4[%c896, %c0_51] : memref<1152x128xf32, #tpu.memory_space<vmem>>, vector<128x128xf32>
    %cst_52 = arith.constant dense<0.000000e+00> : vector<256x128xf32>
    %53 = tpu.matmul %51, %52, %cst_52 {dimension_numbers = #tpu.dot_dimension_numbers<[1], [0], [0], [1], [0, 0, 1, 1], [], []>} : vector<256x128xf32>, vector<128x128xf32>, vector<256x128xf32> -> vector<256x128xf32>
    %54 = arith.addf %49, %53 : vector<256x128xf32>
    %c2_53 = arith.constant 2 : index
    %c2_54 = arith.constant 2 : index
    %c0_55 = arith.constant 0 : index
    %55 = vector.load %arg7[%c2_53, %c2_54, %c0_55] : memref<18x18x128xf32, #tpu.memory_space<vmem>>, vector<16x16x128xf32>
    %56 = vector.shape_cast %55 : vector<16x16x128xf32> to vector<256x128xf32>
    %c1024 = arith.constant 1024 : index
    %c0_56 = arith.constant 0 : index
    %57 = vector.load %arg4[%c1024, %c0_56] : memref<1152x128xf32, #tpu.memory_space<vmem>>, vector<128x128xf32>
    %cst_57 = arith.constant dense<0.000000e+00> : vector<256x128xf32>
    %58 = tpu.matmul %56, %57, %cst_57 {dimension_numbers = #tpu.dot_dimension_numbers<[1], [0], [0], [1], [0, 0, 1, 1], [], []>} : vector<256x128xf32>, vector<128x128xf32>, vector<256x128xf32> -> vector<256x128xf32>
    %59 = arith.addf %54, %58 : vector<256x128xf32>
    %c0_58 = arith.constant 0 : index
    %c0_59 = arith.constant 0 : index
    %c0_60 = arith.constant 0 : index
    %60 = vector.load %arg5[%c0_58, %c0_59, %c0_60] : memref<1x256x128xf32, #tpu.memory_space<vmem>>, vector<1x256x128xf32>
    %61 = vector.shape_cast %60 : vector<1x256x128xf32> to vector<256x128xf32>
    %62 = vector.shape_cast %59 : vector<256x128xf32> to vector<1x256x128xf32>
    tpu.vector_store %arg5[%c0_58, %c0_59, %c0_60], %62 {strides = array<i32>} : memref<1x256x128xf32, #tpu.memory_space<vmem>>, vector<1x256x128xf32>,
    %c0_i32 = arith.constant 0 : i32
    %63 = arith.cmpi eq, %arg0, %c0_i32 : i32
    %64 = arith.extui %63 : i1 to i32
    %c0_i32_61 = arith.constant 0 : i32
    %65 = arith.cmpi ne, %64, %c0_i32_61 : i32
    scf.if %65 {
      %cst_68 = arith.constant 0.000000e+00 : f32
      %75 = vector.broadcast %cst_68 : f32 to vector<2x128xf32>
      %c0_69 = arith.constant 0 : index
      %c0_70 = arith.constant 0 : index
      %76 = vector.load %arg6[%c0_69, %c0_70] : memref<2x128xf32, #tpu.memory_space<vmem>>, vector<2x128xf32>
      tpu.vector_store %arg6[%c0_69, %c0_70], %75 {strides = array<i32>} : memref<2x128xf32, #tpu.memory_space<vmem>>, vector<2x128xf32>,
    } else {
    }
    %cst_62 = arith.constant dense<0.000000e+00> : vector<128xf32>
    %66 = vector.multi_reduction <add>, %59, %cst_62 [0] : vector<256x128xf32> to vector<128xf32>
    %67 = vector.shape_cast %66 : vector<128xf32> to vector<1x128xf32>
    %68 = arith.mulf %59, %59 : vector<256x128xf32>
    %cst_63 = arith.constant dense<0.000000e+00> : vector<128xf32>
    %69 = vector.multi_reduction <add>, %68, %cst_63 [0] : vector<256x128xf32> to vector<128xf32>
    %70 = vector.shape_cast %69 : vector<128xf32> to vector<1x128xf32>
    %c0_64 = arith.constant 0 : index
    %c0_65 = arith.constant 0 : index
    %71 = vector.load %arg6[%c0_64, %c0_65] : memref<2x128xf32, #tpu.memory_space<vmem>>, vector<2x128xf32>
    %72 = tpu.concatenate %67, %70 in 0 : vector<1x128xf32>, vector<1x128xf32> -> vector<2x128xf32>
    %73 = arith.addf %71, %72 : vector<2x128xf32>
    %c0_66 = arith.constant 0 : index
    %c0_67 = arith.constant 0 : index
    %74 = vector.load %arg6[%c0_66, %c0_67] : memref<2x128xf32, #tpu.memory_space<vmem>>, vector<2x128xf32>
    tpu.vector_store %arg6[%c0_66, %c0_67], %73 {strides = array<i32>} : memref<2x128xf32, #tpu.memory_space<vmem>>, vector<2x128xf32>,
    return
  }
  func.func @transform_0(%arg0: i32) -> (i32, i32, i32) {
    %c0_i32 = arith.constant 0 : i32
    %c0_i32_0 = arith.constant 0 : i32
    %c0_i32_1 = arith.constant 0 : i32
    return %arg0, %c0_i32, %c0_i32_0 : i32, i32, i32
  }
  func.func @transform_1(%arg0: i32) -> (i32, i32) {
    %c0_i32 = arith.constant 0 : i32
    %c0_i32_0 = arith.constant 0 : i32
    %c0_i32_1 = arith.constant 0 : i32
    return %c0_i32, %c0_i32_0 : i32, i32
  }
  func.func @transform_2(%arg0: i32) -> (i32, i32) {
    %c0_i32 = arith.constant 0 : i32
    %c0_i32_0 = arith.constant 0 : i32
    %c0_i32_1 = arith.constant 0 : i32
    return %c0_i32, %c0_i32_0 : i32, i32
  }
  func.func @transform_3(%arg0: i32) -> (i32, i32) {
    %c0_i32 = arith.constant 0 : i32
    %c0_i32_0 = arith.constant 0 : i32
    %c0_i32_1 = arith.constant 0 : i32
    return %c0_i32, %c0_i32_0 : i32, i32
  }
  func.func @transform_4(%arg0: i32) -> (i32, i32, i32) {
    %c0_i32 = arith.constant 0 : i32
    %c0_i32_0 = arith.constant 0 : i32
    %c0_i32_1 = arith.constant 0 : i32
    return %arg0, %c0_i32, %c0_i32_0 : i32, i32, i32
  }
  func.func @transform_5(%arg0: i32) -> (i32, i32) {
    %c0_i32 = arith.constant 0 : i32
    %c0_i32_0 = arith.constant 0 : i32
    %c0_i32_1 = arith.constant 0 : i32
    return %c0_i32, %c0_i32_0 : i32, i32
  }
}

module attributes {stable_mosaic.version = 11 : i64} {
  func.func @bn2_shortcut_relu_kernel(%arg0: i32, %arg1: memref<1x256x128xf32, #tpu.memory_space<vmem>>, %arg2: memref<1x18x18x128xf32, #tpu.memory_space<vmem>>, %arg3: memref<1x128xf32, #tpu.memory_space<vmem>>, %arg4: memref<1x128xf32, #tpu.memory_space<vmem>>, %arg5: memref<128x128xf32, #tpu.memory_space<vmem>>, %arg6: memref<1x128xf32, #tpu.memory_space<vmem>>, %arg7: memref<1x256x128xf32, #tpu.memory_space<vmem>>) attributes {dimension_semantics = [#tpu.dimension_semantics<parallel>], iteration_bounds = array<i64: 2>, scalar_prefetch = 0 : i64, scratch_operands = 0 : i64, tpu.core_type = #tpu.core_type<tc>, window_params = [{transform_indices = @transform_0, window_bounds = array<i64: 1, 256, 128>}, {transform_indices = @transform_1, window_bounds = array<i64: 1, 18, 18, 128>}, {pipeline_mode = #tpu.pipeline_mode<synchronous>, transform_indices = @transform_2, window_bounds = array<i64: 1, 128>}, {pipeline_mode = #tpu.pipeline_mode<synchronous>, transform_indices = @transform_3, window_bounds = array<i64: 1, 128>}, {pipeline_mode = #tpu.pipeline_mode<synchronous>, transform_indices = @transform_4, window_bounds = array<i64: 128, 128>}, {pipeline_mode = #tpu.pipeline_mode<synchronous>, transform_indices = @transform_5, window_bounds = array<i64: 1, 128>}, {transform_indices = @transform_6, window_bounds = array<i64: 1, 256, 128>}]} {
    %c0 = arith.constant 0 : index
    %c0_0 = arith.constant 0 : index
    %c0_1 = arith.constant 0 : index
    %0 = vector.load %arg1[%c0, %c0_0, %c0_1] : memref<1x256x128xf32, #tpu.memory_space<vmem>>, vector<1x256x128xf32>
    %1 = vector.shape_cast %0 : vector<1x256x128xf32> to vector<256x128xf32>
    %c0_2 = arith.constant 0 : index
    %c0_3 = arith.constant 0 : index
    %2 = vector.load %arg3[%c0_2, %c0_3] : memref<1x128xf32, #tpu.memory_space<vmem>>, vector<1x128xf32>
    %3 = vector.broadcast %2 : vector<1x128xf32> to vector<256x128xf32>
    %4 = arith.mulf %1, %3 : vector<256x128xf32>
    %c0_4 = arith.constant 0 : index
    %c0_5 = arith.constant 0 : index
    %5 = vector.load %arg4[%c0_4, %c0_5] : memref<1x128xf32, #tpu.memory_space<vmem>>, vector<1x128xf32>
    %6 = vector.broadcast %5 : vector<1x128xf32> to vector<256x128xf32>
    %7 = arith.addf %4, %6 : vector<256x128xf32>
    %c0_6 = arith.constant 0 : index
    %c1 = arith.constant 1 : index
    %c1_7 = arith.constant 1 : index
    %c0_8 = arith.constant 0 : index
    %8 = vector.load %arg2[%c0_6, %c1, %c1_7, %c0_8] : memref<1x18x18x128xf32, #tpu.memory_space<vmem>>, vector<1x16x16x128xf32>
    %9 = vector.shape_cast %8 : vector<1x16x16x128xf32> to vector<16x16x128xf32>
    %10 = vector.shape_cast %9 : vector<16x16x128xf32> to vector<256x128xf32>
    %c0_9 = arith.constant 0 : index
    %c0_10 = arith.constant 0 : index
    %11 = vector.load %arg5[%c0_9, %c0_10] : memref<128x128xf32, #tpu.memory_space<vmem>>, vector<128x128xf32>
    %cst = arith.constant dense<0.000000e+00> : vector<256x128xf32>
    %12 = tpu.matmul %10, %11, %cst {dimension_numbers = #tpu.dot_dimension_numbers<[1], [0], [0], [1], [0, 0, 1, 1], [], []>} : vector<256x128xf32>, vector<128x128xf32>, vector<256x128xf32> -> vector<256x128xf32>
    %c0_11 = arith.constant 0 : index
    %c0_12 = arith.constant 0 : index
    %13 = vector.load %arg6[%c0_11, %c0_12] : memref<1x128xf32, #tpu.memory_space<vmem>>, vector<1x128xf32>
    %14 = vector.broadcast %13 : vector<1x128xf32> to vector<256x128xf32>
    %15 = arith.addf %12, %14 : vector<256x128xf32>
    %16 = arith.addf %7, %15 : vector<256x128xf32>
    %cst_13 = arith.constant 0.000000e+00 : f32
    %17 = vector.broadcast %cst_13 : f32 to vector<256x128xf32>
    %18 = arith.maximumf %16, %17 : vector<256x128xf32>
    %c0_14 = arith.constant 0 : index
    %c0_15 = arith.constant 0 : index
    %c0_16 = arith.constant 0 : index
    %19 = vector.load %arg7[%c0_14, %c0_15, %c0_16] : memref<1x256x128xf32, #tpu.memory_space<vmem>>, vector<1x256x128xf32>
    %20 = vector.shape_cast %19 : vector<1x256x128xf32> to vector<256x128xf32>
    %21 = vector.shape_cast %18 : vector<256x128xf32> to vector<1x256x128xf32>
    tpu.vector_store %arg7[%c0_14, %c0_15, %c0_16], %21 {strides = array<i32>} : memref<1x256x128xf32, #tpu.memory_space<vmem>>, vector<1x256x128xf32>,
    return
  }
  func.func @transform_0(%arg0: i32) -> (i32, i32, i32) {
    %c0_i32 = arith.constant 0 : i32
    %c0_i32_0 = arith.constant 0 : i32
    %c0_i32_1 = arith.constant 0 : i32
    return %arg0, %c0_i32, %c0_i32_0 : i32, i32, i32
  }
  func.func @transform_1(%arg0: i32) -> (i32, i32, i32, i32) {
    %c0_i32 = arith.constant 0 : i32
    %c0_i32_0 = arith.constant 0 : i32
    %c0_i32_1 = arith.constant 0 : i32
    %c0_i32_2 = arith.constant 0 : i32
    return %arg0, %c0_i32, %c0_i32_0, %c0_i32_1 : i32, i32, i32, i32
  }
  func.func @transform_2(%arg0: i32) -> (i32, i32) {
    %c0_i32 = arith.constant 0 : i32
    %c0_i32_0 = arith.constant 0 : i32
    %c0_i32_1 = arith.constant 0 : i32
    return %c0_i32, %c0_i32_0 : i32, i32
  }
  func.func @transform_3(%arg0: i32) -> (i32, i32) {
    %c0_i32 = arith.constant 0 : i32
    %c0_i32_0 = arith.constant 0 : i32
    %c0_i32_1 = arith.constant 0 : i32
    return %c0_i32, %c0_i32_0 : i32, i32
  }
  func.func @transform_4(%arg0: i32) -> (i32, i32) {
    %c0_i32 = arith.constant 0 : i32
    %c0_i32_0 = arith.constant 0 : i32
    %c0_i32_1 = arith.constant 0 : i32
    return %c0_i32, %c0_i32_0 : i32, i32
  }
  func.func @transform_5(%arg0: i32) -> (i32, i32) {
    %c0_i32 = arith.constant 0 : i32
    %c0_i32_0 = arith.constant 0 : i32
    %c0_i32_1 = arith.constant 0 : i32
    return %c0_i32, %c0_i32_0 : i32, i32
  }
  func.func @transform_6(%arg0: i32) -> (i32, i32, i32) {
    %c0_i32 = arith.constant 0 : i32
    %c0_i32_0 = arith.constant 0 : i32
    %c0_i32_1 = arith.constant 0 : i32
    return %arg0, %c0_i32, %c0_i32_0 : i32, i32, i32
  }
}

</mosaic_0001>

<llo_original>
// kernel: residual_forward.5
$region0: #{residual_forward.5}
  #allocation0 [shape = 'u32[]', space=smem, size = 0x4, offset = 0x4, fixed_abs, tag = 'smem constant byte address 0x4 - core index']
  #allocation1 [shape = 'u32[144,128]{1,0:T(1,128)}', space=vmem, size = 0x12000, scoped, tag = 'internal scratch']
  %s0 = inlined_call_operand.vmem [shape: f32[2,256,128], index: 0, kind: input, shape index: {}]
  %s1 = inlined_call_operand.vmem [shape: f32[2,18,18,128], index: 1, kind: input, shape index: {}]
  %s2 = inlined_call_operand.vmem [shape: f32[1,128], index: 2, kind: input, shape index: {}]
  %s3 = inlined_call_operand.vmem [shape: f32[1,128], index: 3, kind: input, shape index: {}]
  %s4 = inlined_call_operand.vmem [shape: f32[128,128], index: 4, kind: input, shape index: {}]
  %s5 = inlined_call_operand.vmem [shape: f32[1,128], index: 5, kind: input, shape index: {}]
  %s6 = inlined_call_operand.vmem [shape: f32[2,256,128], index: 6, kind: output, shape index: {}]
  %s7 = sld [smem:[#allocation0]]
  $region57: #{residual_forward.5} parent=0
    _
  %s9 = ssub.s32 1, %s7
  %s10 = scalar_select 0, %s9, %s7
  loop: start=0, step=1, limit=4
  $region2: #{residual_forward.5} parent=0 // loop_pre_header
    _
  $region3: #{residual_forward.5} parent=0 // loop_header
    %s12 = sphi 0, %s16
    %p13 = scmp.ge.s32.totalorder %s12, 4
    %s22 = sphi 0, %s24
    %s25 = sphi 0, %s22
    %s26 = sphi 0, %s25
    %s42 = sphi 0, %s26
    %s48 = sphi 0, %s50
    %s51 = sphi 0, %s48
    %s52 = sphi 0, %s51
    %s68 = sphi 0, %s52
    %s72 = sphi 0, %s72
    %s74 = sphi 0, %s72
    %s75 = sphi 0, %s74
    %s89 = sphi 0, %s75
    %s93 = sphi 0, %s93
    %s95 = sphi 0, %s93
    %s96 = sphi 0, %s95
    %s110 = sphi 0, %s96
    %s114 = sphi 0, %s114
    %s116 = sphi 0, %s114
    %s117 = sphi 0, %s116
    %s131 = sphi 0, %s117
    %s135 = sphi 0, %s135
    %s137 = sphi 0, %s135
    %s138 = sphi 0, %s137
    %s152 = sphi 0, %s138
    %s158 = sphi 0, %s160
    %s161 = sphi 0, %s158
    %s162 = sphi 0, %s161
    %s178 = sphi 0, %s162
  $region4: #{residual_forward.5} parent=0 // loop_header_branch
    %15 = sbr.rel (%p13) target = $region8
  $region5: #{residual_forward.5} parent=0 // loop_body
    %s17 = ssub.s32 %s12, 1
    %s18 = ssub.s32 %s12, 2
    %s19 = sadd.s32 %s12, 1
    %s20 = ssub.s32 %s12, %s19
    %p21 = scmp.eq.s32.totalorder %s20, 0
    %s23 = sadd.s32 %s22, 1
    %s24 = scalar_select %p21, %s22, %s23
    %p27 = pneg %p21
    %p28 = scmp.eq.s32.totalorder %s12, 1
    %p29 = por %p27, %p28
    %p30 = scmp.ne.s32.totalorder %s22, %s25
    %p31 = scmp.eq.s32.totalorder %s12, 0
    %p32 = por %p30, %p31
    %p33 = scmp.ne.s32.totalorder %s22, %s25
    %p34 = scmp.eq.s32.totalorder %s17, 1
    %p35 = por %p33, %p34
    %p36 = scmp.ne.s32.totalorder %s25, %s26
    %p37 = scmp.eq.s32.totalorder %s17, 0
    %p38 = por %p36, %p37
    %p39 = scmp.ne.s32.totalorder %s25, %s26
    %p40 = scmp.eq.s32.totalorder %s18, 1
    %p41 = por %p39, %p40
    %p43 = scmp.ne.s32.totalorder %s26, %s42
    %p44 = scmp.eq.s32.totalorder %s18, 0
    %p45 = por %p43, %p44
    %s46 = ssub.s32 %s12, %s19
    %p47 = scmp.eq.s32.totalorder %s46, 0
    %s49 = sadd.s32 %s48, 1
    %s50 = scalar_select %p47, %s48, %s49
    %p53 = pneg %p47
    %p54 = scmp.eq.s32.totalorder %s12, 1
    %p55 = por %p53, %p54
    %p56 = scmp.ne.s32.totalorder %s48, %s51
    %p57 = scmp.eq.s32.totalorder %s12, 0
    %p58 = por %p56, %p57
    %p59 = scmp.ne.s32.totalorder %s48, %s51
    %p60 = scmp.eq.s32.totalorder %s17, 1
    %p61 = por %p59, %p60
    %p62 = scmp.ne.s32.totalorder %s51, %s52
    %p63 = scmp.eq.s32.totalorder %s17, 0
    %p64 = por %p62, %p63
    %p65 = scmp.ne.s32.totalorder %s51, %s52
    %p66 = scmp.eq.s32.totalorder %s18, 1
    %p67 = por %p65, %p66
    %p69 = scmp.ne.s32.totalorder %s52, %s68
    %p70 = scmp.eq.s32.totalorder %s18, 0
    %p71 = por %p69, %p70
    %s73 = sadd.s32 %s72, 1
    %p76 = scmp.eq.s32.totalorder %s12, 1
    %p77 = scmp.ne.s32.totalorder %s72, %s74
    %p78 = scmp.eq.s32.totalorder %s12, 0
    %p79 = por %p77, %p78
    %p80 = scmp.ne.s32.totalorder %s72, %s74
    %p81 = scmp.eq.s32.totalorder %s17, 1
    %p82 = por %p80, %p81
    %p83 = scmp.ne.s32.totalorder %s74, %s75
    %p84 = scmp.eq.s32.totalorder %s17, 0
    %p85 = por %p83, %p84
    %p86 = scmp.ne.s32.totalorder %s74, %s75
    %p87 = scmp.eq.s32.totalorder %s18, 1
    %p88 = por %p86, %p87
    %p90 = scmp.ne.s32.totalorder %s75, %s89
    %p91 = scmp.eq.s32.totalorder %s18, 0
    %p92 = por %p90, %p91
    %s94 = sadd.s32 %s93, 1
    %p97 = scmp.eq.s32.totalorder %s12, 1
    %p98 = scmp.ne.s32.totalorder %s93, %s95
    %p99 = scmp.eq.s32.totalorder %s12, 0
    %p100 = por %p98, %p99
    %p101 = scmp.ne.s32.totalorder %s93, %s95
    %p102 = scmp.eq.s32.totalorder %s17, 1
    %p103 = por %p101, %p102
    %p104 = scmp.ne.s32.totalorder %s95, %s96
    %p105 = scmp.eq.s32.totalorder %s17, 0
    %p106 = por %p104, %p105
    %p107 = scmp.ne.s32.totalorder %s95, %s96
    %p108 = scmp.eq.s32.totalorder %s18, 1
    %p109 = por %p107, %p108
    %p111 = scmp.ne.s32.totalorder %s96, %s110
    %p112 = scmp.eq.s32.totalorder %s18, 0
    %p113 = por %p111, %p112
    %s115 = sadd.s32 %s114, 1
    %p118 = scmp.eq.s32.totalorder %s12, 1
    %p119 = scmp.ne.s32.totalorder %s114, %s116
    %p120 = scmp.eq.s32.totalorder %s12, 0
    %p121 = por %p119, %p120
    %p122 = scmp.ne.s32.totalorder %s114, %s116
    %p123 = scmp.eq.s32.totalorder %s17, 1
    %p124 = por %p122, %p123
    %p125 = scmp.ne.s32.totalorder %s116, %s117
    %p126 = scmp.eq.s32.totalorder %s17, 0
    %p127 = por %p125, %p126
    %p128 = scmp.ne.s32.totalorder %s116, %s117
    %p129 = scmp.eq.s32.totalorder %s18, 1
    %p130 = por %p128, %p129
    %p132 = scmp.ne.s32.totalorder %s117, %s131
    %p133 = scmp.eq.s32.totalorder %s18, 0
    %p134 = por %p132, %p133
    %s136 = sadd.s32 %s135, 1
    %p139 = scmp.eq.s32.totalorder %s12, 1
    %p140 = scmp.ne.s32.totalorder %s135, %s137
    %p141 = scmp.eq.s32.totalorder %s12, 0
    %p142 = por %p140, %p141
    %p143 = scmp.ne.s32.totalorder %s135, %s137
    %p144 = scmp.eq.s32.totalorder %s17, 1
    %p145 = por %p143, %p144
    %p146 = scmp.ne.s32.totalorder %s137, %s138
    %p147 = scmp.eq.s32.totalorder %s17, 0
    %p148 = por %p146, %p147
    %p149 = scmp.ne.s32.totalorder %s137, %s138
    %p150 = scmp.eq.s32.totalorder %s18, 1
    %p151 = por %p149, %p150
    %p153 = scmp.ne.s32.totalorder %s138, %s152
    %p154 = scmp.eq.s32.totalorder %s18, 0
    %p155 = por %p153, %p154
    %s156 = ssub.s32 %s12, %s19
    %p157 = scmp.eq.s32.totalorder %s156, 0
    %s159 = sadd.s32 %s158, 1
    %s160 = scalar_select %p157, %s158, %s159
    %p163 = pneg %p157
    %p164 = scmp.eq.s32.totalorder %s12, 1
    %p165 = por %p163, %p164
    %p166 = scmp.ne.s32.totalorder %s158, %s161
    %p167 = scmp.eq.s32.totalorder %s12, 0
    %p168 = por %p166, %p167
    %p169 = scmp.ne.s32.totalorder %s158, %s161
    %p170 = scmp.eq.s32.totalorder %s17, 1
    %p171 = por %p169, %p170
    %p172 = scmp.ne.s32.totalorder %s161, %s162
    %p173 = scmp.eq.s32.totalorder %s17, 0
    %p174 = por %p172, %p173
    %p175 = scmp.ne.s32.totalorder %s161, %s162
    %p176 = scmp.eq.s32.totalorder %s18, 1
    %p177 = por %p175, %p176
    %p179 = scmp.ne.s32.totalorder %s162, %s178
    %p180 = scmp.eq.s32.totalorder %s18, 0
    %p181 = por %p179, %p180
    %p182 = scmp.le.s32.totalorder 1, %s12
    %p183 = scmp.lt.s32.totalorder %s12, 3
    %p184 = pnand %p182, %p183
    %p185 = pneg %p184
    // Predicated region
    $region9: #{residual_forward.5} parent=5 // pred_check
      _
    $region10: #{residual_forward.5} parent=5 // pred_check_branch
      %187 = sbr.rel (%p184) target = $region12
    $region11: #{residual_forward.5} parent=5 // pred_region
      %s188 = ssub.s32 %s12, 1
      // Predicated region
      $region13: #{residual_forward.5} parent=11 // pred_check
        %p189 = pneg %p85
      $region14: #{residual_forward.5} parent=11 // pred_check_branch
        %191 = sbr.rel (%p189) target = $region16
      $region15: #{residual_forward.5} parent=11 // pred_region
        _
      $region16: #{residual_forward.5} parent=11 // pred_fallthru
        _
      // Predicated region
      $region17: #{residual_forward.5} parent=11 // pred_check
        %p192 = pneg %p106
      $region18: #{residual_forward.5} parent=11 // pred_check_branch
        %194 = sbr.rel (%p192) target = $region20
      $region19: #{residual_forward.5} parent=11 // pred_region
        _
      $region20: #{residual_forward.5} parent=11 // pred_fallthru
        _
      // Predicated region
      $region21: #{residual_forward.5} parent=11 // pred_check
        %p195 = pneg %p127
      $region22: #{residual_forward.5} parent=11 // pred_check_branch
        %197 = sbr.rel (%p195) target = $region24
      $region23: #{residual_forward.5} parent=11 // pred_region
        _
      $region24: #{residual_forward.5} parent=11 // pred_fallthru
        _
      // Predicated region
      $region25: #{residual_forward.5} parent=11 // pred_check
        %p198 = pneg %p148
      $region26: #{residual_forward.5} parent=11 // pred_check_branch
        %200 = sbr.rel (%p198) target = $region28
      $region27: #{residual_forward.5} parent=11 // pred_region
        _
      $region28: #{residual_forward.5} parent=11 // pred_fallthru
        _
    $region12: #{residual_forward.5} parent=5 // pred_fallthru
      _
    %p201 = scmp.lt.s32.totalorder %s12, 2
    // Predicated region
    $region29: #{residual_forward.5} parent=5 // pred_check
      %p202 = pneg %p201
    $region30: #{residual_forward.5} parent=5 // pred_check_branch
      %204 = sbr.rel (%p202) target = $region32
    $region31: #{residual_forward.5} parent=5 // pred_region
      // Predicated region
      $region33: #{residual_forward.5} parent=31 // pred_check
        %p205 = pneg %p32
      $region34: #{residual_forward.5} parent=31 // pred_check_branch
        %207 = sbr.rel (%p205) target = $region36
      $region35: #{residual_forward.5} parent=31 // pred_region
        %p208 = scmp.lt.s32.totalorder %s12, 1
        %s209 = scalar_select %p208, %s12, 1
        %s210 = smul.addr %s209, 32
        %s211 = smul.addr %s210, 8
        %s212 = scalar_lea.vmem %s0, %s211
      $region36: #{residual_forward.5} parent=31 // pred_fallthru
        _
      // Predicated region
      $region37: #{residual_forward.5} parent=31 // pred_check
        %p213 = pneg %p58
      $region38: #{residual_forward.5} parent=31 // pred_check_branch
        %215 = sbr.rel (%p213) target = $region40
      $region39: #{residual_forward.5} parent=31 // pred_region
        %p216 = scmp.lt.s32.totalorder %s12, 1
        %s217 = scalar_select %p216, %s12, 1
        %s218 = smul.addr %s217, 54
        %s219 = smul.addr %s218, 8
        %s220 = scalar_lea.vmem %s1, %s219
      $region40: #{residual_forward.5} parent=31 // pred_fallthru
        _
    $region32: #{residual_forward.5} parent=5 // pred_fallthru
      _
    %p221 = scmp.le.s32.totalorder 1, %s12
    %p222 = scmp.lt.s32.totalorder %s12, 3
    %p223 = pnand %p221, %p222
    %p224 = pneg %p223
    // Predicated region
    $region41: #{residual_forward.5} parent=5 // pred_check
      _
    $region42: #{residual_forward.5} parent=5 // pred_check_branch
      %226 = sbr.rel (%p223) target = $region44
    $region43: #{residual_forward.5} parent=5 // pred_region
      %s227 = ssub.s32 %s12, 1
      %p228 = scmp.lt.s32.totalorder %s17, 1
      %s229 = scalar_select %p228, %s17, 1
      %s230 = smul.addr %s229, 32
      %s231 = smul.addr %s230, 8
      %s232 = scalar_lea.vmem %s0, %s231
      %p233 = pneg %p38
      %p234 = pneg %p35
      %p235 = scmp.lt.s32.totalorder %s17, 1
      %s236 = scalar_select %p235, %s17, 1
      %s237 = smul.addr %s236, 54
      %s238 = smul.addr %s237, 8
      %s239 = scalar_lea.vmem %s1, %s238
      %p240 = pneg %p64
      %p241 = pneg %p61
      %p242 = pneg %p85
      %p243 = pneg %p82
      %p244 = pneg %p106
      %p245 = pneg %p103
      %p246 = pneg %p127
      %p247 = pneg %p124
      %p248 = pneg %p148
      %p249 = pneg %p145
      %p250 = pneg %p174
      %p251 = pneg %p171
      %p252 = scmp.lt.s32.totalorder %s17, 1
      %s253 = scalar_select %p252, %s17, 1
      %s254 = smul.addr %s253, 32
      %s255 = smul.addr %s254, 8
      %s256 = scalar_lea.vmem %s6, %s255
      %p257 = scmp.lt.s32.totalorder %s17, 1
      %s258 = scalar_select %p257, %s17, 1
      %s259 = smul.addr %s258, 32
      %s260 = smul.addr %s259, 8
      %s261 = scalar_lea.vmem %s0, %s260
      %p262 = scmp.lt.s32.totalorder %s17, 1
      %s263 = scalar_select %p262, %s17, 1
      %s264 = smul.addr %s263, 54
      %s265 = smul.addr %s264, 8
      %s266 = scalar_lea.vmem %s1, %s265
      %p267 = scmp.lt.s32.totalorder %s17, 1
      %s268 = scalar_select %p267, %s17, 1
      %s269 = smul.addr %s268, 32
      %s270 = smul.addr %s269, 8
      %s271 = scalar_lea.vmem %s6, %s270
      %v272 = vld [vmem:[%s261] sm:$0xff]
      %v273 = vld [vmem:[%s261 + $0x8] sm:$0xff]
      %v274 = vld [vmem:[%s261 + $0x10] sm:$0xff]
      %v275 = vld [vmem:[%s261 + $0x18] sm:$0xff]
      %v276 = vld [vmem:[%s261 + $0x20] sm:$0xff]
      %v277 = vld [vmem:[%s261 + $0x28] sm:$0xff]
      %v278 = vld [vmem:[%s261 + $0x30] sm:$0xff]
      %v279 = vld [vmem:[%s261 + $0x38] sm:$0xff]
      %v280 = vld [vmem:[%s261 + $0x40] sm:$0xff]
      %v281 = vld [vmem:[%s261 + $0x48] sm:$0xff]
      %v282 = vld [vmem:[%s261 + $0x50] sm:$0xff]
      %v283 = vld [vmem:[%s261 + $0x58] sm:$0xff]
      %v284 = vld [vmem:[%s261 + $0x60] sm:$0xff]
      %v285 = vld [vmem:[%s261 + $0x68] sm:$0xff]
      %v286 = vld [vmem:[%s261 + $0x70] sm:$0xff]
      %v287 = vld [vmem:[%s261 + $0x78] sm:$0xff]
      %v288 = vld [vmem:[%s261 + $0x80] sm:$0xff]
      %v289 = vld [vmem:[%s261 + $0x88] sm:$0xff]
      %v290 = vld [vmem:[%s261 + $0x90] sm:$0xff]
      %v291 = vld [vmem:[%s261 + $0x98] sm:$0xff]
      %v292 = vld [vmem:[%s261 + $0xa0] sm:$0xff]
      %v293 = vld [vmem:[%s261 + $0xa8] sm:$0xff]
      %v294 = vld [vmem:[%s261 + $0xb0] sm:$0xff]
      %v295 = vld [vmem:[%s261 + $0xb8] sm:$0xff]
      %v296 = vld [vmem:[%s261 + $0xc0] sm:$0xff]
      %v297 = vld [vmem:[%s261 + $0xc8] sm:$0xff]
      %v298 = vld [vmem:[%s261 + $0xd0] sm:$0xff]
      %v299 = vld [vmem:[%s261 + $0xd8] sm:$0xff]
      %v300 = vld [vmem:[%s261 + $0xe0] sm:$0xff]
      %v301 = vld [vmem:[%s261 + $0xe8] sm:$0xff]
      %v302 = vld [vmem:[%s261 + $0xf0] sm:$0xff]
      %v303 = vld [vmem:[%s261 + $0xf8] sm:$0xff]
      %v304 = vld [vmem:[%s2] sm:$0x1]
      %v306 = vlaneseq
      %v307 = vshrl.u32 %v306, 7
      %v308 = vsub.s32 0, %v307
      %v309 = vrot.slane %v304, %v308
      %v311 = vmul.f32 %v272, %v309
      %v312 = vmul.f32 %v273, %v309
      %v313 = vmul.f32 %v274, %v309
      %v314 = vmul.f32 %v275, %v309
      %v315 = vmul.f32 %v276, %v309
      %v316 = vmul.f32 %v277, %v309
      %v317 = vmul.f32 %v278, %v309
      %v318 = vmul.f32 %v279, %v309
      %v319 = vmul.f32 %v280, %v309
      %v320 = vmul.f32 %v281, %v309
      %v321 = vmul.f32 %v282, %v309
      %v322 = vmul.f32 %v283, %v309
      %v323 = vmul.f32 %v284, %v309
      %v324 = vmul.f32 %v285, %v309
      %v325 = vmul.f32 %v286, %v309
      %v326 = vmul.f32 %v287, %v309
      %v327 = vmul.f32 %v288, %v309
      %v328 = vmul.f32 %v289, %v309
      %v329 = vmul.f32 %v290, %v309
      %v330 = vmul.f32 %v291, %v309
      %v331 = vmul.f32 %v292, %v309
      %v332 = vmul.f32 %v293, %v309
      %v333 = vmul.f32 %v294, %v309
      %v334 = vmul.f32 %v295, %v309
      %v335 = vmul.f32 %v296, %v309
      %v336 = vmul.f32 %v297, %v309
      %v337 = vmul.f32 %v298, %v309
      %v338 = vmul.f32 %v299, %v309
      %v339 = vmul.f32 %v300, %v309
      %v340 = vmul.f32 %v301, %v309
      %v341 = vmul.f32 %v302, %v309
      %v342 = vmul.f32 %v303, %v309
      %v343 = vld [vmem:[%s3] sm:$0x1]
      %v345 = vlaneseq
      %v346 = vshrl.u32 %v345, 7
      %v347 = vsub.s32 0, %v346
      %v348 = vrot.slane %v343, %v347
      %v350 = vadd.f32 %v311, %v348
      %v351 = vadd.f32 %v312, %v348
      %v352 = vadd.f32 %v313, %v348
      %v353 = vadd.f32 %v314, %v348
      %v354 = vadd.f32 %v315, %v348
      %v355 = vadd.f32 %v316, %v348
      %v356 = vadd.f32 %v317, %v348
      %v357 = vadd.f32 %v318, %v348
      %v358 = vadd.f32 %v319, %v348
      %v359 = vadd.f32 %v320, %v348
      %v360 = vadd.f32 %v321, %v348
      %v361 = vadd.f32 %v322, %v348
      %v362 = vadd.f32 %v323, %v348
      %v363 = vadd.f32 %v324, %v348
      %v364 = vadd.f32 %v325, %v348
      %v365 = vadd.f32 %v326, %v348
      %v366 = vadd.f32 %v327, %v348
      %v367 = vadd.f32 %v328, %v348
      %v368 = vadd.f32 %v329, %v348
      %v369 = vadd.f32 %v330, %v348
      %v370 = vadd.f32 %v331, %v348
      %v371 = vadd.f32 %v332, %v348
      %v372 = vadd.f32 %v333, %v348
      %v373 = vadd.f32 %v334, %v348
      %v374 = vadd.f32 %v335, %v348
      %v375 = vadd.f32 %v336, %v348
      %v376 = vadd.f32 %v337, %v348
      %v377 = vadd.f32 %v338, %v348
      %v378 = vadd.f32 %v339, %v348
      %v379 = vadd.f32 %v340, %v348
      %v380 = vadd.f32 %v341, %v348
      %v381 = vadd.f32 %v342, %v348
      %s382 = scalar_lea.vmem %s266, 24
      %v383 = vld [vmem:[%s382 + $0x1] sm:$0xff]
      %v384 = vld [vmem:[%s382 + $0x9] sm:$0xff]
      %v385 = vld [vmem:[%s382 + $0x19] sm:$0xff]
      %v386 = vld [vmem:[%s382 + $0x21] sm:$0xff]
      %v387 = vld [vmem:[%s382 + $0x31] sm:$0xff]
      %v388 = vld [vmem:[%s382 + $0x39] sm:$0xff]
      %v389 = vld [vmem:[%s382 + $0x49] sm:$0xff]
      %v390 = vld [vmem:[%s382 + $0x51] sm:$0xff]
      %v391 = vld [vmem:[%s382 + $0x61] sm:$0xff]
      %v392 = vld [vmem:[%s382 + $0x69] sm:$0xff]
      %v393 = vld [vmem:[%s382 + $0x79] sm:$0xff]
      %v394 = vld [vmem:[%s382 + $0x81] sm:$0xff]
      %v395 = vld [vmem:[%s382 + $0x91] sm:$0xff]
      %v396 = vld [vmem:[%s382 + $0x99] sm:$0xff]
      %v397 = vld [vmem:[%s382 + $0xa9] sm:$0xff]
      %v398 = vld [vmem:[%s382 + $0xb1] sm:$0xff]
      %v399 = vld [vmem:[%s382 + $0xc1] sm:$0xff]
      %v400 = vld [vmem:[%s382 + $0xc9] sm:$0xff]
      %v401 = vld [vmem:[%s382 + $0xd9] sm:$0xff]
      %v402 = vld [vmem:[%s382 + $0xe1] sm:$0xff]
      %v403 = vld [vmem:[%s382 + $0xf1] sm:$0xff]
      %v404 = vld [vmem:[%s382 + $0xf9] sm:$0xff]
      %v405 = vld [vmem:[%s382 + $0x109] sm:$0xff]
      %v406 = vld [vmem:[%s382 + $0x111] sm:$0xff]
      %v407 = vld [vmem:[%s382 + $0x121] sm:$0xff]
      %v408 = vld [vmem:[%s382 + $0x129] sm:$0xff]
      %v409 = vld [vmem:[%s382 + $0x139] sm:$0xff]
      %v410 = vld [vmem:[%s382 + $0x141] sm:$0xff]
      %v411 = vld [vmem:[%s382 + $0x151] sm:$0xff]
      %v412 = vld [vmem:[%s382 + $0x159] sm:$0xff]
      %v413 = vld [vmem:[%s382 + $0x169] sm:$0xff]
      %v414 = vld [vmem:[%s382 + $0x171] sm:$0xff]
      %v415 = vld [vmem:[%s4] sm:$0xff]
      %v416 = vld [vmem:[%s4 + $0x8] sm:$0xff]
      %v417 = vld [vmem:[%s4 + $0x10] sm:$0xff]
      %v418 = vld [vmem:[%s4 + $0x18] sm:$0xff]
      %v419 = vld [vmem:[%s4 + $0x20] sm:$0xff]
      %v420 = vld [vmem:[%s4 + $0x28] sm:$0xff]
      %v421 = vld [vmem:[%s4 + $0x30] sm:$0xff]
      %v422 = vld [vmem:[%s4 + $0x38] sm:$0xff]
      %v423 = vld [vmem:[%s4 + $0x40] sm:$0xff]
      %v424 = vld [vmem:[%s4 + $0x48] sm:$0xff]
      %v425 = vld [vmem:[%s4 + $0x50] sm:$0xff]
      %v426 = vld [vmem:[%s4 + $0x58] sm:$0xff]
      %v427 = vld [vmem:[%s4 + $0x60] sm:$0xff]
      %v428 = vld [vmem:[%s4 + $0x68] sm:$0xff]
      %v429 = vld [vmem:[%s4 + $0x70] sm:$0xff]
      %v430 = vld [vmem:[%s4 + $0x78] sm:$0xff]
      %v431 = vld [vmem:[%s5] sm:$0x1]
      %v433 = vlaneseq
      %v434 = vshrl.u32 %v433, 7
      %v435 = vsub.s32 0, %v434
      %v436 = vrot.slane %v431, %v435
      %438 = vmatprep.subr.mxu0 0.0
      %439 = vmatpush1.msra.mxu0 %v430
      %440 = vmatprep.subr.mxu0 0.0
      %441 = vmatpush1.msra.mxu0 %v429
      %442 = vmatprep.subr.mxu0 0.0
      %443 = vmatpush1.msra.mxu0 %v428
      %444 = vmatprep.subr.mxu0 0.0
      %445 = vmatpush1.msra.mxu0 %v427
      %446 = vmatprep.subr.mxu0 0.0
      %447 = vmatpush1.msra.mxu0 %v426
      %448 = vmatprep.subr.mxu0 0.0
      %449 = vmatpush1.msra.mxu0 %v425
      %450 = vmatprep.subr.mxu0 0.0
      %451 = vmatpush1.msra.mxu0 %v424
      %452 = vmatprep.subr.mxu0 0.0
      %453 = vmatpush1.msra.mxu0 %v423
      %454 = vmatprep.subr.mxu0 0.0
      %455 = vmatpush1.msra.mxu0 %v422
      %456 = vmatprep.subr.mxu0 0.0
      %457 = vmatpush1.msra.mxu0 %v421
      %458 = vmatprep.subr.mxu0 0.0
      %459 = vmatpush1.msra.mxu0 %v420
      %460 = vmatprep.subr.mxu0 0.0
      %461 = vmatpush1.msra.mxu0 %v419
      %462 = vmatprep.subr.mxu0 0.0
      %463 = vmatpush1.msra.mxu0 %v418
      %464 = vmatprep.subr.mxu0 0.0
      %465 = vmatpush1.msra.mxu0 %v417
      %466 = vmatprep.subr.mxu0 0.0
      %467 = vmatpush1.msra.mxu0 %v416
      %468 = vmatprep.subr.mxu0 0.0
      %469 = vmatpush1.msra.mxu0 %v415
      %470 = vmatprep.subr.mxu0 0.0
      %471 = vmatpush2.msra.mxu0 0.0
      %472 = vmatprep.subr.mxu0 0.0
      %473 = vmatpush2.msra.mxu0 0.0
      %474 = vmatprep.subr.mxu0 0.0
      %475 = vmatpush2.msra.mxu0 0.0
      %476 = vmatprep.subr.mxu0 0.0
      %477 = vmatpush2.msra.mxu0 0.0
      %478 = vmatprep.subr.mxu0 0.0
      %479 = vmatpush2.msra.mxu0 0.0
      %480 = vmatprep.subr.mxu0 0.0
      %481 = vmatpush2.msra.mxu0 0.0
      %482 = vmatprep.subr.mxu0 0.0
      %483 = vmatpush2.msra.mxu0 0.0
      %484 = vmatprep.subr.mxu0 0.0
      %485 = vmatpush2.msra.mxu0 0.0
      %486 = vmatprep.subr.mxu0 0.0
      %487 = vmatpush2.msra.mxu0 0.0
      %488 = vmatprep.subr.mxu0 0.0
      %489 = vmatpush2.msra.mxu0 0.0
      %490 = vmatprep.subr.mxu0 0.0
      %491 = vmatpush2.msra.mxu0 0.0
      %492 = vmatprep.subr.mxu0 0.0
      %493 = vmatpush2.msra.mxu0 0.0
      %494 = vmatprep.subr.mxu0 0.0
      %495 = vmatpush2.msra.mxu0 0.0
      %496 = vmatprep.subr.mxu0 0.0
      %497 = vmatpush2.msra.mxu0 0.0
      %498 = vmatprep.subr.mxu0 0.0
      %499 = vmatpush2.msra.mxu0 0.0
      %500 = vmatprep.subr.mxu0 0.0
      %501 = vmatpush2.msra.mxu0 0.0
      %502 = vmatprep.mubr.f32.mxu0 0.0
      %503 = vmatmul.mubr.f32.gmra.mxu0 %v383
      %v504 = vpop.f32.mrf.mxu0
      %v505 = vadd.f32 %v436, %v504
      %v506 = vpop.f32.mrf.mxu0
      %507 = vmatprep.mubr.f32.mxu0 0.0
      %508 = vmatmul.mubr.f32.gmra.mxu0 %v384
      %v509 = vpop.f32.mrf.mxu0
      %v510 = vadd.f32 %v436, %v509
      %v511 = vpop.f32.mrf.mxu0
      %512 = vmatprep.mubr.f32.mxu0 0.0
      %513 = vmatmul.mubr.f32.gmra.mxu0 %v385
      %v514 = vpop.f32.mrf.mxu0
      %v515 = vadd.f32 %v436, %v514
      %v516 = vpop.f32.mrf.mxu0
      %517 = vmatprep.mubr.f32.mxu0 0.0
      %518 = vmatmul.mubr.f32.gmra.mxu0 %v386
      %v519 = vpop.f32.mrf.mxu0
      %v520 = vadd.f32 %v436, %v519
      %v521 = vpop.f32.mrf.mxu0
      %522 = vmatprep.mubr.f32.mxu0 0.0
      %523 = vmatmul.mubr.f32.gmra.mxu0 %v387
      %v524 = vpop.f32.mrf.mxu0
      %v525 = vadd.f32 %v436, %v524
      %v526 = vpop.f32.mrf.mxu0
      %527 = vmatprep.mubr.f32.mxu0 0.0
      %528 = vmatmul.mubr.f32.gmra.mxu0 %v388
      %v529 = vpop.f32.mrf.mxu0
      %v530 = vadd.f32 %v436, %v529
      %v531 = vpop.f32.mrf.mxu0
      %532 = vmatprep.mubr.f32.mxu0 0.0
      %533 = vmatmul.mubr.f32.gmra.mxu0 %v389
      %v534 = vpop.f32.mrf.mxu0
      %v535 = vadd.f32 %v436, %v534
      %v536 = vpop.f32.mrf.mxu0
      %537 = vmatprep.mubr.f32.mxu0 0.0
      %538 = vmatmul.mubr.f32.gmra.mxu0 %v390
      %v539 = vpop.f32.mrf.mxu0
      %v540 = vadd.f32 %v436, %v539
      %v541 = vpop.f32.mrf.mxu0
      %542 = vmatprep.mubr.f32.mxu0 0.0
      %543 = vmatmul.mubr.f32.gmra.mxu0 %v391
      %v544 = vpop.f32.mrf.mxu0
      %v545 = vadd.f32 %v436, %v544
      %v546 = vpop.f32.mrf.mxu0
      %547 = vmatprep.mubr.f32.mxu0 0.0
      %548 = vmatmul.mubr.f32.gmra.mxu0 %v392
      %v549 = vpop.f32.mrf.mxu0
      %v550 = vadd.f32 %v436, %v549
      %v551 = vpop.f32.mrf.mxu0
      %552 = vmatprep.mubr.f32.mxu0 0.0
      %553 = vmatmul.mubr.f32.gmra.mxu0 %v393
      %v554 = vpop.f32.mrf.mxu0
      %v555 = vadd.f32 %v436, %v554
      %v556 = vpop.f32.mrf.mxu0
      %557 = vmatprep.mubr.f32.mxu0 0.0
      %558 = vmatmul.mubr.f32.gmra.mxu0 %v394
      %v559 = vpop.f32.mrf.mxu0
      %v560 = vadd.f32 %v436, %v559
      %v561 = vpop.f32.mrf.mxu0
      %562 = vmatprep.mubr.f32.mxu0 0.0
      %563 = vmatmul.mubr.f32.gmra.mxu0 %v395
      %v564 = vpop.f32.mrf.mxu0
      %v565 = vadd.f32 %v436, %v564
      %v566 = vpop.f32.mrf.mxu0
      %567 = vmatprep.mubr.f32.mxu0 0.0
      %568 = vmatmul.mubr.f32.gmra.mxu0 %v396
      %v569 = vpop.f32.mrf.mxu0
      %v570 = vadd.f32 %v436, %v569
      %v571 = vpop.f32.mrf.mxu0
      %572 = vmatprep.mubr.f32.mxu0 0.0
      %573 = vmatmul.mubr.f32.gmra.mxu0 %v397
      %v574 = vpop.f32.mrf.mxu0
      %v575 = vadd.f32 %v436, %v574
      %v576 = vpop.f32.mrf.mxu0
      %577 = vmatprep.mubr.f32.mxu0 0.0
      %578 = vmatmul.mubr.f32.gmra.mxu0 %v398
      %v579 = vpop.f32.mrf.mxu0
      %v580 = vadd.f32 %v436, %v579
      %v581 = vpop.f32.mrf.mxu0
      %582 = vmatprep.mubr.f32.mxu0 0.0
      %583 = vmatmul.mubr.f32.gmra.mxu0 %v399
      %v584 = vpop.f32.mrf.mxu0
      %v585 = vadd.f32 %v436, %v584
      %v586 = vpop.f32.mrf.mxu0
      %587 = vmatprep.mubr.f32.mxu0 0.0
      %588 = vmatmul.mubr.f32.gmra.mxu0 %v400
      %v589 = vpop.f32.mrf.mxu0
      %v590 = vadd.f32 %v436, %v589
      %v591 = vpop.f32.mrf.mxu0
      %592 = vmatprep.mubr.f32.mxu0 0.0
      %593 = vmatmul.mubr.f32.gmra.mxu0 %v401
      %v594 = vpop.f32.mrf.mxu0
      %v595 = vadd.f32 %v436, %v594
      %v596 = vpop.f32.mrf.mxu0
      %597 = vmatprep.mubr.f32.mxu0 0.0
      %598 = vmatmul.mubr.f32.gmra.mxu0 %v402
      %v599 = vpop.f32.mrf.mxu0
      %v600 = vadd.f32 %v436, %v599
      %v601 = vpop.f32.mrf.mxu0
      %602 = vmatprep.mubr.f32.mxu0 0.0
      %603 = vmatmul.mubr.f32.gmra.mxu0 %v403
      %v604 = vpop.f32.mrf.mxu0
      %v605 = vadd.f32 %v436, %v604
      %v606 = vpop.f32.mrf.mxu0
      %607 = vmatprep.mubr.f32.mxu0 0.0
      %608 = vmatmul.mubr.f32.gmra.mxu0 %v404
      %v609 = vpop.f32.mrf.mxu0
      %v610 = vadd.f32 %v436, %v609
      %v611 = vpop.f32.mrf.mxu0
      %612 = vmatprep.mubr.f32.mxu0 0.0
      %613 = vmatmul.mubr.f32.gmra.mxu0 %v405
      %v614 = vpop.f32.mrf.mxu0
      %v615 = vadd.f32 %v436, %v614
      %v616 = vpop.f32.mrf.mxu0
      %617 = vmatprep.mubr.f32.mxu0 0.0
      %618 = vmatmul.mubr.f32.gmra.mxu0 %v406
      %v619 = vpop.f32.mrf.mxu0
      %v620 = vadd.f32 %v436, %v619
      %v621 = vpop.f32.mrf.mxu0
      %622 = vmatprep.mubr.f32.mxu0 0.0
      %623 = vmatmul.mubr.f32.gmra.mxu0 %v407
      %v624 = vpop.f32.mrf.mxu0
      %v625 = vadd.f32 %v436, %v624
      %v626 = vpop.f32.mrf.mxu0
      %627 = vmatprep.mubr.f32.mxu0 0.0
      %628 = vmatmul.mubr.f32.gmra.mxu0 %v408
      %v629 = vpop.f32.mrf.mxu0
      %v630 = vadd.f32 %v436, %v629
      %v631 = vpop.f32.mrf.mxu0
      %632 = vmatprep.mubr.f32.mxu0 0.0
      %633 = vmatmul.mubr.f32.gmra.mxu0 %v409
      %v634 = vpop.f32.mrf.mxu0
      %v635 = vadd.f32 %v436, %v634
      %v636 = vpop.f32.mrf.mxu0
      %637 = vmatprep.mubr.f32.mxu0 0.0
      %638 = vmatmul.mubr.f32.gmra.mxu0 %v410
      %v639 = vpop.f32.mrf.mxu0
      %v640 = vadd.f32 %v436, %v639
      %v641 = vpop.f32.mrf.mxu0
      %642 = vmatprep.mubr.f32.mxu0 0.0
      %643 = vmatmul.mubr.f32.gmra.mxu0 %v411
      %v644 = vpop.f32.mrf.mxu0
      %v645 = vadd.f32 %v436, %v644
      %v646 = vpop.f32.mrf.mxu0
      %647 = vmatprep.mubr.f32.mxu0 0.0
      %648 = vmatmul.mubr.f32.gmra.mxu0 %v412
      %v649 = vpop.f32.mrf.mxu0
      %v650 = vadd.f32 %v436, %v649
      %v651 = vpop.f32.mrf.mxu0
      %652 = vmatprep.mubr.f32.mxu0 0.0
      %653 = vmatmul.mubr.f32.gmra.mxu0 %v413
      %v654 = vpop.f32.mrf.mxu0
      %v655 = vadd.f32 %v436, %v654
      %v656 = vpop.f32.mrf.mxu0
      %657 = vmatprep.mubr.f32.mxu0 0.0
      %658 = vmatmul.mubr.f32.gmra.mxu0 %v414
      %v659 = vpop.f32.mrf.mxu0
      %v660 = vadd.f32 %v436, %v659
      %v661 = vpop.f32.mrf.mxu0
      %662 = vdwg.mxu0
      %v663 = vadd.f32 %v350, %v505
      %v664 = vadd.f32 %v351, %v510
      %v665 = vadd.f32 %v352, %v515
      %v666 = vadd.f32 %v353, %v520
      %v667 = vadd.f32 %v354, %v525
      %v668 = vadd.f32 %v355, %v530
      %v669 = vadd.f32 %v356, %v535
      %v670 = vadd.f32 %v357, %v540
      %v671 = vadd.f32 %v358, %v545
      %v672 = vadd.f32 %v359, %v550
      %v673 = vadd.f32 %v360, %v555
      %v674 = vadd.f32 %v361, %v560
      %v675 = vadd.f32 %v362, %v565
      %v676 = vadd.f32 %v363, %v570
      %v677 = vadd.f32 %v364, %v575
      %v678 = vadd.f32 %v365, %v580
      %v679 = vadd.f32 %v366, %v585
      %v680 = vadd.f32 %v367, %v590
      %v681 = vadd.f32 %v368, %v595
      %v682 = vadd.f32 %v369, %v600
      %v683 = vadd.f32 %v370, %v605
      %v684 = vadd.f32 %v371, %v610
      %v685 = vadd.f32 %v372, %v615
      %v686 = vadd.f32 %v373, %v620
      %v687 = vadd.f32 %v374, %v625
      %v688 = vadd.f32 %v375, %v630
      %v689 = vadd.f32 %v376, %v635
      %v690 = vadd.f32 %v377, %v640
      %v691 = vadd.f32 %v378, %v645
      %v692 = vadd.f32 %v379, %v650
      %v693 = vadd.f32 %v380, %v655
      %v694 = vadd.f32 %v381, %v660
      %v695 = vmax.f32 %v663, 0.0
      %v696 = vmax.f32 %v664, 0.0
      %v697 = vmax.f32 %v665, 0.0
      %v698 = vmax.f32 %v666, 0.0
      %v699 = vmax.f32 %v667, 0.0
      %v700 = vmax.f32 %v668, 0.0
      %v701 = vmax.f32 %v669, 0.0
      %v702 = vmax.f32 %v670, 0.0
      %v703 = vmax.f32 %v671, 0.0
      %v704 = vmax.f32 %v672, 0.0
      %v705 = vmax.f32 %v673, 0.0
      %v706 = vmax.f32 %v674, 0.0
      %v707 = vmax.f32 %v675, 0.0
      %v708 = vmax.f32 %v676, 0.0
      %v709 = vmax.f32 %v677, 0.0
      %v710 = vmax.f32 %v678, 0.0
      %v711 = vmax.f32 %v679, 0.0
      %v712 = vmax.f32 %v680, 0.0
      %v713 = vmax.f32 %v681, 0.0
      %v714 = vmax.f32 %v682, 0.0
      %v715 = vmax.f32 %v683, 0.0
      %v716 = vmax.f32 %v684, 0.0
      %v717 = vmax.f32 %v685, 0.0
      %v718 = vmax.f32 %v686, 0.0
      %v719 = vmax.f32 %v687, 0.0
      %v720 = vmax.f32 %v688, 0.0
      %v721 = vmax.f32 %v689, 0.0
      %v722 = vmax.f32 %v690, 0.0
      %v723 = vmax.f32 %v691, 0.0
      %v724 = vmax.f32 %v692, 0.0
      %v725 = vmax.f32 %v693, 0.0
      %v726 = vmax.f32 %v694, 0.0
      %727 = vst [vmem:[%s271] sm:$0xff] %v695
      %728 = vst [vmem:[%s271 + $0x8] sm:$0xff] %v696
      %729 = vst [vmem:[%s271 + $0x10] sm:$0xff] %v697
      %730 = vst [vmem:[%s271 + $0x18] sm:$0xff] %v698
      %731 = vst [vmem:[%s271 + $0x20] sm:$0xff] %v699
      %732 = vst [vmem:[%s271 + $0x28] sm:$0xff] %v700
      %733 = vst [vmem:[%s271 + $0x30] sm:$0xff] %v701
      %734 = vst [vmem:[%s271 + $0x38] sm:$0xff] %v702
      %735 = vst [vmem:[%s271 + $0x40] sm:$0xff] %v703
      %736 = vst [vmem:[%s271 + $0x48] sm:$0xff] %v704
      %737 = vst [vmem:[%s271 + $0x50] sm:$0xff] %v705
      %738 = vst [vmem:[%s271 + $0x58] sm:$0xff] %v706
      %739 = vst [vmem:[%s271 + $0x60] sm:$0xff] %v707
      %740 = vst [vmem:[%s271 + $0x68] sm:$0xff] %v708
      %741 = vst [vmem:[%s271 + $0x70] sm:$0xff] %v709
      %742 = vst [vmem:[%s271 + $0x78] sm:$0xff] %v710
      %743 = vst [vmem:[%s271 + $0x80] sm:$0xff] %v711
      %744 = vst [vmem:[%s271 + $0x88] sm:$0xff] %v712
      %745 = vst [vmem:[%s271 + $0x90] sm:$0xff] %v713
      %746 = vst [vmem:[%s271 + $0x98] sm:$0xff] %v714
      %747 = vst [vmem:[%s271 + $0xa0] sm:$0xff] %v715
      %748 = vst [vmem:[%s271 + $0xa8] sm:$0xff] %v716
      %749 = vst [vmem:[%s271 + $0xb0] sm:$0xff] %v717
      %750 = vst [vmem:[%s271 + $0xb8] sm:$0xff] %v718
      %751 = vst [vmem:[%s271 + $0xc0] sm:$0xff] %v719
      %752 = vst [vmem:[%s271 + $0xc8] sm:$0xff] %v720
      %753 = vst [vmem:[%s271 + $0xd0] sm:$0xff] %v721
      %754 = vst [vmem:[%s271 + $0xd8] sm:$0xff] %v722
      %755 = vst [vmem:[%s271 + $0xe0] sm:$0xff] %v723
      %756 = vst [vmem:[%s271 + $0xe8] sm:$0xff] %v724
      %757 = vst [vmem:[%s271 + $0xf0] sm:$0xff] %v725
      %758 = vst [vmem:[%s271 + $0xf8] sm:$0xff] %v726
      %p759 = scmp.lt.s32.totalorder %s17, 1
      %s760 = scalar_select %p759, %s17, 1
      %s761 = smul.addr %s760, 32
      %s762 = smul.addr %s761, 8
      %s763 = scalar_lea.vmem %s6, %s762
      // Predicated region
      $region45: #{residual_forward.5} parent=43 // pred_check
        %p764 = pneg %p171
      $region46: #{residual_forward.5} parent=43 // pred_check_branch
        %766 = sbr.rel (%p764) target = $region48
      $region47: #{residual_forward.5} parent=43 // pred_region
        _
      $region48: #{residual_forward.5} parent=43 // pred_fallthru
        _
    $region44: #{residual_forward.5} parent=5 // pred_fallthru
      _
    %p767 = scmp.le.s32.totalorder 2, %s12
    // Predicated region
    $region49: #{residual_forward.5} parent=5 // pred_check
      %p768 = pneg %p767
    $region50: #{residual_forward.5} parent=5 // pred_check_branch
      %770 = sbr.rel (%p768) target = $region52
    $region51: #{residual_forward.5} parent=5 // pred_region
      %s771 = ssub.s32 %s12, 2
      // Predicated region
      $region53: #{residual_forward.5} parent=51 // pred_check
        %p772 = pneg %p177
      $region54: #{residual_forward.5} parent=51 // pred_check_branch
        %774 = sbr.rel (%p772) target = $region56
      $region55: #{residual_forward.5} parent=51 // pred_region
        %p775 = scmp.lt.s32.totalorder %s18, 1
        %s776 = scalar_select %p775, %s18, 1
        %s777 = smul.addr %s776, 32
        %s778 = smul.addr %s777, 8
        %s779 = scalar_lea.vmem %s6, %s778
      $region56: #{residual_forward.5} parent=51 // pred_fallthru
        _
    $region52: #{residual_forward.5} parent=5 // pred_fallthru
      _
  $region6: #{residual_forward.5} parent=0 // loop_footer
    %s16 = sadd.s32 1, %s12
  $region7: #{residual_forward.5} parent=0 // loop_footer_branch
    %11 = sbr.rel target = $region3
  $region8: #{residual_forward.5} parent=0 // loop_exit
    _

// kernel: residual_forward.3
$region0: #{residual_forward.3}
  #allocation0 [shape = 'u32[]', space=smem, size = 0x4, offset = 0x4, fixed_abs, tag = 'smem constant byte address 0x4 - core index']
  #allocation1 [shape = 'u32[144,128]{1,0:T(1,128)}', space=vmem, size = 0x12000, scoped, tag = 'internal scratch']
  %s0 = inlined_call_operand.vmem [shape: f32[2,18,18,128], index: 0, kind: input, shape index: {}]
  %s1 = inlined_call_operand.vmem [shape: f32[1152,128], index: 1, kind: input, shape index: {}]
  %s2 = inlined_call_operand.vmem [shape: f32[2,256,128], index: 2, kind: output, shape index: {0}]
  %s3 = inlined_call_operand.vmem [shape: f32[2,128], index: 3, kind: output, shape index: {1}]
  %4 = xla_tuple %s2, %s3
  %s5 = sld [smem:[#allocation0]]
  $region53: #{residual_forward.3} parent=0
    _
  %s7 = ssub.s32 1, %s5
  %s8 = scalar_select 0, %s7, %s5
  loop: start=0, step=1, limit=4
  $region2: #{residual_forward.3} parent=0 // loop_pre_header
    _
  $region3: #{residual_forward.3} parent=0 // loop_header
    %s10 = sphi 0, %s14
    %p11 = scmp.ge.s32.totalorder %s10, 4
    %s20 = sphi 0, %s22
    %s23 = sphi 0, %s20
    %s24 = sphi 0, %s23
    %s40 = sphi 0, %s24
    %s44 = sphi 0, %s44
    %s46 = sphi 0, %s44
    %s47 = sphi 0, %s46
    %s61 = sphi 0, %s47
    %s67 = sphi 0, %s69
    %s70 = sphi 0, %s67
    %s71 = sphi 0, %s70
    %s87 = sphi 0, %s71
    %s91 = sphi 0, %s91
    %s93 = sphi 0, %s91
    %s94 = sphi 0, %s93
    %s108 = sphi 0, %s94
  $region4: #{residual_forward.3} parent=0 // loop_header_branch
    %13 = sbr.rel (%p11) target = $region8
  $region5: #{residual_forward.3} parent=0 // loop_body
    %s15 = ssub.s32 %s10, 1
    %s16 = ssub.s32 %s10, 2
    %s17 = sadd.s32 %s10, 1
    %s18 = ssub.s32 %s10, %s17
    %p19 = scmp.eq.s32.totalorder %s18, 0
    %s21 = sadd.s32 %s20, 1
    %s22 = scalar_select %p19, %s20, %s21
    %p25 = pneg %p19
    %p26 = scmp.eq.s32.totalorder %s10, 1
    %p27 = por %p25, %p26
    %p28 = scmp.ne.s32.totalorder %s20, %s23
    %p29 = scmp.eq.s32.totalorder %s10, 0
    %p30 = por %p28, %p29
    %p31 = scmp.ne.s32.totalorder %s20, %s23
    %p32 = scmp.eq.s32.totalorder %s15, 1
    %p33 = por %p31, %p32
    %p34 = scmp.ne.s32.totalorder %s23, %s24
    %p35 = scmp.eq.s32.totalorder %s15, 0
    %p36 = por %p34, %p35
    %p37 = scmp.ne.s32.totalorder %s23, %s24
    %p38 = scmp.eq.s32.totalorder %s16, 1
    %p39 = por %p37, %p38
    %p41 = scmp.ne.s32.totalorder %s24, %s40
    %p42 = scmp.eq.s32.totalorder %s16, 0
    %p43 = por %p41, %p42
    %s45 = sadd.s32 %s44, 1
    %p48 = scmp.eq.s32.totalorder %s10, 1
    %p49 = scmp.ne.s32.totalorder %s44, %s46
    %p50 = scmp.eq.s32.totalorder %s10, 0
    %p51 = por %p49, %p50
    %p52 = scmp.ne.s32.totalorder %s44, %s46
    %p53 = scmp.eq.s32.totalorder %s15, 1
    %p54 = por %p52, %p53
    %p55 = scmp.ne.s32.totalorder %s46, %s47
    %p56 = scmp.eq.s32.totalorder %s15, 0
    %p57 = por %p55, %p56
    %p58 = scmp.ne.s32.totalorder %s46, %s47
    %p59 = scmp.eq.s32.totalorder %s16, 1
    %p60 = por %p58, %p59
    %p62 = scmp.ne.s32.totalorder %s47, %s61
    %p63 = scmp.eq.s32.totalorder %s16, 0
    %p64 = por %p62, %p63
    %s65 = ssub.s32 %s10, %s17
    %p66 = scmp.eq.s32.totalorder %s65, 0
    %s68 = sadd.s32 %s67, 1
    %s69 = scalar_select %p66, %s67, %s68
    %p72 = pneg %p66
    %p73 = scmp.eq.s32.totalorder %s10, 1
    %p74 = por %p72, %p73
    %p75 = scmp.ne.s32.totalorder %s67, %s70
    %p76 = scmp.eq.s32.totalorder %s10, 0
    %p77 = por %p75, %p76
    %p78 = scmp.ne.s32.totalorder %s67, %s70
    %p79 = scmp.eq.s32.totalorder %s15, 1
    %p80 = por %p78, %p79
    %p81 = scmp.ne.s32.totalorder %s70, %s71
    %p82 = scmp.eq.s32.totalorder %s15, 0
    %p83 = por %p81, %p82
    %p84 = scmp.ne.s32.totalorder %s70, %s71
    %p85 = scmp.eq.s32.totalorder %s16, 1
    %p86 = por %p84, %p85
    %p88 = scmp.ne.s32.totalorder %s71, %s87
    %p89 = scmp.eq.s32.totalorder %s16, 0
    %p90 = por %p88, %p89
    %s92 = sadd.s32 %s91, 1
    %p95 = scmp.eq.s32.totalorder %s10, 1
    %p96 = scmp.ne.s32.totalorder %s91, %s93
    %p97 = scmp.eq.s32.totalorder %s10, 0
    %p98 = por %p96, %p97
    %p99 = scmp.ne.s32.totalorder %s91, %s93
    %p100 = scmp.eq.s32.totalorder %s15, 1
    %p101 = por %p99, %p100
    %p102 = scmp.ne.s32.totalorder %s93, %s94
    %p103 = scmp.eq.s32.totalorder %s15, 0
    %p104 = por %p102, %p103
    %p105 = scmp.ne.s32.totalorder %s93, %s94
    %p106 = scmp.eq.s32.totalorder %s16, 1
    %p107 = por %p105, %p106
    %p109 = scmp.ne.s32.totalorder %s94, %s108
    %p110 = scmp.eq.s32.totalorder %s16, 0
    %p111 = por %p109, %p110
    %p112 = scmp.le.s32.totalorder 1, %s10
    %p113 = scmp.lt.s32.totalorder %s10, 3
    %p114 = pnand %p112, %p113
    %p115 = pneg %p114
    // Predicated region
    $region9: #{residual_forward.3} parent=5 // pred_check
      _
    $region10: #{residual_forward.3} parent=5 // pred_check_branch
      %117 = sbr.rel (%p114) target = $region12
    $region11: #{residual_forward.3} parent=5 // pred_region
      %s118 = ssub.s32 %s10, 1
      // Predicated region
      $region13: #{residual_forward.3} parent=11 // pred_check
        %p119 = pneg %p57
      $region14: #{residual_forward.3} parent=11 // pred_check_branch
        %121 = sbr.rel (%p119) target = $region16
      $region15: #{residual_forward.3} parent=11 // pred_region
        _
      $region16: #{residual_forward.3} parent=11 // pred_fallthru
        _
    $region12: #{residual_forward.3} parent=5 // pred_fallthru
      _
    %p122 = scmp.lt.s32.totalorder %s10, 2
    // Predicated region
    $region17: #{residual_forward.3} parent=5 // pred_check
      %p123 = pneg %p122
    $region18: #{residual_forward.3} parent=5 // pred_check_branch
      %125 = sbr.rel (%p123) target = $region20
    $region19: #{residual_forward.3} parent=5 // pred_region
      // Predicated region
      $region21: #{residual_forward.3} parent=19 // pred_check
        %p126 = pneg %p30
      $region22: #{residual_forward.3} parent=19 // pred_check_branch
        %128 = sbr.rel (%p126) target = $region24
      $region23: #{residual_forward.3} parent=19 // pred_region
        %p129 = scmp.lt.s32.totalorder %s10, 1
        %s130 = scalar_select %p129, %s10, 1
        %s131 = smul.addr %s130, 54
        %s132 = smul.addr %s131, 8
        %s133 = scalar_lea.vmem %s0, %s132
      $region24: #{residual_forward.3} parent=19 // pred_fallthru
        _
    $region20: #{residual_forward.3} parent=5 // pred_fallthru
      _
    %p134 = scmp.le.s32.totalorder 1, %s10
    %p135 = scmp.lt.s32.totalorder %s10, 3
    %p136 = pnand %p134, %p135
    %p137 = pneg %p136
    // Predicated region
    $region25: #{residual_forward.3} parent=5 // pred_check
      _
    $region26: #{residual_forward.3} parent=5 // pred_check_branch
      %139 = sbr.rel (%p136) target = $region28
    $region27: #{residual_forward.3} parent=5 // pred_region
      %s140 = ssub.s32 %s10, 1
      %p141 = scmp.lt.s32.totalorder %s15, 1
      %s142 = scalar_select %p141, %s15, 1
      %s143 = smul.addr %s142, 54
      %s144 = smul.addr %s143, 8
      %s145 = scalar_lea.vmem %s0, %s144
      %p146 = pneg %p36
      %p147 = pneg %p33
      %p148 = pneg %p57
      %p149 = pneg %p54
      %p150 = pneg %p83
      %p151 = pneg %p80
      %p152 = scmp.lt.s32.totalorder %s15, 1
      %s153 = scalar_select %p152, %s15, 1
      %s154 = smul.addr %s153, 32
      %s155 = smul.addr %s154, 8
      %s156 = scalar_lea.vmem %s2, %s155
      %p157 = pneg %p104
      %p158 = pneg %p101
      %p159 = scmp.lt.s32.totalorder %s15, 1
      %s160 = scalar_select %p159, %s15, 1
      %s161 = smul.addr %s160, 54
      %s162 = smul.addr %s161, 8
      %s163 = scalar_lea.vmem %s0, %s162
      %p164 = scmp.lt.s32.totalorder %s15, 1
      %s165 = scalar_select %p164, %s15, 1
      %s166 = smul.addr %s165, 32
      %s167 = smul.addr %s166, 8
      %s168 = scalar_lea.vmem %s2, %s167
      %v169 = vld [vmem:[%s163] sm:$0xff]
      %v170 = vld [vmem:[%s163 + $0x8] sm:$0xff]
      %v171 = vld [vmem:[%s163 + $0x18] sm:$0xff]
      %v172 = vld [vmem:[%s163 + $0x20] sm:$0xff]
      %v173 = vld [vmem:[%s163 + $0x30] sm:$0xff]
      %v174 = vld [vmem:[%s163 + $0x38] sm:$0xff]
      %v175 = vld [vmem:[%s163 + $0x48] sm:$0xff]
      %v176 = vld [vmem:[%s163 + $0x50] sm:$0xff]
      %v177 = vld [vmem:[%s163 + $0x60] sm:$0xff]
      %v178 = vld [vmem:[%s163 + $0x68] sm:$0xff]
      %v179 = vld [vmem:[%s163 + $0x78] sm:$0xff]
      %v180 = vld [vmem:[%s163 + $0x80] sm:$0xff]
      %v181 = vld [vmem:[%s163 + $0x90] sm:$0xff]
      %v182 = vld [vmem:[%s163 + $0x98] sm:$0xff]
      %v183 = vld [vmem:[%s163 + $0xa8] sm:$0xff]
      %v184 = vld [vmem:[%s163 + $0xb0] sm:$0xff]
      %v185 = vld [vmem:[%s163 + $0xc0] sm:$0xff]
      %v186 = vld [vmem:[%s163 + $0xc8] sm:$0xff]
      %v187 = vld [vmem:[%s163 + $0xd8] sm:$0xff]
      %v188 = vld [vmem:[%s163 + $0xe0] sm:$0xff]
      %v189 = vld [vmem:[%s163 + $0xf0] sm:$0xff]
      %v190 = vld [vmem:[%s163 + $0xf8] sm:$0xff]
      %v191 = vld [vmem:[%s163 + $0x108] sm:$0xff]
      %v192 = vld [vmem:[%s163 + $0x110] sm:$0xff]
      %v193 = vld [vmem:[%s163 + $0x120] sm:$0xff]
      %v194 = vld [vmem:[%s163 + $0x128] sm:$0xff]
      %v195 = vld [vmem:[%s163 + $0x138] sm:$0xff]
      %v196 = vld [vmem:[%s163 + $0x140] sm:$0xff]
      %v197 = vld [vmem:[%s163 + $0x150] sm:$0xff]
      %v198 = vld [vmem:[%s163 + $0x158] sm:$0xff]
      %v199 = vld [vmem:[%s163 + $0x168] sm:$0xff]
      %v200 = vld [vmem:[%s163 + $0x170] sm:$0xff]
      %v201 = vld [vmem:[%s1] sm:$0xff]
      %v202 = vld [vmem:[%s1 + $0x8] sm:$0xff]
      %v203 = vld [vmem:[%s1 + $0x10] sm:$0xff]
      %v204 = vld [vmem:[%s1 + $0x18] sm:$0xff]
      %v205 = vld [vmem:[%s1 + $0x20] sm:$0xff]
      %v206 = vld [vmem:[%s1 + $0x28] sm:$0xff]
      %v207 = vld [vmem:[%s1 + $0x30] sm:$0xff]
      %v208 = vld [vmem:[%s1 + $0x38] sm:$0xff]
      %v209 = vld [vmem:[%s1 + $0x40] sm:$0xff]
      %v210 = vld [vmem:[%s1 + $0x48] sm:$0xff]
      %v211 = vld [vmem:[%s1 + $0x50] sm:$0xff]
      %v212 = vld [vmem:[%s1 + $0x58] sm:$0xff]
      %v213 = vld [vmem:[%s1 + $0x60] sm:$0xff]
      %v214 = vld [vmem:[%s1 + $0x68] sm:$0xff]
      %v215 = vld [vmem:[%s1 + $0x70] sm:$0xff]
      %v216 = vld [vmem:[%s1 + $0x78] sm:$0xff]
      %v217 = vld [vmem:[%s163 + $0x1] sm:$0xff]
      %v218 = vld [vmem:[%s163 + $0x9] sm:$0xff]
      %v219 = vld [vmem:[%s163 + $0x19] sm:$0xff]
      %v220 = vld [vmem:[%s163 + $0x21] sm:$0xff]
      %v221 = vld [vmem:[%s163 + $0x31] sm:$0xff]
      %v222 = vld [vmem:[%s163 + $0x39] sm:$0xff]
      %v223 = vld [vmem:[%s163 + $0x49] sm:$0xff]
      %v224 = vld [vmem:[%s163 + $0x51] sm:$0xff]
      %v225 = vld [vmem:[%s163 + $0x61] sm:$0xff]
      %v226 = vld [vmem:[%s163 + $0x69] sm:$0xff]
      %v227 = vld [vmem:[%s163 + $0x79] sm:$0xff]
      %v228 = vld [vmem:[%s163 + $0x81] sm:$0xff]
      %v229 = vld [vmem:[%s163 + $0x91] sm:$0xff]
      %v230 = vld [vmem:[%s163 + $0x99] sm:$0xff]
      %v231 = vld [vmem:[%s163 + $0xa9] sm:$0xff]
      %v232 = vld [vmem:[%s163 + $0xb1] sm:$0xff]
      %v233 = vld [vmem:[%s163 + $0xc1] sm:$0xff]
      %v234 = vld [vmem:[%s163 + $0xc9] sm:$0xff]
      %v235 = vld [vmem:[%s163 + $0xd9] sm:$0xff]
      %v236 = vld [vmem:[%s163 + $0xe1] sm:$0xff]
      %v237 = vld [vmem:[%s163 + $0xf1] sm:$0xff]
      %v238 = vld [vmem:[%s163 + $0xf9] sm:$0xff]
      %v239 = vld [vmem:[%s163 + $0x109] sm:$0xff]
      %v240 = vld [vmem:[%s163 + $0x111] sm:$0xff]
      %v241 = vld [vmem:[%s163 + $0x121] sm:$0xff]
      %v242 = vld [vmem:[%s163 + $0x129] sm:$0xff]
      %v243 = vld [vmem:[%s163 + $0x139] sm:$0xff]
      %v244 = vld [vmem:[%s163 + $0x141] sm:$0xff]
      %v245 = vld [vmem:[%s163 + $0x151] sm:$0xff]
      %v246 = vld [vmem:[%s163 + $0x159] sm:$0xff]
      %v247 = vld [vmem:[%s163 + $0x169] sm:$0xff]
      %v248 = vld [vmem:[%s163 + $0x171] sm:$0xff]
      %v249 = vld [vmem:[%s1 + $0x80] sm:$0xff]
      %v250 = vld [vmem:[%s1 + $0x88] sm:$0xff]
      %v251 = vld [vmem:[%s1 + $0x90] sm:$0xff]
      %v252 = vld [vmem:[%s1 + $0x98] sm:$0xff]
      %v253 = vld [vmem:[%s1 + $0xa0] sm:$0xff]
      %v254 = vld [vmem:[%s1 + $0xa8] sm:$0xff]
      %v255 = vld [vmem:[%s1 + $0xb0] sm:$0xff]
      %v256 = vld [vmem:[%s1 + $0xb8] sm:$0xff]
      %v257 = vld [vmem:[%s1 + $0xc0] sm:$0xff]
      %v258 = vld [vmem:[%s1 + $0xc8] sm:$0xff]
      %v259 = vld [vmem:[%s1 + $0xd0] sm:$0xff]
      %v260 = vld [vmem:[%s1 + $0xd8] sm:$0xff]
      %v261 = vld [vmem:[%s1 + $0xe0] sm:$0xff]
      %v262 = vld [vmem:[%s1 + $0xe8] sm:$0xff]
      %v263 = vld [vmem:[%s1 + $0xf0] sm:$0xff]
      %v264 = vld [vmem:[%s1 + $0xf8] sm:$0xff]
      %265 = vmatprep.subr.mxu0 0.0
      %266 = vmatpush1.msra.mxu0 %v264
      %267 = vmatprep.subr.mxu0 0.0
      %268 = vmatpush1.msra.mxu0 %v263
      %269 = vmatprep.subr.mxu0 0.0
      %270 = vmatpush1.msra.mxu0 %v262
      %271 = vmatprep.subr.mxu0 0.0
      %272 = vmatpush1.msra.mxu0 %v261
      %273 = vmatprep.subr.mxu0 0.0
      %274 = vmatpush1.msra.mxu0 %v260
      %275 = vmatprep.subr.mxu0 0.0
      %276 = vmatpush1.msra.mxu0 %v259
      %277 = vmatprep.subr.mxu0 0.0
      %278 = vmatpush1.msra.mxu0 %v258
      %279 = vmatprep.subr.mxu0 0.0
      %280 = vmatpush1.msra.mxu0 %v257
      %281 = vmatprep.subr.mxu0 0.0
      %282 = vmatpush1.msra.mxu0 %v256
      %283 = vmatprep.subr.mxu0 0.0
      %284 = vmatpush1.msra.mxu0 %v255
      %285 = vmatprep.subr.mxu0 0.0
      %286 = vmatpush1.msra.mxu0 %v254
      %287 = vmatprep.subr.mxu0 0.0
      %288 = vmatpush1.msra.mxu0 %v253
      %289 = vmatprep.subr.mxu0 0.0
      %290 = vmatpush1.msra.mxu0 %v252
      %291 = vmatprep.subr.mxu0 0.0
      %292 = vmatpush1.msra.mxu0 %v251
      %293 = vmatprep.subr.mxu0 0.0
      %294 = vmatpush1.msra.mxu0 %v250
      %295 = vmatprep.subr.mxu0 0.0
      %296 = vmatpush1.msra.mxu0 %v249
      %297 = vmatprep.subr.mxu0 0.0
      %298 = vmatpush2.msra.mxu0 0.0
      %299 = vmatprep.subr.mxu0 0.0
      %300 = vmatpush2.msra.mxu0 0.0
      %301 = vmatprep.subr.mxu0 0.0
      %302 = vmatpush2.msra.mxu0 0.0
      %303 = vmatprep.subr.mxu0 0.0
      %304 = vmatpush2.msra.mxu0 0.0
      %305 = vmatprep.subr.mxu0 0.0
      %306 = vmatpush2.msra.mxu0 0.0
      %307 = vmatprep.subr.mxu0 0.0
      %308 = vmatpush2.msra.mxu0 0.0
      %309 = vmatprep.subr.mxu0 0.0
      %310 = vmatpush2.msra.mxu0 0.0
      %311 = vmatprep.subr.mxu0 0.0
      %312 = vmatpush2.msra.mxu0 0.0
      %313 = vmatprep.subr.mxu0 0.0
      %314 = vmatpush2.msra.mxu0 0.0
      %315 = vmatprep.subr.mxu0 0.0
      %316 = vmatpush2.msra.mxu0 0.0
      %317 = vmatprep.subr.mxu0 0.0
      %318 = vmatpush2.msra.mxu0 0.0
      %319 = vmatprep.subr.mxu0 0.0
      %320 = vmatpush2.msra.mxu0 0.0
      %321 = vmatprep.subr.mxu0 0.0
      %322 = vmatpush2.msra.mxu0 0.0
      %323 = vmatprep.subr.mxu0 0.0
      %324 = vmatpush2.msra.mxu0 0.0
      %325 = vmatprep.subr.mxu0 0.0
      %326 = vmatpush2.msra.mxu0 0.0
      %327 = vmatprep.subr.mxu0 0.0
      %328 = vmatpush2.msra.mxu0 0.0
      %329 = vmatprep.mubr.f32.mxu0 0.0
      %330 = vmatmul.mubr.f32.gmra.mxu0 %v217
      %v331 = vpop.f32.mrf.mxu0
      %v332 = vadd.f32 0.0, %v331
      %v333 = vpop.f32.mrf.mxu0
      %334 = vmatprep.mubr.f32.mxu0 0.0
      %335 = vmatmul.mubr.f32.gmra.mxu0 %v218
      %v336 = vpop.f32.mrf.mxu0
      %v337 = vadd.f32 0.0, %v336
      %v338 = vpop.f32.mrf.mxu0
      %339 = vmatprep.mubr.f32.mxu0 0.0
      %340 = vmatmul.mubr.f32.gmra.mxu0 %v219
      %v341 = vpop.f32.mrf.mxu0
      %v342 = vadd.f32 0.0, %v341
      %v343 = vpop.f32.mrf.mxu0
      %344 = vmatprep.mubr.f32.mxu0 0.0
      %345 = vmatmul.mubr.f32.gmra.mxu0 %v220
      %v346 = vpop.f32.mrf.mxu0
      %v347 = vadd.f32 0.0, %v346
      %v348 = vpop.f32.mrf.mxu0
      %349 = vmatprep.mubr.f32.mxu0 0.0
      %350 = vmatmul.mubr.f32.gmra.mxu0 %v221
      %v351 = vpop.f32.mrf.mxu0
      %v352 = vadd.f32 0.0, %v351
      %v353 = vpop.f32.mrf.mxu0
      %354 = vmatprep.mubr.f32.mxu0 0.0
      %355 = vmatmul.mubr.f32.gmra.mxu0 %v222
      %v356 = vpop.f32.mrf.mxu0
      %v357 = vadd.f32 0.0, %v356
      %v358 = vpop.f32.mrf.mxu0
      %359 = vmatprep.mubr.f32.mxu0 0.0
      %360 = vmatmul.mubr.f32.gmra.mxu0 %v223
      %v361 = vpop.f32.mrf.mxu0
      %v362 = vadd.f32 0.0, %v361
      %v363 = vpop.f32.mrf.mxu0
      %364 = vmatprep.mubr.f32.mxu0 0.0
      %365 = vmatmul.mubr.f32.gmra.mxu0 %v224
      %v366 = vpop.f32.mrf.mxu0
      %v367 = vadd.f32 0.0, %v366
      %v368 = vpop.f32.mrf.mxu0
      %369 = vmatprep.mubr.f32.mxu0 0.0
      %370 = vmatmul.mubr.f32.gmra.mxu0 %v225
      %v371 = vpop.f32.mrf.mxu0
      %v372 = vadd.f32 0.0, %v371
      %v373 = vpop.f32.mrf.mxu0
      %374 = vmatprep.mubr.f32.mxu0 0.0
      %375 = vmatmul.mubr.f32.gmra.mxu0 %v226
      %v376 = vpop.f32.mrf.mxu0
      %v377 = vadd.f32 0.0, %v376
      %v378 = vpop.f32.mrf.mxu0
      %379 = vmatprep.mubr.f32.mxu0 0.0
      %380 = vmatmul.mubr.f32.gmra.mxu0 %v227
      %v381 = vpop.f32.mrf.mxu0
      %v382 = vadd.f32 0.0, %v381
      %v383 = vpop.f32.mrf.mxu0
      %384 = vmatprep.mubr.f32.mxu0 0.0
      %385 = vmatmul.mubr.f32.gmra.mxu0 %v228
      %v386 = vpop.f32.mrf.mxu0
      %v387 = vadd.f32 0.0, %v386
      %v388 = vpop.f32.mrf.mxu0
      %389 = vmatprep.mubr.f32.mxu0 0.0
      %390 = vmatmul.mubr.f32.gmra.mxu0 %v229
      %v391 = vpop.f32.mrf.mxu0
      %v392 = vadd.f32 0.0, %v391
      %v393 = vpop.f32.mrf.mxu0
      %394 = vmatprep.mubr.f32.mxu0 0.0
      %395 = vmatmul.mubr.f32.gmra.mxu0 %v230
      %v396 = vpop.f32.mrf.mxu0
      %v397 = vadd.f32 0.0, %v396
      %v398 = vpop.f32.mrf.mxu0
      %399 = vmatprep.mubr.f32.mxu0 0.0
      %400 = vmatmul.mubr.f32.gmra.mxu0 %v231
      %v401 = vpop.f32.mrf.mxu0
      %v402 = vadd.f32 0.0, %v401
      %v403 = vpop.f32.mrf.mxu0
      %404 = vmatprep.mubr.f32.mxu0 0.0
      %405 = vmatmul.mubr.f32.gmra.mxu0 %v232
      %v406 = vpop.f32.mrf.mxu0
      %v407 = vadd.f32 0.0, %v406
      %v408 = vpop.f32.mrf.mxu0
      %409 = vmatprep.mubr.f32.mxu0 0.0
      %410 = vmatmul.mubr.f32.gmra.mxu0 %v233
      %v411 = vpop.f32.mrf.mxu0
      %v412 = vadd.f32 0.0, %v411
      %v413 = vpop.f32.mrf.mxu0
      %414 = vmatprep.mubr.f32.mxu0 0.0
      %415 = vmatmul.mubr.f32.gmra.mxu0 %v234
      %v416 = vpop.f32.mrf.mxu0
      %v417 = vadd.f32 0.0, %v416
      %v418 = vpop.f32.mrf.mxu0
      %419 = vmatprep.mubr.f32.mxu0 0.0
      %420 = vmatmul.mubr.f32.gmra.mxu0 %v235
      %v421 = vpop.f32.mrf.mxu0
      %v422 = vadd.f32 0.0, %v421
      %v423 = vpop.f32.mrf.mxu0
      %424 = vmatprep.mubr.f32.mxu0 0.0
      %425 = vmatmul.mubr.f32.gmra.mxu0 %v236
      %v426 = vpop.f32.mrf.mxu0
      %v427 = vadd.f32 0.0, %v426
      %v428 = vpop.f32.mrf.mxu0
      %429 = vmatprep.mubr.f32.mxu0 0.0
      %430 = vmatmul.mubr.f32.gmra.mxu0 %v237
      %v431 = vpop.f32.mrf.mxu0
      %v432 = vadd.f32 0.0, %v431
      %v433 = vpop.f32.mrf.mxu0
      %434 = vmatprep.mubr.f32.mxu0 0.0
      %435 = vmatmul.mubr.f32.gmra.mxu0 %v238
      %v436 = vpop.f32.mrf.mxu0
      %v437 = vadd.f32 0.0, %v436
      %v438 = vpop.f32.mrf.mxu0
      %439 = vmatprep.mubr.f32.mxu0 0.0
      %440 = vmatmul.mubr.f32.gmra.mxu0 %v239
      %v441 = vpop.f32.mrf.mxu0
      %v442 = vadd.f32 0.0, %v441
      %v443 = vpop.f32.mrf.mxu0
      %444 = vmatprep.mubr.f32.mxu0 0.0
      %445 = vmatmul.mubr.f32.gmra.mxu0 %v240
      %v446 = vpop.f32.mrf.mxu0
      %v447 = vadd.f32 0.0, %v446
      %v448 = vpop.f32.mrf.mxu0
      %449 = vmatprep.mubr.f32.mxu0 0.0
      %450 = vmatmul.mubr.f32.gmra.mxu0 %v241
      %v451 = vpop.f32.mrf.mxu0
      %v452 = vadd.f32 0.0, %v451
      %v453 = vpop.f32.mrf.mxu0
      %454 = vmatprep.mubr.f32.mxu0 0.0
      %455 = vmatmul.mubr.f32.gmra.mxu0 %v242
      %v456 = vpop.f32.mrf.mxu0
      %v457 = vadd.f32 0.0, %v456
      %v458 = vpop.f32.mrf.mxu0
      %459 = vmatprep.mubr.f32.mxu0 0.0
      %460 = vmatmul.mubr.f32.gmra.mxu0 %v243
      %v461 = vpop.f32.mrf.mxu0
      %v462 = vadd.f32 0.0, %v461
      %v463 = vpop.f32.mrf.mxu0
      %464 = vmatprep.mubr.f32.mxu0 0.0
      %465 = vmatmul.mubr.f32.gmra.mxu0 %v244
      %v466 = vpop.f32.mrf.mxu0
      %v467 = vadd.f32 0.0, %v466
      %v468 = vpop.f32.mrf.mxu0
      %469 = vmatprep.mubr.f32.mxu0 0.0
      %470 = vmatmul.mubr.f32.gmra.mxu0 %v245
      %v471 = vpop.f32.mrf.mxu0
      %v472 = vadd.f32 0.0, %v471
      %v473 = vpop.f32.mrf.mxu0
      %474 = vmatprep.mubr.f32.mxu0 0.0
      %475 = vmatmul.mubr.f32.gmra.mxu0 %v246
      %v476 = vpop.f32.mrf.mxu0
      %v477 = vadd.f32 0.0, %v476
      %v478 = vpop.f32.mrf.mxu0
      %479 = vmatprep.mubr.f32.mxu0 0.0
      %480 = vmatmul.mubr.f32.gmra.mxu0 %v247
      %v481 = vpop.f32.mrf.mxu0
      %v482 = vadd.f32 0.0, %v481
      %v483 = vpop.f32.mrf.mxu0
      %484 = vmatprep.mubr.f32.mxu0 0.0
      %485 = vmatmul.mubr.f32.gmra.mxu0 %v248
      %v486 = vpop.f32.mrf.mxu0
      %v487 = vadd.f32 0.0, %v486
      %v488 = vpop.f32.mrf.mxu0
      %489 = vdwg.mxu0
      %490 = vmatprep.subr.mxu0 0.0
      %491 = vmatpush1.msra.mxu0 %v216
      %492 = vmatprep.subr.mxu0 0.0
      %493 = vmatpush1.msra.mxu0 %v215
      %494 = vmatprep.subr.mxu0 0.0
      %495 = vmatpush1.msra.mxu0 %v214
      %496 = vmatprep.subr.mxu0 0.0
      %497 = vmatpush1.msra.mxu0 %v213
      %498 = vmatprep.subr.mxu0 0.0
      %499 = vmatpush1.msra.mxu0 %v212
      %500 = vmatprep.subr.mxu0 0.0
      %501 = vmatpush1.msra.mxu0 %v211
      %502 = vmatprep.subr.mxu0 0.0
      %503 = vmatpush1.msra.mxu0 %v210
      %504 = vmatprep.subr.mxu0 0.0
      %505 = vmatpush1.msra.mxu0 %v209
      %506 = vmatprep.subr.mxu0 0.0
      %507 = vmatpush1.msra.mxu0 %v208
      %508 = vmatprep.subr.mxu0 0.0
      %509 = vmatpush1.msra.mxu0 %v207
      %510 = vmatprep.subr.mxu0 0.0
      %511 = vmatpush1.msra.mxu0 %v206
      %512 = vmatprep.subr.mxu0 0.0
      %513 = vmatpush1.msra.mxu0 %v205
      %514 = vmatprep.subr.mxu0 0.0
      %515 = vmatpush1.msra.mxu0 %v204
      %516 = vmatprep.subr.mxu0 0.0
      %517 = vmatpush1.msra.mxu0 %v203
      %518 = vmatprep.subr.mxu0 0.0
      %519 = vmatpush1.msra.mxu0 %v202
      %520 = vmatprep.subr.mxu0 0.0
      %521 = vmatpush1.msra.mxu0 %v201
      %522 = vmatprep.subr.mxu0 0.0
      %523 = vmatpush2.msra.mxu0 0.0
      %524 = vmatprep.subr.mxu0 0.0
      %525 = vmatpush2.msra.mxu0 0.0
      %526 = vmatprep.subr.mxu0 0.0
      %527 = vmatpush2.msra.mxu0 0.0
      %528 = vmatprep.subr.mxu0 0.0
      %529 = vmatpush2.msra.mxu0 0.0
      %530 = vmatprep.subr.mxu0 0.0
      %531 = vmatpush2.msra.mxu0 0.0
      %532 = vmatprep.subr.mxu0 0.0
      %533 = vmatpush2.msra.mxu0 0.0
      %534 = vmatprep.subr.mxu0 0.0
      %535 = vmatpush2.msra.mxu0 0.0
      %536 = vmatprep.subr.mxu0 0.0
      %537 = vmatpush2.msra.mxu0 0.0
      %538 = vmatprep.subr.mxu0 0.0
      %539 = vmatpush2.msra.mxu0 0.0
      %540 = vmatprep.subr.mxu0 0.0
      %541 = vmatpush2.msra.mxu0 0.0
      %542 = vmatprep.subr.mxu0 0.0
      %543 = vmatpush2.msra.mxu0 0.0
      %544 = vmatprep.subr.mxu0 0.0
      %545 = vmatpush2.msra.mxu0 0.0
      %546 = vmatprep.subr.mxu0 0.0
      %547 = vmatpush2.msra.mxu0 0.0
      %548 = vmatprep.subr.mxu0 0.0
      %549 = vmatpush2.msra.mxu0 0.0
      %550 = vmatprep.subr.mxu0 0.0
      %551 = vmatpush2.msra.mxu0 0.0
      %552 = vmatprep.subr.mxu0 0.0
      %553 = vmatpush2.msra.mxu0 0.0
      %554 = vmatprep.mubr.f32.mxu0 0.0
      %555 = vmatmul.mubr.f32.gmra.mxu0 %v169
      %v556 = vpop.f32.mrf.mxu0
      %v557 = vadd.f32 %v332, %v556
      %v558 = vpop.f32.mrf.mxu0
      %559 = vmatprep.mubr.f32.mxu0 0.0
      %560 = vmatmul.mubr.f32.gmra.mxu0 %v170
      %v561 = vpop.f32.mrf.mxu0
      %v562 = vadd.f32 %v337, %v561
      %v563 = vpop.f32.mrf.mxu0
      %564 = vmatprep.mubr.f32.mxu0 0.0
      %565 = vmatmul.mubr.f32.gmra.mxu0 %v171
      %v566 = vpop.f32.mrf.mxu0
      %v567 = vadd.f32 %v342, %v566
      %v568 = vpop.f32.mrf.mxu0
      %569 = vmatprep.mubr.f32.mxu0 0.0
      %570 = vmatmul.mubr.f32.gmra.mxu0 %v172
      %v571 = vpop.f32.mrf.mxu0
      %v572 = vadd.f32 %v347, %v571
      %v573 = vpop.f32.mrf.mxu0
      %574 = vmatprep.mubr.f32.mxu0 0.0
      %575 = vmatmul.mubr.f32.gmra.mxu0 %v173
      %v576 = vpop.f32.mrf.mxu0
      %v577 = vadd.f32 %v352, %v576
      %v578 = vpop.f32.mrf.mxu0
      %579 = vmatprep.mubr.f32.mxu0 0.0
      %580 = vmatmul.mubr.f32.gmra.mxu0 %v174
      %v581 = vpop.f32.mrf.mxu0
      %v582 = vadd.f32 %v357, %v581
      %v583 = vpop.f32.mrf.mxu0
      %584 = vmatprep.mubr.f32.mxu0 0.0
      %585 = vmatmul.mubr.f32.gmra.mxu0 %v175
      %v586 = vpop.f32.mrf.mxu0
      %v587 = vadd.f32 %v362, %v586
      %v588 = vpop.f32.mrf.mxu0
      %589 = vmatprep.mubr.f32.mxu0 0.0
      %590 = vmatmul.mubr.f32.gmra.mxu0 %v176
      %v591 = vpop.f32.mrf.mxu0
      %v592 = vadd.f32 %v367, %v591
      %v593 = vpop.f32.mrf.mxu0
      %594 = vmatprep.mubr.f32.mxu0 0.0
      %595 = vmatmul.mubr.f32.gmra.mxu0 %v177
      %v596 = vpop.f32.mrf.mxu0
      %v597 = vadd.f32 %v372, %v596
      %v598 = vpop.f32.mrf.mxu0
      %599 = vmatprep.mubr.f32.mxu0 0.0
      %600 = vmatmul.mubr.f32.gmra.mxu0 %v178
      %v601 = vpop.f32.mrf.mxu0
      %v602 = vadd.f32 %v377, %v601
      %v603 = vpop.f32.mrf.mxu0
      %604 = vmatprep.mubr.f32.mxu0 0.0
      %605 = vmatmul.mubr.f32.gmra.mxu0 %v179
      %v606 = vpop.f32.mrf.mxu0
      %v607 = vadd.f32 %v382, %v606
      %v608 = vpop.f32.mrf.mxu0
      %609 = vmatprep.mubr.f32.mxu0 0.0
      %610 = vmatmul.mubr.f32.gmra.mxu0 %v180
      %v611 = vpop.f32.mrf.mxu0
      %v612 = vadd.f32 %v387, %v611
      %v613 = vpop.f32.mrf.mxu0
      %614 = vmatprep.mubr.f32.mxu0 0.0
      %615 = vmatmul.mubr.f32.gmra.mxu0 %v181
      %v616 = vpop.f32.mrf.mxu0
      %v617 = vadd.f32 %v392, %v616
      %v618 = vpop.f32.mrf.mxu0
      %619 = vmatprep.mubr.f32.mxu0 0.0
      %620 = vmatmul.mubr.f32.gmra.mxu0 %v182
      %v621 = vpop.f32.mrf.mxu0
      %v622 = vadd.f32 %v397, %v621
      %v623 = vpop.f32.mrf.mxu0
      %624 = vmatprep.mubr.f32.mxu0 0.0
      %625 = vmatmul.mubr.f32.gmra.mxu0 %v183
      %v626 = vpop.f32.mrf.mxu0
      %v627 = vadd.f32 %v402, %v626
      %v628 = vpop.f32.mrf.mxu0
      %629 = vmatprep.mubr.f32.mxu0 0.0
      %630 = vmatmul.mubr.f32.gmra.mxu0 %v184
      %v631 = vpop.f32.mrf.mxu0
      %v632 = vadd.f32 %v407, %v631
      %v633 = vpop.f32.mrf.mxu0
      %634 = vmatprep.mubr.f32.mxu0 0.0
      %635 = vmatmul.mubr.f32.gmra.mxu0 %v185
      %v636 = vpop.f32.mrf.mxu0
      %v637 = vadd.f32 %v412, %v636
      %v638 = vpop.f32.mrf.mxu0
      %639 = vmatprep.mubr.f32.mxu0 0.0
      %640 = vmatmul.mubr.f32.gmra.mxu0 %v186
      %v641 = vpop.f32.mrf.mxu0
      %v642 = vadd.f32 %v417, %v641
      %v643 = vpop.f32.mrf.mxu0
      %644 = vmatprep.mubr.f32.mxu0 0.0
      %645 = vmatmul.mubr.f32.gmra.mxu0 %v187
      %v646 = vpop.f32.mrf.mxu0
      %v647 = vadd.f32 %v422, %v646
      %v648 = vpop.f32.mrf.mxu0
      %649 = vmatprep.mubr.f32.mxu0 0.0
      %650 = vmatmul.mubr.f32.gmra.mxu0 %v188
      %v651 = vpop.f32.mrf.mxu0
      %v652 = vadd.f32 %v427, %v651
      %v653 = vpop.f32.mrf.mxu0
      %654 = vmatprep.mubr.f32.mxu0 0.0
      %655 = vmatmul.mubr.f32.gmra.mxu0 %v189
      %v656 = vpop.f32.mrf.mxu0
      %v657 = vadd.f32 %v432, %v656
      %v658 = vpop.f32.mrf.mxu0
      %659 = vmatprep.mubr.f32.mxu0 0.0
      %660 = vmatmul.mubr.f32.gmra.mxu0 %v190
      %v661 = vpop.f32.mrf.mxu0
      %v662 = vadd.f32 %v437, %v661
      %v663 = vpop.f32.mrf.mxu0
      %664 = vmatprep.mubr.f32.mxu0 0.0
      %665 = vmatmul.mubr.f32.gmra.mxu0 %v191
      %v666 = vpop.f32.mrf.mxu0
      %v667 = vadd.f32 %v442, %v666
      %v668 = vpop.f32.mrf.mxu0
      %669 = vmatprep.mubr.f32.mxu0 0.0
      %670 = vmatmul.mubr.f32.gmra.mxu0 %v192
      %v671 = vpop.f32.mrf.mxu0
      %v672 = vadd.f32 %v447, %v671
      %v673 = vpop.f32.mrf.mxu0
      %674 = vmatprep.mubr.f32.mxu0 0.0
      %675 = vmatmul.mubr.f32.gmra.mxu0 %v193
      %v676 = vpop.f32.mrf.mxu0
      %v677 = vadd.f32 %v452, %v676
      %v678 = vpop.f32.mrf.mxu0
      %679 = vmatprep.mubr.f32.mxu0 0.0
      %680 = vmatmul.mubr.f32.gmra.mxu0 %v194
      %v681 = vpop.f32.mrf.mxu0
      %v682 = vadd.f32 %v457, %v681
      %v683 = vpop.f32.mrf.mxu0
      %684 = vmatprep.mubr.f32.mxu0 0.0
      %685 = vmatmul.mubr.f32.gmra.mxu0 %v195
      %v686 = vpop.f32.mrf.mxu0
      %v687 = vadd.f32 %v462, %v686
      %v688 = vpop.f32.mrf.mxu0
      %689 = vmatprep.mubr.f32.mxu0 0.0
      %690 = vmatmul.mubr.f32.gmra.mxu0 %v196
      %v691 = vpop.f32.mrf.mxu0
      %v692 = vadd.f32 %v467, %v691
      %v693 = vpop.f32.mrf.mxu0
      %694 = vmatprep.mubr.f32.mxu0 0.0
      %695 = vmatmul.mubr.f32.gmra.mxu0 %v197
      %v696 = vpop.f32.mrf.mxu0
      %v697 = vadd.f32 %v472, %v696
      %v698 = vpop.f32.mrf.mxu0
      %699 = vmatprep.mubr.f32.mxu0 0.0
      %700 = vmatmul.mubr.f32.gmra.mxu0 %v198
      %v701 = vpop.f32.mrf.mxu0
      %v702 = vadd.f32 %v477, %v701
      %v703 = vpop.f32.mrf.mxu0
      %704 = vmatprep.mubr.f32.mxu0 0.0
      %705 = vmatmul.mubr.f32.gmra.mxu0 %v199
      %v706 = vpop.f32.mrf.mxu0
      %v707 = vadd.f32 %v482, %v706
      %v708 = vpop.f32.mrf.mxu0
      %709 = vmatprep.mubr.f32.mxu0 0.0
      %710 = vmatmul.mubr.f32.gmra.mxu0 %v200
      %v711 = vpop.f32.mrf.mxu0
      %v712 = vadd.f32 %v487, %v711
      %v713 = vpop.f32.mrf.mxu0
      %714 = vdwg.mxu0
      %v715 = vld [vmem:[%s163 + $0x2] sm:$0xff]
      %v716 = vld [vmem:[%s163 + $0xa] sm:$0xff]
      %v717 = vld [vmem:[%s163 + $0x1a] sm:$0xff]
      %v718 = vld [vmem:[%s163 + $0x22] sm:$0xff]
      %v719 = vld [vmem:[%s163 + $0x32] sm:$0xff]
      %v720 = vld [vmem:[%s163 + $0x3a] sm:$0xff]
      %v721 = vld [vmem:[%s163 + $0x4a] sm:$0xff]
      %v722 = vld [vmem:[%s163 + $0x52] sm:$0xff]
      %v723 = vld [vmem:[%s163 + $0x62] sm:$0xff]
      %v724 = vld [vmem:[%s163 + $0x6a] sm:$0xff]
      %v725 = vld [vmem:[%s163 + $0x7a] sm:$0xff]
      %v726 = vld [vmem:[%s163 + $0x82] sm:$0xff]
      %v727 = vld [vmem:[%s163 + $0x92] sm:$0xff]
      %v728 = vld [vmem:[%s163 + $0x9a] sm:$0xff]
      %v729 = vld [vmem:[%s163 + $0xaa] sm:$0xff]
      %v730 = vld [vmem:[%s163 + $0xb2] sm:$0xff]
      %v731 = vld [vmem:[%s163 + $0xc2] sm:$0xff]
      %v732 = vld [vmem:[%s163 + $0xca] sm:$0xff]
      %v733 = vld [vmem:[%s163 + $0xda] sm:$0xff]
      %v734 = vld [vmem:[%s163 + $0xe2] sm:$0xff]
      %v735 = vld [vmem:[%s163 + $0xf2] sm:$0xff]
      %v736 = vld [vmem:[%s163 + $0xfa] sm:$0xff]
      %v737 = vld [vmem:[%s163 + $0x10a] sm:$0xff]
      %v738 = vld [vmem:[%s163 + $0x112] sm:$0xff]
      %v739 = vld [vmem:[%s163 + $0x122] sm:$0xff]
      %v740 = vld [vmem:[%s163 + $0x12a] sm:$0xff]
      %v741 = vld [vmem:[%s163 + $0x13a] sm:$0xff]
      %v742 = vld [vmem:[%s163 + $0x142] sm:$0xff]
      %v743 = vld [vmem:[%s163 + $0x152] sm:$0xff]
      %v744 = vld [vmem:[%s163 + $0x15a] sm:$0xff]
      %v745 = vld [vmem:[%s163 + $0x16a] sm:$0xff]
      %v746 = vld [vmem:[%s163 + $0x172] sm:$0xff]
      %v747 = vld [vmem:[%s1 + $0x100] sm:$0xff]
      %v748 = vld [vmem:[%s1 + $0x108] sm:$0xff]
      %v749 = vld [vmem:[%s1 + $0x110] sm:$0xff]
      %v750 = vld [vmem:[%s1 + $0x118] sm:$0xff]
      %v751 = vld [vmem:[%s1 + $0x120] sm:$0xff]
      %v752 = vld [vmem:[%s1 + $0x128] sm:$0xff]
      %v753 = vld [vmem:[%s1 + $0x130] sm:$0xff]
      %v754 = vld [vmem:[%s1 + $0x138] sm:$0xff]
      %v755 = vld [vmem:[%s1 + $0x140] sm:$0xff]
      %v756 = vld [vmem:[%s1 + $0x148] sm:$0xff]
      %v757 = vld [vmem:[%s1 + $0x150] sm:$0xff]
      %v758 = vld [vmem:[%s1 + $0x158] sm:$0xff]
      %v759 = vld [vmem:[%s1 + $0x160] sm:$0xff]
      %v760 = vld [vmem:[%s1 + $0x168] sm:$0xff]
      %v761 = vld [vmem:[%s1 + $0x170] sm:$0xff]
      %v762 = vld [vmem:[%s1 + $0x178] sm:$0xff]
      %763 = vmatprep.subr.mxu0 0.0
      %764 = vmatpush1.msra.mxu0 %v762
      %765 = vmatprep.subr.mxu0 0.0
      %766 = vmatpush1.msra.mxu0 %v761
      %767 = vmatprep.subr.mxu0 0.0
      %768 = vmatpush1.msra.mxu0 %v760
      %769 = vmatprep.subr.mxu0 0.0
      %770 = vmatpush1.msra.mxu0 %v759
      %771 = vmatprep.subr.mxu0 0.0
      %772 = vmatpush1.msra.mxu0 %v758
      %773 = vmatprep.subr.mxu0 0.0
      %774 = vmatpush1.msra.mxu0 %v757
      %775 = vmatprep.subr.mxu0 0.0
      %776 = vmatpush1.msra.mxu0 %v756
      %777 = vmatprep.subr.mxu0 0.0
      %778 = vmatpush1.msra.mxu0 %v755
      %779 = vmatprep.subr.mxu0 0.0
      %780 = vmatpush1.msra.mxu0 %v754
      %781 = vmatprep.subr.mxu0 0.0
      %782 = vmatpush1.msra.mxu0 %v753
      %783 = vmatprep.subr.mxu0 0.0
      %784 = vmatpush1.msra.mxu0 %v752
      %785 = vmatprep.subr.mxu0 0.0
      %786 = vmatpush1.msra.mxu0 %v751
      %787 = vmatprep.subr.mxu0 0.0
      %788 = vmatpush1.msra.mxu0 %v750
      %789 = vmatprep.subr.mxu0 0.0
      %790 = vmatpush1.msra.mxu0 %v749
      %791 = vmatprep.subr.mxu0 0.0
      %792 = vmatpush1.msra.mxu0 %v748
      %793 = vmatprep.subr.mxu0 0.0
      %794 = vmatpush1.msra.mxu0 %v747
      %795 = vmatprep.subr.mxu0 0.0
      %796 = vmatpush2.msra.mxu0 0.0
      %797 = vmatprep.subr.mxu0 0.0
      %798 = vmatpush2.msra.mxu0 0.0
      %799 = vmatprep.subr.mxu0 0.0
      %800 = vmatpush2.msra.mxu0 0.0
      %801 = vmatprep.subr.mxu0 0.0
      %802 = vmatpush2.msra.mxu0 0.0
      %803 = vmatprep.subr.mxu0 0.0
      %804 = vmatpush2.msra.mxu0 0.0
      %805 = vmatprep.subr.mxu0 0.0
      %806 = vmatpush2.msra.mxu0 0.0
      %807 = vmatprep.subr.mxu0 0.0
      %808 = vmatpush2.msra.mxu0 0.0
      %809 = vmatprep.subr.mxu0 0.0
      %810 = vmatpush2.msra.mxu0 0.0
      %811 = vmatprep.subr.mxu0 0.0
      %812 = vmatpush2.msra.mxu0 0.0
      %813 = vmatprep.subr.mxu0 0.0
      %814 = vmatpush2.msra.mxu0 0.0
      %815 = vmatprep.subr.mxu0 0.0
      %816 = vmatpush2.msra.mxu0 0.0
      %817 = vmatprep.subr.mxu0 0.0
      %818 = vmatpush2.msra.mxu0 0.0
      %819 = vmatprep.subr.mxu0 0.0
      %820 = vmatpush2.msra.mxu0 0.0
      %821 = vmatprep.subr.mxu0 0.0
      %822 = vmatpush2.msra.mxu0 0.0
      %823 = vmatprep.subr.mxu0 0.0
      %824 = vmatpush2.msra.mxu0 0.0
      %825 = vmatprep.subr.mxu0 0.0
      %826 = vmatpush2.msra.mxu0 0.0
      %827 = vmatprep.mubr.f32.mxu0 0.0
      %828 = vmatmul.mubr.f32.gmra.mxu0 %v715
      %v829 = vpop.f32.mrf.mxu0
      %v830 = vadd.f32 0.0, %v829
      %v831 = vpop.f32.mrf.mxu0
      %832 = vmatprep.mubr.f32.mxu0 0.0
      %833 = vmatmul.mubr.f32.gmra.mxu0 %v716
      %v834 = vpop.f32.mrf.mxu0
      %v835 = vadd.f32 0.0, %v834
      %v836 = vpop.f32.mrf.mxu0
      %837 = vmatprep.mubr.f32.mxu0 0.0
      %838 = vmatmul.mubr.f32.gmra.mxu0 %v717
      %v839 = vpop.f32.mrf.mxu0
      %v840 = vadd.f32 0.0, %v839
      %v841 = vpop.f32.mrf.mxu0
      %842 = vmatprep.mubr.f32.mxu0 0.0
      %843 = vmatmul.mubr.f32.gmra.mxu0 %v718
      %v844 = vpop.f32.mrf.mxu0
      %v845 = vadd.f32 0.0, %v844
      %v846 = vpop.f32.mrf.mxu0
      %847 = vmatprep.mubr.f32.mxu0 0.0
      %848 = vmatmul.mubr.f32.gmra.mxu0 %v719
      %v849 = vpop.f32.mrf.mxu0
      %v850 = vadd.f32 0.0, %v849
      %v851 = vpop.f32.mrf.mxu0
      %852 = vmatprep.mubr.f32.mxu0 0.0
      %853 = vmatmul.mubr.f32.gmra.mxu0 %v720
      %v854 = vpop.f32.mrf.mxu0
      %v855 = vadd.f32 0.0, %v854
      %v856 = vpop.f32.mrf.mxu0
      %857 = vmatprep.mubr.f32.mxu0 0.0
      %858 = vmatmul.mubr.f32.gmra.mxu0 %v721
      %v859 = vpop.f32.mrf.mxu0
      %v860 = vadd.f32 0.0, %v859
      %v861 = vpop.f32.mrf.mxu0
      %862 = vmatprep.mubr.f32.mxu0 0.0
      %863 = vmatmul.mubr.f32.gmra.mxu0 %v722
      %v864 = vpop.f32.mrf.mxu0
      %v865 = vadd.f32 0.0, %v864
      %v866 = vpop.f32.mrf.mxu0
      %867 = vmatprep.mubr.f32.mxu0 0.0
      %868 = vmatmul.mubr.f32.gmra.mxu0 %v723
      %v869 = vpop.f32.mrf.mxu0
      %v870 = vadd.f32 0.0, %v869
      %v871 = vpop.f32.mrf.mxu0
      %872 = vmatprep.mubr.f32.mxu0 0.0
      %873 = vmatmul.mubr.f32.gmra.mxu0 %v724
      %v874 = vpop.f32.mrf.mxu0
      %v875 = vadd.f32 0.0, %v874
      %v876 = vpop.f32.mrf.mxu0
      %877 = vmatprep.mubr.f32.mxu0 0.0
      %878 = vmatmul.mubr.f32.gmra.mxu0 %v725
      %v879 = vpop.f32.mrf.mxu0
      %v880 = vadd.f32 0.0, %v879
      %v881 = vpop.f32.mrf.mxu0
      %882 = vmatprep.mubr.f32.mxu0 0.0
      %883 = vmatmul.mubr.f32.gmra.mxu0 %v726
      %v884 = vpop.f32.mrf.mxu0
      %v885 = vadd.f32 0.0, %v884
      %v886 = vpop.f32.mrf.mxu0
      %887 = vmatprep.mubr.f32.mxu0 0.0
      %888 = vmatmul.mubr.f32.gmra.mxu0 %v727
      %v889 = vpop.f32.mrf.mxu0
      %v890 = vadd.f32 0.0, %v889
      %v891 = vpop.f32.mrf.mxu0
      %892 = vmatprep.mubr.f32.mxu0 0.0
      %893 = vmatmul.mubr.f32.gmra.mxu0 %v728
      %v894 = vpop.f32.mrf.mxu0
      %v895 = vadd.f32 0.0, %v894
      %v896 = vpop.f32.mrf.mxu0
      %897 = vmatprep.mubr.f32.mxu0 0.0
      %898 = vmatmul.mubr.f32.gmra.mxu0 %v729
      %v899 = vpop.f32.mrf.mxu0
      %v900 = vadd.f32 0.0, %v899
      %v901 = vpop.f32.mrf.mxu0
      %902 = vmatprep.mubr.f32.mxu0 0.0
      %903 = vmatmul.mubr.f32.gmra.mxu0 %v730
      %v904 = vpop.f32.mrf.mxu0
      %v905 = vadd.f32 0.0, %v904
      %v906 = vpop.f32.mrf.mxu0
      %907 = vmatprep.mubr.f32.mxu0 0.0
      %908 = vmatmul.mubr.f32.gmra.mxu0 %v731
      %v909 = vpop.f32.mrf.mxu0
      %v910 = vadd.f32 0.0, %v909
      %v911 = vpop.f32.mrf.mxu0
      %912 = vmatprep.mubr.f32.mxu0 0.0
      %913 = vmatmul.mubr.f32.gmra.mxu0 %v732
      %v914 = vpop.f32.mrf.mxu0
      %v915 = vadd.f32 0.0, %v914
      %v916 = vpop.f32.mrf.mxu0
      %917 = vmatprep.mubr.f32.mxu0 0.0
      %918 = vmatmul.mubr.f32.gmra.mxu0 %v733
      %v919 = vpop.f32.mrf.mxu0
      %v920 = vadd.f32 0.0, %v919
      %v921 = vpop.f32.mrf.mxu0
      %922 = vmatprep.mubr.f32.mxu0 0.0
      %923 = vmatmul.mubr.f32.gmra.mxu0 %v734
      %v924 = vpop.f32.mrf.mxu0
      %v925 = vadd.f32 0.0, %v924
      %v926 = vpop.f32.mrf.mxu0
      %927 = vmatprep.mubr.f32.mxu0 0.0
      %928 = vmatmul.mubr.f32.gmra.mxu0 %v735
      %v929 = vpop.f32.mrf.mxu0
      %v930 = vadd.f32 0.0, %v929
      %v931 = vpop.f32.mrf.mxu0
      %932 = vmatprep.mubr.f32.mxu0 0.0
      %933 = vmatmul.mubr.f32.gmra.mxu0 %v736
      %v934 = vpop.f32.mrf.mxu0
      %v935 = vadd.f32 0.0, %v934
      %v936 = vpop.f32.mrf.mxu0
      %937 = vmatprep.mubr.f32.mxu0 0.0
      %938 = vmatmul.mubr.f32.gmra.mxu0 %v737
      %v939 = vpop.f32.mrf.mxu0
      %v940 = vadd.f32 0.0, %v939
      %v941 = vpop.f32.mrf.mxu0
      %942 = vmatprep.mubr.f32.mxu0 0.0
      %943 = vmatmul.mubr.f32.gmra.mxu0 %v738
      %v944 = vpop.f32.mrf.mxu0
      %v945 = vadd.f32 0.0, %v944
      %v946 = vpop.f32.mrf.mxu0
      %947 = vmatprep.mubr.f32.mxu0 0.0
      %948 = vmatmul.mubr.f32.gmra.mxu0 %v739
      %v949 = vpop.f32.mrf.mxu0
      %v950 = vadd.f32 0.0, %v949
      %v951 = vpop.f32.mrf.mxu0
      %952 = vmatprep.mubr.f32.mxu0 0.0
      %953 = vmatmul.mubr.f32.gmra.mxu0 %v740
      %v954 = vpop.f32.mrf.mxu0
      %v955 = vadd.f32 0.0, %v954
      %v956 = vpop.f32.mrf.mxu0
      %957 = vmatprep.mubr.f32.mxu0 0.0
      %958 = vmatmul.mubr.f32.gmra.mxu0 %v741
      %v959 = vpop.f32.mrf.mxu0
      %v960 = vadd.f32 0.0, %v959
      %v961 = vpop.f32.mrf.mxu0
      %962 = vmatprep.mubr.f32.mxu0 0.0
      %963 = vmatmul.mubr.f32.gmra.mxu0 %v742
      %v964 = vpop.f32.mrf.mxu0
      %v965 = vadd.f32 0.0, %v964
      %v966 = vpop.f32.mrf.mxu0
      %967 = vmatprep.mubr.f32.mxu0 0.0
      %968 = vmatmul.mubr.f32.gmra.mxu0 %v743
      %v969 = vpop.f32.mrf.mxu0
      %v970 = vadd.f32 0.0, %v969
      %v971 = vpop.f32.mrf.mxu0
      %972 = vmatprep.mubr.f32.mxu0 0.0
      %973 = vmatmul.mubr.f32.gmra.mxu0 %v744
      %v974 = vpop.f32.mrf.mxu0
      %v975 = vadd.f32 0.0, %v974
      %v976 = vpop.f32.mrf.mxu0
      %977 = vmatprep.mubr.f32.mxu0 0.0
      %978 = vmatmul.mubr.f32.gmra.mxu0 %v745
      %v979 = vpop.f32.mrf.mxu0
      %v980 = vadd.f32 0.0, %v979
      %v981 = vpop.f32.mrf.mxu0
      %982 = vmatprep.mubr.f32.mxu0 0.0
      %983 = vmatmul.mubr.f32.gmra.mxu0 %v746
      %v984 = vpop.f32.mrf.mxu0
      %v985 = vadd.f32 0.0, %v984
      %v986 = vpop.f32.mrf.mxu0
      %987 = vdwg.mxu0
      %v988 = vadd.f32 %v557, %v830
      %v989 = vadd.f32 %v562, %v835
      %v990 = vadd.f32 %v567, %v840
      %v991 = vadd.f32 %v572, %v845
      %v992 = vadd.f32 %v577, %v850
      %v993 = vadd.f32 %v582, %v855
      %v994 = vadd.f32 %v587, %v860
      %v995 = vadd.f32 %v592, %v865
      %v996 = vadd.f32 %v597, %v870
      %v997 = vadd.f32 %v602, %v875
      %v998 = vadd.f32 %v607, %v880
      %v999 = vadd.f32 %v612, %v885
      %v1000 = vadd.f32 %v617, %v890
      %v1001 = vadd.f32 %v622, %v895
      %v1002 = vadd.f32 %v627, %v900
      %v1003 = vadd.f32 %v632, %v905
      %v1004 = vadd.f32 %v637, %v910
      %v1005 = vadd.f32 %v642, %v915
      %v1006 = vadd.f32 %v647, %v920
      %v1007 = vadd.f32 %v652, %v925
      %v1008 = vadd.f32 %v657, %v930
      %v1009 = vadd.f32 %v662, %v935
      %v1010 = vadd.f32 %v667, %v940
      %v1011 = vadd.f32 %v672, %v945
      %v1012 = vadd.f32 %v677, %v950
      %v1013 = vadd.f32 %v682, %v955
      %v1014 = vadd.f32 %v687, %v960
      %v1015 = vadd.f32 %v692, %v965
      %v1016 = vadd.f32 %v697, %v970
      %v1017 = vadd.f32 %v702, %v975
      %v1018 = vadd.f32 %v707, %v980
      %v1019 = vadd.f32 %v712, %v985
      %s1020 = scalar_lea.vmem %s163, 24
      %v1021 = vld [vmem:[%s1020] sm:$0xff]
      %v1022 = vld [vmem:[%s1020 + $0x8] sm:$0xff]
      %v1023 = vld [vmem:[%s1020 + $0x18] sm:$0xff]
      %v1024 = vld [vmem:[%s1020 + $0x20] sm:$0xff]
      %v1025 = vld [vmem:[%s1020 + $0x30] sm:$0xff]
      %v1026 = vld [vmem:[%s1020 + $0x38] sm:$0xff]
      %v1027 = vld [vmem:[%s1020 + $0x48] sm:$0xff]
      %v1028 = vld [vmem:[%s1020 + $0x50] sm:$0xff]
      %v1029 = vld [vmem:[%s1020 + $0x60] sm:$0xff]
      %v1030 = vld [vmem:[%s1020 + $0x68] sm:$0xff]
      %v1031 = vld [vmem:[%s1020 + $0x78] sm:$0xff]
      %v1032 = vld [vmem:[%s1020 + $0x80] sm:$0xff]
      %v1033 = vld [vmem:[%s1020 + $0x90] sm:$0xff]
      %v1034 = vld [vmem:[%s1020 + $0x98] sm:$0xff]
      %v1035 = vld [vmem:[%s1020 + $0xa8] sm:$0xff]
      %v1036 = vld [vmem:[%s1020 + $0xb0] sm:$0xff]
      %v1037 = vld [vmem:[%s1020 + $0xc0] sm:$0xff]
      %v1038 = vld [vmem:[%s1020 + $0xc8] sm:$0xff]
      %v1039 = vld [vmem:[%s1020 + $0xd8] sm:$0xff]
      %v1040 = vld [vmem:[%s1020 + $0xe0] sm:$0xff]
      %v1041 = vld [vmem:[%s1020 + $0xf0] sm:$0xff]
      %v1042 = vld [vmem:[%s1020 + $0xf8] sm:$0xff]
      %v1043 = vld [vmem:[%s1020 + $0x108] sm:$0xff]
      %v1044 = vld [vmem:[%s1020 + $0x110] sm:$0xff]
      %v1045 = vld [vmem:[%s1020 + $0x120] sm:$0xff]
      %v1046 = vld [vmem:[%s1020 + $0x128] sm:$0xff]
      %v1047 = vld [vmem:[%s1020 + $0x138] sm:$0xff]
      %v1048 = vld [vmem:[%s1020 + $0x140] sm:$0xff]
      %v1049 = vld [vmem:[%s1020 + $0x150] sm:$0xff]
      %v1050 = vld [vmem:[%s1020 + $0x158] sm:$0xff]
      %v1051 = vld [vmem:[%s1020 + $0x168] sm:$0xff]
      %v1052 = vld [vmem:[%s1020 + $0x170] sm:$0xff]
      %v1053 = vld [vmem:[%s1 + $0x180] sm:$0xff]
      %v1054 = vld [vmem:[%s1 + $0x188] sm:$0xff]
      %v1055 = vld [vmem:[%s1 + $0x190] sm:$0xff]
      %v1056 = vld [vmem:[%s1 + $0x198] sm:$0xff]
      %v1057 = vld [vmem:[%s1 + $0x1a0] sm:$0xff]
      %v1058 = vld [vmem:[%s1 + $0x1a8] sm:$0xff]
      %v1059 = vld [vmem:[%s1 + $0x1b0] sm:$0xff]
      %v1060 = vld [vmem:[%s1 + $0x1b8] sm:$0xff]
      %v1061 = vld [vmem:[%s1 + $0x1c0] sm:$0xff]
      %v1062 = vld [vmem:[%s1 + $0x1c8] sm:$0xff]
      %v1063 = vld [vmem:[%s1 + $0x1d0] sm:$0xff]
      %v1064 = vld [vmem:[%s1 + $0x1d8] sm:$0xff]
      %v1065 = vld [vmem:[%s1 + $0x1e0] sm:$0xff]
      %v1066 = vld [vmem:[%s1 + $0x1e8] sm:$0xff]
      %v1067 = vld [vmem:[%s1 + $0x1f0] sm:$0xff]
      %v1068 = vld [vmem:[%s1 + $0x1f8] sm:$0xff]
      %1069 = vmatprep.subr.mxu0 0.0
      %1070 = vmatpush1.msra.mxu0 %v1068
      %1071 = vmatprep.subr.mxu0 0.0
      %1072 = vmatpush1.msra.mxu0 %v1067
      %1073 = vmatprep.subr.mxu0 0.0
      %1074 = vmatpush1.msra.mxu0 %v1066
      %1075 = vmatprep.subr.mxu0 0.0
      %1076 = vmatpush1.msra.mxu0 %v1065
      %1077 = vmatprep.subr.mxu0 0.0
      %1078 = vmatpush1.msra.mxu0 %v1064
      %1079 = vmatprep.subr.mxu0 0.0
      %1080 = vmatpush1.msra.mxu0 %v1063
      %1081 = vmatprep.subr.mxu0 0.0
      %1082 = vmatpush1.msra.mxu0 %v1062
      %1083 = vmatprep.subr.mxu0 0.0
      %1084 = vmatpush1.msra.mxu0 %v1061
      %1085 = vmatprep.subr.mxu0 0.0
      %1086 = vmatpush1.msra.mxu0 %v1060
      %1087 = vmatprep.subr.mxu0 0.0
      %1088 = vmatpush1.msra.mxu0 %v1059
      %1089 = vmatprep.subr.mxu0 0.0
      %1090 = vmatpush1.msra.mxu0 %v1058
      %1091 = vmatprep.subr.mxu0 0.0
      %1092 = vmatpush1.msra.mxu0 %v1057
      %1093 = vmatprep.subr.mxu0 0.0
      %1094 = vmatpush1.msra.mxu0 %v1056
      %1095 = vmatprep.subr.mxu0 0.0
      %1096 = vmatpush1.msra.mxu0 %v1055
      %1097 = vmatprep.subr.mxu0 0.0
      %1098 = vmatpush1.msra.mxu0 %v1054
      %1099 = vmatprep.subr.mxu0 0.0
      %1100 = vmatpush1.msra.mxu0 %v1053
      %1101 = vmatprep.subr.mxu0 0.0
      %1102 = vmatpush2.msra.mxu0 0.0
      %1103 = vmatprep.subr.mxu0 0.0
      %1104 = vmatpush2.msra.mxu0 0.0
      %1105 = vmatprep.subr.mxu0 0.0
      %1106 = vmatpush2.msra.mxu0 0.0
      %1107 = vmatprep.subr.mxu0 0.0
      %1108 = vmatpush2.msra.mxu0 0.0
      %1109 = vmatprep.subr.mxu0 0.0
      %1110 = vmatpush2.msra.mxu0 0.0
      %1111 = vmatprep.subr.mxu0 0.0
      %1112 = vmatpush2.msra.mxu0 0.0
      %1113 = vmatprep.subr.mxu0 0.0
      %1114 = vmatpush2.msra.mxu0 0.0
      %1115 = vmatprep.subr.mxu0 0.0
      %1116 = vmatpush2.msra.mxu0 0.0
      %1117 = vmatprep.subr.mxu0 0.0
      %1118 = vmatpush2.msra.mxu0 0.0
      %1119 = vmatprep.subr.mxu0 0.0
      %1120 = vmatpush2.msra.mxu0 0.0
      %1121 = vmatprep.subr.mxu0 0.0
      %1122 = vmatpush2.msra.mxu0 0.0
      %1123 = vmatprep.subr.mxu0 0.0
      %1124 = vmatpush2.msra.mxu0 0.0
      %1125 = vmatprep.subr.mxu0 0.0
      %1126 = vmatpush2.msra.mxu0 0.0
      %1127 = vmatprep.subr.mxu0 0.0
      %1128 = vmatpush2.msra.mxu0 0.0
      %1129 = vmatprep.subr.mxu0 0.0
      %1130 = vmatpush2.msra.mxu0 0.0
      %1131 = vmatprep.subr.mxu0 0.0
      %1132 = vmatpush2.msra.mxu0 0.0
      %1133 = vmatprep.mubr.f32.mxu0 0.0
      %1134 = vmatmul.mubr.f32.gmra.mxu0 %v1021
      %v1135 = vpop.f32.mrf.mxu0
      %v1136 = vadd.f32 0.0, %v1135
      %v1137 = vpop.f32.mrf.mxu0
      %1138 = vmatprep.mubr.f32.mxu0 0.0
      %1139 = vmatmul.mubr.f32.gmra.mxu0 %v1022
      %v1140 = vpop.f32.mrf.mxu0
      %v1141 = vadd.f32 0.0, %v1140
      %v1142 = vpop.f32.mrf.mxu0
      %1143 = vmatprep.mubr.f32.mxu0 0.0
      %1144 = vmatmul.mubr.f32.gmra.mxu0 %v1023
      %v1145 = vpop.f32.mrf.mxu0
      %v1146 = vadd.f32 0.0, %v1145
      %v1147 = vpop.f32.mrf.mxu0
      %1148 = vmatprep.mubr.f32.mxu0 0.0
      %1149 = vmatmul.mubr.f32.gmra.mxu0 %v1024
      %v1150 = vpop.f32.mrf.mxu0
      %v1151 = vadd.f32 0.0, %v1150
      %v1152 = vpop.f32.mrf.mxu0
      %1153 = vmatprep.mubr.f32.mxu0 0.0
      %1154 = vmatmul.mubr.f32.gmra.mxu0 %v1025
      %v1155 = vpop.f32.mrf.mxu0
      %v1156 = vadd.f32 0.0, %v1155
      %v1157 = vpop.f32.mrf.mxu0
      %1158 = vmatprep.mubr.f32.mxu0 0.0
      %1159 = vmatmul.mubr.f32.gmra.mxu0 %v1026
      %v1160 = vpop.f32.mrf.mxu0
      %v1161 = vadd.f32 0.0, %v1160
      %v1162 = vpop.f32.mrf.mxu0
      %1163 = vmatprep.mubr.f32.mxu0 0.0
      %1164 = vmatmul.mubr.f32.gmra.mxu0 %v1027
      %v1165 = vpop.f32.mrf.mxu0
      %v1166 = vadd.f32 0.0, %v1165
      %v1167 = vpop.f32.mrf.mxu0
      %1168 = vmatprep.mubr.f32.mxu0 0.0
      %1169 = vmatmul.mubr.f32.gmra.mxu0 %v1028
      %v1170 = vpop.f32.mrf.mxu0
      %v1171 = vadd.f32 0.0, %v1170
      %v1172 = vpop.f32.mrf.mxu0
      %1173 = vmatprep.mubr.f32.mxu0 0.0
      %1174 = vmatmul.mubr.f32.gmra.mxu0 %v1029
      %v1175 = vpop.f32.mrf.mxu0
      %v1176 = vadd.f32 0.0, %v1175
      %v1177 = vpop.f32.mrf.mxu0
      %1178 = vmatprep.mubr.f32.mxu0 0.0
      %1179 = vmatmul.mubr.f32.gmra.mxu0 %v1030
      %v1180 = vpop.f32.mrf.mxu0
      %v1181 = vadd.f32 0.0, %v1180
      %v1182 = vpop.f32.mrf.mxu0
      %1183 = vmatprep.mubr.f32.mxu0 0.0
      %1184 = vmatmul.mubr.f32.gmra.mxu0 %v1031
      %v1185 = vpop.f32.mrf.mxu0
      %v1186 = vadd.f32 0.0, %v1185
      %v1187 = vpop.f32.mrf.mxu0
      %1188 = vmatprep.mubr.f32.mxu0 0.0
      %1189 = vmatmul.mubr.f32.gmra.mxu0 %v1032
      %v1190 = vpop.f32.mrf.mxu0
      %v1191 = vadd.f32 0.0, %v1190
      %v1192 = vpop.f32.mrf.mxu0
      %1193 = vmatprep.mubr.f32.mxu0 0.0
      %1194 = vmatmul.mubr.f32.gmra.mxu0 %v1033
      %v1195 = vpop.f32.mrf.mxu0
      %v1196 = vadd.f32 0.0, %v1195
      %v1197 = vpop.f32.mrf.mxu0
      %1198 = vmatprep.mubr.f32.mxu0 0.0
      %1199 = vmatmul.mubr.f32.gmra.mxu0 %v1034
      %v1200 = vpop.f32.mrf.mxu0
      %v1201 = vadd.f32 0.0, %v1200
      %v1202 = vpop.f32.mrf.mxu0
      %1203 = vmatprep.mubr.f32.mxu0 0.0
      %1204 = vmatmul.mubr.f32.gmra.mxu0 %v1035
      %v1205 = vpop.f32.mrf.mxu0
      %v1206 = vadd.f32 0.0, %v1205
      %v1207 = vpop.f32.mrf.mxu0
      %1208 = vmatprep.mubr.f32.mxu0 0.0
      %1209 = vmatmul.mubr.f32.gmra.mxu0 %v1036
      %v1210 = vpop.f32.mrf.mxu0
      %v1211 = vadd.f32 0.0, %v1210
      %v1212 = vpop.f32.mrf.mxu0
      %1213 = vmatprep.mubr.f32.mxu0 0.0
      %1214 = vmatmul.mubr.f32.gmra.mxu0 %v1037
      %v1215 = vpop.f32.mrf.mxu0
      %v1216 = vadd.f32 0.0, %v1215
      %v1217 = vpop.f32.mrf.mxu0
      %1218 = vmatprep.mubr.f32.mxu0 0.0
      %1219 = vmatmul.mubr.f32.gmra.mxu0 %v1038
      %v1220 = vpop.f32.mrf.mxu0
      %v1221 = vadd.f32 0.0, %v1220
      %v1222 = vpop.f32.mrf.mxu0
      %1223 = vmatprep.mubr.f32.mxu0 0.0
      %1224 = vmatmul.mubr.f32.gmra.mxu0 %v1039
      %v1225 = vpop.f32.mrf.mxu0
      %v1226 = vadd.f32 0.0, %v1225
      %v1227 = vpop.f32.mrf.mxu0
      %1228 = vmatprep.mubr.f32.mxu0 0.0
      %1229 = vmatmul.mubr.f32.gmra.mxu0 %v1040
      %v1230 = vpop.f32.mrf.mxu0
      %v1231 = vadd.f32 0.0, %v1230
      %v1232 = vpop.f32.mrf.mxu0
      %1233 = vmatprep.mubr.f32.mxu0 0.0
      %1234 = vmatmul.mubr.f32.gmra.mxu0 %v1041
      %v1235 = vpop.f32.mrf.mxu0
      %v1236 = vadd.f32 0.0, %v1235
      %v1237 = vpop.f32.mrf.mxu0
      %1238 = vmatprep.mubr.f32.mxu0 0.0
      %1239 = vmatmul.mubr.f32.gmra.mxu0 %v1042
      %v1240 = vpop.f32.mrf.mxu0
      %v1241 = vadd.f32 0.0, %v1240
      %v1242 = vpop.f32.mrf.mxu0
      %1243 = vmatprep.mubr.f32.mxu0 0.0
      %1244 = vmatmul.mubr.f32.gmra.mxu0 %v1043
      %v1245 = vpop.f32.mrf.mxu0
      %v1246 = vadd.f32 0.0, %v1245
      %v1247 = vpop.f32.mrf.mxu0
      %1248 = vmatprep.mubr.f32.mxu0 0.0
      %1249 = vmatmul.mubr.f32.gmra.mxu0 %v1044
      %v1250 = vpop.f32.mrf.mxu0
      %v1251 = vadd.f32 0.0, %v1250
      %v1252 = vpop.f32.mrf.mxu0
      %1253 = vmatprep.mubr.f32.mxu0 0.0
      %1254 = vmatmul.mubr.f32.gmra.mxu0 %v1045
      %v1255 = vpop.f32.mrf.mxu0
      %v1256 = vadd.f32 0.0, %v1255
      %v1257 = vpop.f32.mrf.mxu0
      %1258 = vmatprep.mubr.f32.mxu0 0.0
      %1259 = vmatmul.mubr.f32.gmra.mxu0 %v1046
      %v1260 = vpop.f32.mrf.mxu0
      %v1261 = vadd.f32 0.0, %v1260
      %v1262 = vpop.f32.mrf.mxu0
      %1263 = vmatprep.mubr.f32.mxu0 0.0
      %1264 = vmatmul.mubr.f32.gmra.mxu0 %v1047
      %v1265 = vpop.f32.mrf.mxu0
      %v1266 = vadd.f32 0.0, %v1265
      %v1267 = vpop.f32.mrf.mxu0
      %1268 = vmatprep.mubr.f32.mxu0 0.0
      %1269 = vmatmul.mubr.f32.gmra.mxu0 %v1048
      %v1270 = vpop.f32.mrf.mxu0
      %v1271 = vadd.f32 0.0, %v1270
      %v1272 = vpop.f32.mrf.mxu0
      %1273 = vmatprep.mubr.f32.mxu0 0.0
      %1274 = vmatmul.mubr.f32.gmra.mxu0 %v1049
      %v1275 = vpop.f32.mrf.mxu0
      %v1276 = vadd.f32 0.0, %v1275
      %v1277 = vpop.f32.mrf.mxu0
      %1278 = vmatprep.mubr.f32.mxu0 0.0
      %1279 = vmatmul.mubr.f32.gmra.mxu0 %v1050
      %v1280 = vpop.f32.mrf.mxu0
      %v1281 = vadd.f32 0.0, %v1280
      %v1282 = vpop.f32.mrf.mxu0
      %1283 = vmatprep.mubr.f32.mxu0 0.0
      %1284 = vmatmul.mubr.f32.gmra.mxu0 %v1051
      %v1285 = vpop.f32.mrf.mxu0
      %v1286 = vadd.f32 0.0, %v1285
      %v1287 = vpop.f32.mrf.mxu0
      %1288 = vmatprep.mubr.f32.mxu0 0.0
      %1289 = vmatmul.mubr.f32.gmra.mxu0 %v1052
      %v1290 = vpop.f32.mrf.mxu0
      %v1291 = vadd.f32 0.0, %v1290
      %v1292 = vpop.f32.mrf.mxu0
      %1293 = vdwg.mxu0
      %v1294 = vadd.f32 %v988, %v1136
      %v1295 = vadd.f32 %v989, %v1141
      %v1296 = vadd.f32 %v990, %v1146
      %v1297 = vadd.f32 %v991, %v1151
      %v1298 = vadd.f32 %v992, %v1156
      %v1299 = vadd.f32 %v993, %v1161
      %v1300 = vadd.f32 %v994, %v1166
      %v1301 = vadd.f32 %v995, %v1171
      %v1302 = vadd.f32 %v996, %v1176
      %v1303 = vadd.f32 %v997, %v1181
      %v1304 = vadd.f32 %v998, %v1186
      %v1305 = vadd.f32 %v999, %v1191
      %v1306 = vadd.f32 %v1000, %v1196
      %v1307 = vadd.f32 %v1001, %v1201
      %v1308 = vadd.f32 %v1002, %v1206
      %v1309 = vadd.f32 %v1003, %v1211
      %v1310 = vadd.f32 %v1004, %v1216
      %v1311 = vadd.f32 %v1005, %v1221
      %v1312 = vadd.f32 %v1006, %v1226
      %v1313 = vadd.f32 %v1007, %v1231
      %v1314 = vadd.f32 %v1008, %v1236
      %v1315 = vadd.f32 %v1009, %v1241
      %v1316 = vadd.f32 %v1010, %v1246
      %v1317 = vadd.f32 %v1011, %v1251
      %v1318 = vadd.f32 %v1012, %v1256
      %v1319 = vadd.f32 %v1013, %v1261
      %v1320 = vadd.f32 %v1014, %v1266
      %v1321 = vadd.f32 %v1015, %v1271
      %v1322 = vadd.f32 %v1016, %v1276
      %v1323 = vadd.f32 %v1017, %v1281
      %v1324 = vadd.f32 %v1018, %v1286
      %v1325 = vadd.f32 %v1019, %v1291
      %v1326 = vld [vmem:[%s1020 + $0x1] sm:$0xff]
      %v1327 = vld [vmem:[%s1020 + $0x9] sm:$0xff]
      %v1328 = vld [vmem:[%s1020 + $0x19] sm:$0xff]
      %v1329 = vld [vmem:[%s1020 + $0x21] sm:$0xff]
      %v1330 = vld [vmem:[%s1020 + $0x31] sm:$0xff]
      %v1331 = vld [vmem:[%s1020 + $0x39] sm:$0xff]
      %v1332 = vld [vmem:[%s1020 + $0x49] sm:$0xff]
      %v1333 = vld [vmem:[%s1020 + $0x51] sm:$0xff]
      %v1334 = vld [vmem:[%s1020 + $0x61] sm:$0xff]
      %v1335 = vld [vmem:[%s1020 + $0x69] sm:$0xff]
      %v1336 = vld [vmem:[%s1020 + $0x79] sm:$0xff]
      %v1337 = vld [vmem:[%s1020 + $0x81] sm:$0xff]
      %v1338 = vld [vmem:[%s1020 + $0x91] sm:$0xff]
      %v1339 = vld [vmem:[%s1020 + $0x99] sm:$0xff]
      %v1340 = vld [vmem:[%s1020 + $0xa9] sm:$0xff]
      %v1341 = vld [vmem:[%s1020 + $0xb1] sm:$0xff]
      %v1342 = vld [vmem:[%s1020 + $0xc1] sm:$0xff]
      %v1343 = vld [vmem:[%s1020 + $0xc9] sm:$0xff]
      %v1344 = vld [vmem:[%s1020 + $0xd9] sm:$0xff]
      %v1345 = vld [vmem:[%s1020 + $0xe1] sm:$0xff]
      %v1346 = vld [vmem:[%s1020 + $0xf1] sm:$0xff]
      %v1347 = vld [vmem:[%s1020 + $0xf9] sm:$0xff]
      %v1348 = vld [vmem:[%s1020 + $0x109] sm:$0xff]
      %v1349 = vld [vmem:[%s1020 + $0x111] sm:$0xff]
      %v1350 = vld [vmem:[%s1020 + $0x121] sm:$0xff]
      %v1351 = vld [vmem:[%s1020 + $0x129] sm:$0xff]
      %v1352 = vld [vmem:[%s1020 + $0x139] sm:$0xff]
      %v1353 = vld [vmem:[%s1020 + $0x141] sm:$0xff]
      %v1354 = vld [vmem:[%s1020 + $0x151] sm:$0xff]
      %v1355 = vld [vmem:[%s1020 + $0x159] sm:$0xff]
      %v1356 = vld [vmem:[%s1020 + $0x169] sm:$0xff]
      %v1357 = vld [vmem:[%s1020 + $0x171] sm:$0xff]
      %v1358 = vld [vmem:[%s1 + $0x200] sm:$0xff]
      %v1359 = vld [vmem:[%s1 + $0x208] sm:$0xff]
      %v1360 = vld [vmem:[%s1 + $0x210] sm:$0xff]
      %v1361 = vld [vmem:[%s1 + $0x218] sm:$0xff]
      %v1362 = vld [vmem:[%s1 + $0x220] sm:$0xff]
      %v1363 = vld [vmem:[%s1 + $0x228] sm:$0xff]
      %v1364 = vld [vmem:[%s1 + $0x230] sm:$0xff]
      %v1365 = vld [vmem:[%s1 + $0x238] sm:$0xff]
      %v1366 = vld [vmem:[%s1 + $0x240] sm:$0xff]
      %v1367 = vld [vmem:[%s1 + $0x248] sm:$0xff]
      %v1368 = vld [vmem:[%s1 + $0x250] sm:$0xff]
      %v1369 = vld [vmem:[%s1 + $0x258] sm:$0xff]
      %v1370 = vld [vmem:[%s1 + $0x260] sm:$0xff]
      %v1371 = vld [vmem:[%s1 + $0x268] sm:$0xff]
      %v1372 = vld [vmem:[%s1 + $0x270] sm:$0xff]
      %v1373 = vld [vmem:[%s1 + $0x278] sm:$0xff]
      %1374 = vmatprep.subr.mxu0 0.0
      %1375 = vmatpush1.msra.mxu0 %v1373
      %1376 = vmatprep.subr.mxu0 0.0
      %1377 = vmatpush1.msra.mxu0 %v1372
      %1378 = vmatprep.subr.mxu0 0.0
      %1379 = vmatpush1.msra.mxu0 %v1371
      %1380 = vmatprep.subr.mxu0 0.0
      %1381 = vmatpush1.msra.mxu0 %v1370
      %1382 = vmatprep.subr.mxu0 0.0
      %1383 = vmatpush1.msra.mxu0 %v1369
      %1384 = vmatprep.subr.mxu0 0.0
      %1385 = vmatpush1.msra.mxu0 %v1368
      %1386 = vmatprep.subr.mxu0 0.0
      %1387 = vmatpush1.msra.mxu0 %v1367
      %1388 = vmatprep.subr.mxu0 0.0
      %1389 = vmatpush1.msra.mxu0 %v1366
      %1390 = vmatprep.subr.mxu0 0.0
      %1391 = vmatpush1.msra.mxu0 %v1365
      %1392 = vmatprep.subr.mxu0 0.0
      %1393 = vmatpush1.msra.mxu0 %v1364
      %1394 = vmatprep.subr.mxu0 0.0
      %1395 = vmatpush1.msra.mxu0 %v1363
      %1396 = vmatprep.subr.mxu0 0.0
      %1397 = vmatpush1.msra.mxu0 %v1362
      %1398 = vmatprep.subr.mxu0 0.0
      %1399 = vmatpush1.msra.mxu0 %v1361
      %1400 = vmatprep.subr.mxu0 0.0
      %1401 = vmatpush1.msra.mxu0 %v1360
      %1402 = vmatprep.subr.mxu0 0.0
      %1403 = vmatpush1.msra.mxu0 %v1359
      %1404 = vmatprep.subr.mxu0 0.0
      %1405 = vmatpush1.msra.mxu0 %v1358
      %1406 = vmatprep.subr.mxu0 0.0
      %1407 = vmatpush2.msra.mxu0 0.0
      %1408 = vmatprep.subr.mxu0 0.0
      %1409 = vmatpush2.msra.mxu0 0.0
      %1410 = vmatprep.subr.mxu0 0.0
      %1411 = vmatpush2.msra.mxu0 0.0
      %1412 = vmatprep.subr.mxu0 0.0
      %1413 = vmatpush2.msra.mxu0 0.0
      %1414 = vmatprep.subr.mxu0 0.0
      %1415 = vmatpush2.msra.mxu0 0.0
      %1416 = vmatprep.subr.mxu0 0.0
      %1417 = vmatpush2.msra.mxu0 0.0
      %1418 = vmatprep.subr.mxu0 0.0
      %1419 = vmatpush2.msra.mxu0 0.0
      %1420 = vmatprep.subr.mxu0 0.0
      %1421 = vmatpush2.msra.mxu0 0.0
      %1422 = vmatprep.subr.mxu0 0.0
      %1423 = vmatpush2.msra.mxu0 0.0
      %1424 = vmatprep.subr.mxu0 0.0
      %1425 = vmatpush2.msra.mxu0 0.0
      %1426 = vmatprep.subr.mxu0 0.0
      %1427 = vmatpush2.msra.mxu0 0.0
      %1428 = vmatprep.subr.mxu0 0.0
      %1429 = vmatpush2.msra.mxu0 0.0
      %1430 = vmatprep.subr.mxu0 0.0
      %1431 = vmatpush2.msra.mxu0 0.0
      %1432 = vmatprep.subr.mxu0 0.0
      %1433 = vmatpush2.msra.mxu0 0.0
      %1434 = vmatprep.subr.mxu0 0.0
      %1435 = vmatpush2.msra.mxu0 0.0
      %1436 = vmatprep.subr.mxu0 0.0
      %1437 = vmatpush2.msra.mxu0 0.0
      %1438 = vmatprep.mubr.f32.mxu0 0.0
      %1439 = vmatmul.mubr.f32.gmra.mxu0 %v1326
      %v1440 = vpop.f32.mrf.mxu0
      %v1441 = vadd.f32 0.0, %v1440
      %v1442 = vpop.f32.mrf.mxu0
      %1443 = vmatprep.mubr.f32.mxu0 0.0
      %1444 = vmatmul.mubr.f32.gmra.mxu0 %v1327
      %v1445 = vpop.f32.mrf.mxu0
      %v1446 = vadd.f32 0.0, %v1445
      %v1447 = vpop.f32.mrf.mxu0
      %1448 = vmatprep.mubr.f32.mxu0 0.0
      %1449 = vmatmul.mubr.f32.gmra.mxu0 %v1328
      %v1450 = vpop.f32.mrf.mxu0
      %v1451 = vadd.f32 0.0, %v1450
      %v1452 = vpop.f32.mrf.mxu0
      %1453 = vmatprep.mubr.f32.mxu0 0.0
      %1454 = vmatmul.mubr.f32.gmra.mxu0 %v1329
      %v1455 = vpop.f32.mrf.mxu0
      %v1456 = vadd.f32 0.0, %v1455
      %v1457 = vpop.f32.mrf.mxu0
      %1458 = vmatprep.mubr.f32.mxu0 0.0
      %1459 = vmatmul.mubr.f32.gmra.mxu0 %v1330
      %v1460 = vpop.f32.mrf.mxu0
      %v1461 = vadd.f32 0.0, %v1460
      %v1462 = vpop.f32.mrf.mxu0
      %1463 = vmatprep.mubr.f32.mxu0 0.0
      %1464 = vmatmul.mubr.f32.gmra.mxu0 %v1331
      %v1465 = vpop.f32.mrf.mxu0
      %v1466 = vadd.f32 0.0, %v1465
      %v1467 = vpop.f32.mrf.mxu0
      %1468 = vmatprep.mubr.f32.mxu0 0.0
      %1469 = vmatmul.mubr.f32.gmra.mxu0 %v1332
      %v1470 = vpop.f32.mrf.mxu0
      %v1471 = vadd.f32 0.0, %v1470
      %v1472 = vpop.f32.mrf.mxu0
      %1473 = vmatprep.mubr.f32.mxu0 0.0
      %1474 = vmatmul.mubr.f32.gmra.mxu0 %v1333
      %v1475 = vpop.f32.mrf.mxu0
      %v1476 = vadd.f32 0.0, %v1475
      %v1477 = vpop.f32.mrf.mxu0
      %1478 = vmatprep.mubr.f32.mxu0 0.0
      %1479 = vmatmul.mubr.f32.gmra.mxu0 %v1334
      %v1480 = vpop.f32.mrf.mxu0
      %v1481 = vadd.f32 0.0, %v1480
      %v1482 = vpop.f32.mrf.mxu0
      %1483 = vmatprep.mubr.f32.mxu0 0.0
      %1484 = vmatmul.mubr.f32.gmra.mxu0 %v1335
      %v1485 = vpop.f32.mrf.mxu0
      %v1486 = vadd.f32 0.0, %v1485
      %v1487 = vpop.f32.mrf.mxu0
      %1488 = vmatprep.mubr.f32.mxu0 0.0
      %1489 = vmatmul.mubr.f32.gmra.mxu0 %v1336
      %v1490 = vpop.f32.mrf.mxu0
      %v1491 = vadd.f32 0.0, %v1490
      %v1492 = vpop.f32.mrf.mxu0
      %1493 = vmatprep.mubr.f32.mxu0 0.0
      %1494 = vmatmul.mubr.f32.gmra.mxu0 %v1337
      %v1495 = vpop.f32.mrf.mxu0
      %v1496 = vadd.f32 0.0, %v1495
      %v1497 = vpop.f32.mrf.mxu0
      %1498 = vmatprep.mubr.f32.mxu0 0.0
      %1499 = vmatmul.mubr.f32.gmra.mxu0 %v1338
      %v1500 = vpop.f32.mrf.mxu0
      %v1501 = vadd.f32 0.0, %v1500
      %v1502 = vpop.f32.mrf.mxu0
      %1503 = vmatprep.mubr.f32.mxu0 0.0
      %1504 = vmatmul.mubr.f32.gmra.mxu0 %v1339
      %v1505 = vpop.f32.mrf.mxu0
      %v1506 = vadd.f32 0.0, %v1505
      %v1507 = vpop.f32.mrf.mxu0
      %1508 = vmatprep.mubr.f32.mxu0 0.0
      %1509 = vmatmul.mubr.f32.gmra.mxu0 %v1340
      %v1510 = vpop.f32.mrf.mxu0
      %v1511 = vadd.f32 0.0, %v1510
      %v1512 = vpop.f32.mrf.mxu0
      %1513 = vmatprep.mubr.f32.mxu0 0.0
      %1514 = vmatmul.mubr.f32.gmra.mxu0 %v1341
      %v1515 = vpop.f32.mrf.mxu0
      %v1516 = vadd.f32 0.0, %v1515
      %v1517 = vpop.f32.mrf.mxu0
      %1518 = vmatprep.mubr.f32.mxu0 0.0
      %1519 = vmatmul.mubr.f32.gmra.mxu0 %v1342
      %v1520 = vpop.f32.mrf.mxu0
      %v1521 = vadd.f32 0.0, %v1520
      %v1522 = vpop.f32.mrf.mxu0
      %1523 = vmatprep.mubr.f32.mxu0 0.0
      %1524 = vmatmul.mubr.f32.gmra.mxu0 %v1343
      %v1525 = vpop.f32.mrf.mxu0
      %v1526 = vadd.f32 0.0, %v1525
      %v1527 = vpop.f32.mrf.mxu0
      %1528 = vmatprep.mubr.f32.mxu0 0.0
      %1529 = vmatmul.mubr.f32.gmra.mxu0 %v1344
      %v1530 = vpop.f32.mrf.mxu0
      %v1531 = vadd.f32 0.0, %v1530
      %v1532 = vpop.f32.mrf.mxu0
      %1533 = vmatprep.mubr.f32.mxu0 0.0
      %1534 = vmatmul.mubr.f32.gmra.mxu0 %v1345
      %v1535 = vpop.f32.mrf.mxu0
      %v1536 = vadd.f32 0.0, %v1535
      %v1537 = vpop.f32.mrf.mxu0
      %1538 = vmatprep.mubr.f32.mxu0 0.0
      %1539 = vmatmul.mubr.f32.gmra.mxu0 %v1346
      %v1540 = vpop.f32.mrf.mxu0
      %v1541 = vadd.f32 0.0, %v1540
      %v1542 = vpop.f32.mrf.mxu0
      %1543 = vmatprep.mubr.f32.mxu0 0.0
      %1544 = vmatmul.mubr.f32.gmra.mxu0 %v1347
      %v1545 = vpop.f32.mrf.mxu0
      %v1546 = vadd.f32 0.0, %v1545
      %v1547 = vpop.f32.mrf.mxu0
      %1548 = vmatprep.mubr.f32.mxu0 0.0
      %1549 = vmatmul.mubr.f32.gmra.mxu0 %v1348
      %v1550 = vpop.f32.mrf.mxu0
      %v1551 = vadd.f32 0.0, %v1550
      %v1552 = vpop.f32.mrf.mxu0
      %1553 = vmatprep.mubr.f32.mxu0 0.0
      %1554 = vmatmul.mubr.f32.gmra.mxu0 %v1349
      %v1555 = vpop.f32.mrf.mxu0
      %v1556 = vadd.f32 0.0, %v1555
      %v1557 = vpop.f32.mrf.mxu0
      %1558 = vmatprep.mubr.f32.mxu0 0.0
      %1559 = vmatmul.mubr.f32.gmra.mxu0 %v1350
      %v1560 = vpop.f32.mrf.mxu0
      %v1561 = vadd.f32 0.0, %v1560
      %v1562 = vpop.f32.mrf.mxu0
      %1563 = vmatprep.mubr.f32.mxu0 0.0
      %1564 = vmatmul.mubr.f32.gmra.mxu0 %v1351
      %v1565 = vpop.f32.mrf.mxu0
      %v1566 = vadd.f32 0.0, %v1565
      %v1567 = vpop.f32.mrf.mxu0
      %1568 = vmatprep.mubr.f32.mxu0 0.0
      %1569 = vmatmul.mubr.f32.gmra.mxu0 %v1352
      %v1570 = vpop.f32.mrf.mxu0
      %v1571 = vadd.f32 0.0, %v1570
      %v1572 = vpop.f32.mrf.mxu0
      %1573 = vmatprep.mubr.f32.mxu0 0.0
      %1574 = vmatmul.mubr.f32.gmra.mxu0 %v1353
      %v1575 = vpop.f32.mrf.mxu0
      %v1576 = vadd.f32 0.0, %v1575
      %v1577 = vpop.f32.mrf.mxu0
      %1578 = vmatprep.mubr.f32.mxu0 0.0
      %1579 = vmatmul.mubr.f32.gmra.mxu0 %v1354
      %v1580 = vpop.f32.mrf.mxu0
      %v1581 = vadd.f32 0.0, %v1580
      %v1582 = vpop.f32.mrf.mxu0
      %1583 = vmatprep.mubr.f32.mxu0 0.0
      %1584 = vmatmul.mubr.f32.gmra.mxu0 %v1355
      %v1585 = vpop.f32.mrf.mxu0
      %v1586 = vadd.f32 0.0, %v1585
      %v1587 = vpop.f32.mrf.mxu0
      %1588 = vmatprep.mubr.f32.mxu0 0.0
      %1589 = vmatmul.mubr.f32.gmra.mxu0 %v1356
      %v1590 = vpop.f32.mrf.mxu0
      %v1591 = vadd.f32 0.0, %v1590
      %v1592 = vpop.f32.mrf.mxu0
      %1593 = vmatprep.mubr.f32.mxu0 0.0
      %1594 = vmatmul.mubr.f32.gmra.mxu0 %v1357
      %v1595 = vpop.f32.mrf.mxu0
      %v1596 = vadd.f32 0.0, %v1595
      %v1597 = vpop.f32.mrf.mxu0
      %1598 = vdwg.mxu0
      %v1599 = vadd.f32 %v1294, %v1441
      %v1600 = vadd.f32 %v1295, %v1446
      %v1601 = vadd.f32 %v1296, %v1451
      %v1602 = vadd.f32 %v1297, %v1456
      %v1603 = vadd.f32 %v1298, %v1461
      %v1604 = vadd.f32 %v1299, %v1466
      %v1605 = vadd.f32 %v1300, %v1471
      %v1606 = vadd.f32 %v1301, %v1476
      %v1607 = vadd.f32 %v1302, %v1481
      %v1608 = vadd.f32 %v1303, %v1486
      %v1609 = vadd.f32 %v1304, %v1491
      %v1610 = vadd.f32 %v1305, %v1496
      %v1611 = vadd.f32 %v1306, %v1501
      %v1612 = vadd.f32 %v1307, %v1506
      %v1613 = vadd.f32 %v1308, %v1511
      %v1614 = vadd.f32 %v1309, %v1516
      %v1615 = vadd.f32 %v1310, %v1521
      %v1616 = vadd.f32 %v1311, %v1526
      %v1617 = vadd.f32 %v1312, %v1531
      %v1618 = vadd.f32 %v1313, %v1536
      %v1619 = vadd.f32 %v1314, %v1541
      %v1620 = vadd.f32 %v1315, %v1546
      %v1621 = vadd.f32 %v1316, %v1551
      %v1622 = vadd.f32 %v1317, %v1556
      %v1623 = vadd.f32 %v1318, %v1561
      %v1624 = vadd.f32 %v1319, %v1566
      %v1625 = vadd.f32 %v1320, %v1571
      %v1626 = vadd.f32 %v1321, %v1576
      %v1627 = vadd.f32 %v1322, %v1581
      %v1628 = vadd.f32 %v1323, %v1586
      %v1629 = vadd.f32 %v1324, %v1591
      %v1630 = vadd.f32 %v1325, %v1596
      %v1631 = vld [vmem:[%s1020 + $0x2] sm:$0xff]
      %v1632 = vld [vmem:[%s1020 + $0xa] sm:$0xff]
      %v1633 = vld [vmem:[%s1020 + $0x1a] sm:$0xff]
      %v1634 = vld [vmem:[%s1020 + $0x22] sm:$0xff]
      %v1635 = vld [vmem:[%s1020 + $0x32] sm:$0xff]
      %v1636 = vld [vmem:[%s1020 + $0x3a] sm:$0xff]
      %v1637 = vld [vmem:[%s1020 + $0x4a] sm:$0xff]
      %v1638 = vld [vmem:[%s1020 + $0x52] sm:$0xff]
      %v1639 = vld [vmem:[%s1020 + $0x62] sm:$0xff]
      %v1640 = vld [vmem:[%s1020 + $0x6a] sm:$0xff]
      %v1641 = vld [vmem:[%s1020 + $0x7a] sm:$0xff]
      %v1642 = vld [vmem:[%s1020 + $0x82] sm:$0xff]
      %v1643 = vld [vmem:[%s1020 + $0x92] sm:$0xff]
      %v1644 = vld [vmem:[%s1020 + $0x9a] sm:$0xff]
      %v1645 = vld [vmem:[%s1020 + $0xaa] sm:$0xff]
      %v1646 = vld [vmem:[%s1020 + $0xb2] sm:$0xff]
      %v1647 = vld [vmem:[%s1020 + $0xc2] sm:$0xff]
      %v1648 = vld [vmem:[%s1020 + $0xca] sm:$0xff]
      %v1649 = vld [vmem:[%s1020 + $0xda] sm:$0xff]
      %v1650 = vld [vmem:[%s1020 + $0xe2] sm:$0xff]
      %v1651 = vld [vmem:[%s1020 + $0xf2] sm:$0xff]
      %v1652 = vld [vmem:[%s1020 + $0xfa] sm:$0xff]
      %v1653 = vld [vmem:[%s1020 + $0x10a] sm:$0xff]
      %v1654 = vld [vmem:[%s1020 + $0x112] sm:$0xff]
      %v1655 = vld [vmem:[%s1020 + $0x122] sm:$0xff]
      %v1656 = vld [vmem:[%s1020 + $0x12a] sm:$0xff]
      %v1657 = vld [vmem:[%s1020 + $0x13a] sm:$0xff]
      %v1658 = vld [vmem:[%s1020 + $0x142] sm:$0xff]
      %v1659 = vld [vmem:[%s1020 + $0x152] sm:$0xff]
      %v1660 = vld [vmem:[%s1020 + $0x15a] sm:$0xff]
      %v1661 = vld [vmem:[%s1020 + $0x16a] sm:$0xff]
      %v1662 = vld [vmem:[%s1020 + $0x172] sm:$0xff]
      %v1663 = vld [vmem:[%s1 + $0x280] sm:$0xff]
      %v1664 = vld [vmem:[%s1 + $0x288] sm:$0xff]
      %v1665 = vld [vmem:[%s1 + $0x290] sm:$0xff]
      %v1666 = vld [vmem:[%s1 + $0x298] sm:$0xff]
      %v1667 = vld [vmem:[%s1 + $0x2a0] sm:$0xff]
      %v1668 = vld [vmem:[%s1 + $0x2a8] sm:$0xff]
      %v1669 = vld [vmem:[%s1 + $0x2b0] sm:$0xff]
      %v1670 = vld [vmem:[%s1 + $0x2b8] sm:$0xff]
      %v1671 = vld [vmem:[%s1 + $0x2c0] sm:$0xff]
      %v1672 = vld [vmem:[%s1 + $0x2c8] sm:$0xff]
      %v1673 = vld [vmem:[%s1 + $0x2d0] sm:$0xff]
      %v1674 = vld [vmem:[%s1 + $0x2d8] sm:$0xff]
      %v1675 = vld [vmem:[%s1 + $0x2e0] sm:$0xff]
      %v1676 = vld [vmem:[%s1 + $0x2e8] sm:$0xff]
      %v1677 = vld [vmem:[%s1 + $0x2f0] sm:$0xff]
      %v1678 = vld [vmem:[%s1 + $0x2f8] sm:$0xff]
      %1679 = vmatprep.subr.mxu0 0.0
      %1680 = vmatpush1.msra.mxu0 %v1678
      %1681 = vmatprep.subr.mxu0 0.0
      %1682 = vmatpush1.msra.mxu0 %v1677
      %1683 = vmatprep.subr.mxu0 0.0
      %1684 = vmatpush1.msra.mxu0 %v1676
      %1685 = vmatprep.subr.mxu0 0.0
      %1686 = vmatpush1.msra.mxu0 %v1675
      %1687 = vmatprep.subr.mxu0 0.0
      %1688 = vmatpush1.msra.mxu0 %v1674
      %1689 = vmatprep.subr.mxu0 0.0
      %1690 = vmatpush1.msra.mxu0 %v1673
      %1691 = vmatprep.subr.mxu0 0.0
      %1692 = vmatpush1.msra.mxu0 %v1672
      %1693 = vmatprep.subr.mxu0 0.0
      %1694 = vmatpush1.msra.mxu0 %v1671
      %1695 = vmatprep.subr.mxu0 0.0
      %1696 = vmatpush1.msra.mxu0 %v1670
      %1697 = vmatprep.subr.mxu0 0.0
      %1698 = vmatpush1.msra.mxu0 %v1669
      %1699 = vmatprep.subr.mxu0 0.0
      %1700 = vmatpush1.msra.mxu0 %v1668
      %1701 = vmatprep.subr.mxu0 0.0
      %1702 = vmatpush1.msra.mxu0 %v1667
      %1703 = vmatprep.subr.mxu0 0.0
      %1704 = vmatpush1.msra.mxu0 %v1666
      %1705 = vmatprep.subr.mxu0 0.0
      %1706 = vmatpush1.msra.mxu0 %v1665
      %1707 = vmatprep.subr.mxu0 0.0
      %1708 = vmatpush1.msra.mxu0 %v1664
      %1709 = vmatprep.subr.mxu0 0.0
      %1710 = vmatpush1.msra.mxu0 %v1663
      %1711 = vmatprep.subr.mxu0 0.0
      %1712 = vmatpush2.msra.mxu0 0.0
      %1713 = vmatprep.subr.mxu0 0.0
      %1714 = vmatpush2.msra.mxu0 0.0
      %1715 = vmatprep.subr.mxu0 0.0
      %1716 = vmatpush2.msra.mxu0 0.0
      %1717 = vmatprep.subr.mxu0 0.0
      %1718 = vmatpush2.msra.mxu0 0.0
      %1719 = vmatprep.subr.mxu0 0.0
      %1720 = vmatpush2.msra.mxu0 0.0
      %1721 = vmatprep.subr.mxu0 0.0
      %1722 = vmatpush2.msra.mxu0 0.0
      %1723 = vmatprep.subr.mxu0 0.0
      %1724 = vmatpush2.msra.mxu0 0.0
      %1725 = vmatprep.subr.mxu0 0.0
      %1726 = vmatpush2.msra.mxu0 0.0
      %1727 = vmatprep.subr.mxu0 0.0
      %1728 = vmatpush2.msra.mxu0 0.0
      %1729 = vmatprep.subr.mxu0 0.0
      %1730 = vmatpush2.msra.mxu0 0.0
      %1731 = vmatprep.subr.mxu0 0.0
      %1732 = vmatpush2.msra.mxu0 0.0
      %1733 = vmatprep.subr.mxu0 0.0
      %1734 = vmatpush2.msra.mxu0 0.0
      %1735 = vmatprep.subr.mxu0 0.0
      %1736 = vmatpush2.msra.mxu0 0.0
      %1737 = vmatprep.subr.mxu0 0.0
      %1738 = vmatpush2.msra.mxu0 0.0
      %1739 = vmatprep.subr.mxu0 0.0
      %1740 = vmatpush2.msra.mxu0 0.0
      %1741 = vmatprep.subr.mxu0 0.0
      %1742 = vmatpush2.msra.mxu0 0.0
      %1743 = vmatprep.mubr.f32.mxu0 0.0
      %1744 = vmatmul.mubr.f32.gmra.mxu0 %v1631
      %v1745 = vpop.f32.mrf.mxu0
      %v1746 = vadd.f32 0.0, %v1745
      %v1747 = vpop.f32.mrf.mxu0
      %1748 = vmatprep.mubr.f32.mxu0 0.0
      %1749 = vmatmul.mubr.f32.gmra.mxu0 %v1632
      %v1750 = vpop.f32.mrf.mxu0
      %v1751 = vadd.f32 0.0, %v1750
      %v1752 = vpop.f32.mrf.mxu0
      %1753 = vmatprep.mubr.f32.mxu0 0.0
      %1754 = vmatmul.mubr.f32.gmra.mxu0 %v1633
      %v1755 = vpop.f32.mrf.mxu0
      %v1756 = vadd.f32 0.0, %v1755
      %v1757 = vpop.f32.mrf.mxu0
      %1758 = vmatprep.mubr.f32.mxu0 0.0
      %1759 = vmatmul.mubr.f32.gmra.mxu0 %v1634
      %v1760 = vpop.f32.mrf.mxu0
      %v1761 = vadd.f32 0.0, %v1760
      %v1762 = vpop.f32.mrf.mxu0
      %1763 = vmatprep.mubr.f32.mxu0 0.0
      %1764 = vmatmul.mubr.f32.gmra.mxu0 %v1635
      %v1765 = vpop.f32.mrf.mxu0
      %v1766 = vadd.f32 0.0, %v1765
      %v1767 = vpop.f32.mrf.mxu0
      %1768 = vmatprep.mubr.f32.mxu0 0.0
      %1769 = vmatmul.mubr.f32.gmra.mxu0 %v1636
      %v1770 = vpop.f32.mrf.mxu0
      %v1771 = vadd.f32 0.0, %v1770
      %v1772 = vpop.f32.mrf.mxu0
      %1773 = vmatprep.mubr.f32.mxu0 0.0
      %1774 = vmatmul.mubr.f32.gmra.mxu0 %v1637
      %v1775 = vpop.f32.mrf.mxu0
      %v1776 = vadd.f32 0.0, %v1775
      %v1777 = vpop.f32.mrf.mxu0
      %1778 = vmatprep.mubr.f32.mxu0 0.0
      %1779 = vmatmul.mubr.f32.gmra.mxu0 %v1638
      %v1780 = vpop.f32.mrf.mxu0
      %v1781 = vadd.f32 0.0, %v1780
      %v1782 = vpop.f32.mrf.mxu0
      %1783 = vmatprep.mubr.f32.mxu0 0.0
      %1784 = vmatmul.mubr.f32.gmra.mxu0 %v1639
      %v1785 = vpop.f32.mrf.mxu0
      %v1786 = vadd.f32 0.0, %v1785
      %v1787 = vpop.f32.mrf.mxu0
      %1788 = vmatprep.mubr.f32.mxu0 0.0
      %1789 = vmatmul.mubr.f32.gmra.mxu0 %v1640
      %v1790 = vpop.f32.mrf.mxu0
      %v1791 = vadd.f32 0.0, %v1790
      %v1792 = vpop.f32.mrf.mxu0
      %1793 = vmatprep.mubr.f32.mxu0 0.0
      %1794 = vmatmul.mubr.f32.gmra.mxu0 %v1641
      %v1795 = vpop.f32.mrf.mxu0
      %v1796 = vadd.f32 0.0, %v1795
      %v1797 = vpop.f32.mrf.mxu0
      %1798 = vmatprep.mubr.f32.mxu0 0.0
      %1799 = vmatmul.mubr.f32.gmra.mxu0 %v1642
      %v1800 = vpop.f32.mrf.mxu0
      %v1801 = vadd.f32 0.0, %v1800
      %v1802 = vpop.f32.mrf.mxu0
      %1803 = vmatprep.mubr.f32.mxu0 0.0
      %1804 = vmatmul.mubr.f32.gmra.mxu0 %v1643
      %v1805 = vpop.f32.mrf.mxu0
      %v1806 = vadd.f32 0.0, %v1805
      %v1807 = vpop.f32.mrf.mxu0
      %1808 = vmatprep.mubr.f32.mxu0 0.0
      %1809 = vmatmul.mubr.f32.gmra.mxu0 %v1644
      %v1810 = vpop.f32.mrf.mxu0
      %v1811 = vadd.f32 0.0, %v1810
      %v1812 = vpop.f32.mrf.mxu0
      %1813 = vmatprep.mubr.f32.mxu0 0.0
      %1814 = vmatmul.mubr.f32.gmra.mxu0 %v1645
      %v1815 = vpop.f32.mrf.mxu0
      %v1816 = vadd.f32 0.0, %v1815
      %v1817 = vpop.f32.mrf.mxu0
      %1818 = vmatprep.mubr.f32.mxu0 0.0
      %1819 = vmatmul.mubr.f32.gmra.mxu0 %v1646
      %v1820 = vpop.f32.mrf.mxu0
      %v1821 = vadd.f32 0.0, %v1820
      %v1822 = vpop.f32.mrf.mxu0
      %1823 = vmatprep.mubr.f32.mxu0 0.0
      %1824 = vmatmul.mubr.f32.gmra.mxu0 %v1647
      %v1825 = vpop.f32.mrf.mxu0
      %v1826 = vadd.f32 0.0, %v1825
      %v1827 = vpop.f32.mrf.mxu0
      %1828 = vmatprep.mubr.f32.mxu0 0.0
      %1829 = vmatmul.mubr.f32.gmra.mxu0 %v1648
      %v1830 = vpop.f32.mrf.mxu0
      %v1831 = vadd.f32 0.0, %v1830
      %v1832 = vpop.f32.mrf.mxu0
      %1833 = vmatprep.mubr.f32.mxu0 0.0
      %1834 = vmatmul.mubr.f32.gmra.mxu0 %v1649
      %v1835 = vpop.f32.mrf.mxu0
      %v1836 = vadd.f32 0.0, %v1835
      %v1837 = vpop.f32.mrf.mxu0
      %1838 = vmatprep.mubr.f32.mxu0 0.0
      %1839 = vmatmul.mubr.f32.gmra.mxu0 %v1650
      %v1840 = vpop.f32.mrf.mxu0
      %v1841 = vadd.f32 0.0, %v1840
      %v1842 = vpop.f32.mrf.mxu0
      %1843 = vmatprep.mubr.f32.mxu0 0.0
      %1844 = vmatmul.mubr.f32.gmra.mxu0 %v1651
      %v1845 = vpop.f32.mrf.mxu0
      %v1846 = vadd.f32 0.0, %v1845
      %v1847 = vpop.f32.mrf.mxu0
      %1848 = vmatprep.mubr.f32.mxu0 0.0
      %1849 = vmatmul.mubr.f32.gmra.mxu0 %v1652
      %v1850 = vpop.f32.mrf.mxu0
      %v1851 = vadd.f32 0.0, %v1850
      %v1852 = vpop.f32.mrf.mxu0
      %1853 = vmatprep.mubr.f32.mxu0 0.0
      %1854 = vmatmul.mubr.f32.gmra.mxu0 %v1653
      %v1855 = vpop.f32.mrf.mxu0
      %v1856 = vadd.f32 0.0, %v1855
      %v1857 = vpop.f32.mrf.mxu0
      %1858 = vmatprep.mubr.f32.mxu0 0.0
      %1859 = vmatmul.mubr.f32.gmra.mxu0 %v1654
      %v1860 = vpop.f32.mrf.mxu0
      %v1861 = vadd.f32 0.0, %v1860
      %v1862 = vpop.f32.mrf.mxu0
      %1863 = vmatprep.mubr.f32.mxu0 0.0
      %1864 = vmatmul.mubr.f32.gmra.mxu0 %v1655
      %v1865 = vpop.f32.mrf.mxu0
      %v1866 = vadd.f32 0.0, %v1865
      %v1867 = vpop.f32.mrf.mxu0
      %1868 = vmatprep.mubr.f32.mxu0 0.0
      %1869 = vmatmul.mubr.f32.gmra.mxu0 %v1656
      %v1870 = vpop.f32.mrf.mxu0
      %v1871 = vadd.f32 0.0, %v1870
      %v1872 = vpop.f32.mrf.mxu0
      %1873 = vmatprep.mubr.f32.mxu0 0.0
      %1874 = vmatmul.mubr.f32.gmra.mxu0 %v1657
      %v1875 = vpop.f32.mrf.mxu0
      %v1876 = vadd.f32 0.0, %v1875
      %v1877 = vpop.f32.mrf.mxu0
      %1878 = vmatprep.mubr.f32.mxu0 0.0
      %1879 = vmatmul.mubr.f32.gmra.mxu0 %v1658
      %v1880 = vpop.f32.mrf.mxu0
      %v1881 = vadd.f32 0.0, %v1880
      %v1882 = vpop.f32.mrf.mxu0
      %1883 = vmatprep.mubr.f32.mxu0 0.0
      %1884 = vmatmul.mubr.f32.gmra.mxu0 %v1659
      %v1885 = vpop.f32.mrf.mxu0
      %v1886 = vadd.f32 0.0, %v1885
      %v1887 = vpop.f32.mrf.mxu0
      %1888 = vmatprep.mubr.f32.mxu0 0.0
      %1889 = vmatmul.mubr.f32.gmra.mxu0 %v1660
      %v1890 = vpop.f32.mrf.mxu0
      %v1891 = vadd.f32 0.0, %v1890
      %v1892 = vpop.f32.mrf.mxu0
      %1893 = vmatprep.mubr.f32.mxu0 0.0
      %1894 = vmatmul.mubr.f32.gmra.mxu0 %v1661
      %v1895 = vpop.f32.mrf.mxu0
      %v1896 = vadd.f32 0.0, %v1895
      %v1897 = vpop.f32.mrf.mxu0
      %1898 = vmatprep.mubr.f32.mxu0 0.0
      %1899 = vmatmul.mubr.f32.gmra.mxu0 %v1662
      %v1900 = vpop.f32.mrf.mxu0
      %v1901 = vadd.f32 0.0, %v1900
      %v1902 = vpop.f32.mrf.mxu0
      %1903 = vdwg.mxu0
      %v1904 = vadd.f32 %v1599, %v1746
      %v1905 = vadd.f32 %v1600, %v1751
      %v1906 = vadd.f32 %v1601, %v1756
      %v1907 = vadd.f32 %v1602, %v1761
      %v1908 = vadd.f32 %v1603, %v1766
      %v1909 = vadd.f32 %v1604, %v1771
      %v1910 = vadd.f32 %v1605, %v1776
      %v1911 = vadd.f32 %v1606, %v1781
      %v1912 = vadd.f32 %v1607, %v1786
      %v1913 = vadd.f32 %v1608, %v1791
      %v1914 = vadd.f32 %v1609, %v1796
      %v1915 = vadd.f32 %v1610, %v1801
      %v1916 = vadd.f32 %v1611, %v1806
      %v1917 = vadd.f32 %v1612, %v1811
      %v1918 = vadd.f32 %v1613, %v1816
      %v1919 = vadd.f32 %v1614, %v1821
      %v1920 = vadd.f32 %v1615, %v1826
      %v1921 = vadd.f32 %v1616, %v1831
      %v1922 = vadd.f32 %v1617, %v1836
      %v1923 = vadd.f32 %v1618, %v1841
      %v1924 = vadd.f32 %v1619, %v1846
      %v1925 = vadd.f32 %v1620, %v1851
      %v1926 = vadd.f32 %v1621, %v1856
      %v1927 = vadd.f32 %v1622, %v1861
      %v1928 = vadd.f32 %v1623, %v1866
      %v1929 = vadd.f32 %v1624, %v1871
      %v1930 = vadd.f32 %v1625, %v1876
      %v1931 = vadd.f32 %v1626, %v1881
      %v1932 = vadd.f32 %v1627, %v1886
      %v1933 = vadd.f32 %v1628, %v1891
      %v1934 = vadd.f32 %v1629, %v1896
      %v1935 = vadd.f32 %v1630, %v1901
      %s1936 = scalar_lea.vmem %s163, 48
      %v1937 = vld [vmem:[%s1936] sm:$0xff]
      %v1938 = vld [vmem:[%s1936 + $0x8] sm:$0xff]
      %v1939 = vld [vmem:[%s1936 + $0x18] sm:$0xff]
      %v1940 = vld [vmem:[%s1936 + $0x20] sm:$0xff]
      %v1941 = vld [vmem:[%s1936 + $0x30] sm:$0xff]
      %v1942 = vld [vmem:[%s1936 + $0x38] sm:$0xff]
      %v1943 = vld [vmem:[%s1936 + $0x48] sm:$0xff]
      %v1944 = vld [vmem:[%s1936 + $0x50] sm:$0xff]
      %v1945 = vld [vmem:[%s1936 + $0x60] sm:$0xff]
      %v1946 = vld [vmem:[%s1936 + $0x68] sm:$0xff]
      %v1947 = vld [vmem:[%s1936 + $0x78] sm:$0xff]
      %v1948 = vld [vmem:[%s1936 + $0x80] sm:$0xff]
      %v1949 = vld [vmem:[%s1936 + $0x90] sm:$0xff]
      %v1950 = vld [vmem:[%s1936 + $0x98] sm:$0xff]
      %v1951 = vld [vmem:[%s1936 + $0xa8] sm:$0xff]
      %v1952 = vld [vmem:[%s1936 + $0xb0] sm:$0xff]
      %v1953 = vld [vmem:[%s1936 + $0xc0] sm:$0xff]
      %v1954 = vld [vmem:[%s1936 + $0xc8] sm:$0xff]
      %v1955 = vld [vmem:[%s1936 + $0xd8] sm:$0xff]
      %v1956 = vld [vmem:[%s1936 + $0xe0] sm:$0xff]
      %v1957 = vld [vmem:[%s1936 + $0xf0] sm:$0xff]
      %v1958 = vld [vmem:[%s1936 + $0xf8] sm:$0xff]
      %v1959 = vld [vmem:[%s1936 + $0x108] sm:$0xff]
      %v1960 = vld [vmem:[%s1936 + $0x110] sm:$0xff]
      %v1961 = vld [vmem:[%s1936 + $0x120] sm:$0xff]
      %v1962 = vld [vmem:[%s1936 + $0x128] sm:$0xff]
      %v1963 = vld [vmem:[%s1936 + $0x138] sm:$0xff]
      %v1964 = vld [vmem:[%s1936 + $0x140] sm:$0xff]
      %v1965 = vld [vmem:[%s1936 + $0x150] sm:$0xff]
      %v1966 = vld [vmem:[%s1936 + $0x158] sm:$0xff]
      %v1967 = vld [vmem:[%s1936 + $0x168] sm:$0xff]
      %v1968 = vld [vmem:[%s1936 + $0x170] sm:$0xff]
      %v1969 = vld [vmem:[%s1 + $0x300] sm:$0xff]
      %v1970 = vld [vmem:[%s1 + $0x308] sm:$0xff]
      %v1971 = vld [vmem:[%s1 + $0x310] sm:$0xff]
      %v1972 = vld [vmem:[%s1 + $0x318] sm:$0xff]
      %v1973 = vld [vmem:[%s1 + $0x320] sm:$0xff]
      %v1974 = vld [vmem:[%s1 + $0x328] sm:$0xff]
      %v1975 = vld [vmem:[%s1 + $0x330] sm:$0xff]
      %v1976 = vld [vmem:[%s1 + $0x338] sm:$0xff]
      %v1977 = vld [vmem:[%s1 + $0x340] sm:$0xff]
      %v1978 = vld [vmem:[%s1 + $0x348] sm:$0xff]
      %v1979 = vld [vmem:[%s1 + $0x350] sm:$0xff]
      %v1980 = vld [vmem:[%s1 + $0x358] sm:$0xff]
      %v1981 = vld [vmem:[%s1 + $0x360] sm:$0xff]
      %v1982 = vld [vmem:[%s1 + $0x368] sm:$0xff]
      %v1983 = vld [vmem:[%s1 + $0x370] sm:$0xff]
      %v1984 = vld [vmem:[%s1 + $0x378] sm:$0xff]
      %1985 = vmatprep.subr.mxu0 0.0
      %1986 = vmatpush1.msra.mxu0 %v1984
      %1987 = vmatprep.subr.mxu0 0.0
      %1988 = vmatpush1.msra.mxu0 %v1983
      %1989 = vmatprep.subr.mxu0 0.0
      %1990 = vmatpush1.msra.mxu0 %v1982
      %1991 = vmatprep.subr.mxu0 0.0
      %1992 = vmatpush1.msra.mxu0 %v1981
      %1993 = vmatprep.subr.mxu0 0.0
      %1994 = vmatpush1.msra.mxu0 %v1980
      %1995 = vmatprep.subr.mxu0 0.0
      %1996 = vmatpush1.msra.mxu0 %v1979
      %1997 = vmatprep.subr.mxu0 0.0
      %1998 = vmatpush1.msra.mxu0 %v1978
      %1999 = vmatprep.subr.mxu0 0.0
      %2000 = vmatpush1.msra.mxu0 %v1977
      %2001 = vmatprep.subr.mxu0 0.0
      %2002 = vmatpush1.msra.mxu0 %v1976
      %2003 = vmatprep.subr.mxu0 0.0
      %2004 = vmatpush1.msra.mxu0 %v1975
      %2005 = vmatprep.subr.mxu0 0.0
      %2006 = vmatpush1.msra.mxu0 %v1974
      %2007 = vmatprep.subr.mxu0 0.0
      %2008 = vmatpush1.msra.mxu0 %v1973
      %2009 = vmatprep.subr.mxu0 0.0
      %2010 = vmatpush1.msra.mxu0 %v1972
      %2011 = vmatprep.subr.mxu0 0.0
      %2012 = vmatpush1.msra.mxu0 %v1971
      %2013 = vmatprep.subr.mxu0 0.0
      %2014 = vmatpush1.msra.mxu0 %v1970
      %2015 = vmatprep.subr.mxu0 0.0
      %2016 = vmatpush1.msra.mxu0 %v1969
      %2017 = vmatprep.subr.mxu0 0.0
      %2018 = vmatpush2.msra.mxu0 0.0
      %2019 = vmatprep.subr.mxu0 0.0
      %2020 = vmatpush2.msra.mxu0 0.0
      %2021 = vmatprep.subr.mxu0 0.0
      %2022 = vmatpush2.msra.mxu0 0.0
      %2023 = vmatprep.subr.mxu0 0.0
      %2024 = vmatpush2.msra.mxu0 0.0
      %2025 = vmatprep.subr.mxu0 0.0
      %2026 = vmatpush2.msra.mxu0 0.0
      %2027 = vmatprep.subr.mxu0 0.0
      %2028 = vmatpush2.msra.mxu0 0.0
      %2029 = vmatprep.subr.mxu0 0.0
      %2030 = vmatpush2.msra.mxu0 0.0
      %2031 = vmatprep.subr.mxu0 0.0
      %2032 = vmatpush2.msra.mxu0 0.0
      %2033 = vmatprep.subr.mxu0 0.0
      %2034 = vmatpush2.msra.mxu0 0.0
      %2035 = vmatprep.subr.mxu0 0.0
      %2036 = vmatpush2.msra.mxu0 0.0
      %2037 = vmatprep.subr.mxu0 0.0
      %2038 = vmatpush2.msra.mxu0 0.0
      %2039 = vmatprep.subr.mxu0 0.0
      %2040 = vmatpush2.msra.mxu0 0.0
      %2041 = vmatprep.subr.mxu0 0.0
      %2042 = vmatpush2.msra.mxu0 0.0
      %2043 = vmatprep.subr.mxu0 0.0
      %2044 = vmatpush2.msra.mxu0 0.0
      %2045 = vmatprep.subr.mxu0 0.0
      %2046 = vmatpush2.msra.mxu0 0.0
      %2047 = vmatprep.subr.mxu0 0.0
      %2048 = vmatpush2.msra.mxu0 0.0
      %2049 = vmatprep.mubr.f32.mxu0 0.0
      %2050 = vmatmul.mubr.f32.gmra.mxu0 %v1937
      %v2051 = vpop.f32.mrf.mxu0
      %v2052 = vadd.f32 0.0, %v2051
      %v2053 = vpop.f32.mrf.mxu0
      %2054 = vmatprep.mubr.f32.mxu0 0.0
      %2055 = vmatmul.mubr.f32.gmra.mxu0 %v1938
      %v2056 = vpop.f32.mrf.mxu0
      %v2057 = vadd.f32 0.0, %v2056
      %v2058 = vpop.f32.mrf.mxu0
      %2059 = vmatprep.mubr.f32.mxu0 0.0
      %2060 = vmatmul.mubr.f32.gmra.mxu0 %v1939
      %v2061 = vpop.f32.mrf.mxu0
      %v2062 = vadd.f32 0.0, %v2061
      %v2063 = vpop.f32.mrf.mxu0
      %2064 = vmatprep.mubr.f32.mxu0 0.0
      %2065 = vmatmul.mubr.f32.gmra.mxu0 %v1940
      %v2066 = vpop.f32.mrf.mxu0
      %v2067 = vadd.f32 0.0, %v2066
      %v2068 = vpop.f32.mrf.mxu0
      %2069 = vmatprep.mubr.f32.mxu0 0.0
      %2070 = vmatmul.mubr.f32.gmra.mxu0 %v1941
      %v2071 = vpop.f32.mrf.mxu0
      %v2072 = vadd.f32 0.0, %v2071
      %v2073 = vpop.f32.mrf.mxu0
      %2074 = vmatprep.mubr.f32.mxu0 0.0
      %2075 = vmatmul.mubr.f32.gmra.mxu0 %v1942
      %v2076 = vpop.f32.mrf.mxu0
      %v2077 = vadd.f32 0.0, %v2076
      %v2078 = vpop.f32.mrf.mxu0
      %2079 = vmatprep.mubr.f32.mxu0 0.0
      %2080 = vmatmul.mubr.f32.gmra.mxu0 %v1943
      %v2081 = vpop.f32.mrf.mxu0
      %v2082 = vadd.f32 0.0, %v2081
      %v2083 = vpop.f32.mrf.mxu0
      %2084 = vmatprep.mubr.f32.mxu0 0.0
      %2085 = vmatmul.mubr.f32.gmra.mxu0 %v1944
      %v2086 = vpop.f32.mrf.mxu0
      %v2087 = vadd.f32 0.0, %v2086
      %v2088 = vpop.f32.mrf.mxu0
      %2089 = vmatprep.mubr.f32.mxu0 0.0
      %2090 = vmatmul.mubr.f32.gmra.mxu0 %v1945
      %v2091 = vpop.f32.mrf.mxu0
      %v2092 = vadd.f32 0.0, %v2091
      %v2093 = vpop.f32.mrf.mxu0
      %2094 = vmatprep.mubr.f32.mxu0 0.0
      %2095 = vmatmul.mubr.f32.gmra.mxu0 %v1946
      %v2096 = vpop.f32.mrf.mxu0
      %v2097 = vadd.f32 0.0, %v2096
      %v2098 = vpop.f32.mrf.mxu0
      %2099 = vmatprep.mubr.f32.mxu0 0.0
      %2100 = vmatmul.mubr.f32.gmra.mxu0 %v1947
      %v2101 = vpop.f32.mrf.mxu0
      %v2102 = vadd.f32 0.0, %v2101
      %v2103 = vpop.f32.mrf.mxu0
      %2104 = vmatprep.mubr.f32.mxu0 0.0
      %2105 = vmatmul.mubr.f32.gmra.mxu0 %v1948
      %v2106 = vpop.f32.mrf.mxu0
      %v2107 = vadd.f32 0.0, %v2106
      %v2108 = vpop.f32.mrf.mxu0
      %2109 = vmatprep.mubr.f32.mxu0 0.0
      %2110 = vmatmul.mubr.f32.gmra.mxu0 %v1949
      %v2111 = vpop.f32.mrf.mxu0
      %v2112 = vadd.f32 0.0, %v2111
      %v2113 = vpop.f32.mrf.mxu0
      %2114 = vmatprep.mubr.f32.mxu0 0.0
      %2115 = vmatmul.mubr.f32.gmra.mxu0 %v1950
      %v2116 = vpop.f32.mrf.mxu0
      %v2117 = vadd.f32 0.0, %v2116
      %v2118 = vpop.f32.mrf.mxu0
      %2119 = vmatprep.mubr.f32.mxu0 0.0
      %2120 = vmatmul.mubr.f32.gmra.mxu0 %v1951
      %v2121 = vpop.f32.mrf.mxu0
      %v2122 = vadd.f32 0.0, %v2121
      %v2123 = vpop.f32.mrf.mxu0
      %2124 = vmatprep.mubr.f32.mxu0 0.0
      %2125 = vmatmul.mubr.f32.gmra.mxu0 %v1952
      %v2126 = vpop.f32.mrf.mxu0
      %v2127 = vadd.f32 0.0, %v2126
      %v2128 = vpop.f32.mrf.mxu0
      %2129 = vmatprep.mubr.f32.mxu0 0.0
      %2130 = vmatmul.mubr.f32.gmra.mxu0 %v1953
      %v2131 = vpop.f32.mrf.mxu0
      %v2132 = vadd.f32 0.0, %v2131
      %v2133 = vpop.f32.mrf.mxu0
      %2134 = vmatprep.mubr.f32.mxu0 0.0
      %2135 = vmatmul.mubr.f32.gmra.mxu0 %v1954
      %v2136 = vpop.f32.mrf.mxu0
      %v2137 = vadd.f32 0.0, %v2136
      %v2138 = vpop.f32.mrf.mxu0
      %2139 = vmatprep.mubr.f32.mxu0 0.0
      %2140 = vmatmul.mubr.f32.gmra.mxu0 %v1955
      %v2141 = vpop.f32.mrf.mxu0
      %v2142 = vadd.f32 0.0, %v2141
      %v2143 = vpop.f32.mrf.mxu0
      %2144 = vmatprep.mubr.f32.mxu0 0.0
      %2145 = vmatmul.mubr.f32.gmra.mxu0 %v1956
      %v2146 = vpop.f32.mrf.mxu0
      %v2147 = vadd.f32 0.0, %v2146
      %v2148 = vpop.f32.mrf.mxu0
      %2149 = vmatprep.mubr.f32.mxu0 0.0
      %2150 = vmatmul.mubr.f32.gmra.mxu0 %v1957
      %v2151 = vpop.f32.mrf.mxu0
      %v2152 = vadd.f32 0.0, %v2151
      %v2153 = vpop.f32.mrf.mxu0
      %2154 = vmatprep.mubr.f32.mxu0 0.0
      %2155 = vmatmul.mubr.f32.gmra.mxu0 %v1958
      %v2156 = vpop.f32.mrf.mxu0
      %v2157 = vadd.f32 0.0, %v2156
      %v2158 = vpop.f32.mrf.mxu0
      %2159 = vmatprep.mubr.f32.mxu0 0.0
      %2160 = vmatmul.mubr.f32.gmra.mxu0 %v1959
      %v2161 = vpop.f32.mrf.mxu0
      %v2162 = vadd.f32 0.0, %v2161
      %v2163 = vpop.f32.mrf.mxu0
      %2164 = vmatprep.mubr.f32.mxu0 0.0
      %2165 = vmatmul.mubr.f32.gmra.mxu0 %v1960
      %v2166 = vpop.f32.mrf.mxu0
      %v2167 = vadd.f32 0.0, %v2166
      %v2168 = vpop.f32.mrf.mxu0
      %2169 = vmatprep.mubr.f32.mxu0 0.0
      %2170 = vmatmul.mubr.f32.gmra.mxu0 %v1961
      %v2171 = vpop.f32.mrf.mxu0
      %v2172 = vadd.f32 0.0, %v2171
      %v2173 = vpop.f32.mrf.mxu0
      %2174 = vmatprep.mubr.f32.mxu0 0.0
      %2175 = vmatmul.mubr.f32.gmra.mxu0 %v1962
      %v2176 = vpop.f32.mrf.mxu0
      %v2177 = vadd.f32 0.0, %v2176
      %v2178 = vpop.f32.mrf.mxu0
      %2179 = vmatprep.mubr.f32.mxu0 0.0
      %2180 = vmatmul.mubr.f32.gmra.mxu0 %v1963
      %v2181 = vpop.f32.mrf.mxu0
      %v2182 = vadd.f32 0.0, %v2181
      %v2183 = vpop.f32.mrf.mxu0
      %2184 = vmatprep.mubr.f32.mxu0 0.0
      %2185 = vmatmul.mubr.f32.gmra.mxu0 %v1964
      %v2186 = vpop.f32.mrf.mxu0
      %v2187 = vadd.f32 0.0, %v2186
      %v2188 = vpop.f32.mrf.mxu0
      %2189 = vmatprep.mubr.f32.mxu0 0.0
      %2190 = vmatmul.mubr.f32.gmra.mxu0 %v1965
      %v2191 = vpop.f32.mrf.mxu0
      %v2192 = vadd.f32 0.0, %v2191
      %v2193 = vpop.f32.mrf.mxu0
      %2194 = vmatprep.mubr.f32.mxu0 0.0
      %2195 = vmatmul.mubr.f32.gmra.mxu0 %v1966
      %v2196 = vpop.f32.mrf.mxu0
      %v2197 = vadd.f32 0.0, %v2196
      %v2198 = vpop.f32.mrf.mxu0
      %2199 = vmatprep.mubr.f32.mxu0 0.0
      %2200 = vmatmul.mubr.f32.gmra.mxu0 %v1967
      %v2201 = vpop.f32.mrf.mxu0
      %v2202 = vadd.f32 0.0, %v2201
      %v2203 = vpop.f32.mrf.mxu0
      %2204 = vmatprep.mubr.f32.mxu0 0.0
      %2205 = vmatmul.mubr.f32.gmra.mxu0 %v1968
      %v2206 = vpop.f32.mrf.mxu0
      %v2207 = vadd.f32 0.0, %v2206
      %v2208 = vpop.f32.mrf.mxu0
      %2209 = vdwg.mxu0
      %v2210 = vadd.f32 %v1904, %v2052
      %v2211 = vadd.f32 %v1905, %v2057
      %v2212 = vadd.f32 %v1906, %v2062
      %v2213 = vadd.f32 %v1907, %v2067
      %v2214 = vadd.f32 %v1908, %v2072
      %v2215 = vadd.f32 %v1909, %v2077
      %v2216 = vadd.f32 %v1910, %v2082
      %v2217 = vadd.f32 %v1911, %v2087
      %v2218 = vadd.f32 %v1912, %v2092
      %v2219 = vadd.f32 %v1913, %v2097
      %v2220 = vadd.f32 %v1914, %v2102
      %v2221 = vadd.f32 %v1915, %v2107
      %v2222 = vadd.f32 %v1916, %v2112
      %v2223 = vadd.f32 %v1917, %v2117
      %v2224 = vadd.f32 %v1918, %v2122
      %v2225 = vadd.f32 %v1919, %v2127
      %v2226 = vadd.f32 %v1920, %v2132
      %v2227 = vadd.f32 %v1921, %v2137
      %v2228 = vadd.f32 %v1922, %v2142
      %v2229 = vadd.f32 %v1923, %v2147
      %v2230 = vadd.f32 %v1924, %v2152
      %v2231 = vadd.f32 %v1925, %v2157
      %v2232 = vadd.f32 %v1926, %v2162
      %v2233 = vadd.f32 %v1927, %v2167
      %v2234 = vadd.f32 %v1928, %v2172
      %v2235 = vadd.f32 %v1929, %v2177
      %v2236 = vadd.f32 %v1930, %v2182
      %v2237 = vadd.f32 %v1931, %v2187
      %v2238 = vadd.f32 %v1932, %v2192
      %v2239 = vadd.f32 %v1933, %v2197
      %v2240 = vadd.f32 %v1934, %v2202
      %v2241 = vadd.f32 %v1935, %v2207
      %v2242 = vld [vmem:[%s1936 + $0x1] sm:$0xff]
      %v2243 = vld [vmem:[%s1936 + $0x9] sm:$0xff]
      %v2244 = vld [vmem:[%s1936 + $0x19] sm:$0xff]
      %v2245 = vld [vmem:[%s1936 + $0x21] sm:$0xff]
      %v2246 = vld [vmem:[%s1936 + $0x31] sm:$0xff]
      %v2247 = vld [vmem:[%s1936 + $0x39] sm:$0xff]
      %v2248 = vld [vmem:[%s1936 + $0x49] sm:$0xff]
      %v2249 = vld [vmem:[%s1936 + $0x51] sm:$0xff]
      %v2250 = vld [vmem:[%s1936 + $0x61] sm:$0xff]
      %v2251 = vld [vmem:[%s1936 + $0x69] sm:$0xff]
      %v2252 = vld [vmem:[%s1936 + $0x79] sm:$0xff]
      %v2253 = vld [vmem:[%s1936 + $0x81] sm:$0xff]
      %v2254 = vld [vmem:[%s1936 + $0x91] sm:$0xff]
      %v2255 = vld [vmem:[%s1936 + $0x99] sm:$0xff]
      %v2256 = vld [vmem:[%s1936 + $0xa9] sm:$0xff]
      %v2257 = vld [vmem:[%s1936 + $0xb1] sm:$0xff]
      %v2258 = vld [vmem:[%s1936 + $0xc1] sm:$0xff]
      %v2259 = vld [vmem:[%s1936 + $0xc9] sm:$0xff]
      %v2260 = vld [vmem:[%s1936 + $0xd9] sm:$0xff]
      %v2261 = vld [vmem:[%s1936 + $0xe1] sm:$0xff]
      %v2262 = vld [vmem:[%s1936 + $0xf1] sm:$0xff]
      %v2263 = vld [vmem:[%s1936 + $0xf9] sm:$0xff]
      %v2264 = vld [vmem:[%s1936 + $0x109] sm:$0xff]
      %v2265 = vld [vmem:[%s1936 + $0x111] sm:$0xff]
      %v2266 = vld [vmem:[%s1936 + $0x121] sm:$0xff]
      %v2267 = vld [vmem:[%s1936 + $0x129] sm:$0xff]
      %v2268 = vld [vmem:[%s1936 + $0x139] sm:$0xff]
      %v2269 = vld [vmem:[%s1936 + $0x141] sm:$0xff]
      %v2270 = vld [vmem:[%s1936 + $0x151] sm:$0xff]
      %v2271 = vld [vmem:[%s1936 + $0x159] sm:$0xff]
      %v2272 = vld [vmem:[%s1936 + $0x169] sm:$0xff]
      %v2273 = vld [vmem:[%s1936 + $0x171] sm:$0xff]
      %v2274 = vld [vmem:[%s1 + $0x380] sm:$0xff]
      %v2275 = vld [vmem:[%s1 + $0x388] sm:$0xff]
      %v2276 = vld [vmem:[%s1 + $0x390] sm:$0xff]
      %v2277 = vld [vmem:[%s1 + $0x398] sm:$0xff]
      %v2278 = vld [vmem:[%s1 + $0x3a0] sm:$0xff]
      %v2279 = vld [vmem:[%s1 + $0x3a8] sm:$0xff]
      %v2280 = vld [vmem:[%s1 + $0x3b0] sm:$0xff]
      %v2281 = vld [vmem:[%s1 + $0x3b8] sm:$0xff]
      %v2282 = vld [vmem:[%s1 + $0x3c0] sm:$0xff]
      %v2283 = vld [vmem:[%s1 + $0x3c8] sm:$0xff]
      %v2284 = vld [vmem:[%s1 + $0x3d0] sm:$0xff]
      %v2285 = vld [vmem:[%s1 + $0x3d8] sm:$0xff]
      %v2286 = vld [vmem:[%s1 + $0x3e0] sm:$0xff]
      %v2287 = vld [vmem:[%s1 + $0x3e8] sm:$0xff]
      %v2288 = vld [vmem:[%s1 + $0x3f0] sm:$0xff]
      %v2289 = vld [vmem:[%s1 + $0x3f8] sm:$0xff]
      %2290 = vmatprep.subr.mxu0 0.0
      %2291 = vmatpush1.msra.mxu0 %v2289
      %2292 = vmatprep.subr.mxu0 0.0
      %2293 = vmatpush1.msra.mxu0 %v2288
      %2294 = vmatprep.subr.mxu0 0.0
      %2295 = vmatpush1.msra.mxu0 %v2287
      %2296 = vmatprep.subr.mxu0 0.0
      %2297 = vmatpush1.msra.mxu0 %v2286
      %2298 = vmatprep.subr.mxu0 0.0
      %2299 = vmatpush1.msra.mxu0 %v2285
      %2300 = vmatprep.subr.mxu0 0.0
      %2301 = vmatpush1.msra.mxu0 %v2284
      %2302 = vmatprep.subr.mxu0 0.0
      %2303 = vmatpush1.msra.mxu0 %v2283
      %2304 = vmatprep.subr.mxu0 0.0
      %2305 = vmatpush1.msra.mxu0 %v2282
      %2306 = vmatprep.subr.mxu0 0.0
      %2307 = vmatpush1.msra.mxu0 %v2281
      %2308 = vmatprep.subr.mxu0 0.0
      %2309 = vmatpush1.msra.mxu0 %v2280
      %2310 = vmatprep.subr.mxu0 0.0
      %2311 = vmatpush1.msra.mxu0 %v2279
      %2312 = vmatprep.subr.mxu0 0.0
      %2313 = vmatpush1.msra.mxu0 %v2278
      %2314 = vmatprep.subr.mxu0 0.0
      %2315 = vmatpush1.msra.mxu0 %v2277
      %2316 = vmatprep.subr.mxu0 0.0
      %2317 = vmatpush1.msra.mxu0 %v2276
      %2318 = vmatprep.subr.mxu0 0.0
      %2319 = vmatpush1.msra.mxu0 %v2275
      %2320 = vmatprep.subr.mxu0 0.0
      %2321 = vmatpush1.msra.mxu0 %v2274
      %2322 = vmatprep.subr.mxu0 0.0
      %2323 = vmatpush2.msra.mxu0 0.0
      %2324 = vmatprep.subr.mxu0 0.0
      %2325 = vmatpush2.msra.mxu0 0.0
      %2326 = vmatprep.subr.mxu0 0.0
      %2327 = vmatpush2.msra.mxu0 0.0
      %2328 = vmatprep.subr.mxu0 0.0
      %2329 = vmatpush2.msra.mxu0 0.0
      %2330 = vmatprep.subr.mxu0 0.0
      %2331 = vmatpush2.msra.mxu0 0.0
      %2332 = vmatprep.subr.mxu0 0.0
      %2333 = vmatpush2.msra.mxu0 0.0
      %2334 = vmatprep.subr.mxu0 0.0
      %2335 = vmatpush2.msra.mxu0 0.0
      %2336 = vmatprep.subr.mxu0 0.0
      %2337 = vmatpush2.msra.mxu0 0.0
      %2338 = vmatprep.subr.mxu0 0.0
      %2339 = vmatpush2.msra.mxu0 0.0
      %2340 = vmatprep.subr.mxu0 0.0
      %2341 = vmatpush2.msra.mxu0 0.0
      %2342 = vmatprep.subr.mxu0 0.0
      %2343 = vmatpush2.msra.mxu0 0.0
      %2344 = vmatprep.subr.mxu0 0.0
      %2345 = vmatpush2.msra.mxu0 0.0
      %2346 = vmatprep.subr.mxu0 0.0
      %2347 = vmatpush2.msra.mxu0 0.0
      %2348 = vmatprep.subr.mxu0 0.0
      %2349 = vmatpush2.msra.mxu0 0.0
      %2350 = vmatprep.subr.mxu0 0.0
      %2351 = vmatpush2.msra.mxu0 0.0
      %2352 = vmatprep.subr.mxu0 0.0
      %2353 = vmatpush2.msra.mxu0 0.0
      %2354 = vmatprep.mubr.f32.mxu0 0.0
      %2355 = vmatmul.mubr.f32.gmra.mxu0 %v2242
      %v2356 = vpop.f32.mrf.mxu0
      %v2357 = vadd.f32 0.0, %v2356
      %v2358 = vpop.f32.mrf.mxu0
      %2359 = vmatprep.mubr.f32.mxu0 0.0
      %2360 = vmatmul.mubr.f32.gmra.mxu0 %v2243
      %v2361 = vpop.f32.mrf.mxu0
      %v2362 = vadd.f32 0.0, %v2361
      %v2363 = vpop.f32.mrf.mxu0
      %2364 = vmatprep.mubr.f32.mxu0 0.0
      %2365 = vmatmul.mubr.f32.gmra.mxu0 %v2244
      %v2366 = vpop.f32.mrf.mxu0
      %v2367 = vadd.f32 0.0, %v2366
      %v2368 = vpop.f32.mrf.mxu0
      %2369 = vmatprep.mubr.f32.mxu0 0.0
      %2370 = vmatmul.mubr.f32.gmra.mxu0 %v2245
      %v2371 = vpop.f32.mrf.mxu0
      %v2372 = vadd.f32 0.0, %v2371
      %v2373 = vpop.f32.mrf.mxu0
      %2374 = vmatprep.mubr.f32.mxu0 0.0
      %2375 = vmatmul.mubr.f32.gmra.mxu0 %v2246
      %v2376 = vpop.f32.mrf.mxu0
      %v2377 = vadd.f32 0.0, %v2376
      %v2378 = vpop.f32.mrf.mxu0
      %2379 = vmatprep.mubr.f32.mxu0 0.0
      %2380 = vmatmul.mubr.f32.gmra.mxu0 %v2247
      %v2381 = vpop.f32.mrf.mxu0
      %v2382 = vadd.f32 0.0, %v2381
      %v2383 = vpop.f32.mrf.mxu0
      %2384 = vmatprep.mubr.f32.mxu0 0.0
      %2385 = vmatmul.mubr.f32.gmra.mxu0 %v2248
      %v2386 = vpop.f32.mrf.mxu0
      %v2387 = vadd.f32 0.0, %v2386
      %v2388 = vpop.f32.mrf.mxu0
      %2389 = vmatprep.mubr.f32.mxu0 0.0
      %2390 = vmatmul.mubr.f32.gmra.mxu0 %v2249
      %v2391 = vpop.f32.mrf.mxu0
      %v2392 = vadd.f32 0.0, %v2391
      %v2393 = vpop.f32.mrf.mxu0
      %2394 = vmatprep.mubr.f32.mxu0 0.0
      %2395 = vmatmul.mubr.f32.gmra.mxu0 %v2250
      %v2396 = vpop.f32.mrf.mxu0
      %v2397 = vadd.f32 0.0, %v2396
      %v2398 = vpop.f32.mrf.mxu0
      %2399 = vmatprep.mubr.f32.mxu0 0.0
      %2400 = vmatmul.mubr.f32.gmra.mxu0 %v2251
      %v2401 = vpop.f32.mrf.mxu0
      %v2402 = vadd.f32 0.0, %v2401
      %v2403 = vpop.f32.mrf.mxu0
      %2404 = vmatprep.mubr.f32.mxu0 0.0
      %2405 = vmatmul.mubr.f32.gmra.mxu0 %v2252
      %v2406 = vpop.f32.mrf.mxu0
      %v2407 = vadd.f32 0.0, %v2406
      %v2408 = vpop.f32.mrf.mxu0
      %2409 = vmatprep.mubr.f32.mxu0 0.0
      %2410 = vmatmul.mubr.f32.gmra.mxu0 %v2253
      %v2411 = vpop.f32.mrf.mxu0
      %v2412 = vadd.f32 0.0, %v2411
      %v2413 = vpop.f32.mrf.mxu0
      %2414 = vmatprep.mubr.f32.mxu0 0.0
      %2415 = vmatmul.mubr.f32.gmra.mxu0 %v2254
      %v2416 = vpop.f32.mrf.mxu0
      %v2417 = vadd.f32 0.0, %v2416
      %v2418 = vpop.f32.mrf.mxu0
      %2419 = vmatprep.mubr.f32.mxu0 0.0
      %2420 = vmatmul.mubr.f32.gmra.mxu0 %v2255
      %v2421 = vpop.f32.mrf.mxu0
      %v2422 = vadd.f32 0.0, %v2421
      %v2423 = vpop.f32.mrf.mxu0
      %2424 = vmatprep.mubr.f32.mxu0 0.0
      %2425 = vmatmul.mubr.f32.gmra.mxu0 %v2256
      %v2426 = vpop.f32.mrf.mxu0
      %v2427 = vadd.f32 0.0, %v2426
      %v2428 = vpop.f32.mrf.mxu0
      %2429 = vmatprep.mubr.f32.mxu0 0.0
      %2430 = vmatmul.mubr.f32.gmra.mxu0 %v2257
      %v2431 = vpop.f32.mrf.mxu0
      %v2432 = vadd.f32 0.0, %v2431
      %v2433 = vpop.f32.mrf.mxu0
      %2434 = vmatprep.mubr.f32.mxu0 0.0
      %2435 = vmatmul.mubr.f32.gmra.mxu0 %v2258
      %v2436 = vpop.f32.mrf.mxu0
      %v2437 = vadd.f32 0.0, %v2436
      %v2438 = vpop.f32.mrf.mxu0
      %2439 = vmatprep.mubr.f32.mxu0 0.0
      %2440 = vmatmul.mubr.f32.gmra.mxu0 %v2259
      %v2441 = vpop.f32.mrf.mxu0
      %v2442 = vadd.f32 0.0, %v2441
      %v2443 = vpop.f32.mrf.mxu0
      %2444 = vmatprep.mubr.f32.mxu0 0.0
      %2445 = vmatmul.mubr.f32.gmra.mxu0 %v2260
      %v2446 = vpop.f32.mrf.mxu0
      %v2447 = vadd.f32 0.0, %v2446
      %v2448 = vpop.f32.mrf.mxu0
      %2449 = vmatprep.mubr.f32.mxu0 0.0
      %2450 = vmatmul.mubr.f32.gmra.mxu0 %v2261
      %v2451 = vpop.f32.mrf.mxu0
      %v2452 = vadd.f32 0.0, %v2451
      %v2453 = vpop.f32.mrf.mxu0
      %2454 = vmatprep.mubr.f32.mxu0 0.0
      %2455 = vmatmul.mubr.f32.gmra.mxu0 %v2262
      %v2456 = vpop.f32.mrf.mxu0
      %v2457 = vadd.f32 0.0, %v2456
      %v2458 = vpop.f32.mrf.mxu0
      %2459 = vmatprep.mubr.f32.mxu0 0.0
      %2460 = vmatmul.mubr.f32.gmra.mxu0 %v2263
      %v2461 = vpop.f32.mrf.mxu0
      %v2462 = vadd.f32 0.0, %v2461
      %v2463 = vpop.f32.mrf.mxu0
      %2464 = vmatprep.mubr.f32.mxu0 0.0
      %2465 = vmatmul.mubr.f32.gmra.mxu0 %v2264
      %v2466 = vpop.f32.mrf.mxu0
      %v2467 = vadd.f32 0.0, %v2466
      %v2468 = vpop.f32.mrf.mxu0
      %2469 = vmatprep.mubr.f32.mxu0 0.0
      %2470 = vmatmul.mubr.f32.gmra.mxu0 %v2265
      %v2471 = vpop.f32.mrf.mxu0
      %v2472 = vadd.f32 0.0, %v2471
      %v2473 = vpop.f32.mrf.mxu0
      %2474 = vmatprep.mubr.f32.mxu0 0.0
      %2475 = vmatmul.mubr.f32.gmra.mxu0 %v2266
      %v2476 = vpop.f32.mrf.mxu0
      %v2477 = vadd.f32 0.0, %v2476
      %v2478 = vpop.f32.mrf.mxu0
      %2479 = vmatprep.mubr.f32.mxu0 0.0
      %2480 = vmatmul.mubr.f32.gmra.mxu0 %v2267
      %v2481 = vpop.f32.mrf.mxu0
      %v2482 = vadd.f32 0.0, %v2481
      %v2483 = vpop.f32.mrf.mxu0
      %2484 = vmatprep.mubr.f32.mxu0 0.0
      %2485 = vmatmul.mubr.f32.gmra.mxu0 %v2268
      %v2486 = vpop.f32.mrf.mxu0
      %v2487 = vadd.f32 0.0, %v2486
      %v2488 = vpop.f32.mrf.mxu0
      %2489 = vmatprep.mubr.f32.mxu0 0.0
      %2490 = vmatmul.mubr.f32.gmra.mxu0 %v2269
      %v2491 = vpop.f32.mrf.mxu0
      %v2492 = vadd.f32 0.0, %v2491
      %v2493 = vpop.f32.mrf.mxu0
      %2494 = vmatprep.mubr.f32.mxu0 0.0
      %2495 = vmatmul.mubr.f32.gmra.mxu0 %v2270
      %v2496 = vpop.f32.mrf.mxu0
      %v2497 = vadd.f32 0.0, %v2496
      %v2498 = vpop.f32.mrf.mxu0
      %2499 = vmatprep.mubr.f32.mxu0 0.0
      %2500 = vmatmul.mubr.f32.gmra.mxu0 %v2271
      %v2501 = vpop.f32.mrf.mxu0
      %v2502 = vadd.f32 0.0, %v2501
      %v2503 = vpop.f32.mrf.mxu0
      %2504 = vmatprep.mubr.f32.mxu0 0.0
      %2505 = vmatmul.mubr.f32.gmra.mxu0 %v2272
      %v2506 = vpop.f32.mrf.mxu0
      %v2507 = vadd.f32 0.0, %v2506
      %v2508 = vpop.f32.mrf.mxu0
      %2509 = vmatprep.mubr.f32.mxu0 0.0
      %2510 = vmatmul.mubr.f32.gmra.mxu0 %v2273
      %v2511 = vpop.f32.mrf.mxu0
      %v2512 = vadd.f32 0.0, %v2511
      %v2513 = vpop.f32.mrf.mxu0
      %2514 = vdwg.mxu0
      %v2515 = vadd.f32 %v2210, %v2357
      %v2516 = vadd.f32 %v2211, %v2362
      %v2517 = vadd.f32 %v2212, %v2367
      %v2518 = vadd.f32 %v2213, %v2372
      %v2519 = vadd.f32 %v2214, %v2377
      %v2520 = vadd.f32 %v2215, %v2382
      %v2521 = vadd.f32 %v2216, %v2387
      %v2522 = vadd.f32 %v2217, %v2392
      %v2523 = vadd.f32 %v2218, %v2397
      %v2524 = vadd.f32 %v2219, %v2402
      %v2525 = vadd.f32 %v2220, %v2407
      %v2526 = vadd.f32 %v2221, %v2412
      %v2527 = vadd.f32 %v2222, %v2417
      %v2528 = vadd.f32 %v2223, %v2422
      %v2529 = vadd.f32 %v2224, %v2427
      %v2530 = vadd.f32 %v2225, %v2432
      %v2531 = vadd.f32 %v2226, %v2437
      %v2532 = vadd.f32 %v2227, %v2442
      %v2533 = vadd.f32 %v2228, %v2447
      %v2534 = vadd.f32 %v2229, %v2452
      %v2535 = vadd.f32 %v2230, %v2457
      %v2536 = vadd.f32 %v2231, %v2462
      %v2537 = vadd.f32 %v2232, %v2467
      %v2538 = vadd.f32 %v2233, %v2472
      %v2539 = vadd.f32 %v2234, %v2477
      %v2540 = vadd.f32 %v2235, %v2482
      %v2541 = vadd.f32 %v2236, %v2487
      %v2542 = vadd.f32 %v2237, %v2492
      %v2543 = vadd.f32 %v2238, %v2497
      %v2544 = vadd.f32 %v2239, %v2502
      %v2545 = vadd.f32 %v2240, %v2507
      %v2546 = vadd.f32 %v2241, %v2512
      %v2547 = vld [vmem:[%s1936 + $0x2] sm:$0xff]
      %v2548 = vld [vmem:[%s1936 + $0xa] sm:$0xff]
      %v2549 = vld [vmem:[%s1936 + $0x1a] sm:$0xff]
      %v2550 = vld [vmem:[%s1936 + $0x22] sm:$0xff]
      %v2551 = vld [vmem:[%s1936 + $0x32] sm:$0xff]
      %v2552 = vld [vmem:[%s1936 + $0x3a] sm:$0xff]
      %v2553 = vld [vmem:[%s1936 + $0x4a] sm:$0xff]
      %v2554 = vld [vmem:[%s1936 + $0x52] sm:$0xff]
      %v2555 = vld [vmem:[%s1936 + $0x62] sm:$0xff]
      %v2556 = vld [vmem:[%s1936 + $0x6a] sm:$0xff]
      %v2557 = vld [vmem:[%s1936 + $0x7a] sm:$0xff]
      %v2558 = vld [vmem:[%s1936 + $0x82] sm:$0xff]
      %v2559 = vld [vmem:[%s1936 + $0x92] sm:$0xff]
      %v2560 = vld [vmem:[%s1936 + $0x9a] sm:$0xff]
      %v2561 = vld [vmem:[%s1936 + $0xaa] sm:$0xff]
      %v2562 = vld [vmem:[%s1936 + $0xb2] sm:$0xff]
      %v2563 = vld [vmem:[%s1936 + $0xc2] sm:$0xff]
      %v2564 = vld [vmem:[%s1936 + $0xca] sm:$0xff]
      %v2565 = vld [vmem:[%s1936 + $0xda] sm:$0xff]
      %v2566 = vld [vmem:[%s1936 + $0xe2] sm:$0xff]
      %v2567 = vld [vmem:[%s1936 + $0xf2] sm:$0xff]
      %v2568 = vld [vmem:[%s1936 + $0xfa] sm:$0xff]
      %v2569 = vld [vmem:[%s1936 + $0x10a] sm:$0xff]
      %v2570 = vld [vmem:[%s1936 + $0x112] sm:$0xff]
      %v2571 = vld [vmem:[%s1936 + $0x122] sm:$0xff]
      %v2572 = vld [vmem:[%s1936 + $0x12a] sm:$0xff]
      %v2573 = vld [vmem:[%s1936 + $0x13a] sm:$0xff]
      %v2574 = vld [vmem:[%s1936 + $0x142] sm:$0xff]
      %v2575 = vld [vmem:[%s1936 + $0x152] sm:$0xff]
      %v2576 = vld [vmem:[%s1936 + $0x15a] sm:$0xff]
      %v2577 = vld [vmem:[%s1936 + $0x16a] sm:$0xff]
      %v2578 = vld [vmem:[%s1936 + $0x172] sm:$0xff]
      %v2579 = vld [vmem:[%s1 + $0x400] sm:$0xff]
      %v2580 = vld [vmem:[%s1 + $0x408] sm:$0xff]
      %v2581 = vld [vmem:[%s1 + $0x410] sm:$0xff]
      %v2582 = vld [vmem:[%s1 + $0x418] sm:$0xff]
      %v2583 = vld [vmem:[%s1 + $0x420] sm:$0xff]
      %v2584 = vld [vmem:[%s1 + $0x428] sm:$0xff]
      %v2585 = vld [vmem:[%s1 + $0x430] sm:$0xff]
      %v2586 = vld [vmem:[%s1 + $0x438] sm:$0xff]
      %v2587 = vld [vmem:[%s1 + $0x440] sm:$0xff]
      %v2588 = vld [vmem:[%s1 + $0x448] sm:$0xff]
      %v2589 = vld [vmem:[%s1 + $0x450] sm:$0xff]
      %v2590 = vld [vmem:[%s1 + $0x458] sm:$0xff]
      %v2591 = vld [vmem:[%s1 + $0x460] sm:$0xff]
      %v2592 = vld [vmem:[%s1 + $0x468] sm:$0xff]
      %v2593 = vld [vmem:[%s1 + $0x470] sm:$0xff]
      %v2594 = vld [vmem:[%s1 + $0x478] sm:$0xff]
      %2595 = vmatprep.subr.mxu0 0.0
      %2596 = vmatpush1.msra.mxu0 %v2594
      %2597 = vmatprep.subr.mxu0 0.0
      %2598 = vmatpush1.msra.mxu0 %v2593
      %2599 = vmatprep.subr.mxu0 0.0
      %2600 = vmatpush1.msra.mxu0 %v2592
      %2601 = vmatprep.subr.mxu0 0.0
      %2602 = vmatpush1.msra.mxu0 %v2591
      %2603 = vmatprep.subr.mxu0 0.0
      %2604 = vmatpush1.msra.mxu0 %v2590
      %2605 = vmatprep.subr.mxu0 0.0
      %2606 = vmatpush1.msra.mxu0 %v2589
      %2607 = vmatprep.subr.mxu0 0.0
      %2608 = vmatpush1.msra.mxu0 %v2588
      %2609 = vmatprep.subr.mxu0 0.0
      %2610 = vmatpush1.msra.mxu0 %v2587
      %2611 = vmatprep.subr.mxu0 0.0
      %2612 = vmatpush1.msra.mxu0 %v2586
      %2613 = vmatprep.subr.mxu0 0.0
      %2614 = vmatpush1.msra.mxu0 %v2585
      %2615 = vmatprep.subr.mxu0 0.0
      %2616 = vmatpush1.msra.mxu0 %v2584
      %2617 = vmatprep.subr.mxu0 0.0
      %2618 = vmatpush1.msra.mxu0 %v2583
      %2619 = vmatprep.subr.mxu0 0.0
      %2620 = vmatpush1.msra.mxu0 %v2582
      %2621 = vmatprep.subr.mxu0 0.0
      %2622 = vmatpush1.msra.mxu0 %v2581
      %2623 = vmatprep.subr.mxu0 0.0
      %2624 = vmatpush1.msra.mxu0 %v2580
      %2625 = vmatprep.subr.mxu0 0.0
      %2626 = vmatpush1.msra.mxu0 %v2579
      %2627 = vmatprep.subr.mxu0 0.0
      %2628 = vmatpush2.msra.mxu0 0.0
      %2629 = vmatprep.subr.mxu0 0.0
      %2630 = vmatpush2.msra.mxu0 0.0
      %2631 = vmatprep.subr.mxu0 0.0
      %2632 = vmatpush2.msra.mxu0 0.0
      %2633 = vmatprep.subr.mxu0 0.0
      %2634 = vmatpush2.msra.mxu0 0.0
      %2635 = vmatprep.subr.mxu0 0.0
      %2636 = vmatpush2.msra.mxu0 0.0
      %2637 = vmatprep.subr.mxu0 0.0
      %2638 = vmatpush2.msra.mxu0 0.0
      %2639 = vmatprep.subr.mxu0 0.0
      %2640 = vmatpush2.msra.mxu0 0.0
      %2641 = vmatprep.subr.mxu0 0.0
      %2642 = vmatpush2.msra.mxu0 0.0
      %2643 = vmatprep.subr.mxu0 0.0
      %2644 = vmatpush2.msra.mxu0 0.0
      %2645 = vmatprep.subr.mxu0 0.0
      %2646 = vmatpush2.msra.mxu0 0.0
      %2647 = vmatprep.subr.mxu0 0.0
      %2648 = vmatpush2.msra.mxu0 0.0
      %2649 = vmatprep.subr.mxu0 0.0
      %2650 = vmatpush2.msra.mxu0 0.0
      %2651 = vmatprep.subr.mxu0 0.0
      %2652 = vmatpush2.msra.mxu0 0.0
      %2653 = vmatprep.subr.mxu0 0.0
      %2654 = vmatpush2.msra.mxu0 0.0
      %2655 = vmatprep.subr.mxu0 0.0
      %2656 = vmatpush2.msra.mxu0 0.0
      %2657 = vmatprep.subr.mxu0 0.0
      %2658 = vmatpush2.msra.mxu0 0.0
      %2659 = vmatprep.mubr.f32.mxu0 0.0
      %2660 = vmatmul.mubr.f32.gmra.mxu0 %v2547
      %v2661 = vpop.f32.mrf.mxu0
      %v2662 = vadd.f32 0.0, %v2661
      %v2663 = vpop.f32.mrf.mxu0
      %2664 = vmatprep.mubr.f32.mxu0 0.0
      %2665 = vmatmul.mubr.f32.gmra.mxu0 %v2548
      %v2666 = vpop.f32.mrf.mxu0
      %v2667 = vadd.f32 0.0, %v2666
      %v2668 = vpop.f32.mrf.mxu0
      %2669 = vmatprep.mubr.f32.mxu0 0.0
      %2670 = vmatmul.mubr.f32.gmra.mxu0 %v2549
      %v2671 = vpop.f32.mrf.mxu0
      %v2672 = vadd.f32 0.0, %v2671
      %v2673 = vpop.f32.mrf.mxu0
      %2674 = vmatprep.mubr.f32.mxu0 0.0
      %2675 = vmatmul.mubr.f32.gmra.mxu0 %v2550
      %v2676 = vpop.f32.mrf.mxu0
      %v2677 = vadd.f32 0.0, %v2676
      %v2678 = vpop.f32.mrf.mxu0
      %2679 = vmatprep.mubr.f32.mxu0 0.0
      %2680 = vmatmul.mubr.f32.gmra.mxu0 %v2551
      %v2681 = vpop.f32.mrf.mxu0
      %v2682 = vadd.f32 0.0, %v2681
      %v2683 = vpop.f32.mrf.mxu0
      %2684 = vmatprep.mubr.f32.mxu0 0.0
      %2685 = vmatmul.mubr.f32.gmra.mxu0 %v2552
      %v2686 = vpop.f32.mrf.mxu0
      %v2687 = vadd.f32 0.0, %v2686
      %v2688 = vpop.f32.mrf.mxu0
      %2689 = vmatprep.mubr.f32.mxu0 0.0
      %2690 = vmatmul.mubr.f32.gmra.mxu0 %v2553
      %v2691 = vpop.f32.mrf.mxu0
      %v2692 = vadd.f32 0.0, %v2691
      %v2693 = vpop.f32.mrf.mxu0
      %2694 = vmatprep.mubr.f32.mxu0 0.0
      %2695 = vmatmul.mubr.f32.gmra.mxu0 %v2554
      %v2696 = vpop.f32.mrf.mxu0
      %v2697 = vadd.f32 0.0, %v2696
      %v2698 = vpop.f32.mrf.mxu0
      %2699 = vmatprep.mubr.f32.mxu0 0.0
      %2700 = vmatmul.mubr.f32.gmra.mxu0 %v2555
      %v2701 = vpop.f32.mrf.mxu0
      %v2702 = vadd.f32 0.0, %v2701
      %v2703 = vpop.f32.mrf.mxu0
      %2704 = vmatprep.mubr.f32.mxu0 0.0
      %2705 = vmatmul.mubr.f32.gmra.mxu0 %v2556
      %v2706 = vpop.f32.mrf.mxu0
      %v2707 = vadd.f32 0.0, %v2706
      %v2708 = vpop.f32.mrf.mxu0
      %2709 = vmatprep.mubr.f32.mxu0 0.0
      %2710 = vmatmul.mubr.f32.gmra.mxu0 %v2557
      %v2711 = vpop.f32.mrf.mxu0
      %v2712 = vadd.f32 0.0, %v2711
      %v2713 = vpop.f32.mrf.mxu0
      %2714 = vmatprep.mubr.f32.mxu0 0.0
      %2715 = vmatmul.mubr.f32.gmra.mxu0 %v2558
      %v2716 = vpop.f32.mrf.mxu0
      %v2717 = vadd.f32 0.0, %v2716
      %v2718 = vpop.f32.mrf.mxu0
      %2719 = vmatprep.mubr.f32.mxu0 0.0
      %2720 = vmatmul.mubr.f32.gmra.mxu0 %v2559
      %v2721 = vpop.f32.mrf.mxu0
      %v2722 = vadd.f32 0.0, %v2721
      %v2723 = vpop.f32.mrf.mxu0
      %2724 = vmatprep.mubr.f32.mxu0 0.0
      %2725 = vmatmul.mubr.f32.gmra.mxu0 %v2560
      %v2726 = vpop.f32.mrf.mxu0
      %v2727 = vadd.f32 0.0, %v2726
      %v2728 = vpop.f32.mrf.mxu0
      %2729 = vmatprep.mubr.f32.mxu0 0.0
      %2730 = vmatmul.mubr.f32.gmra.mxu0 %v2561
      %v2731 = vpop.f32.mrf.mxu0
      %v2732 = vadd.f32 0.0, %v2731
      %v2733 = vpop.f32.mrf.mxu0
      %2734 = vmatprep.mubr.f32.mxu0 0.0
      %2735 = vmatmul.mubr.f32.gmra.mxu0 %v2562
      %v2736 = vpop.f32.mrf.mxu0
      %v2737 = vadd.f32 0.0, %v2736
      %v2738 = vpop.f32.mrf.mxu0
      %2739 = vmatprep.mubr.f32.mxu0 0.0
      %2740 = vmatmul.mubr.f32.gmra.mxu0 %v2563
      %v2741 = vpop.f32.mrf.mxu0
      %v2742 = vadd.f32 0.0, %v2741
      %v2743 = vpop.f32.mrf.mxu0
      %2744 = vmatprep.mubr.f32.mxu0 0.0
      %2745 = vmatmul.mubr.f32.gmra.mxu0 %v2564
      %v2746 = vpop.f32.mrf.mxu0
      %v2747 = vadd.f32 0.0, %v2746
      %v2748 = vpop.f32.mrf.mxu0
      %2749 = vmatprep.mubr.f32.mxu0 0.0
      %2750 = vmatmul.mubr.f32.gmra.mxu0 %v2565
      %v2751 = vpop.f32.mrf.mxu0
      %v2752 = vadd.f32 0.0, %v2751
      %v2753 = vpop.f32.mrf.mxu0
      %2754 = vmatprep.mubr.f32.mxu0 0.0
      %2755 = vmatmul.mubr.f32.gmra.mxu0 %v2566
      %v2756 = vpop.f32.mrf.mxu0
      %v2757 = vadd.f32 0.0, %v2756
      %v2758 = vpop.f32.mrf.mxu0
      %2759 = vmatprep.mubr.f32.mxu0 0.0
      %2760 = vmatmul.mubr.f32.gmra.mxu0 %v2567
      %v2761 = vpop.f32.mrf.mxu0
      %v2762 = vadd.f32 0.0, %v2761
      %v2763 = vpop.f32.mrf.mxu0
      %2764 = vmatprep.mubr.f32.mxu0 0.0
      %2765 = vmatmul.mubr.f32.gmra.mxu0 %v2568
      %v2766 = vpop.f32.mrf.mxu0
      %v2767 = vadd.f32 0.0, %v2766
      %v2768 = vpop.f32.mrf.mxu0
      %2769 = vmatprep.mubr.f32.mxu0 0.0
      %2770 = vmatmul.mubr.f32.gmra.mxu0 %v2569
      %v2771 = vpop.f32.mrf.mxu0
      %v2772 = vadd.f32 0.0, %v2771
      %v2773 = vpop.f32.mrf.mxu0
      %2774 = vmatprep.mubr.f32.mxu0 0.0
      %2775 = vmatmul.mubr.f32.gmra.mxu0 %v2570
      %v2776 = vpop.f32.mrf.mxu0
      %v2777 = vadd.f32 0.0, %v2776
      %v2778 = vpop.f32.mrf.mxu0
      %2779 = vmatprep.mubr.f32.mxu0 0.0
      %2780 = vmatmul.mubr.f32.gmra.mxu0 %v2571
      %v2781 = vpop.f32.mrf.mxu0
      %v2782 = vadd.f32 0.0, %v2781
      %v2783 = vpop.f32.mrf.mxu0
      %2784 = vmatprep.mubr.f32.mxu0 0.0
      %2785 = vmatmul.mubr.f32.gmra.mxu0 %v2572
      %v2786 = vpop.f32.mrf.mxu0
      %v2787 = vadd.f32 0.0, %v2786
      %v2788 = vpop.f32.mrf.mxu0
      %2789 = vmatprep.mubr.f32.mxu0 0.0
      %2790 = vmatmul.mubr.f32.gmra.mxu0 %v2573
      %v2791 = vpop.f32.mrf.mxu0
      %v2792 = vadd.f32 0.0, %v2791
      %v2793 = vpop.f32.mrf.mxu0
      %2794 = vmatprep.mubr.f32.mxu0 0.0
      %2795 = vmatmul.mubr.f32.gmra.mxu0 %v2574
      %v2796 = vpop.f32.mrf.mxu0
      %v2797 = vadd.f32 0.0, %v2796
      %v2798 = vpop.f32.mrf.mxu0
      %2799 = vmatprep.mubr.f32.mxu0 0.0
      %2800 = vmatmul.mubr.f32.gmra.mxu0 %v2575
      %v2801 = vpop.f32.mrf.mxu0
      %v2802 = vadd.f32 0.0, %v2801
      %v2803 = vpop.f32.mrf.mxu0
      %2804 = vmatprep.mubr.f32.mxu0 0.0
      %2805 = vmatmul.mubr.f32.gmra.mxu0 %v2576
      %v2806 = vpop.f32.mrf.mxu0
      %v2807 = vadd.f32 0.0, %v2806
      %v2808 = vpop.f32.mrf.mxu0
      %2809 = vmatprep.mubr.f32.mxu0 0.0
      %2810 = vmatmul.mubr.f32.gmra.mxu0 %v2577
      %v2811 = vpop.f32.mrf.mxu0
      %v2812 = vadd.f32 0.0, %v2811
      %v2813 = vpop.f32.mrf.mxu0
      %2814 = vmatprep.mubr.f32.mxu0 0.0
      %2815 = vmatmul.mubr.f32.gmra.mxu0 %v2578
      %v2816 = vpop.f32.mrf.mxu0
      %v2817 = vadd.f32 0.0, %v2816
      %v2818 = vpop.f32.mrf.mxu0
      %2819 = vdwg.mxu0
      %v2820 = vadd.f32 %v2515, %v2662
      %v2821 = vadd.f32 %v2516, %v2667
      %v2822 = vadd.f32 %v2517, %v2672
      %v2823 = vadd.f32 %v2518, %v2677
      %v2824 = vadd.f32 %v2519, %v2682
      %v2825 = vadd.f32 %v2520, %v2687
      %v2826 = vadd.f32 %v2521, %v2692
      %v2827 = vadd.f32 %v2522, %v2697
      %v2828 = vadd.f32 %v2523, %v2702
      %v2829 = vadd.f32 %v2524, %v2707
      %v2830 = vadd.f32 %v2525, %v2712
      %v2831 = vadd.f32 %v2526, %v2717
      %v2832 = vadd.f32 %v2527, %v2722
      %v2833 = vadd.f32 %v2528, %v2727
      %v2834 = vadd.f32 %v2529, %v2732
      %v2835 = vadd.f32 %v2530, %v2737
      %v2836 = vadd.f32 %v2531, %v2742
      %v2837 = vadd.f32 %v2532, %v2747
      %v2838 = vadd.f32 %v2533, %v2752
      %v2839 = vadd.f32 %v2534, %v2757
      %v2840 = vadd.f32 %v2535, %v2762
      %v2841 = vadd.f32 %v2536, %v2767
      %v2842 = vadd.f32 %v2537, %v2772
      %v2843 = vadd.f32 %v2538, %v2777
      %v2844 = vadd.f32 %v2539, %v2782
      %v2845 = vadd.f32 %v2540, %v2787
      %v2846 = vadd.f32 %v2541, %v2792
      %v2847 = vadd.f32 %v2542, %v2797
      %v2848 = vadd.f32 %v2543, %v2802
      %v2849 = vadd.f32 %v2544, %v2807
      %v2850 = vadd.f32 %v2545, %v2812
      %v2851 = vadd.f32 %v2546, %v2817
      %2852 = vst [vmem:[%s168] sm:$0xff] %v2820
      %2853 = vst [vmem:[%s168 + $0x8] sm:$0xff] %v2821
      %2854 = vst [vmem:[%s168 + $0x10] sm:$0xff] %v2822
      %2855 = vst [vmem:[%s168 + $0x18] sm:$0xff] %v2823
      %2856 = vst [vmem:[%s168 + $0x20] sm:$0xff] %v2824
      %2857 = vst [vmem:[%s168 + $0x28] sm:$0xff] %v2825
      %2858 = vst [vmem:[%s168 + $0x30] sm:$0xff] %v2826
      %2859 = vst [vmem:[%s168 + $0x38] sm:$0xff] %v2827
      %2860 = vst [vmem:[%s168 + $0x40] sm:$0xff] %v2828
      %2861 = vst [vmem:[%s168 + $0x48] sm:$0xff] %v2829
      %2862 = vst [vmem:[%s168 + $0x50] sm:$0xff] %v2830
      %2863 = vst [vmem:[%s168 + $0x58] sm:$0xff] %v2831
      %2864 = vst [vmem:[%s168 + $0x60] sm:$0xff] %v2832
      %2865 = vst [vmem:[%s168 + $0x68] sm:$0xff] %v2833
      %2866 = vst [vmem:[%s168 + $0x70] sm:$0xff] %v2834
      %2867 = vst [vmem:[%s168 + $0x78] sm:$0xff] %v2835
      %2868 = vst [vmem:[%s168 + $0x80] sm:$0xff] %v2836
      %2869 = vst [vmem:[%s168 + $0x88] sm:$0xff] %v2837
      %2870 = vst [vmem:[%s168 + $0x90] sm:$0xff] %v2838
      %2871 = vst [vmem:[%s168 + $0x98] sm:$0xff] %v2839
      %2872 = vst [vmem:[%s168 + $0xa0] sm:$0xff] %v2840
      %2873 = vst [vmem:[%s168 + $0xa8] sm:$0xff] %v2841
      %2874 = vst [vmem:[%s168 + $0xb0] sm:$0xff] %v2842
      %2875 = vst [vmem:[%s168 + $0xb8] sm:$0xff] %v2843
      %2876 = vst [vmem:[%s168 + $0xc0] sm:$0xff] %v2844
      %2877 = vst [vmem:[%s168 + $0xc8] sm:$0xff] %v2845
      %2878 = vst [vmem:[%s168 + $0xd0] sm:$0xff] %v2846
      %2879 = vst [vmem:[%s168 + $0xd8] sm:$0xff] %v2847
      %2880 = vst [vmem:[%s168 + $0xe0] sm:$0xff] %v2848
      %2881 = vst [vmem:[%s168 + $0xe8] sm:$0xff] %v2849
      %2882 = vst [vmem:[%s168 + $0xf0] sm:$0xff] %v2850
      %2883 = vst [vmem:[%s168 + $0xf8] sm:$0xff] %v2851
      %p2884 = scmp.eq.s32.totalorder %s15, 0
      // Predicated region
      $region29: #{residual_forward.3} parent=27 // pred_check
        %p2885 = pneg %p2884
      $region30: #{residual_forward.3} parent=27 // pred_check_branch
        %2887 = sbr.rel (%p2885) target = $region32
      $region31: #{residual_forward.3} parent=27 // pred_region
        %2888 = vst [vmem:[%s3] sm:$0x3] 0.0
      $region32: #{residual_forward.3} parent=27 // pred_fallthru
        _
      %v2889 = vadd.f32 %v2820, %v2821
      %v2890 = vadd.f32 %v2889, %v2822
      %v2891 = vadd.f32 %v2890, %v2823
      %v2892 = vadd.f32 %v2891, %v2824
      %v2893 = vadd.f32 %v2892, %v2825
      %v2894 = vadd.f32 %v2893, %v2826
      %v2895 = vadd.f32 %v2894, %v2827
      %v2896 = vadd.f32 %v2895, %v2828
      %v2897 = vadd.f32 %v2896, %v2829
      %v2898 = vadd.f32 %v2897, %v2830
      %v2899 = vadd.f32 %v2898, %v2831
      %v2900 = vadd.f32 %v2899, %v2832
      %v2901 = vadd.f32 %v2900, %v2833
      %v2902 = vadd.f32 %v2901, %v2834
      %v2903 = vadd.f32 %v2902, %v2835
      %v2904 = vadd.f32 %v2903, %v2836
      %v2905 = vadd.f32 %v2904, %v2837
      %v2906 = vadd.f32 %v2905, %v2838
      %v2907 = vadd.f32 %v2906, %v2839
      %v2908 = vadd.f32 %v2907, %v2840
      %v2909 = vadd.f32 %v2908, %v2841
      %v2910 = vadd.f32 %v2909, %v2842
      %v2911 = vadd.f32 %v2910, %v2843
      %v2912 = vadd.f32 %v2911, %v2844
      %v2913 = vadd.f32 %v2912, %v2845
      %v2914 = vadd.f32 %v2913, %v2846
      %v2915 = vadd.f32 %v2914, %v2847
      %v2916 = vadd.f32 %v2915, %v2848
      %v2917 = vadd.f32 %v2916, %v2849
      %v2918 = vadd.f32 %v2917, %v2850
      %v2919 = vadd.f32 %v2918, %v2851
      %v2920 = vrot.slane %v2919, 4
      %v2921 = vadd.f32 %v2919, %v2920
      %v2922 = vrot.slane %v2921, 2
      %v2923 = vadd.f32 %v2921, %v2922
      %v2924 = vrot.slane %v2923, 1
      %v2925 = vadd.f32 %v2923, %v2924
      %v2926 = vmul.f32 %v2820, %v2820
      %v2927 = vmul.f32 %v2821, %v2821
      %v2928 = vmul.f32 %v2822, %v2822
      %v2929 = vmul.f32 %v2823, %v2823
      %v2930 = vmul.f32 %v2824, %v2824
      %v2931 = vmul.f32 %v2825, %v2825
      %v2932 = vmul.f32 %v2826, %v2826
      %v2933 = vmul.f32 %v2827, %v2827
      %v2934 = vmul.f32 %v2828, %v2828
      %v2935 = vmul.f32 %v2829, %v2829
      %v2936 = vmul.f32 %v2830, %v2830
      %v2937 = vmul.f32 %v2831, %v2831
      %v2938 = vmul.f32 %v2832, %v2832
      %v2939 = vmul.f32 %v2833, %v2833
      %v2940 = vmul.f32 %v2834, %v2834
      %v2941 = vmul.f32 %v2835, %v2835
      %v2942 = vmul.f32 %v2836, %v2836
      %v2943 = vmul.f32 %v2837, %v2837
      %v2944 = vmul.f32 %v2838, %v2838
      %v2945 = vmul.f32 %v2839, %v2839
      %v2946 = vmul.f32 %v2840, %v2840
      %v2947 = vmul.f32 %v2841, %v2841
      %v2948 = vmul.f32 %v2842, %v2842
      %v2949 = vmul.f32 %v2843, %v2843
      %v2950 = vmul.f32 %v2844, %v2844
      %v2951 = vmul.f32 %v2845, %v2845
      %v2952 = vmul.f32 %v2846, %v2846
      %v2953 = vmul.f32 %v2847, %v2847
      %v2954 = vmul.f32 %v2848, %v2848
      %v2955 = vmul.f32 %v2849, %v2849
      %v2956 = vmul.f32 %v2850, %v2850
      %v2957 = vmul.f32 %v2851, %v2851
      %v2958 = vadd.f32 %v2926, %v2927
      %v2959 = vadd.f32 %v2958, %v2928
      %v2960 = vadd.f32 %v2959, %v2929
      %v2961 = vadd.f32 %v2960, %v2930
      %v2962 = vadd.f32 %v2961, %v2931
      %v2963 = vadd.f32 %v2962, %v2932
      %v2964 = vadd.f32 %v2963, %v2933
      %v2965 = vadd.f32 %v2964, %v2934
      %v2966 = vadd.f32 %v2965, %v2935
      %v2967 = vadd.f32 %v2966, %v2936
      %v2968 = vadd.f32 %v2967, %v2937
      %v2969 = vadd.f32 %v2968, %v2938
      %v2970 = vadd.f32 %v2969, %v2939
      %v2971 = vadd.f32 %v2970, %v2940
      %v2972 = vadd.f32 %v2971, %v2941
      %v2973 = vadd.f32 %v2972, %v2942
      %v2974 = vadd.f32 %v2973, %v2943
      %v2975 = vadd.f32 %v2974, %v2944
      %v2976 = vadd.f32 %v2975, %v2945
      %v2977 = vadd.f32 %v2976, %v2946
      %v2978 = vadd.f32 %v2977, %v2947
      %v2979 = vadd.f32 %v2978, %v2948
      %v2980 = vadd.f32 %v2979, %v2949
      %v2981 = vadd.f32 %v2980, %v2950
      %v2982 = vadd.f32 %v2981, %v2951
      %v2983 = vadd.f32 %v2982, %v2952
      %v2984 = vadd.f32 %v2983, %v2953
      %v2985 = vadd.f32 %v2984, %v2954
      %v2986 = vadd.f32 %v2985, %v2955
      %v2987 = vadd.f32 %v2986, %v2956
      %v2988 = vadd.f32 %v2987, %v2957
      %v2989 = vrot.slane %v2988, 4
      %v2990 = vadd.f32 %v2988, %v2989
      %v2991 = vrot.slane %v2990, 2
      %v2992 = vadd.f32 %v2990, %v2991
      %v2993 = vrot.slane %v2992, 1
      %v2994 = vadd.f32 %v2992, %v2993
      %v2995 = vld [vmem:[%s3] sm:$0x3]
      %vm2996 = vcmask 1040384
      %v2997 = vsel %vm2996, %v2925, %v2994
      %v2998 = vadd.f32 %v2995, %v2997
      %2999 = vst [vmem:[%s3] sm:$0x3] %v2998
      %p3000 = scmp.lt.s32.totalorder %s15, 1
      %s3001 = scalar_select %p3000, %s15, 1
      %s3002 = smul.addr %s3001, 32
      %s3003 = smul.addr %s3002, 8
      %s3004 = scalar_lea.vmem %s2, %s3003
      // Predicated region
      $region33: #{residual_forward.3} parent=27 // pred_check
        %p3005 = pneg %p80
      $region34: #{residual_forward.3} parent=27 // pred_check_branch
        %3007 = sbr.rel (%p3005) target = $region36
      $region35: #{residual_forward.3} parent=27 // pred_region
        _
      $region36: #{residual_forward.3} parent=27 // pred_fallthru
        _
      // Predicated region
      $region37: #{residual_forward.3} parent=27 // pred_check
        %p3008 = pneg %p101
      $region38: #{residual_forward.3} parent=27 // pred_check_branch
        %3010 = sbr.rel (%p3008) target = $region40
      $region39: #{residual_forward.3} parent=27 // pred_region
        _
      $region40: #{residual_forward.3} parent=27 // pred_fallthru
        _
      // Predicated region
      $region41: #{residual_forward.3} parent=27 // pred_check
        %p3011 = pneg %p101
      $region42: #{residual_forward.3} parent=27 // pred_check_branch
        %3013 = sbr.rel (%p3011) target = $region44
      $region43: #{residual_forward.3} parent=27 // pred_region
        _
      $region44: #{residual_forward.3} parent=27 // pred_fallthru
        _
    $region28: #{residual_forward.3} parent=5 // pred_fallthru
      _
    %p3014 = scmp.le.s32.totalorder 2, %s10
    // Predicated region
    $region45: #{residual_forward.3} parent=5 // pred_check
      %p3015 = pneg %p3014
    $region46: #{residual_forward.3} parent=5 // pred_check_branch
      %3017 = sbr.rel (%p3015) target = $region48
    $region47: #{residual_forward.3} parent=5 // pred_region
      %s3018 = ssub.s32 %s10, 2
      // Predicated region
      $region49: #{residual_forward.3} parent=47 // pred_check
        %p3019 = pneg %p86
      $region50: #{residual_forward.3} parent=47 // pred_check_branch
        %3021 = sbr.rel (%p3019) target = $region52
      $region51: #{residual_forward.3} parent=47 // pred_region
        %p3022 = scmp.lt.s32.totalorder %s16, 1
        %s3023 = scalar_select %p3022, %s16, 1
        %s3024 = smul.addr %s3023, 32
        %s3025 = smul.addr %s3024, 8
        %s3026 = scalar_lea.vmem %s2, %s3025
      $region52: #{residual_forward.3} parent=47 // pred_fallthru
        _
    $region48: #{residual_forward.3} parent=5 // pred_fallthru
      _
  $region6: #{residual_forward.3} parent=0 // loop_footer
    %s14 = sadd.s32 1, %s10
  $region7: #{residual_forward.3} parent=0 // loop_footer_branch
    %9 = sbr.rel target = $region3
  $region8: #{residual_forward.3} parent=0 // loop_exit
    _

// kernel: residual_forward.4
$region0: #{residual_forward.4}
  #allocation0 [shape = 'u32[]', space=smem, size = 0x4, offset = 0x4, fixed_abs, tag = 'smem constant byte address 0x4 - core index']
  #allocation1 [shape = 'u32[144,128]{1,0:T(1,128)}', space=vmem, size = 0x12000, scoped, tag = 'internal scratch']
  #allocation2 [shape = 'f32[18,18,128]{2,1,0:T(8,128)}', space=vmem, size = 0x36000, scoped, tag = 'scratch operand']
  %s0 = inlined_call_operand.vmem [shape: f32[2,256,128], index: 0, kind: input, shape index: {}]
  %s1 = inlined_call_operand.vmem [shape: f32[1,128], index: 1, kind: input, shape index: {}]
  %s2 = inlined_call_operand.vmem [shape: f32[1,128], index: 2, kind: input, shape index: {}]
  %s3 = inlined_call_operand.vmem [shape: f32[1152,128], index: 3, kind: input, shape index: {}]
  %s4 = inlined_call_operand.vmem [shape: f32[2,256,128], index: 4, kind: output, shape index: {0}]
  %s5 = inlined_call_operand.vmem [shape: f32[2,128], index: 5, kind: output, shape index: {1}]
  %6 = xla_tuple %s4, %s5
  %s7 = sld [smem:[#allocation0]]
  $region61: #{residual_forward.4} parent=0
    _
  %s9 = ssub.s32 1, %s7
  %s10 = scalar_select 0, %s9, %s7
  loop: start=0, step=1, limit=4
  $region2: #{residual_forward.4} parent=0 // loop_pre_header
    _
  $region3: #{residual_forward.4} parent=0 // loop_header
    %s12 = sphi 0, %s16
    %p13 = scmp.ge.s32.totalorder %s12, 4
    %s22 = sphi 0, %s24
    %s25 = sphi 0, %s22
    %s26 = sphi 0, %s25
    %s42 = sphi 0, %s26
    %s46 = sphi 0, %s46
    %s48 = sphi 0, %s46
    %s49 = sphi 0, %s48
    %s63 = sphi 0, %s49
    %s67 = sphi 0, %s67
    %s69 = sphi 0, %s67
    %s70 = sphi 0, %s69
    %s84 = sphi 0, %s70
    %s88 = sphi 0, %s88
    %s90 = sphi 0, %s88
    %s91 = sphi 0, %s90
    %s105 = sphi 0, %s91
    %s111 = sphi 0, %s113
    %s114 = sphi 0, %s111
    %s115 = sphi 0, %s114
    %s131 = sphi 0, %s115
    %s135 = sphi 0, %s135
    %s137 = sphi 0, %s135
    %s138 = sphi 0, %s137
    %s152 = sphi 0, %s138
  $region4: #{residual_forward.4} parent=0 // loop_header_branch
    %15 = sbr.rel (%p13) target = $region8
  $region5: #{residual_forward.4} parent=0 // loop_body
    %s17 = ssub.s32 %s12, 1
    %s18 = ssub.s32 %s12, 2
    %s19 = sadd.s32 %s12, 1
    %s20 = ssub.s32 %s12, %s19
    %p21 = scmp.eq.s32.totalorder %s20, 0
    %s23 = sadd.s32 %s22, 1
    %s24 = scalar_select %p21, %s22, %s23
    %p27 = pneg %p21
    %p28 = scmp.eq.s32.totalorder %s12, 1
    %p29 = por %p27, %p28
    %p30 = scmp.ne.s32.totalorder %s22, %s25
    %p31 = scmp.eq.s32.totalorder %s12, 0
    %p32 = por %p30, %p31
    %p33 = scmp.ne.s32.totalorder %s22, %s25
    %p34 = scmp.eq.s32.totalorder %s17, 1
    %p35 = por %p33, %p34
    %p36 = scmp.ne.s32.totalorder %s25, %s26
    %p37 = scmp.eq.s32.totalorder %s17, 0
    %p38 = por %p36, %p37
    %p39 = scmp.ne.s32.totalorder %s25, %s26
    %p40 = scmp.eq.s32.totalorder %s18, 1
    %p41 = por %p39, %p40
    %p43 = scmp.ne.s32.totalorder %s26, %s42
    %p44 = scmp.eq.s32.totalorder %s18, 0
    %p45 = por %p43, %p44
    %s47 = sadd.s32 %s46, 1
    %p50 = scmp.eq.s32.totalorder %s12, 1
    %p51 = scmp.ne.s32.totalorder %s46, %s48
    %p52 = scmp.eq.s32.totalorder %s12, 0
    %p53 = por %p51, %p52
    %p54 = scmp.ne.s32.totalorder %s46, %s48
    %p55 = scmp.eq.s32.totalorder %s17, 1
    %p56 = por %p54, %p55
    %p57 = scmp.ne.s32.totalorder %s48, %s49
    %p58 = scmp.eq.s32.totalorder %s17, 0
    %p59 = por %p57, %p58
    %p60 = scmp.ne.s32.totalorder %s48, %s49
    %p61 = scmp.eq.s32.totalorder %s18, 1
    %p62 = por %p60, %p61
    %p64 = scmp.ne.s32.totalorder %s49, %s63
    %p65 = scmp.eq.s32.totalorder %s18, 0
    %p66 = por %p64, %p65
    %s68 = sadd.s32 %s67, 1
    %p71 = scmp.eq.s32.totalorder %s12, 1
    %p72 = scmp.ne.s32.totalorder %s67, %s69
    %p73 = scmp.eq.s32.totalorder %s12, 0
    %p74 = por %p72, %p73
    %p75 = scmp.ne.s32.totalorder %s67, %s69
    %p76 = scmp.eq.s32.totalorder %s17, 1
    %p77 = por %p75, %p76
    %p78 = scmp.ne.s32.totalorder %s69, %s70
    %p79 = scmp.eq.s32.totalorder %s17, 0
    %p80 = por %p78, %p79
    %p81 = scmp.ne.s32.totalorder %s69, %s70
    %p82 = scmp.eq.s32.totalorder %s18, 1
    %p83 = por %p81, %p82
    %p85 = scmp.ne.s32.totalorder %s70, %s84
    %p86 = scmp.eq.s32.totalorder %s18, 0
    %p87 = por %p85, %p86
    %s89 = sadd.s32 %s88, 1
    %p92 = scmp.eq.s32.totalorder %s12, 1
    %p93 = scmp.ne.s32.totalorder %s88, %s90
    %p94 = scmp.eq.s32.totalorder %s12, 0
    %p95 = por %p93, %p94
    %p96 = scmp.ne.s32.totalorder %s88, %s90
    %p97 = scmp.eq.s32.totalorder %s17, 1
    %p98 = por %p96, %p97
    %p99 = scmp.ne.s32.totalorder %s90, %s91
    %p100 = scmp.eq.s32.totalorder %s17, 0
    %p101 = por %p99, %p100
    %p102 = scmp.ne.s32.totalorder %s90, %s91
    %p103 = scmp.eq.s32.totalorder %s18, 1
    %p104 = por %p102, %p103
    %p106 = scmp.ne.s32.totalorder %s91, %s105
    %p107 = scmp.eq.s32.totalorder %s18, 0
    %p108 = por %p106, %p107
    %s109 = ssub.s32 %s12, %s19
    %p110 = scmp.eq.s32.totalorder %s109, 0
    %s112 = sadd.s32 %s111, 1
    %s113 = scalar_select %p110, %s111, %s112
    %p116 = pneg %p110
    %p117 = scmp.eq.s32.totalorder %s12, 1
    %p118 = por %p116, %p117
    %p119 = scmp.ne.s32.totalorder %s111, %s114
    %p120 = scmp.eq.s32.totalorder %s12, 0
    %p121 = por %p119, %p120
    %p122 = scmp.ne.s32.totalorder %s111, %s114
    %p123 = scmp.eq.s32.totalorder %s17, 1
    %p124 = por %p122, %p123
    %p125 = scmp.ne.s32.totalorder %s114, %s115
    %p126 = scmp.eq.s32.totalorder %s17, 0
    %p127 = por %p125, %p126
    %p128 = scmp.ne.s32.totalorder %s114, %s115
    %p129 = scmp.eq.s32.totalorder %s18, 1
    %p130 = por %p128, %p129
    %p132 = scmp.ne.s32.totalorder %s115, %s131
    %p133 = scmp.eq.s32.totalorder %s18, 0
    %p134 = por %p132, %p133
    %s136 = sadd.s32 %s135, 1
    %p139 = scmp.eq.s32.totalorder %s12, 1
    %p140 = scmp.ne.s32.totalorder %s135, %s137
    %p141 = scmp.eq.s32.totalorder %s12, 0
    %p142 = por %p140, %p141
    %p143 = scmp.ne.s32.totalorder %s135, %s137
    %p144 = scmp.eq.s32.totalorder %s17, 1
    %p145 = por %p143, %p144
    %p146 = scmp.ne.s32.totalorder %s137, %s138
    %p147 = scmp.eq.s32.totalorder %s17, 0
    %p148 = por %p146, %p147
    %p149 = scmp.ne.s32.totalorder %s137, %s138
    %p150 = scmp.eq.s32.totalorder %s18, 1
    %p151 = por %p149, %p150
    %p153 = scmp.ne.s32.totalorder %s138, %s152
    %p154 = scmp.eq.s32.totalorder %s18, 0
    %p155 = por %p153, %p154
    %p156 = scmp.le.s32.totalorder 1, %s12
    %p157 = scmp.lt.s32.totalorder %s12, 3
    %p158 = pnand %p156, %p157
    %p159 = pneg %p158
    // Predicated region
    $region9: #{residual_forward.4} parent=5 // pred_check
      _
    $region10: #{residual_forward.4} parent=5 // pred_check_branch
      %161 = sbr.rel (%p158) target = $region12
    $region11: #{residual_forward.4} parent=5 // pred_region
      %s162 = ssub.s32 %s12, 1
      // Predicated region
      $region13: #{residual_forward.4} parent=11 // pred_check
        %p163 = pneg %p59
      $region14: #{residual_forward.4} parent=11 // pred_check_branch
        %165 = sbr.rel (%p163) target = $region16
      $region15: #{residual_forward.4} parent=11 // pred_region
        _
      $region16: #{residual_forward.4} parent=11 // pred_fallthru
        _
      // Predicated region
      $region17: #{residual_forward.4} parent=11 // pred_check
        %p166 = pneg %p80
      $region18: #{residual_forward.4} parent=11 // pred_check_branch
        %168 = sbr.rel (%p166) target = $region20
      $region19: #{residual_forward.4} parent=11 // pred_region
        _
      $region20: #{residual_forward.4} parent=11 // pred_fallthru
        _
      // Predicated region
      $region21: #{residual_forward.4} parent=11 // pred_check
        %p169 = pneg %p101
      $region22: #{residual_forward.4} parent=11 // pred_check_branch
        %171 = sbr.rel (%p169) target = $region24
      $region23: #{residual_forward.4} parent=11 // pred_region
        _
      $region24: #{residual_forward.4} parent=11 // pred_fallthru
        _
    $region12: #{residual_forward.4} parent=5 // pred_fallthru
      _
    %p172 = scmp.lt.s32.totalorder %s12, 2
    // Predicated region
    $region25: #{residual_forward.4} parent=5 // pred_check
      %p173 = pneg %p172
    $region26: #{residual_forward.4} parent=5 // pred_check_branch
      %175 = sbr.rel (%p173) target = $region28
    $region27: #{residual_forward.4} parent=5 // pred_region
      // Predicated region
      $region29: #{residual_forward.4} parent=27 // pred_check
        %p176 = pneg %p32
      $region30: #{residual_forward.4} parent=27 // pred_check_branch
        %178 = sbr.rel (%p176) target = $region32
      $region31: #{residual_forward.4} parent=27 // pred_region
        %p179 = scmp.lt.s32.totalorder %s12, 1
        %s180 = scalar_select %p179, %s12, 1
        %s181 = smul.addr %s180, 32
        %s182 = smul.addr %s181, 8
        %s183 = scalar_lea.vmem %s0, %s182
      $region32: #{residual_forward.4} parent=27 // pred_fallthru
        _
    $region28: #{residual_forward.4} parent=5 // pred_fallthru
      _
    %p184 = scmp.le.s32.totalorder 1, %s12
    %p185 = scmp.lt.s32.totalorder %s12, 3
    %p186 = pnand %p184, %p185
    %p187 = pneg %p186
    // Predicated region
    $region33: #{residual_forward.4} parent=5 // pred_check
      _
    $region34: #{residual_forward.4} parent=5 // pred_check_branch
      %189 = sbr.rel (%p186) target = $region36
    $region35: #{residual_forward.4} parent=5 // pred_region
      %s190 = ssub.s32 %s12, 1
      %p191 = scmp.lt.s32.totalorder %s17, 1
      %s192 = scalar_select %p191, %s17, 1
      %s193 = smul.addr %s192, 32
      %s194 = smul.addr %s193, 8
      %s195 = scalar_lea.vmem %s0, %s194
      %p196 = pneg %p38
      %p197 = pneg %p35
      %p198 = pneg %p59
      %p199 = pneg %p56
      %p200 = pneg %p80
      %p201 = pneg %p77
      %p202 = pneg %p101
      %p203 = pneg %p98
      %p204 = pneg %p127
      %p205 = pneg %p124
      %p206 = scmp.lt.s32.totalorder %s17, 1
      %s207 = scalar_select %p206, %s17, 1
      %s208 = smul.addr %s207, 32
      %s209 = smul.addr %s208, 8
      %s210 = scalar_lea.vmem %s4, %s209
      %p211 = pneg %p148
      %p212 = pneg %p145
      %p213 = scmp.lt.s32.totalorder %s17, 1
      %s214 = scalar_select %p213, %s17, 1
      %s215 = smul.addr %s214, 32
      %s216 = smul.addr %s215, 8
      %s217 = scalar_lea.vmem %s0, %s216
      %p218 = scmp.lt.s32.totalorder %s17, 1
      %s219 = scalar_select %p218, %s17, 1
      %s220 = smul.addr %s219, 32
      %s221 = smul.addr %s220, 8
      %s222 = scalar_lea.vmem %s4, %s221
      %v223 = vld [vmem:[%s217] sm:$0xff]
      %v224 = vld [vmem:[%s217 + $0x8] sm:$0xff]
      %v225 = vld [vmem:[%s217 + $0x10] sm:$0xff]
      %v226 = vld [vmem:[%s217 + $0x18] sm:$0xff]
      %v227 = vld [vmem:[%s217 + $0x20] sm:$0xff]
      %v228 = vld [vmem:[%s217 + $0x28] sm:$0xff]
      %v229 = vld [vmem:[%s217 + $0x30] sm:$0xff]
      %v230 = vld [vmem:[%s217 + $0x38] sm:$0xff]
      %v231 = vld [vmem:[%s217 + $0x40] sm:$0xff]
      %v232 = vld [vmem:[%s217 + $0x48] sm:$0xff]
      %v233 = vld [vmem:[%s217 + $0x50] sm:$0xff]
      %v234 = vld [vmem:[%s217 + $0x58] sm:$0xff]
      %v235 = vld [vmem:[%s217 + $0x60] sm:$0xff]
      %v236 = vld [vmem:[%s217 + $0x68] sm:$0xff]
      %v237 = vld [vmem:[%s217 + $0x70] sm:$0xff]
      %v238 = vld [vmem:[%s217 + $0x78] sm:$0xff]
      %v239 = vld [vmem:[%s217 + $0x80] sm:$0xff]
      %v240 = vld [vmem:[%s217 + $0x88] sm:$0xff]
      %v241 = vld [vmem:[%s217 + $0x90] sm:$0xff]
      %v242 = vld [vmem:[%s217 + $0x98] sm:$0xff]
      %v243 = vld [vmem:[%s217 + $0xa0] sm:$0xff]
      %v244 = vld [vmem:[%s217 + $0xa8] sm:$0xff]
      %v245 = vld [vmem:[%s217 + $0xb0] sm:$0xff]
      %v246 = vld [vmem:[%s217 + $0xb8] sm:$0xff]
      %v247 = vld [vmem:[%s217 + $0xc0] sm:$0xff]
      %v248 = vld [vmem:[%s217 + $0xc8] sm:$0xff]
      %v249 = vld [vmem:[%s217 + $0xd0] sm:$0xff]
      %v250 = vld [vmem:[%s217 + $0xd8] sm:$0xff]
      %v251 = vld [vmem:[%s217 + $0xe0] sm:$0xff]
      %v252 = vld [vmem:[%s217 + $0xe8] sm:$0xff]
      %v253 = vld [vmem:[%s217 + $0xf0] sm:$0xff]
      %v254 = vld [vmem:[%s217 + $0xf8] sm:$0xff]
      %v255 = vld [vmem:[%s1] sm:$0x1]
      %v257 = vlaneseq
      %v258 = vshrl.u32 %v257, 7
      %v259 = vsub.s32 0, %v258
      %v260 = vrot.slane %v255, %v259
      %v262 = vmul.f32 %v223, %v260
      %v263 = vmul.f32 %v224, %v260
      %v264 = vmul.f32 %v225, %v260
      %v265 = vmul.f32 %v226, %v260
      %v266 = vmul.f32 %v227, %v260
      %v267 = vmul.f32 %v228, %v260
      %v268 = vmul.f32 %v229, %v260
      %v269 = vmul.f32 %v230, %v260
      %v270 = vmul.f32 %v231, %v260
      %v271 = vmul.f32 %v232, %v260
      %v272 = vmul.f32 %v233, %v260
      %v273 = vmul.f32 %v234, %v260
      %v274 = vmul.f32 %v235, %v260
      %v275 = vmul.f32 %v236, %v260
      %v276 = vmul.f32 %v237, %v260
      %v277 = vmul.f32 %v238, %v260
      %v278 = vmul.f32 %v239, %v260
      %v279 = vmul.f32 %v240, %v260
      %v280 = vmul.f32 %v241, %v260
      %v281 = vmul.f32 %v242, %v260
      %v282 = vmul.f32 %v243, %v260
      %v283 = vmul.f32 %v244, %v260
      %v284 = vmul.f32 %v245, %v260
      %v285 = vmul.f32 %v246, %v260
      %v286 = vmul.f32 %v247, %v260
      %v287 = vmul.f32 %v248, %v260
      %v288 = vmul.f32 %v249, %v260
      %v289 = vmul.f32 %v250, %v260
      %v290 = vmul.f32 %v251, %v260
      %v291 = vmul.f32 %v252, %v260
      %v292 = vmul.f32 %v253, %v260
      %v293 = vmul.f32 %v254, %v260
      %v294 = vld [vmem:[%s2] sm:$0x1]
      %v296 = vlaneseq
      %v297 = vshrl.u32 %v296, 7
      %v298 = vsub.s32 0, %v297
      %v299 = vrot.slane %v294, %v298
      %v301 = vadd.f32 %v262, %v299
      %v302 = vadd.f32 %v263, %v299
      %v303 = vadd.f32 %v264, %v299
      %v304 = vadd.f32 %v265, %v299
      %v305 = vadd.f32 %v266, %v299
      %v306 = vadd.f32 %v267, %v299
      %v307 = vadd.f32 %v268, %v299
      %v308 = vadd.f32 %v269, %v299
      %v309 = vadd.f32 %v270, %v299
      %v310 = vadd.f32 %v271, %v299
      %v311 = vadd.f32 %v272, %v299
      %v312 = vadd.f32 %v273, %v299
      %v313 = vadd.f32 %v274, %v299
      %v314 = vadd.f32 %v275, %v299
      %v315 = vadd.f32 %v276, %v299
      %v316 = vadd.f32 %v277, %v299
      %v317 = vadd.f32 %v278, %v299
      %v318 = vadd.f32 %v279, %v299
      %v319 = vadd.f32 %v280, %v299
      %v320 = vadd.f32 %v281, %v299
      %v321 = vadd.f32 %v282, %v299
      %v322 = vadd.f32 %v283, %v299
      %v323 = vadd.f32 %v284, %v299
      %v324 = vadd.f32 %v285, %v299
      %v325 = vadd.f32 %v286, %v299
      %v326 = vadd.f32 %v287, %v299
      %v327 = vadd.f32 %v288, %v299
      %v328 = vadd.f32 %v289, %v299
      %v329 = vadd.f32 %v290, %v299
      %v330 = vadd.f32 %v291, %v299
      %v331 = vadd.f32 %v292, %v299
      %v332 = vadd.f32 %v293, %v299
      %v333 = vmax.f32 %v301, 0.0
      %v334 = vmax.f32 %v302, 0.0
      %v335 = vmax.f32 %v303, 0.0
      %v336 = vmax.f32 %v304, 0.0
      %v337 = vmax.f32 %v305, 0.0
      %v338 = vmax.f32 %v306, 0.0
      %v339 = vmax.f32 %v307, 0.0
      %v340 = vmax.f32 %v308, 0.0
      %v341 = vmax.f32 %v309, 0.0
      %v342 = vmax.f32 %v310, 0.0
      %v343 = vmax.f32 %v311, 0.0
      %v344 = vmax.f32 %v312, 0.0
      %v345 = vmax.f32 %v313, 0.0
      %v346 = vmax.f32 %v314, 0.0
      %v347 = vmax.f32 %v315, 0.0
      %v348 = vmax.f32 %v316, 0.0
      %v349 = vmax.f32 %v317, 0.0
      %v350 = vmax.f32 %v318, 0.0
      %v351 = vmax.f32 %v319, 0.0
      %v352 = vmax.f32 %v320, 0.0
      %v353 = vmax.f32 %v321, 0.0
      %v354 = vmax.f32 %v322, 0.0
      %v355 = vmax.f32 %v323, 0.0
      %v356 = vmax.f32 %v324, 0.0
      %v357 = vmax.f32 %v325, 0.0
      %v358 = vmax.f32 %v326, 0.0
      %v359 = vmax.f32 %v327, 0.0
      %v360 = vmax.f32 %v328, 0.0
      %v361 = vmax.f32 %v329, 0.0
      %v362 = vmax.f32 %v330, 0.0
      %v363 = vmax.f32 %v331, 0.0
      %v364 = vmax.f32 %v332, 0.0
      %365 = vst [vmem:[#allocation2] sm:$0xff] 0.0
      %366 = vst [vmem:[#allocation2 + $0x8] sm:$0xff] 0.0
      %367 = vst [vmem:[#allocation2 + $0x10] sm:$0x3] 0.0
      %368 = vst [vmem:[#allocation2 + $0x18] sm:$0xff] 0.0
      %369 = vst [vmem:[#allocation2 + $0x20] sm:$0xff] 0.0
      %370 = vst [vmem:[#allocation2 + $0x28] sm:$0x3] 0.0
      %371 = vst [vmem:[#allocation2 + $0x30] sm:$0xff] 0.0
      %372 = vst [vmem:[#allocation2 + $0x38] sm:$0xff] 0.0
      %373 = vst [vmem:[#allocation2 + $0x40] sm:$0x3] 0.0
      %374 = vst [vmem:[#allocation2 + $0x48] sm:$0xff] 0.0
      %375 = vst [vmem:[#allocation2 + $0x50] sm:$0xff] 0.0
      %376 = vst [vmem:[#allocation2 + $0x58] sm:$0x3] 0.0
      %377 = vst [vmem:[#allocation2 + $0x60] sm:$0xff] 0.0
      %378 = vst [vmem:[#allocation2 + $0x68] sm:$0xff] 0.0
      %379 = vst [vmem:[#allocation2 + $0x70] sm:$0x3] 0.0
      %380 = vst [vmem:[#allocation2 + $0x78] sm:$0xff] 0.0
      %381 = vst [vmem:[#allocation2 + $0x80] sm:$0xff] 0.0
      %382 = vst [vmem:[#allocation2 + $0x88] sm:$0x3] 0.0
      %383 = vst [vmem:[#allocation2 + $0x90] sm:$0xff] 0.0
      %384 = vst [vmem:[#allocation2 + $0x98] sm:$0xff] 0.0
      %385 = vst [vmem:[#allocation2 + $0xa0] sm:$0x3] 0.0
      %386 = vst [vmem:[#allocation2 + $0xa8] sm:$0xff] 0.0
      %387 = vst [vmem:[#allocation2 + $0xb0] sm:$0xff] 0.0
      %388 = vst [vmem:[#allocation2 + $0xb8] sm:$0x3] 0.0
      %389 = vst [vmem:[#allocation2 + $0xc0] sm:$0xff] 0.0
      %390 = vst [vmem:[#allocation2 + $0xc8] sm:$0xff] 0.0
      %391 = vst [vmem:[#allocation2 + $0xd0] sm:$0x3] 0.0
      %392 = vst [vmem:[#allocation2 + $0xd8] sm:$0xff] 0.0
      %393 = vst [vmem:[#allocation2 + $0xe0] sm:$0xff] 0.0
      %394 = vst [vmem:[#allocation2 + $0xe8] sm:$0x3] 0.0
      %395 = vst [vmem:[#allocation2 + $0xf0] sm:$0xff] 0.0
      %396 = vst [vmem:[#allocation2 + $0xf8] sm:$0xff] 0.0
      %397 = vst [vmem:[#allocation2 + $0x100] sm:$0x3] 0.0
      %398 = vst [vmem:[#allocation2 + $0x108] sm:$0xff] 0.0
      %399 = vst [vmem:[#allocation2 + $0x110] sm:$0xff] 0.0
      %400 = vst [vmem:[#allocation2 + $0x118] sm:$0x3] 0.0
      %401 = vst [vmem:[#allocation2 + $0x120] sm:$0xff] 0.0
      %402 = vst [vmem:[#allocation2 + $0x128] sm:$0xff] 0.0
      %403 = vst [vmem:[#allocation2 + $0x130] sm:$0x3] 0.0
      %404 = vst [vmem:[#allocation2 + $0x138] sm:$0xff] 0.0
      %405 = vst [vmem:[#allocation2 + $0x140] sm:$0xff] 0.0
      %406 = vst [vmem:[#allocation2 + $0x148] sm:$0x3] 0.0
      %407 = vst [vmem:[#allocation2 + $0x150] sm:$0xff] 0.0
      %408 = vst [vmem:[#allocation2 + $0x158] sm:$0xff] 0.0
      %409 = vst [vmem:[#allocation2 + $0x160] sm:$0x3] 0.0
      %410 = vst [vmem:[#allocation2 + $0x168] sm:$0xff] 0.0
      %411 = vst [vmem:[#allocation2 + $0x170] sm:$0xff] 0.0
      %412 = vst [vmem:[#allocation2 + $0x178] sm:$0x3] 0.0
      %413 = vst [vmem:[#allocation2 + $0x180] sm:$0xff] 0.0
      %414 = vst [vmem:[#allocation2 + $0x188] sm:$0xff] 0.0
      %415 = vst [vmem:[#allocation2 + $0x190] sm:$0x3] 0.0
      %416 = vst [vmem:[#allocation2 + $0x198] sm:$0xff] 0.0
      %417 = vst [vmem:[#allocation2 + $0x1a0] sm:$0xff] 0.0
      %418 = vst [vmem:[#allocation2 + $0x1a8] sm:$0x3] 0.0
      %s419 = scalar_lea.vmem [#allocation2], 24
      %420 = vst [vmem:[%s419 + $0x1] sm:$0xff] %v333
      %421 = vst [vmem:[%s419 + $0x9] sm:$0xff] %v334
      %422 = vst [vmem:[%s419 + $0x19] sm:$0xff] %v335
      %423 = vst [vmem:[%s419 + $0x21] sm:$0xff] %v336
      %424 = vst [vmem:[%s419 + $0x31] sm:$0xff] %v337
      %425 = vst [vmem:[%s419 + $0x39] sm:$0xff] %v338
      %426 = vst [vmem:[%s419 + $0x49] sm:$0xff] %v339
      %427 = vst [vmem:[%s419 + $0x51] sm:$0xff] %v340
      %428 = vst [vmem:[%s419 + $0x61] sm:$0xff] %v341
      %429 = vst [vmem:[%s419 + $0x69] sm:$0xff] %v342
      %430 = vst [vmem:[%s419 + $0x79] sm:$0xff] %v343
      %431 = vst [vmem:[%s419 + $0x81] sm:$0xff] %v344
      %432 = vst [vmem:[%s419 + $0x91] sm:$0xff] %v345
      %433 = vst [vmem:[%s419 + $0x99] sm:$0xff] %v346
      %434 = vst [vmem:[%s419 + $0xa9] sm:$0xff] %v347
      %435 = vst [vmem:[%s419 + $0xb1] sm:$0xff] %v348
      %436 = vst [vmem:[%s419 + $0xc1] sm:$0xff] %v349
      %437 = vst [vmem:[%s419 + $0xc9] sm:$0xff] %v350
      %438 = vst [vmem:[%s419 + $0xd9] sm:$0xff] %v351
      %439 = vst [vmem:[%s419 + $0xe1] sm:$0xff] %v352
      %440 = vst [vmem:[%s419 + $0xf1] sm:$0xff] %v353
      %441 = vst [vmem:[%s419 + $0xf9] sm:$0xff] %v354
      %442 = vst [vmem:[%s419 + $0x109] sm:$0xff] %v355
      %443 = vst [vmem:[%s419 + $0x111] sm:$0xff] %v356
      %444 = vst [vmem:[%s419 + $0x121] sm:$0xff] %v357
      %445 = vst [vmem:[%s419 + $0x129] sm:$0xff] %v358
      %446 = vst [vmem:[%s419 + $0x139] sm:$0xff] %v359
      %447 = vst [vmem:[%s419 + $0x141] sm:$0xff] %v360
      %448 = vst [vmem:[%s419 + $0x151] sm:$0xff] %v361
      %449 = vst [vmem:[%s419 + $0x159] sm:$0xff] %v362
      %450 = vst [vmem:[%s419 + $0x169] sm:$0xff] %v363
      %451 = vst [vmem:[%s419 + $0x171] sm:$0xff] %v364
      %v452 = vld [vmem:[#allocation2] sm:$0xff]
      %v453 = vld [vmem:[#allocation2 + $0x8] sm:$0xff]
      %v454 = vld [vmem:[#allocation2 + $0x18] sm:$0xff]
      %v455 = vld [vmem:[#allocation2 + $0x20] sm:$0xff]
      %v456 = vld [vmem:[#allocation2 + $0x30] sm:$0xff]
      %v457 = vld [vmem:[#allocation2 + $0x38] sm:$0xff]
      %v458 = vld [vmem:[#allocation2 + $0x48] sm:$0xff]
      %v459 = vld [vmem:[#allocation2 + $0x50] sm:$0xff]
      %v460 = vld [vmem:[#allocation2 + $0x60] sm:$0xff]
      %v461 = vld [vmem:[#allocation2 + $0x68] sm:$0xff]
      %v462 = vld [vmem:[#allocation2 + $0x78] sm:$0xff]
      %v463 = vld [vmem:[#allocation2 + $0x80] sm:$0xff]
      %v464 = vld [vmem:[#allocation2 + $0x90] sm:$0xff]
      %v465 = vld [vmem:[#allocation2 + $0x98] sm:$0xff]
      %v466 = vld [vmem:[#allocation2 + $0xa8] sm:$0xff]
      %v467 = vld [vmem:[#allocation2 + $0xb0] sm:$0xff]
      %v468 = vld [vmem:[#allocation2 + $0xc0] sm:$0xff]
      %v469 = vld [vmem:[#allocation2 + $0xc8] sm:$0xff]
      %v470 = vld [vmem:[#allocation2 + $0xd8] sm:$0xff]
      %v471 = vld [vmem:[#allocation2 + $0xe0] sm:$0xff]
      %v472 = vld [vmem:[#allocation2 + $0xf0] sm:$0xff]
      %v473 = vld [vmem:[#allocation2 + $0xf8] sm:$0xff]
      %v474 = vld [vmem:[#allocation2 + $0x108] sm:$0xff]
      %v475 = vld [vmem:[#allocation2 + $0x110] sm:$0xff]
      %v476 = vld [vmem:[#allocation2 + $0x120] sm:$0xff]
      %v477 = vld [vmem:[#allocation2 + $0x128] sm:$0xff]
      %v478 = vld [vmem:[#allocation2 + $0x138] sm:$0xff]
      %v479 = vld [vmem:[#allocation2 + $0x140] sm:$0xff]
      %v480 = vld [vmem:[#allocation2 + $0x150] sm:$0xff]
      %v481 = vld [vmem:[#allocation2 + $0x158] sm:$0xff]
      %v482 = vld [vmem:[#allocation2 + $0x168] sm:$0xff]
      %v483 = vld [vmem:[#allocation2 + $0x170] sm:$0xff]
      %v484 = vld [vmem:[%s3] sm:$0xff]
      %v485 = vld [vmem:[%s3 + $0x8] sm:$0xff]
      %v486 = vld [vmem:[%s3 + $0x10] sm:$0xff]
      %v487 = vld [vmem:[%s3 + $0x18] sm:$0xff]
      %v488 = vld [vmem:[%s3 + $0x20] sm:$0xff]
      %v489 = vld [vmem:[%s3 + $0x28] sm:$0xff]
      %v490 = vld [vmem:[%s3 + $0x30] sm:$0xff]
      %v491 = vld [vmem:[%s3 + $0x38] sm:$0xff]
      %v492 = vld [vmem:[%s3 + $0x40] sm:$0xff]
      %v493 = vld [vmem:[%s3 + $0x48] sm:$0xff]
      %v494 = vld [vmem:[%s3 + $0x50] sm:$0xff]
      %v495 = vld [vmem:[%s3 + $0x58] sm:$0xff]
      %v496 = vld [vmem:[%s3 + $0x60] sm:$0xff]
      %v497 = vld [vmem:[%s3 + $0x68] sm:$0xff]
      %v498 = vld [vmem:[%s3 + $0x70] sm:$0xff]
      %v499 = vld [vmem:[%s3 + $0x78] sm:$0xff]
      %v500 = vld [vmem:[#allocation2 + $0x1] sm:$0xff]
      %v501 = vld [vmem:[#allocation2 + $0x9] sm:$0xff]
      %v502 = vld [vmem:[#allocation2 + $0x19] sm:$0xff]
      %v503 = vld [vmem:[#allocation2 + $0x21] sm:$0xff]
      %v504 = vld [vmem:[#allocation2 + $0x31] sm:$0xff]
      %v505 = vld [vmem:[#allocation2 + $0x39] sm:$0xff]
      %v506 = vld [vmem:[#allocation2 + $0x49] sm:$0xff]
      %v507 = vld [vmem:[#allocation2 + $0x51] sm:$0xff]
      %v508 = vld [vmem:[#allocation2 + $0x61] sm:$0xff]
      %v509 = vld [vmem:[#allocation2 + $0x69] sm:$0xff]
      %v510 = vld [vmem:[#allocation2 + $0x79] sm:$0xff]
      %v511 = vld [vmem:[#allocation2 + $0x81] sm:$0xff]
      %v512 = vld [vmem:[#allocation2 + $0x91] sm:$0xff]
      %v513 = vld [vmem:[#allocation2 + $0x99] sm:$0xff]
      %v514 = vld [vmem:[#allocation2 + $0xa9] sm:$0xff]
      %v515 = vld [vmem:[#allocation2 + $0xb1] sm:$0xff]
      %v516 = vld [vmem:[#allocation2 + $0xc1] sm:$0xff]
      %v517 = vld [vmem:[#allocation2 + $0xc9] sm:$0xff]
      %v518 = vld [vmem:[#allocation2 + $0xd9] sm:$0xff]
      %v519 = vld [vmem:[#allocation2 + $0xe1] sm:$0xff]
      %v520 = vld [vmem:[#allocation2 + $0xf1] sm:$0xff]
      %v521 = vld [vmem:[#allocation2 + $0xf9] sm:$0xff]
      %v522 = vld [vmem:[#allocation2 + $0x109] sm:$0xff]
      %v523 = vld [vmem:[#allocation2 + $0x111] sm:$0xff]
      %v524 = vld [vmem:[#allocation2 + $0x121] sm:$0xff]
      %v525 = vld [vmem:[#allocation2 + $0x129] sm:$0xff]
      %v526 = vld [vmem:[#allocation2 + $0x139] sm:$0xff]
      %v527 = vld [vmem:[#allocation2 + $0x141] sm:$0xff]
      %v528 = vld [vmem:[#allocation2 + $0x151] sm:$0xff]
      %v529 = vld [vmem:[#allocation2 + $0x159] sm:$0xff]
      %v530 = vld [vmem:[#allocation2 + $0x169] sm:$0xff]
      %v531 = vld [vmem:[#allocation2 + $0x171] sm:$0xff]
      %v532 = vld [vmem:[%s3 + $0x80] sm:$0xff]
      %v533 = vld [vmem:[%s3 + $0x88] sm:$0xff]
      %v534 = vld [vmem:[%s3 + $0x90] sm:$0xff]
      %v535 = vld [vmem:[%s3 + $0x98] sm:$0xff]
      %v536 = vld [vmem:[%s3 + $0xa0] sm:$0xff]
      %v537 = vld [vmem:[%s3 + $0xa8] sm:$0xff]
      %v538 = vld [vmem:[%s3 + $0xb0] sm:$0xff]
      %v539 = vld [vmem:[%s3 + $0xb8] sm:$0xff]
      %v540 = vld [vmem:[%s3 + $0xc0] sm:$0xff]
      %v541 = vld [vmem:[%s3 + $0xc8] sm:$0xff]
      %v542 = vld [vmem:[%s3 + $0xd0] sm:$0xff]
      %v543 = vld [vmem:[%s3 + $0xd8] sm:$0xff]
      %v544 = vld [vmem:[%s3 + $0xe0] sm:$0xff]
      %v545 = vld [vmem:[%s3 + $0xe8] sm:$0xff]
      %v546 = vld [vmem:[%s3 + $0xf0] sm:$0xff]
      %v547 = vld [vmem:[%s3 + $0xf8] sm:$0xff]
      %548 = vmatprep.subr.mxu0 0.0
      %549 = vmatpush1.msra.mxu0 %v547
      %550 = vmatprep.subr.mxu0 0.0
      %551 = vmatpush1.msra.mxu0 %v546
      %552 = vmatprep.subr.mxu0 0.0
      %553 = vmatpush1.msra.mxu0 %v545
      %554 = vmatprep.subr.mxu0 0.0
      %555 = vmatpush1.msra.mxu0 %v544
      %556 = vmatprep.subr.mxu0 0.0
      %557 = vmatpush1.msra.mxu0 %v543
      %558 = vmatprep.subr.mxu0 0.0
      %559 = vmatpush1.msra.mxu0 %v542
      %560 = vmatprep.subr.mxu0 0.0
      %561 = vmatpush1.msra.mxu0 %v541
      %562 = vmatprep.subr.mxu0 0.0
      %563 = vmatpush1.msra.mxu0 %v540
      %564 = vmatprep.subr.mxu0 0.0
      %565 = vmatpush1.msra.mxu0 %v539
      %566 = vmatprep.subr.mxu0 0.0
      %567 = vmatpush1.msra.mxu0 %v538
      %568 = vmatprep.subr.mxu0 0.0
      %569 = vmatpush1.msra.mxu0 %v537
      %570 = vmatprep.subr.mxu0 0.0
      %571 = vmatpush1.msra.mxu0 %v536
      %572 = vmatprep.subr.mxu0 0.0
      %573 = vmatpush1.msra.mxu0 %v535
      %574 = vmatprep.subr.mxu0 0.0
      %575 = vmatpush1.msra.mxu0 %v534
      %576 = vmatprep.subr.mxu0 0.0
      %577 = vmatpush1.msra.mxu0 %v533
      %578 = vmatprep.subr.mxu0 0.0
      %579 = vmatpush1.msra.mxu0 %v532
      %580 = vmatprep.subr.mxu0 0.0
      %581 = vmatpush2.msra.mxu0 0.0
      %582 = vmatprep.subr.mxu0 0.0
      %583 = vmatpush2.msra.mxu0 0.0
      %584 = vmatprep.subr.mxu0 0.0
      %585 = vmatpush2.msra.mxu0 0.0
      %586 = vmatprep.subr.mxu0 0.0
      %587 = vmatpush2.msra.mxu0 0.0
      %588 = vmatprep.subr.mxu0 0.0
      %589 = vmatpush2.msra.mxu0 0.0
      %590 = vmatprep.subr.mxu0 0.0
      %591 = vmatpush2.msra.mxu0 0.0
      %592 = vmatprep.subr.mxu0 0.0
      %593 = vmatpush2.msra.mxu0 0.0
      %594 = vmatprep.subr.mxu0 0.0
      %595 = vmatpush2.msra.mxu0 0.0
      %596 = vmatprep.subr.mxu0 0.0
      %597 = vmatpush2.msra.mxu0 0.0
      %598 = vmatprep.subr.mxu0 0.0
      %599 = vmatpush2.msra.mxu0 0.0
      %600 = vmatprep.subr.mxu0 0.0
      %601 = vmatpush2.msra.mxu0 0.0
      %602 = vmatprep.subr.mxu0 0.0
      %603 = vmatpush2.msra.mxu0 0.0
      %604 = vmatprep.subr.mxu0 0.0
      %605 = vmatpush2.msra.mxu0 0.0
      %606 = vmatprep.subr.mxu0 0.0
      %607 = vmatpush2.msra.mxu0 0.0
      %608 = vmatprep.subr.mxu0 0.0
      %609 = vmatpush2.msra.mxu0 0.0
      %610 = vmatprep.subr.mxu0 0.0
      %611 = vmatpush2.msra.mxu0 0.0
      %612 = vmatprep.mubr.f32.mxu0 0.0
      %613 = vmatmul.mubr.f32.gmra.mxu0 %v500
      %v614 = vpop.f32.mrf.mxu0
      %v615 = vadd.f32 0.0, %v614
      %v616 = vpop.f32.mrf.mxu0
      %617 = vmatprep.mubr.f32.mxu0 0.0
      %618 = vmatmul.mubr.f32.gmra.mxu0 %v501
      %v619 = vpop.f32.mrf.mxu0
      %v620 = vadd.f32 0.0, %v619
      %v621 = vpop.f32.mrf.mxu0
      %622 = vmatprep.mubr.f32.mxu0 0.0
      %623 = vmatmul.mubr.f32.gmra.mxu0 %v502
      %v624 = vpop.f32.mrf.mxu0
      %v625 = vadd.f32 0.0, %v624
      %v626 = vpop.f32.mrf.mxu0
      %627 = vmatprep.mubr.f32.mxu0 0.0
      %628 = vmatmul.mubr.f32.gmra.mxu0 %v503
      %v629 = vpop.f32.mrf.mxu0
      %v630 = vadd.f32 0.0, %v629
      %v631 = vpop.f32.mrf.mxu0
      %632 = vmatprep.mubr.f32.mxu0 0.0
      %633 = vmatmul.mubr.f32.gmra.mxu0 %v504
      %v634 = vpop.f32.mrf.mxu0
      %v635 = vadd.f32 0.0, %v634
      %v636 = vpop.f32.mrf.mxu0
      %637 = vmatprep.mubr.f32.mxu0 0.0
      %638 = vmatmul.mubr.f32.gmra.mxu0 %v505
      %v639 = vpop.f32.mrf.mxu0
      %v640 = vadd.f32 0.0, %v639
      %v641 = vpop.f32.mrf.mxu0
      %642 = vmatprep.mubr.f32.mxu0 0.0
      %643 = vmatmul.mubr.f32.gmra.mxu0 %v506
      %v644 = vpop.f32.mrf.mxu0
      %v645 = vadd.f32 0.0, %v644
      %v646 = vpop.f32.mrf.mxu0
      %647 = vmatprep.mubr.f32.mxu0 0.0
      %648 = vmatmul.mubr.f32.gmra.mxu0 %v507
      %v649 = vpop.f32.mrf.mxu0
      %v650 = vadd.f32 0.0, %v649
      %v651 = vpop.f32.mrf.mxu0
      %652 = vmatprep.mubr.f32.mxu0 0.0
      %653 = vmatmul.mubr.f32.gmra.mxu0 %v508
      %v654 = vpop.f32.mrf.mxu0
      %v655 = vadd.f32 0.0, %v654
      %v656 = vpop.f32.mrf.mxu0
      %657 = vmatprep.mubr.f32.mxu0 0.0
      %658 = vmatmul.mubr.f32.gmra.mxu0 %v509
      %v659 = vpop.f32.mrf.mxu0
      %v660 = vadd.f32 0.0, %v659
      %v661 = vpop.f32.mrf.mxu0
      %662 = vmatprep.mubr.f32.mxu0 0.0
      %663 = vmatmul.mubr.f32.gmra.mxu0 %v510
      %v664 = vpop.f32.mrf.mxu0
      %v665 = vadd.f32 0.0, %v664
      %v666 = vpop.f32.mrf.mxu0
      %667 = vmatprep.mubr.f32.mxu0 0.0
      %668 = vmatmul.mubr.f32.gmra.mxu0 %v511
      %v669 = vpop.f32.mrf.mxu0
      %v670 = vadd.f32 0.0, %v669
      %v671 = vpop.f32.mrf.mxu0
      %672 = vmatprep.mubr.f32.mxu0 0.0
      %673 = vmatmul.mubr.f32.gmra.mxu0 %v512
      %v674 = vpop.f32.mrf.mxu0
      %v675 = vadd.f32 0.0, %v674
      %v676 = vpop.f32.mrf.mxu0
      %677 = vmatprep.mubr.f32.mxu0 0.0
      %678 = vmatmul.mubr.f32.gmra.mxu0 %v513
      %v679 = vpop.f32.mrf.mxu0
      %v680 = vadd.f32 0.0, %v679
      %v681 = vpop.f32.mrf.mxu0
      %682 = vmatprep.mubr.f32.mxu0 0.0
      %683 = vmatmul.mubr.f32.gmra.mxu0 %v514
      %v684 = vpop.f32.mrf.mxu0
      %v685 = vadd.f32 0.0, %v684
      %v686 = vpop.f32.mrf.mxu0
      %687 = vmatprep.mubr.f32.mxu0 0.0
      %688 = vmatmul.mubr.f32.gmra.mxu0 %v515
      %v689 = vpop.f32.mrf.mxu0
      %v690 = vadd.f32 0.0, %v689
      %v691 = vpop.f32.mrf.mxu0
      %692 = vmatprep.mubr.f32.mxu0 0.0
      %693 = vmatmul.mubr.f32.gmra.mxu0 %v516
      %v694 = vpop.f32.mrf.mxu0
      %v695 = vadd.f32 0.0, %v694
      %v696 = vpop.f32.mrf.mxu0
      %697 = vmatprep.mubr.f32.mxu0 0.0
      %698 = vmatmul.mubr.f32.gmra.mxu0 %v517
      %v699 = vpop.f32.mrf.mxu0
      %v700 = vadd.f32 0.0, %v699
      %v701 = vpop.f32.mrf.mxu0
      %702 = vmatprep.mubr.f32.mxu0 0.0
      %703 = vmatmul.mubr.f32.gmra.mxu0 %v518
      %v704 = vpop.f32.mrf.mxu0
      %v705 = vadd.f32 0.0, %v704
      %v706 = vpop.f32.mrf.mxu0
      %707 = vmatprep.mubr.f32.mxu0 0.0
      %708 = vmatmul.mubr.f32.gmra.mxu0 %v519
      %v709 = vpop.f32.mrf.mxu0
      %v710 = vadd.f32 0.0, %v709
      %v711 = vpop.f32.mrf.mxu0
      %712 = vmatprep.mubr.f32.mxu0 0.0
      %713 = vmatmul.mubr.f32.gmra.mxu0 %v520
      %v714 = vpop.f32.mrf.mxu0
      %v715 = vadd.f32 0.0, %v714
      %v716 = vpop.f32.mrf.mxu0
      %717 = vmatprep.mubr.f32.mxu0 0.0
      %718 = vmatmul.mubr.f32.gmra.mxu0 %v521
      %v719 = vpop.f32.mrf.mxu0
      %v720 = vadd.f32 0.0, %v719
      %v721 = vpop.f32.mrf.mxu0
      %722 = vmatprep.mubr.f32.mxu0 0.0
      %723 = vmatmul.mubr.f32.gmra.mxu0 %v522
      %v724 = vpop.f32.mrf.mxu0
      %v725 = vadd.f32 0.0, %v724
      %v726 = vpop.f32.mrf.mxu0
      %727 = vmatprep.mubr.f32.mxu0 0.0
      %728 = vmatmul.mubr.f32.gmra.mxu0 %v523
      %v729 = vpop.f32.mrf.mxu0
      %v730 = vadd.f32 0.0, %v729
      %v731 = vpop.f32.mrf.mxu0
      %732 = vmatprep.mubr.f32.mxu0 0.0
      %733 = vmatmul.mubr.f32.gmra.mxu0 %v524
      %v734 = vpop.f32.mrf.mxu0
      %v735 = vadd.f32 0.0, %v734
      %v736 = vpop.f32.mrf.mxu0
      %737 = vmatprep.mubr.f32.mxu0 0.0
      %738 = vmatmul.mubr.f32.gmra.mxu0 %v525
      %v739 = vpop.f32.mrf.mxu0
      %v740 = vadd.f32 0.0, %v739
      %v741 = vpop.f32.mrf.mxu0
      %742 = vmatprep.mubr.f32.mxu0 0.0
      %743 = vmatmul.mubr.f32.gmra.mxu0 %v526
      %v744 = vpop.f32.mrf.mxu0
      %v745 = vadd.f32 0.0, %v744
      %v746 = vpop.f32.mrf.mxu0
      %747 = vmatprep.mubr.f32.mxu0 0.0
      %748 = vmatmul.mubr.f32.gmra.mxu0 %v527
      %v749 = vpop.f32.mrf.mxu0
      %v750 = vadd.f32 0.0, %v749
      %v751 = vpop.f32.mrf.mxu0
      %752 = vmatprep.mubr.f32.mxu0 0.0
      %753 = vmatmul.mubr.f32.gmra.mxu0 %v528
      %v754 = vpop.f32.mrf.mxu0
      %v755 = vadd.f32 0.0, %v754
      %v756 = vpop.f32.mrf.mxu0
      %757 = vmatprep.mubr.f32.mxu0 0.0
      %758 = vmatmul.mubr.f32.gmra.mxu0 %v529
      %v759 = vpop.f32.mrf.mxu0
      %v760 = vadd.f32 0.0, %v759
      %v761 = vpop.f32.mrf.mxu0
      %762 = vmatprep.mubr.f32.mxu0 0.0
      %763 = vmatmul.mubr.f32.gmra.mxu0 %v530
      %v764 = vpop.f32.mrf.mxu0
      %v765 = vadd.f32 0.0, %v764
      %v766 = vpop.f32.mrf.mxu0
      %767 = vmatprep.mubr.f32.mxu0 0.0
      %768 = vmatmul.mubr.f32.gmra.mxu0 %v531
      %v769 = vpop.f32.mrf.mxu0
      %v770 = vadd.f32 0.0, %v769
      %v771 = vpop.f32.mrf.mxu0
      %772 = vdwg.mxu0
      %773 = vmatprep.subr.mxu0 0.0
      %774 = vmatpush1.msra.mxu0 %v499
      %775 = vmatprep.subr.mxu0 0.0
      %776 = vmatpush1.msra.mxu0 %v498
      %777 = vmatprep.subr.mxu0 0.0
      %778 = vmatpush1.msra.mxu0 %v497
      %779 = vmatprep.subr.mxu0 0.0
      %780 = vmatpush1.msra.mxu0 %v496
      %781 = vmatprep.subr.mxu0 0.0
      %782 = vmatpush1.msra.mxu0 %v495
      %783 = vmatprep.subr.mxu0 0.0
      %784 = vmatpush1.msra.mxu0 %v494
      %785 = vmatprep.subr.mxu0 0.0
      %786 = vmatpush1.msra.mxu0 %v493
      %787 = vmatprep.subr.mxu0 0.0
      %788 = vmatpush1.msra.mxu0 %v492
      %789 = vmatprep.subr.mxu0 0.0
      %790 = vmatpush1.msra.mxu0 %v491
      %791 = vmatprep.subr.mxu0 0.0
      %792 = vmatpush1.msra.mxu0 %v490
      %793 = vmatprep.subr.mxu0 0.0
      %794 = vmatpush1.msra.mxu0 %v489
      %795 = vmatprep.subr.mxu0 0.0
      %796 = vmatpush1.msra.mxu0 %v488
      %797 = vmatprep.subr.mxu0 0.0
      %798 = vmatpush1.msra.mxu0 %v487
      %799 = vmatprep.subr.mxu0 0.0
      %800 = vmatpush1.msra.mxu0 %v486
      %801 = vmatprep.subr.mxu0 0.0
      %802 = vmatpush1.msra.mxu0 %v485
      %803 = vmatprep.subr.mxu0 0.0
      %804 = vmatpush1.msra.mxu0 %v484
      %805 = vmatprep.subr.mxu0 0.0
      %806 = vmatpush2.msra.mxu0 0.0
      %807 = vmatprep.subr.mxu0 0.0
      %808 = vmatpush2.msra.mxu0 0.0
      %809 = vmatprep.subr.mxu0 0.0
      %810 = vmatpush2.msra.mxu0 0.0
      %811 = vmatprep.subr.mxu0 0.0
      %812 = vmatpush2.msra.mxu0 0.0
      %813 = vmatprep.subr.mxu0 0.0
      %814 = vmatpush2.msra.mxu0 0.0
      %815 = vmatprep.subr.mxu0 0.0
      %816 = vmatpush2.msra.mxu0 0.0
      %817 = vmatprep.subr.mxu0 0.0
      %818 = vmatpush2.msra.mxu0 0.0
      %819 = vmatprep.subr.mxu0 0.0
      %820 = vmatpush2.msra.mxu0 0.0
      %821 = vmatprep.subr.mxu0 0.0
      %822 = vmatpush2.msra.mxu0 0.0
      %823 = vmatprep.subr.mxu0 0.0
      %824 = vmatpush2.msra.mxu0 0.0
      %825 = vmatprep.subr.mxu0 0.0
      %826 = vmatpush2.msra.mxu0 0.0
      %827 = vmatprep.subr.mxu0 0.0
      %828 = vmatpush2.msra.mxu0 0.0
      %829 = vmatprep.subr.mxu0 0.0
      %830 = vmatpush2.msra.mxu0 0.0
      %831 = vmatprep.subr.mxu0 0.0
      %832 = vmatpush2.msra.mxu0 0.0
      %833 = vmatprep.subr.mxu0 0.0
      %834 = vmatpush2.msra.mxu0 0.0
      %835 = vmatprep.subr.mxu0 0.0
      %836 = vmatpush2.msra.mxu0 0.0
      %837 = vmatprep.mubr.f32.mxu0 0.0
      %838 = vmatmul.mubr.f32.gmra.mxu0 %v452
      %v839 = vpop.f32.mrf.mxu0
      %v840 = vadd.f32 %v615, %v839
      %v841 = vpop.f32.mrf.mxu0
      %842 = vmatprep.mubr.f32.mxu0 0.0
      %843 = vmatmul.mubr.f32.gmra.mxu0 %v453
      %v844 = vpop.f32.mrf.mxu0
      %v845 = vadd.f32 %v620, %v844
      %v846 = vpop.f32.mrf.mxu0
      %847 = vmatprep.mubr.f32.mxu0 0.0
      %848 = vmatmul.mubr.f32.gmra.mxu0 %v454
      %v849 = vpop.f32.mrf.mxu0
      %v850 = vadd.f32 %v625, %v849
      %v851 = vpop.f32.mrf.mxu0
      %852 = vmatprep.mubr.f32.mxu0 0.0
      %853 = vmatmul.mubr.f32.gmra.mxu0 %v455
      %v854 = vpop.f32.mrf.mxu0
      %v855 = vadd.f32 %v630, %v854
      %v856 = vpop.f32.mrf.mxu0
      %857 = vmatprep.mubr.f32.mxu0 0.0
      %858 = vmatmul.mubr.f32.gmra.mxu0 %v456
      %v859 = vpop.f32.mrf.mxu0
      %v860 = vadd.f32 %v635, %v859
      %v861 = vpop.f32.mrf.mxu0
      %862 = vmatprep.mubr.f32.mxu0 0.0
      %863 = vmatmul.mubr.f32.gmra.mxu0 %v457
      %v864 = vpop.f32.mrf.mxu0
      %v865 = vadd.f32 %v640, %v864
      %v866 = vpop.f32.mrf.mxu0
      %867 = vmatprep.mubr.f32.mxu0 0.0
      %868 = vmatmul.mubr.f32.gmra.mxu0 %v458
      %v869 = vpop.f32.mrf.mxu0
      %v870 = vadd.f32 %v645, %v869
      %v871 = vpop.f32.mrf.mxu0
      %872 = vmatprep.mubr.f32.mxu0 0.0
      %873 = vmatmul.mubr.f32.gmra.mxu0 %v459
      %v874 = vpop.f32.mrf.mxu0
      %v875 = vadd.f32 %v650, %v874
      %v876 = vpop.f32.mrf.mxu0
      %877 = vmatprep.mubr.f32.mxu0 0.0
      %878 = vmatmul.mubr.f32.gmra.mxu0 %v460
      %v879 = vpop.f32.mrf.mxu0
      %v880 = vadd.f32 %v655, %v879
      %v881 = vpop.f32.mrf.mxu0
      %882 = vmatprep.mubr.f32.mxu0 0.0
      %883 = vmatmul.mubr.f32.gmra.mxu0 %v461
      %v884 = vpop.f32.mrf.mxu0
      %v885 = vadd.f32 %v660, %v884
      %v886 = vpop.f32.mrf.mxu0
      %887 = vmatprep.mubr.f32.mxu0 0.0
      %888 = vmatmul.mubr.f32.gmra.mxu0 %v462
      %v889 = vpop.f32.mrf.mxu0
      %v890 = vadd.f32 %v665, %v889
      %v891 = vpop.f32.mrf.mxu0
      %892 = vmatprep.mubr.f32.mxu0 0.0
      %893 = vmatmul.mubr.f32.gmra.mxu0 %v463
      %v894 = vpop.f32.mrf.mxu0
      %v895 = vadd.f32 %v670, %v894
      %v896 = vpop.f32.mrf.mxu0
      %897 = vmatprep.mubr.f32.mxu0 0.0
      %898 = vmatmul.mubr.f32.gmra.mxu0 %v464
      %v899 = vpop.f32.mrf.mxu0
      %v900 = vadd.f32 %v675, %v899
      %v901 = vpop.f32.mrf.mxu0
      %902 = vmatprep.mubr.f32.mxu0 0.0
      %903 = vmatmul.mubr.f32.gmra.mxu0 %v465
      %v904 = vpop.f32.mrf.mxu0
      %v905 = vadd.f32 %v680, %v904
      %v906 = vpop.f32.mrf.mxu0
      %907 = vmatprep.mubr.f32.mxu0 0.0
      %908 = vmatmul.mubr.f32.gmra.mxu0 %v466
      %v909 = vpop.f32.mrf.mxu0
      %v910 = vadd.f32 %v685, %v909
      %v911 = vpop.f32.mrf.mxu0
      %912 = vmatprep.mubr.f32.mxu0 0.0
      %913 = vmatmul.mubr.f32.gmra.mxu0 %v467
      %v914 = vpop.f32.mrf.mxu0
      %v915 = vadd.f32 %v690, %v914
      %v916 = vpop.f32.mrf.mxu0
      %917 = vmatprep.mubr.f32.mxu0 0.0
      %918 = vmatmul.mubr.f32.gmra.mxu0 %v468
      %v919 = vpop.f32.mrf.mxu0
      %v920 = vadd.f32 %v695, %v919
      %v921 = vpop.f32.mrf.mxu0
      %922 = vmatprep.mubr.f32.mxu0 0.0
      %923 = vmatmul.mubr.f32.gmra.mxu0 %v469
      %v924 = vpop.f32.mrf.mxu0
      %v925 = vadd.f32 %v700, %v924
      %v926 = vpop.f32.mrf.mxu0
      %927 = vmatprep.mubr.f32.mxu0 0.0
      %928 = vmatmul.mubr.f32.gmra.mxu0 %v470
      %v929 = vpop.f32.mrf.mxu0
      %v930 = vadd.f32 %v705, %v929
      %v931 = vpop.f32.mrf.mxu0
      %932 = vmatprep.mubr.f32.mxu0 0.0
      %933 = vmatmul.mubr.f32.gmra.mxu0 %v471
      %v934 = vpop.f32.mrf.mxu0
      %v935 = vadd.f32 %v710, %v934
      %v936 = vpop.f32.mrf.mxu0
      %937 = vmatprep.mubr.f32.mxu0 0.0
      %938 = vmatmul.mubr.f32.gmra.mxu0 %v472
      %v939 = vpop.f32.mrf.mxu0
      %v940 = vadd.f32 %v715, %v939
      %v941 = vpop.f32.mrf.mxu0
      %942 = vmatprep.mubr.f32.mxu0 0.0
      %943 = vmatmul.mubr.f32.gmra.mxu0 %v473
      %v944 = vpop.f32.mrf.mxu0
      %v945 = vadd.f32 %v720, %v944
      %v946 = vpop.f32.mrf.mxu0
      %947 = vmatprep.mubr.f32.mxu0 0.0
      %948 = vmatmul.mubr.f32.gmra.mxu0 %v474
      %v949 = vpop.f32.mrf.mxu0
      %v950 = vadd.f32 %v725, %v949
      %v951 = vpop.f32.mrf.mxu0
      %952 = vmatprep.mubr.f32.mxu0 0.0
      %953 = vmatmul.mubr.f32.gmra.mxu0 %v475
      %v954 = vpop.f32.mrf.mxu0
      %v955 = vadd.f32 %v730, %v954
      %v956 = vpop.f32.mrf.mxu0
      %957 = vmatprep.mubr.f32.mxu0 0.0
      %958 = vmatmul.mubr.f32.gmra.mxu0 %v476
      %v959 = vpop.f32.mrf.mxu0
      %v960 = vadd.f32 %v735, %v959
      %v961 = vpop.f32.mrf.mxu0
      %962 = vmatprep.mubr.f32.mxu0 0.0
      %963 = vmatmul.mubr.f32.gmra.mxu0 %v477
      %v964 = vpop.f32.mrf.mxu0
      %v965 = vadd.f32 %v740, %v964
      %v966 = vpop.f32.mrf.mxu0
      %967 = vmatprep.mubr.f32.mxu0 0.0
      %968 = vmatmul.mubr.f32.gmra.mxu0 %v478
      %v969 = vpop.f32.mrf.mxu0
      %v970 = vadd.f32 %v745, %v969
      %v971 = vpop.f32.mrf.mxu0
      %972 = vmatprep.mubr.f32.mxu0 0.0
      %973 = vmatmul.mubr.f32.gmra.mxu0 %v479
      %v974 = vpop.f32.mrf.mxu0
      %v975 = vadd.f32 %v750, %v974
      %v976 = vpop.f32.mrf.mxu0
      %977 = vmatprep.mubr.f32.mxu0 0.0
      %978 = vmatmul.mubr.f32.gmra.mxu0 %v480
      %v979 = vpop.f32.mrf.mxu0
      %v980 = vadd.f32 %v755, %v979
      %v981 = vpop.f32.mrf.mxu0
      %982 = vmatprep.mubr.f32.mxu0 0.0
      %983 = vmatmul.mubr.f32.gmra.mxu0 %v481
      %v984 = vpop.f32.mrf.mxu0
      %v985 = vadd.f32 %v760, %v984
      %v986 = vpop.f32.mrf.mxu0
      %987 = vmatprep.mubr.f32.mxu0 0.0
      %988 = vmatmul.mubr.f32.gmra.mxu0 %v482
      %v989 = vpop.f32.mrf.mxu0
      %v990 = vadd.f32 %v765, %v989
      %v991 = vpop.f32.mrf.mxu0
      %992 = vmatprep.mubr.f32.mxu0 0.0
      %993 = vmatmul.mubr.f32.gmra.mxu0 %v483
      %v994 = vpop.f32.mrf.mxu0
      %v995 = vadd.f32 %v770, %v994
      %v996 = vpop.f32.mrf.mxu0
      %997 = vdwg.mxu0
      %v998 = vld [vmem:[#allocation2 + $0x2] sm:$0xff]
      %v999 = vld [vmem:[#allocation2 + $0xa] sm:$0xff]
      %v1000 = vld [vmem:[#allocation2 + $0x1a] sm:$0xff]
      %v1001 = vld [vmem:[#allocation2 + $0x22] sm:$0xff]
      %v1002 = vld [vmem:[#allocation2 + $0x32] sm:$0xff]
      %v1003 = vld [vmem:[#allocation2 + $0x3a] sm:$0xff]
      %v1004 = vld [vmem:[#allocation2 + $0x4a] sm:$0xff]
      %v1005 = vld [vmem:[#allocation2 + $0x52] sm:$0xff]
      %v1006 = vld [vmem:[#allocation2 + $0x62] sm:$0xff]
      %v1007 = vld [vmem:[#allocation2 + $0x6a] sm:$0xff]
      %v1008 = vld [vmem:[#allocation2 + $0x7a] sm:$0xff]
      %v1009 = vld [vmem:[#allocation2 + $0x82] sm:$0xff]
      %v1010 = vld [vmem:[#allocation2 + $0x92] sm:$0xff]
      %v1011 = vld [vmem:[#allocation2 + $0x9a] sm:$0xff]
      %v1012 = vld [vmem:[#allocation2 + $0xaa] sm:$0xff]
      %v1013 = vld [vmem:[#allocation2 + $0xb2] sm:$0xff]
      %v1014 = vld [vmem:[#allocation2 + $0xc2] sm:$0xff]
      %v1015 = vld [vmem:[#allocation2 + $0xca] sm:$0xff]
      %v1016 = vld [vmem:[#allocation2 + $0xda] sm:$0xff]
      %v1017 = vld [vmem:[#allocation2 + $0xe2] sm:$0xff]
      %v1018 = vld [vmem:[#allocation2 + $0xf2] sm:$0xff]
      %v1019 = vld [vmem:[#allocation2 + $0xfa] sm:$0xff]
      %v1020 = vld [vmem:[#allocation2 + $0x10a] sm:$0xff]
      %v1021 = vld [vmem:[#allocation2 + $0x112] sm:$0xff]
      %v1022 = vld [vmem:[#allocation2 + $0x122] sm:$0xff]
      %v1023 = vld [vmem:[#allocation2 + $0x12a] sm:$0xff]
      %v1024 = vld [vmem:[#allocation2 + $0x13a] sm:$0xff]
      %v1025 = vld [vmem:[#allocation2 + $0x142] sm:$0xff]
      %v1026 = vld [vmem:[#allocation2 + $0x152] sm:$0xff]
      %v1027 = vld [vmem:[#allocation2 + $0x15a] sm:$0xff]
      %v1028 = vld [vmem:[#allocation2 + $0x16a] sm:$0xff]
      %v1029 = vld [vmem:[#allocation2 + $0x172] sm:$0xff]
      %v1030 = vld [vmem:[%s3 + $0x100] sm:$0xff]
      %v1031 = vld [vmem:[%s3 + $0x108] sm:$0xff]
      %v1032 = vld [vmem:[%s3 + $0x110] sm:$0xff]
      %v1033 = vld [vmem:[%s3 + $0x118] sm:$0xff]
      %v1034 = vld [vmem:[%s3 + $0x120] sm:$0xff]
      %v1035 = vld [vmem:[%s3 + $0x128] sm:$0xff]
      %v1036 = vld [vmem:[%s3 + $0x130] sm:$0xff]
      %v1037 = vld [vmem:[%s3 + $0x138] sm:$0xff]
      %v1038 = vld [vmem:[%s3 + $0x140] sm:$0xff]
      %v1039 = vld [vmem:[%s3 + $0x148] sm:$0xff]
      %v1040 = vld [vmem:[%s3 + $0x150] sm:$0xff]
      %v1041 = vld [vmem:[%s3 + $0x158] sm:$0xff]
      %v1042 = vld [vmem:[%s3 + $0x160] sm:$0xff]
      %v1043 = vld [vmem:[%s3 + $0x168] sm:$0xff]
      %v1044 = vld [vmem:[%s3 + $0x170] sm:$0xff]
      %v1045 = vld [vmem:[%s3 + $0x178] sm:$0xff]
      %1046 = vmatprep.subr.mxu0 0.0
      %1047 = vmatpush1.msra.mxu0 %v1045
      %1048 = vmatprep.subr.mxu0 0.0
      %1049 = vmatpush1.msra.mxu0 %v1044
      %1050 = vmatprep.subr.mxu0 0.0
      %1051 = vmatpush1.msra.mxu0 %v1043
      %1052 = vmatprep.subr.mxu0 0.0
      %1053 = vmatpush1.msra.mxu0 %v1042
      %1054 = vmatprep.subr.mxu0 0.0
      %1055 = vmatpush1.msra.mxu0 %v1041
      %1056 = vmatprep.subr.mxu0 0.0
      %1057 = vmatpush1.msra.mxu0 %v1040
      %1058 = vmatprep.subr.mxu0 0.0
      %1059 = vmatpush1.msra.mxu0 %v1039
      %1060 = vmatprep.subr.mxu0 0.0
      %1061 = vmatpush1.msra.mxu0 %v1038
      %1062 = vmatprep.subr.mxu0 0.0
      %1063 = vmatpush1.msra.mxu0 %v1037
      %1064 = vmatprep.subr.mxu0 0.0
      %1065 = vmatpush1.msra.mxu0 %v1036
      %1066 = vmatprep.subr.mxu0 0.0
      %1067 = vmatpush1.msra.mxu0 %v1035
      %1068 = vmatprep.subr.mxu0 0.0
      %1069 = vmatpush1.msra.mxu0 %v1034
      %1070 = vmatprep.subr.mxu0 0.0
      %1071 = vmatpush1.msra.mxu0 %v1033
      %1072 = vmatprep.subr.mxu0 0.0
      %1073 = vmatpush1.msra.mxu0 %v1032
      %1074 = vmatprep.subr.mxu0 0.0
      %1075 = vmatpush1.msra.mxu0 %v1031
      %1076 = vmatprep.subr.mxu0 0.0
      %1077 = vmatpush1.msra.mxu0 %v1030
      %1078 = vmatprep.subr.mxu0 0.0
      %1079 = vmatpush2.msra.mxu0 0.0
      %1080 = vmatprep.subr.mxu0 0.0
      %1081 = vmatpush2.msra.mxu0 0.0
      %1082 = vmatprep.subr.mxu0 0.0
      %1083 = vmatpush2.msra.mxu0 0.0
      %1084 = vmatprep.subr.mxu0 0.0
      %1085 = vmatpush2.msra.mxu0 0.0
      %1086 = vmatprep.subr.mxu0 0.0
      %1087 = vmatpush2.msra.mxu0 0.0
      %1088 = vmatprep.subr.mxu0 0.0
      %1089 = vmatpush2.msra.mxu0 0.0
      %1090 = vmatprep.subr.mxu0 0.0
      %1091 = vmatpush2.msra.mxu0 0.0
      %1092 = vmatprep.subr.mxu0 0.0
      %1093 = vmatpush2.msra.mxu0 0.0
      %1094 = vmatprep.subr.mxu0 0.0
      %1095 = vmatpush2.msra.mxu0 0.0
      %1096 = vmatprep.subr.mxu0 0.0
      %1097 = vmatpush2.msra.mxu0 0.0
      %1098 = vmatprep.subr.mxu0 0.0
      %1099 = vmatpush2.msra.mxu0 0.0
      %1100 = vmatprep.subr.mxu0 0.0
      %1101 = vmatpush2.msra.mxu0 0.0
      %1102 = vmatprep.subr.mxu0 0.0
      %1103 = vmatpush2.msra.mxu0 0.0
      %1104 = vmatprep.subr.mxu0 0.0
      %1105 = vmatpush2.msra.mxu0 0.0
      %1106 = vmatprep.subr.mxu0 0.0
      %1107 = vmatpush2.msra.mxu0 0.0
      %1108 = vmatprep.subr.mxu0 0.0
      %1109 = vmatpush2.msra.mxu0 0.0
      %1110 = vmatprep.mubr.f32.mxu0 0.0
      %1111 = vmatmul.mubr.f32.gmra.mxu0 %v998
      %v1112 = vpop.f32.mrf.mxu0
      %v1113 = vadd.f32 0.0, %v1112
      %v1114 = vpop.f32.mrf.mxu0
      %1115 = vmatprep.mubr.f32.mxu0 0.0
      %1116 = vmatmul.mubr.f32.gmra.mxu0 %v999
      %v1117 = vpop.f32.mrf.mxu0
      %v1118 = vadd.f32 0.0, %v1117
      %v1119 = vpop.f32.mrf.mxu0
      %1120 = vmatprep.mubr.f32.mxu0 0.0
      %1121 = vmatmul.mubr.f32.gmra.mxu0 %v1000
      %v1122 = vpop.f32.mrf.mxu0
      %v1123 = vadd.f32 0.0, %v1122
      %v1124 = vpop.f32.mrf.mxu0
      %1125 = vmatprep.mubr.f32.mxu0 0.0
      %1126 = vmatmul.mubr.f32.gmra.mxu0 %v1001
      %v1127 = vpop.f32.mrf.mxu0
      %v1128 = vadd.f32 0.0, %v1127
      %v1129 = vpop.f32.mrf.mxu0
      %1130 = vmatprep.mubr.f32.mxu0 0.0
      %1131 = vmatmul.mubr.f32.gmra.mxu0 %v1002
      %v1132 = vpop.f32.mrf.mxu0
      %v1133 = vadd.f32 0.0, %v1132
      %v1134 = vpop.f32.mrf.mxu0
      %1135 = vmatprep.mubr.f32.mxu0 0.0
      %1136 = vmatmul.mubr.f32.gmra.mxu0 %v1003
      %v1137 = vpop.f32.mrf.mxu0
      %v1138 = vadd.f32 0.0, %v1137
      %v1139 = vpop.f32.mrf.mxu0
      %1140 = vmatprep.mubr.f32.mxu0 0.0
      %1141 = vmatmul.mubr.f32.gmra.mxu0 %v1004
      %v1142 = vpop.f32.mrf.mxu0
      %v1143 = vadd.f32 0.0, %v1142
      %v1144 = vpop.f32.mrf.mxu0
      %1145 = vmatprep.mubr.f32.mxu0 0.0
      %1146 = vmatmul.mubr.f32.gmra.mxu0 %v1005
      %v1147 = vpop.f32.mrf.mxu0
      %v1148 = vadd.f32 0.0, %v1147
      %v1149 = vpop.f32.mrf.mxu0
      %1150 = vmatprep.mubr.f32.mxu0 0.0
      %1151 = vmatmul.mubr.f32.gmra.mxu0 %v1006
      %v1152 = vpop.f32.mrf.mxu0
      %v1153 = vadd.f32 0.0, %v1152
      %v1154 = vpop.f32.mrf.mxu0
      %1155 = vmatprep.mubr.f32.mxu0 0.0
      %1156 = vmatmul.mubr.f32.gmra.mxu0 %v1007
      %v1157 = vpop.f32.mrf.mxu0
      %v1158 = vadd.f32 0.0, %v1157
      %v1159 = vpop.f32.mrf.mxu0
      %1160 = vmatprep.mubr.f32.mxu0 0.0
      %1161 = vmatmul.mubr.f32.gmra.mxu0 %v1008
      %v1162 = vpop.f32.mrf.mxu0
      %v1163 = vadd.f32 0.0, %v1162
      %v1164 = vpop.f32.mrf.mxu0
      %1165 = vmatprep.mubr.f32.mxu0 0.0
      %1166 = vmatmul.mubr.f32.gmra.mxu0 %v1009
      %v1167 = vpop.f32.mrf.mxu0
      %v1168 = vadd.f32 0.0, %v1167
      %v1169 = vpop.f32.mrf.mxu0
      %1170 = vmatprep.mubr.f32.mxu0 0.0
      %1171 = vmatmul.mubr.f32.gmra.mxu0 %v1010
      %v1172 = vpop.f32.mrf.mxu0
      %v1173 = vadd.f32 0.0, %v1172
      %v1174 = vpop.f32.mrf.mxu0
      %1175 = vmatprep.mubr.f32.mxu0 0.0
      %1176 = vmatmul.mubr.f32.gmra.mxu0 %v1011
      %v1177 = vpop.f32.mrf.mxu0
      %v1178 = vadd.f32 0.0, %v1177
      %v1179 = vpop.f32.mrf.mxu0
      %1180 = vmatprep.mubr.f32.mxu0 0.0
      %1181 = vmatmul.mubr.f32.gmra.mxu0 %v1012
      %v1182 = vpop.f32.mrf.mxu0
      %v1183 = vadd.f32 0.0, %v1182
      %v1184 = vpop.f32.mrf.mxu0
      %1185 = vmatprep.mubr.f32.mxu0 0.0
      %1186 = vmatmul.mubr.f32.gmra.mxu0 %v1013
      %v1187 = vpop.f32.mrf.mxu0
      %v1188 = vadd.f32 0.0, %v1187
      %v1189 = vpop.f32.mrf.mxu0
      %1190 = vmatprep.mubr.f32.mxu0 0.0
      %1191 = vmatmul.mubr.f32.gmra.mxu0 %v1014
      %v1192 = vpop.f32.mrf.mxu0
      %v1193 = vadd.f32 0.0, %v1192
      %v1194 = vpop.f32.mrf.mxu0
      %1195 = vmatprep.mubr.f32.mxu0 0.0
      %1196 = vmatmul.mubr.f32.gmra.mxu0 %v1015
      %v1197 = vpop.f32.mrf.mxu0
      %v1198 = vadd.f32 0.0, %v1197
      %v1199 = vpop.f32.mrf.mxu0
      %1200 = vmatprep.mubr.f32.mxu0 0.0
      %1201 = vmatmul.mubr.f32.gmra.mxu0 %v1016
      %v1202 = vpop.f32.mrf.mxu0
      %v1203 = vadd.f32 0.0, %v1202
      %v1204 = vpop.f32.mrf.mxu0
      %1205 = vmatprep.mubr.f32.mxu0 0.0
      %1206 = vmatmul.mubr.f32.gmra.mxu0 %v1017
      %v1207 = vpop.f32.mrf.mxu0
      %v1208 = vadd.f32 0.0, %v1207
      %v1209 = vpop.f32.mrf.mxu0
      %1210 = vmatprep.mubr.f32.mxu0 0.0
      %1211 = vmatmul.mubr.f32.gmra.mxu0 %v1018
      %v1212 = vpop.f32.mrf.mxu0
      %v1213 = vadd.f32 0.0, %v1212
      %v1214 = vpop.f32.mrf.mxu0
      %1215 = vmatprep.mubr.f32.mxu0 0.0
      %1216 = vmatmul.mubr.f32.gmra.mxu0 %v1019
      %v1217 = vpop.f32.mrf.mxu0
      %v1218 = vadd.f32 0.0, %v1217
      %v1219 = vpop.f32.mrf.mxu0
      %1220 = vmatprep.mubr.f32.mxu0 0.0
      %1221 = vmatmul.mubr.f32.gmra.mxu0 %v1020
      %v1222 = vpop.f32.mrf.mxu0
      %v1223 = vadd.f32 0.0, %v1222
      %v1224 = vpop.f32.mrf.mxu0
      %1225 = vmatprep.mubr.f32.mxu0 0.0
      %1226 = vmatmul.mubr.f32.gmra.mxu0 %v1021
      %v1227 = vpop.f32.mrf.mxu0
      %v1228 = vadd.f32 0.0, %v1227
      %v1229 = vpop.f32.mrf.mxu0
      %1230 = vmatprep.mubr.f32.mxu0 0.0
      %1231 = vmatmul.mubr.f32.gmra.mxu0 %v1022
      %v1232 = vpop.f32.mrf.mxu0
      %v1233 = vadd.f32 0.0, %v1232
      %v1234 = vpop.f32.mrf.mxu0
      %1235 = vmatprep.mubr.f32.mxu0 0.0
      %1236 = vmatmul.mubr.f32.gmra.mxu0 %v1023
      %v1237 = vpop.f32.mrf.mxu0
      %v1238 = vadd.f32 0.0, %v1237
      %v1239 = vpop.f32.mrf.mxu0
      %1240 = vmatprep.mubr.f32.mxu0 0.0
      %1241 = vmatmul.mubr.f32.gmra.mxu0 %v1024
      %v1242 = vpop.f32.mrf.mxu0
      %v1243 = vadd.f32 0.0, %v1242
      %v1244 = vpop.f32.mrf.mxu0
      %1245 = vmatprep.mubr.f32.mxu0 0.0
      %1246 = vmatmul.mubr.f32.gmra.mxu0 %v1025
      %v1247 = vpop.f32.mrf.mxu0
      %v1248 = vadd.f32 0.0, %v1247
      %v1249 = vpop.f32.mrf.mxu0
      %1250 = vmatprep.mubr.f32.mxu0 0.0
      %1251 = vmatmul.mubr.f32.gmra.mxu0 %v1026
      %v1252 = vpop.f32.mrf.mxu0
      %v1253 = vadd.f32 0.0, %v1252
      %v1254 = vpop.f32.mrf.mxu0
      %1255 = vmatprep.mubr.f32.mxu0 0.0
      %1256 = vmatmul.mubr.f32.gmra.mxu0 %v1027
      %v1257 = vpop.f32.mrf.mxu0
      %v1258 = vadd.f32 0.0, %v1257
      %v1259 = vpop.f32.mrf.mxu0
      %1260 = vmatprep.mubr.f32.mxu0 0.0
      %1261 = vmatmul.mubr.f32.gmra.mxu0 %v1028
      %v1262 = vpop.f32.mrf.mxu0
      %v1263 = vadd.f32 0.0, %v1262
      %v1264 = vpop.f32.mrf.mxu0
      %1265 = vmatprep.mubr.f32.mxu0 0.0
      %1266 = vmatmul.mubr.f32.gmra.mxu0 %v1029
      %v1267 = vpop.f32.mrf.mxu0
      %v1268 = vadd.f32 0.0, %v1267
      %v1269 = vpop.f32.mrf.mxu0
      %1270 = vdwg.mxu0
      %v1271 = vadd.f32 %v840, %v1113
      %v1272 = vadd.f32 %v845, %v1118
      %v1273 = vadd.f32 %v850, %v1123
      %v1274 = vadd.f32 %v855, %v1128
      %v1275 = vadd.f32 %v860, %v1133
      %v1276 = vadd.f32 %v865, %v1138
      %v1277 = vadd.f32 %v870, %v1143
      %v1278 = vadd.f32 %v875, %v1148
      %v1279 = vadd.f32 %v880, %v1153
      %v1280 = vadd.f32 %v885, %v1158
      %v1281 = vadd.f32 %v890, %v1163
      %v1282 = vadd.f32 %v895, %v1168
      %v1283 = vadd.f32 %v900, %v1173
      %v1284 = vadd.f32 %v905, %v1178
      %v1285 = vadd.f32 %v910, %v1183
      %v1286 = vadd.f32 %v915, %v1188
      %v1287 = vadd.f32 %v920, %v1193
      %v1288 = vadd.f32 %v925, %v1198
      %v1289 = vadd.f32 %v930, %v1203
      %v1290 = vadd.f32 %v935, %v1208
      %v1291 = vadd.f32 %v940, %v1213
      %v1292 = vadd.f32 %v945, %v1218
      %v1293 = vadd.f32 %v950, %v1223
      %v1294 = vadd.f32 %v955, %v1228
      %v1295 = vadd.f32 %v960, %v1233
      %v1296 = vadd.f32 %v965, %v1238
      %v1297 = vadd.f32 %v970, %v1243
      %v1298 = vadd.f32 %v975, %v1248
      %v1299 = vadd.f32 %v980, %v1253
      %v1300 = vadd.f32 %v985, %v1258
      %v1301 = vadd.f32 %v990, %v1263
      %v1302 = vadd.f32 %v995, %v1268
      %v1303 = vld [vmem:[%s419] sm:$0xff]
      %v1304 = vld [vmem:[%s419 + $0x8] sm:$0xff]
      %v1305 = vld [vmem:[%s419 + $0x18] sm:$0xff]
      %v1306 = vld [vmem:[%s419 + $0x20] sm:$0xff]
      %v1307 = vld [vmem:[%s419 + $0x30] sm:$0xff]
      %v1308 = vld [vmem:[%s419 + $0x38] sm:$0xff]
      %v1309 = vld [vmem:[%s419 + $0x48] sm:$0xff]
      %v1310 = vld [vmem:[%s419 + $0x50] sm:$0xff]
      %v1311 = vld [vmem:[%s419 + $0x60] sm:$0xff]
      %v1312 = vld [vmem:[%s419 + $0x68] sm:$0xff]
      %v1313 = vld [vmem:[%s419 + $0x78] sm:$0xff]
      %v1314 = vld [vmem:[%s419 + $0x80] sm:$0xff]
      %v1315 = vld [vmem:[%s419 + $0x90] sm:$0xff]
      %v1316 = vld [vmem:[%s419 + $0x98] sm:$0xff]
      %v1317 = vld [vmem:[%s419 + $0xa8] sm:$0xff]
      %v1318 = vld [vmem:[%s419 + $0xb0] sm:$0xff]
      %v1319 = vld [vmem:[%s419 + $0xc0] sm:$0xff]
      %v1320 = vld [vmem:[%s419 + $0xc8] sm:$0xff]
      %v1321 = vld [vmem:[%s419 + $0xd8] sm:$0xff]
      %v1322 = vld [vmem:[%s419 + $0xe0] sm:$0xff]
      %v1323 = vld [vmem:[%s419 + $0xf0] sm:$0xff]
      %v1324 = vld [vmem:[%s419 + $0xf8] sm:$0xff]
      %v1325 = vld [vmem:[%s419 + $0x108] sm:$0xff]
      %v1326 = vld [vmem:[%s419 + $0x110] sm:$0xff]
      %v1327 = vld [vmem:[%s419 + $0x120] sm:$0xff]
      %v1328 = vld [vmem:[%s419 + $0x128] sm:$0xff]
      %v1329 = vld [vmem:[%s419 + $0x138] sm:$0xff]
      %v1330 = vld [vmem:[%s419 + $0x140] sm:$0xff]
      %v1331 = vld [vmem:[%s419 + $0x150] sm:$0xff]
      %v1332 = vld [vmem:[%s419 + $0x158] sm:$0xff]
      %v1333 = vld [vmem:[%s419 + $0x168] sm:$0xff]
      %v1334 = vld [vmem:[%s419 + $0x170] sm:$0xff]
      %v1335 = vld [vmem:[%s3 + $0x180] sm:$0xff]
      %v1336 = vld [vmem:[%s3 + $0x188] sm:$0xff]
      %v1337 = vld [vmem:[%s3 + $0x190] sm:$0xff]
      %v1338 = vld [vmem:[%s3 + $0x198] sm:$0xff]
      %v1339 = vld [vmem:[%s3 + $0x1a0] sm:$0xff]
      %v1340 = vld [vmem:[%s3 + $0x1a8] sm:$0xff]
      %v1341 = vld [vmem:[%s3 + $0x1b0] sm:$0xff]
      %v1342 = vld [vmem:[%s3 + $0x1b8] sm:$0xff]
      %v1343 = vld [vmem:[%s3 + $0x1c0] sm:$0xff]
      %v1344 = vld [vmem:[%s3 + $0x1c8] sm:$0xff]
      %v1345 = vld [vmem:[%s3 + $0x1d0] sm:$0xff]
      %v1346 = vld [vmem:[%s3 + $0x1d8] sm:$0xff]
      %v1347 = vld [vmem:[%s3 + $0x1e0] sm:$0xff]
      %v1348 = vld [vmem:[%s3 + $0x1e8] sm:$0xff]
      %v1349 = vld [vmem:[%s3 + $0x1f0] sm:$0xff]
      %v1350 = vld [vmem:[%s3 + $0x1f8] sm:$0xff]
      %1351 = vmatprep.subr.mxu0 0.0
      %1352 = vmatpush1.msra.mxu0 %v1350
      %1353 = vmatprep.subr.mxu0 0.0
      %1354 = vmatpush1.msra.mxu0 %v1349
      %1355 = vmatprep.subr.mxu0 0.0
      %1356 = vmatpush1.msra.mxu0 %v1348
      %1357 = vmatprep.subr.mxu0 0.0
      %1358 = vmatpush1.msra.mxu0 %v1347
      %1359 = vmatprep.subr.mxu0 0.0
      %1360 = vmatpush1.msra.mxu0 %v1346
      %1361 = vmatprep.subr.mxu0 0.0
      %1362 = vmatpush1.msra.mxu0 %v1345
      %1363 = vmatprep.subr.mxu0 0.0
      %1364 = vmatpush1.msra.mxu0 %v1344
      %1365 = vmatprep.subr.mxu0 0.0
      %1366 = vmatpush1.msra.mxu0 %v1343
      %1367 = vmatprep.subr.mxu0 0.0
      %1368 = vmatpush1.msra.mxu0 %v1342
      %1369 = vmatprep.subr.mxu0 0.0
      %1370 = vmatpush1.msra.mxu0 %v1341
      %1371 = vmatprep.subr.mxu0 0.0
      %1372 = vmatpush1.msra.mxu0 %v1340
      %1373 = vmatprep.subr.mxu0 0.0
      %1374 = vmatpush1.msra.mxu0 %v1339
      %1375 = vmatprep.subr.mxu0 0.0
      %1376 = vmatpush1.msra.mxu0 %v1338
      %1377 = vmatprep.subr.mxu0 0.0
      %1378 = vmatpush1.msra.mxu0 %v1337
      %1379 = vmatprep.subr.mxu0 0.0
      %1380 = vmatpush1.msra.mxu0 %v1336
      %1381 = vmatprep.subr.mxu0 0.0
      %1382 = vmatpush1.msra.mxu0 %v1335
      %1383 = vmatprep.subr.mxu0 0.0
      %1384 = vmatpush2.msra.mxu0 0.0
      %1385 = vmatprep.subr.mxu0 0.0
      %1386 = vmatpush2.msra.mxu0 0.0
      %1387 = vmatprep.subr.mxu0 0.0
      %1388 = vmatpush2.msra.mxu0 0.0
      %1389 = vmatprep.subr.mxu0 0.0
      %1390 = vmatpush2.msra.mxu0 0.0
      %1391 = vmatprep.subr.mxu0 0.0
      %1392 = vmatpush2.msra.mxu0 0.0
      %1393 = vmatprep.subr.mxu0 0.0
      %1394 = vmatpush2.msra.mxu0 0.0
      %1395 = vmatprep.subr.mxu0 0.0
      %1396 = vmatpush2.msra.mxu0 0.0
      %1397 = vmatprep.subr.mxu0 0.0
      %1398 = vmatpush2.msra.mxu0 0.0
      %1399 = vmatprep.subr.mxu0 0.0
      %1400 = vmatpush2.msra.mxu0 0.0
      %1401 = vmatprep.subr.mxu0 0.0
      %1402 = vmatpush2.msra.mxu0 0.0
      %1403 = vmatprep.subr.mxu0 0.0
      %1404 = vmatpush2.msra.mxu0 0.0
      %1405 = vmatprep.subr.mxu0 0.0
      %1406 = vmatpush2.msra.mxu0 0.0
      %1407 = vmatprep.subr.mxu0 0.0
      %1408 = vmatpush2.msra.mxu0 0.0
      %1409 = vmatprep.subr.mxu0 0.0
      %1410 = vmatpush2.msra.mxu0 0.0
      %1411 = vmatprep.subr.mxu0 0.0
      %1412 = vmatpush2.msra.mxu0 0.0
      %1413 = vmatprep.subr.mxu0 0.0
      %1414 = vmatpush2.msra.mxu0 0.0
      %1415 = vmatprep.mubr.f32.mxu0 0.0
      %1416 = vmatmul.mubr.f32.gmra.mxu0 %v1303
      %v1417 = vpop.f32.mrf.mxu0
      %v1418 = vadd.f32 0.0, %v1417
      %v1419 = vpop.f32.mrf.mxu0
      %1420 = vmatprep.mubr.f32.mxu0 0.0
      %1421 = vmatmul.mubr.f32.gmra.mxu0 %v1304
      %v1422 = vpop.f32.mrf.mxu0
      %v1423 = vadd.f32 0.0, %v1422
      %v1424 = vpop.f32.mrf.mxu0
      %1425 = vmatprep.mubr.f32.mxu0 0.0
      %1426 = vmatmul.mubr.f32.gmra.mxu0 %v1305
      %v1427 = vpop.f32.mrf.mxu0
      %v1428 = vadd.f32 0.0, %v1427
      %v1429 = vpop.f32.mrf.mxu0
      %1430 = vmatprep.mubr.f32.mxu0 0.0
      %1431 = vmatmul.mubr.f32.gmra.mxu0 %v1306
      %v1432 = vpop.f32.mrf.mxu0
      %v1433 = vadd.f32 0.0, %v1432
      %v1434 = vpop.f32.mrf.mxu0
      %1435 = vmatprep.mubr.f32.mxu0 0.0
      %1436 = vmatmul.mubr.f32.gmra.mxu0 %v1307
      %v1437 = vpop.f32.mrf.mxu0
      %v1438 = vadd.f32 0.0, %v1437
      %v1439 = vpop.f32.mrf.mxu0
      %1440 = vmatprep.mubr.f32.mxu0 0.0
      %1441 = vmatmul.mubr.f32.gmra.mxu0 %v1308
      %v1442 = vpop.f32.mrf.mxu0
      %v1443 = vadd.f32 0.0, %v1442
      %v1444 = vpop.f32.mrf.mxu0
      %1445 = vmatprep.mubr.f32.mxu0 0.0
      %1446 = vmatmul.mubr.f32.gmra.mxu0 %v1309
      %v1447 = vpop.f32.mrf.mxu0
      %v1448 = vadd.f32 0.0, %v1447
      %v1449 = vpop.f32.mrf.mxu0
      %1450 = vmatprep.mubr.f32.mxu0 0.0
      %1451 = vmatmul.mubr.f32.gmra.mxu0 %v1310
      %v1452 = vpop.f32.mrf.mxu0
      %v1453 = vadd.f32 0.0, %v1452
      %v1454 = vpop.f32.mrf.mxu0
      %1455 = vmatprep.mubr.f32.mxu0 0.0
      %1456 = vmatmul.mubr.f32.gmra.mxu0 %v1311
      %v1457 = vpop.f32.mrf.mxu0
      %v1458 = vadd.f32 0.0, %v1457
      %v1459 = vpop.f32.mrf.mxu0
      %1460 = vmatprep.mubr.f32.mxu0 0.0
      %1461 = vmatmul.mubr.f32.gmra.mxu0 %v1312
      %v1462 = vpop.f32.mrf.mxu0
      %v1463 = vadd.f32 0.0, %v1462
      %v1464 = vpop.f32.mrf.mxu0
      %1465 = vmatprep.mubr.f32.mxu0 0.0
      %1466 = vmatmul.mubr.f32.gmra.mxu0 %v1313
      %v1467 = vpop.f32.mrf.mxu0
      %v1468 = vadd.f32 0.0, %v1467
      %v1469 = vpop.f32.mrf.mxu0
      %1470 = vmatprep.mubr.f32.mxu0 0.0
      %1471 = vmatmul.mubr.f32.gmra.mxu0 %v1314
      %v1472 = vpop.f32.mrf.mxu0
      %v1473 = vadd.f32 0.0, %v1472
      %v1474 = vpop.f32.mrf.mxu0
      %1475 = vmatprep.mubr.f32.mxu0 0.0
      %1476 = vmatmul.mubr.f32.gmra.mxu0 %v1315
      %v1477 = vpop.f32.mrf.mxu0
      %v1478 = vadd.f32 0.0, %v1477
      %v1479 = vpop.f32.mrf.mxu0
      %1480 = vmatprep.mubr.f32.mxu0 0.0
      %1481 = vmatmul.mubr.f32.gmra.mxu0 %v1316
      %v1482 = vpop.f32.mrf.mxu0
      %v1483 = vadd.f32 0.0, %v1482
      %v1484 = vpop.f32.mrf.mxu0
      %1485 = vmatprep.mubr.f32.mxu0 0.0
      %1486 = vmatmul.mubr.f32.gmra.mxu0 %v1317
      %v1487 = vpop.f32.mrf.mxu0
      %v1488 = vadd.f32 0.0, %v1487
      %v1489 = vpop.f32.mrf.mxu0
      %1490 = vmatprep.mubr.f32.mxu0 0.0
      %1491 = vmatmul.mubr.f32.gmra.mxu0 %v1318
      %v1492 = vpop.f32.mrf.mxu0
      %v1493 = vadd.f32 0.0, %v1492
      %v1494 = vpop.f32.mrf.mxu0
      %1495 = vmatprep.mubr.f32.mxu0 0.0
      %1496 = vmatmul.mubr.f32.gmra.mxu0 %v1319
      %v1497 = vpop.f32.mrf.mxu0
      %v1498 = vadd.f32 0.0, %v1497
      %v1499 = vpop.f32.mrf.mxu0
      %1500 = vmatprep.mubr.f32.mxu0 0.0
      %1501 = vmatmul.mubr.f32.gmra.mxu0 %v1320
      %v1502 = vpop.f32.mrf.mxu0
      %v1503 = vadd.f32 0.0, %v1502
      %v1504 = vpop.f32.mrf.mxu0
      %1505 = vmatprep.mubr.f32.mxu0 0.0
      %1506 = vmatmul.mubr.f32.gmra.mxu0 %v1321
      %v1507 = vpop.f32.mrf.mxu0
      %v1508 = vadd.f32 0.0, %v1507
      %v1509 = vpop.f32.mrf.mxu0
      %1510 = vmatprep.mubr.f32.mxu0 0.0
      %1511 = vmatmul.mubr.f32.gmra.mxu0 %v1322
      %v1512 = vpop.f32.mrf.mxu0
      %v1513 = vadd.f32 0.0, %v1512
      %v1514 = vpop.f32.mrf.mxu0
      %1515 = vmatprep.mubr.f32.mxu0 0.0
      %1516 = vmatmul.mubr.f32.gmra.mxu0 %v1323
      %v1517 = vpop.f32.mrf.mxu0
      %v1518 = vadd.f32 0.0, %v1517
      %v1519 = vpop.f32.mrf.mxu0
      %1520 = vmatprep.mubr.f32.mxu0 0.0
      %1521 = vmatmul.mubr.f32.gmra.mxu0 %v1324
      %v1522 = vpop.f32.mrf.mxu0
      %v1523 = vadd.f32 0.0, %v1522
      %v1524 = vpop.f32.mrf.mxu0
      %1525 = vmatprep.mubr.f32.mxu0 0.0
      %1526 = vmatmul.mubr.f32.gmra.mxu0 %v1325
      %v1527 = vpop.f32.mrf.mxu0
      %v1528 = vadd.f32 0.0, %v1527
      %v1529 = vpop.f32.mrf.mxu0
      %1530 = vmatprep.mubr.f32.mxu0 0.0
      %1531 = vmatmul.mubr.f32.gmra.mxu0 %v1326
      %v1532 = vpop.f32.mrf.mxu0
      %v1533 = vadd.f32 0.0, %v1532
      %v1534 = vpop.f32.mrf.mxu0
      %1535 = vmatprep.mubr.f32.mxu0 0.0
      %1536 = vmatmul.mubr.f32.gmra.mxu0 %v1327
      %v1537 = vpop.f32.mrf.mxu0
      %v1538 = vadd.f32 0.0, %v1537
      %v1539 = vpop.f32.mrf.mxu0
      %1540 = vmatprep.mubr.f32.mxu0 0.0
      %1541 = vmatmul.mubr.f32.gmra.mxu0 %v1328
      %v1542 = vpop.f32.mrf.mxu0
      %v1543 = vadd.f32 0.0, %v1542
      %v1544 = vpop.f32.mrf.mxu0
      %1545 = vmatprep.mubr.f32.mxu0 0.0
      %1546 = vmatmul.mubr.f32.gmra.mxu0 %v1329
      %v1547 = vpop.f32.mrf.mxu0
      %v1548 = vadd.f32 0.0, %v1547
      %v1549 = vpop.f32.mrf.mxu0
      %1550 = vmatprep.mubr.f32.mxu0 0.0
      %1551 = vmatmul.mubr.f32.gmra.mxu0 %v1330
      %v1552 = vpop.f32.mrf.mxu0
      %v1553 = vadd.f32 0.0, %v1552
      %v1554 = vpop.f32.mrf.mxu0
      %1555 = vmatprep.mubr.f32.mxu0 0.0
      %1556 = vmatmul.mubr.f32.gmra.mxu0 %v1331
      %v1557 = vpop.f32.mrf.mxu0
      %v1558 = vadd.f32 0.0, %v1557
      %v1559 = vpop.f32.mrf.mxu0
      %1560 = vmatprep.mubr.f32.mxu0 0.0
      %1561 = vmatmul.mubr.f32.gmra.mxu0 %v1332
      %v1562 = vpop.f32.mrf.mxu0
      %v1563 = vadd.f32 0.0, %v1562
      %v1564 = vpop.f32.mrf.mxu0
      %1565 = vmatprep.mubr.f32.mxu0 0.0
      %1566 = vmatmul.mubr.f32.gmra.mxu0 %v1333
      %v1567 = vpop.f32.mrf.mxu0
      %v1568 = vadd.f32 0.0, %v1567
      %v1569 = vpop.f32.mrf.mxu0
      %1570 = vmatprep.mubr.f32.mxu0 0.0
      %1571 = vmatmul.mubr.f32.gmra.mxu0 %v1334
      %v1572 = vpop.f32.mrf.mxu0
      %v1573 = vadd.f32 0.0, %v1572
      %v1574 = vpop.f32.mrf.mxu0
      %1575 = vdwg.mxu0
      %v1576 = vadd.f32 %v1271, %v1418
      %v1577 = vadd.f32 %v1272, %v1423
      %v1578 = vadd.f32 %v1273, %v1428
      %v1579 = vadd.f32 %v1274, %v1433
      %v1580 = vadd.f32 %v1275, %v1438
      %v1581 = vadd.f32 %v1276, %v1443
      %v1582 = vadd.f32 %v1277, %v1448
      %v1583 = vadd.f32 %v1278, %v1453
      %v1584 = vadd.f32 %v1279, %v1458
      %v1585 = vadd.f32 %v1280, %v1463
      %v1586 = vadd.f32 %v1281, %v1468
      %v1587 = vadd.f32 %v1282, %v1473
      %v1588 = vadd.f32 %v1283, %v1478
      %v1589 = vadd.f32 %v1284, %v1483
      %v1590 = vadd.f32 %v1285, %v1488
      %v1591 = vadd.f32 %v1286, %v1493
      %v1592 = vadd.f32 %v1287, %v1498
      %v1593 = vadd.f32 %v1288, %v1503
      %v1594 = vadd.f32 %v1289, %v1508
      %v1595 = vadd.f32 %v1290, %v1513
      %v1596 = vadd.f32 %v1291, %v1518
      %v1597 = vadd.f32 %v1292, %v1523
      %v1598 = vadd.f32 %v1293, %v1528
      %v1599 = vadd.f32 %v1294, %v1533
      %v1600 = vadd.f32 %v1295, %v1538
      %v1601 = vadd.f32 %v1296, %v1543
      %v1602 = vadd.f32 %v1297, %v1548
      %v1603 = vadd.f32 %v1298, %v1553
      %v1604 = vadd.f32 %v1299, %v1558
      %v1605 = vadd.f32 %v1300, %v1563
      %v1606 = vadd.f32 %v1301, %v1568
      %v1607 = vadd.f32 %v1302, %v1573
      %v1608 = vld [vmem:[%s419 + $0x1] sm:$0xff]
      %v1609 = vld [vmem:[%s419 + $0x9] sm:$0xff]
      %v1610 = vld [vmem:[%s419 + $0x19] sm:$0xff]
      %v1611 = vld [vmem:[%s419 + $0x21] sm:$0xff]
      %v1612 = vld [vmem:[%s419 + $0x31] sm:$0xff]
      %v1613 = vld [vmem:[%s419 + $0x39] sm:$0xff]
      %v1614 = vld [vmem:[%s419 + $0x49] sm:$0xff]
      %v1615 = vld [vmem:[%s419 + $0x51] sm:$0xff]
      %v1616 = vld [vmem:[%s419 + $0x61] sm:$0xff]
      %v1617 = vld [vmem:[%s419 + $0x69] sm:$0xff]
      %v1618 = vld [vmem:[%s419 + $0x79] sm:$0xff]
      %v1619 = vld [vmem:[%s419 + $0x81] sm:$0xff]
      %v1620 = vld [vmem:[%s419 + $0x91] sm:$0xff]
      %v1621 = vld [vmem:[%s419 + $0x99] sm:$0xff]
      %v1622 = vld [vmem:[%s419 + $0xa9] sm:$0xff]
      %v1623 = vld [vmem:[%s419 + $0xb1] sm:$0xff]
      %v1624 = vld [vmem:[%s419 + $0xc1] sm:$0xff]
      %v1625 = vld [vmem:[%s419 + $0xc9] sm:$0xff]
      %v1626 = vld [vmem:[%s419 + $0xd9] sm:$0xff]
      %v1627 = vld [vmem:[%s419 + $0xe1] sm:$0xff]
      %v1628 = vld [vmem:[%s419 + $0xf1] sm:$0xff]
      %v1629 = vld [vmem:[%s419 + $0xf9] sm:$0xff]
      %v1630 = vld [vmem:[%s419 + $0x109] sm:$0xff]
      %v1631 = vld [vmem:[%s419 + $0x111] sm:$0xff]
      %v1632 = vld [vmem:[%s419 + $0x121] sm:$0xff]
      %v1633 = vld [vmem:[%s419 + $0x129] sm:$0xff]
      %v1634 = vld [vmem:[%s419 + $0x139] sm:$0xff]
      %v1635 = vld [vmem:[%s419 + $0x141] sm:$0xff]
      %v1636 = vld [vmem:[%s419 + $0x151] sm:$0xff]
      %v1637 = vld [vmem:[%s419 + $0x159] sm:$0xff]
      %v1638 = vld [vmem:[%s419 + $0x169] sm:$0xff]
      %v1639 = vld [vmem:[%s419 + $0x171] sm:$0xff]
      %v1640 = vld [vmem:[%s3 + $0x200] sm:$0xff]
      %v1641 = vld [vmem:[%s3 + $0x208] sm:$0xff]
      %v1642 = vld [vmem:[%s3 + $0x210] sm:$0xff]
      %v1643 = vld [vmem:[%s3 + $0x218] sm:$0xff]
      %v1644 = vld [vmem:[%s3 + $0x220] sm:$0xff]
      %v1645 = vld [vmem:[%s3 + $0x228] sm:$0xff]
      %v1646 = vld [vmem:[%s3 + $0x230] sm:$0xff]
      %v1647 = vld [vmem:[%s3 + $0x238] sm:$0xff]
      %v1648 = vld [vmem:[%s3 + $0x240] sm:$0xff]
      %v1649 = vld [vmem:[%s3 + $0x248] sm:$0xff]
      %v1650 = vld [vmem:[%s3 + $0x250] sm:$0xff]
      %v1651 = vld [vmem:[%s3 + $0x258] sm:$0xff]
      %v1652 = vld [vmem:[%s3 + $0x260] sm:$0xff]
      %v1653 = vld [vmem:[%s3 + $0x268] sm:$0xff]
      %v1654 = vld [vmem:[%s3 + $0x270] sm:$0xff]
      %v1655 = vld [vmem:[%s3 + $0x278] sm:$0xff]
      %1656 = vmatprep.subr.mxu0 0.0
      %1657 = vmatpush1.msra.mxu0 %v1655
      %1658 = vmatprep.subr.mxu0 0.0
      %1659 = vmatpush1.msra.mxu0 %v1654
      %1660 = vmatprep.subr.mxu0 0.0
      %1661 = vmatpush1.msra.mxu0 %v1653
      %1662 = vmatprep.subr.mxu0 0.0
      %1663 = vmatpush1.msra.mxu0 %v1652
      %1664 = vmatprep.subr.mxu0 0.0
      %1665 = vmatpush1.msra.mxu0 %v1651
      %1666 = vmatprep.subr.mxu0 0.0
      %1667 = vmatpush1.msra.mxu0 %v1650
      %1668 = vmatprep.subr.mxu0 0.0
      %1669 = vmatpush1.msra.mxu0 %v1649
      %1670 = vmatprep.subr.mxu0 0.0
      %1671 = vmatpush1.msra.mxu0 %v1648
      %1672 = vmatprep.subr.mxu0 0.0
      %1673 = vmatpush1.msra.mxu0 %v1647
      %1674 = vmatprep.subr.mxu0 0.0
      %1675 = vmatpush1.msra.mxu0 %v1646
      %1676 = vmatprep.subr.mxu0 0.0
      %1677 = vmatpush1.msra.mxu0 %v1645
      %1678 = vmatprep.subr.mxu0 0.0
      %1679 = vmatpush1.msra.mxu0 %v1644
      %1680 = vmatprep.subr.mxu0 0.0
      %1681 = vmatpush1.msra.mxu0 %v1643
      %1682 = vmatprep.subr.mxu0 0.0
      %1683 = vmatpush1.msra.mxu0 %v1642
      %1684 = vmatprep.subr.mxu0 0.0
      %1685 = vmatpush1.msra.mxu0 %v1641
      %1686 = vmatprep.subr.mxu0 0.0
      %1687 = vmatpush1.msra.mxu0 %v1640
      %1688 = vmatprep.subr.mxu0 0.0
      %1689 = vmatpush2.msra.mxu0 0.0
      %1690 = vmatprep.subr.mxu0 0.0
      %1691 = vmatpush2.msra.mxu0 0.0
      %1692 = vmatprep.subr.mxu0 0.0
      %1693 = vmatpush2.msra.mxu0 0.0
      %1694 = vmatprep.subr.mxu0 0.0
      %1695 = vmatpush2.msra.mxu0 0.0
      %1696 = vmatprep.subr.mxu0 0.0
      %1697 = vmatpush2.msra.mxu0 0.0
      %1698 = vmatprep.subr.mxu0 0.0
      %1699 = vmatpush2.msra.mxu0 0.0
      %1700 = vmatprep.subr.mxu0 0.0
      %1701 = vmatpush2.msra.mxu0 0.0
      %1702 = vmatprep.subr.mxu0 0.0
      %1703 = vmatpush2.msra.mxu0 0.0
      %1704 = vmatprep.subr.mxu0 0.0
      %1705 = vmatpush2.msra.mxu0 0.0
      %1706 = vmatprep.subr.mxu0 0.0
      %1707 = vmatpush2.msra.mxu0 0.0
      %1708 = vmatprep.subr.mxu0 0.0
      %1709 = vmatpush2.msra.mxu0 0.0
      %1710 = vmatprep.subr.mxu0 0.0
      %1711 = vmatpush2.msra.mxu0 0.0
      %1712 = vmatprep.subr.mxu0 0.0
      %1713 = vmatpush2.msra.mxu0 0.0
      %1714 = vmatprep.subr.mxu0 0.0
      %1715 = vmatpush2.msra.mxu0 0.0
      %1716 = vmatprep.subr.mxu0 0.0
      %1717 = vmatpush2.msra.mxu0 0.0
      %1718 = vmatprep.subr.mxu0 0.0
      %1719 = vmatpush2.msra.mxu0 0.0
      %1720 = vmatprep.mubr.f32.mxu0 0.0
      %1721 = vmatmul.mubr.f32.gmra.mxu0 %v1608
      %v1722 = vpop.f32.mrf.mxu0
      %v1723 = vadd.f32 0.0, %v1722
      %v1724 = vpop.f32.mrf.mxu0
      %1725 = vmatprep.mubr.f32.mxu0 0.0
      %1726 = vmatmul.mubr.f32.gmra.mxu0 %v1609
      %v1727 = vpop.f32.mrf.mxu0
      %v1728 = vadd.f32 0.0, %v1727
      %v1729 = vpop.f32.mrf.mxu0
      %1730 = vmatprep.mubr.f32.mxu0 0.0
      %1731 = vmatmul.mubr.f32.gmra.mxu0 %v1610
      %v1732 = vpop.f32.mrf.mxu0
      %v1733 = vadd.f32 0.0, %v1732
      %v1734 = vpop.f32.mrf.mxu0
      %1735 = vmatprep.mubr.f32.mxu0 0.0
      %1736 = vmatmul.mubr.f32.gmra.mxu0 %v1611
      %v1737 = vpop.f32.mrf.mxu0
      %v1738 = vadd.f32 0.0, %v1737
      %v1739 = vpop.f32.mrf.mxu0
      %1740 = vmatprep.mubr.f32.mxu0 0.0
      %1741 = vmatmul.mubr.f32.gmra.mxu0 %v1612
      %v1742 = vpop.f32.mrf.mxu0
      %v1743 = vadd.f32 0.0, %v1742
      %v1744 = vpop.f32.mrf.mxu0
      %1745 = vmatprep.mubr.f32.mxu0 0.0
      %1746 = vmatmul.mubr.f32.gmra.mxu0 %v1613
      %v1747 = vpop.f32.mrf.mxu0
      %v1748 = vadd.f32 0.0, %v1747
      %v1749 = vpop.f32.mrf.mxu0
      %1750 = vmatprep.mubr.f32.mxu0 0.0
      %1751 = vmatmul.mubr.f32.gmra.mxu0 %v1614
      %v1752 = vpop.f32.mrf.mxu0
      %v1753 = vadd.f32 0.0, %v1752
      %v1754 = vpop.f32.mrf.mxu0
      %1755 = vmatprep.mubr.f32.mxu0 0.0
      %1756 = vmatmul.mubr.f32.gmra.mxu0 %v1615
      %v1757 = vpop.f32.mrf.mxu0
      %v1758 = vadd.f32 0.0, %v1757
      %v1759 = vpop.f32.mrf.mxu0
      %1760 = vmatprep.mubr.f32.mxu0 0.0
      %1761 = vmatmul.mubr.f32.gmra.mxu0 %v1616
      %v1762 = vpop.f32.mrf.mxu0
      %v1763 = vadd.f32 0.0, %v1762
      %v1764 = vpop.f32.mrf.mxu0
      %1765 = vmatprep.mubr.f32.mxu0 0.0
      %1766 = vmatmul.mubr.f32.gmra.mxu0 %v1617
      %v1767 = vpop.f32.mrf.mxu0
      %v1768 = vadd.f32 0.0, %v1767
      %v1769 = vpop.f32.mrf.mxu0
      %1770 = vmatprep.mubr.f32.mxu0 0.0
      %1771 = vmatmul.mubr.f32.gmra.mxu0 %v1618
      %v1772 = vpop.f32.mrf.mxu0
      %v1773 = vadd.f32 0.0, %v1772
      %v1774 = vpop.f32.mrf.mxu0
      %1775 = vmatprep.mubr.f32.mxu0 0.0
      %1776 = vmatmul.mubr.f32.gmra.mxu0 %v1619
      %v1777 = vpop.f32.mrf.mxu0
      %v1778 = vadd.f32 0.0, %v1777
      %v1779 = vpop.f32.mrf.mxu0
      %1780 = vmatprep.mubr.f32.mxu0 0.0
      %1781 = vmatmul.mubr.f32.gmra.mxu0 %v1620
      %v1782 = vpop.f32.mrf.mxu0
      %v1783 = vadd.f32 0.0, %v1782
      %v1784 = vpop.f32.mrf.mxu0
      %1785 = vmatprep.mubr.f32.mxu0 0.0
      %1786 = vmatmul.mubr.f32.gmra.mxu0 %v1621
      %v1787 = vpop.f32.mrf.mxu0
      %v1788 = vadd.f32 0.0, %v1787
      %v1789 = vpop.f32.mrf.mxu0
      %1790 = vmatprep.mubr.f32.mxu0 0.0
      %1791 = vmatmul.mubr.f32.gmra.mxu0 %v1622
      %v1792 = vpop.f32.mrf.mxu0
      %v1793 = vadd.f32 0.0, %v1792
      %v1794 = vpop.f32.mrf.mxu0
      %1795 = vmatprep.mubr.f32.mxu0 0.0
      %1796 = vmatmul.mubr.f32.gmra.mxu0 %v1623
      %v1797 = vpop.f32.mrf.mxu0
      %v1798 = vadd.f32 0.0, %v1797
      %v1799 = vpop.f32.mrf.mxu0
      %1800 = vmatprep.mubr.f32.mxu0 0.0
      %1801 = vmatmul.mubr.f32.gmra.mxu0 %v1624
      %v1802 = vpop.f32.mrf.mxu0
      %v1803 = vadd.f32 0.0, %v1802
      %v1804 = vpop.f32.mrf.mxu0
      %1805 = vmatprep.mubr.f32.mxu0 0.0
      %1806 = vmatmul.mubr.f32.gmra.mxu0 %v1625
      %v1807 = vpop.f32.mrf.mxu0
      %v1808 = vadd.f32 0.0, %v1807
      %v1809 = vpop.f32.mrf.mxu0
      %1810 = vmatprep.mubr.f32.mxu0 0.0
      %1811 = vmatmul.mubr.f32.gmra.mxu0 %v1626
      %v1812 = vpop.f32.mrf.mxu0
      %v1813 = vadd.f32 0.0, %v1812
      %v1814 = vpop.f32.mrf.mxu0
      %1815 = vmatprep.mubr.f32.mxu0 0.0
      %1816 = vmatmul.mubr.f32.gmra.mxu0 %v1627
      %v1817 = vpop.f32.mrf.mxu0
      %v1818 = vadd.f32 0.0, %v1817
      %v1819 = vpop.f32.mrf.mxu0
      %1820 = vmatprep.mubr.f32.mxu0 0.0
      %1821 = vmatmul.mubr.f32.gmra.mxu0 %v1628
      %v1822 = vpop.f32.mrf.mxu0
      %v1823 = vadd.f32 0.0, %v1822
      %v1824 = vpop.f32.mrf.mxu0
      %1825 = vmatprep.mubr.f32.mxu0 0.0
      %1826 = vmatmul.mubr.f32.gmra.mxu0 %v1629
      %v1827 = vpop.f32.mrf.mxu0
      %v1828 = vadd.f32 0.0, %v1827
      %v1829 = vpop.f32.mrf.mxu0
      %1830 = vmatprep.mubr.f32.mxu0 0.0
      %1831 = vmatmul.mubr.f32.gmra.mxu0 %v1630
      %v1832 = vpop.f32.mrf.mxu0
      %v1833 = vadd.f32 0.0, %v1832
      %v1834 = vpop.f32.mrf.mxu0
      %1835 = vmatprep.mubr.f32.mxu0 0.0
      %1836 = vmatmul.mubr.f32.gmra.mxu0 %v1631
      %v1837 = vpop.f32.mrf.mxu0
      %v1838 = vadd.f32 0.0, %v1837
      %v1839 = vpop.f32.mrf.mxu0
      %1840 = vmatprep.mubr.f32.mxu0 0.0
      %1841 = vmatmul.mubr.f32.gmra.mxu0 %v1632
      %v1842 = vpop.f32.mrf.mxu0
      %v1843 = vadd.f32 0.0, %v1842
      %v1844 = vpop.f32.mrf.mxu0
      %1845 = vmatprep.mubr.f32.mxu0 0.0
      %1846 = vmatmul.mubr.f32.gmra.mxu0 %v1633
      %v1847 = vpop.f32.mrf.mxu0
      %v1848 = vadd.f32 0.0, %v1847
      %v1849 = vpop.f32.mrf.mxu0
      %1850 = vmatprep.mubr.f32.mxu0 0.0
      %1851 = vmatmul.mubr.f32.gmra.mxu0 %v1634
      %v1852 = vpop.f32.mrf.mxu0
      %v1853 = vadd.f32 0.0, %v1852
      %v1854 = vpop.f32.mrf.mxu0
      %1855 = vmatprep.mubr.f32.mxu0 0.0
      %1856 = vmatmul.mubr.f32.gmra.mxu0 %v1635
      %v1857 = vpop.f32.mrf.mxu0
      %v1858 = vadd.f32 0.0, %v1857
      %v1859 = vpop.f32.mrf.mxu0
      %1860 = vmatprep.mubr.f32.mxu0 0.0
      %1861 = vmatmul.mubr.f32.gmra.mxu0 %v1636
      %v1862 = vpop.f32.mrf.mxu0
      %v1863 = vadd.f32 0.0, %v1862
      %v1864 = vpop.f32.mrf.mxu0
      %1865 = vmatprep.mubr.f32.mxu0 0.0
      %1866 = vmatmul.mubr.f32.gmra.mxu0 %v1637
      %v1867 = vpop.f32.mrf.mxu0
      %v1868 = vadd.f32 0.0, %v1867
      %v1869 = vpop.f32.mrf.mxu0
      %1870 = vmatprep.mubr.f32.mxu0 0.0
      %1871 = vmatmul.mubr.f32.gmra.mxu0 %v1638
      %v1872 = vpop.f32.mrf.mxu0
      %v1873 = vadd.f32 0.0, %v1872
      %v1874 = vpop.f32.mrf.mxu0
      %1875 = vmatprep.mubr.f32.mxu0 0.0
      %1876 = vmatmul.mubr.f32.gmra.mxu0 %v1639
      %v1877 = vpop.f32.mrf.mxu0
      %v1878 = vadd.f32 0.0, %v1877
      %v1879 = vpop.f32.mrf.mxu0
      %1880 = vdwg.mxu0
      %v1881 = vadd.f32 %v1576, %v1723
      %v1882 = vadd.f32 %v1577, %v1728
      %v1883 = vadd.f32 %v1578, %v1733
      %v1884 = vadd.f32 %v1579, %v1738
      %v1885 = vadd.f32 %v1580, %v1743
      %v1886 = vadd.f32 %v1581, %v1748
      %v1887 = vadd.f32 %v1582, %v1753
      %v1888 = vadd.f32 %v1583, %v1758
      %v1889 = vadd.f32 %v1584, %v1763
      %v1890 = vadd.f32 %v1585, %v1768
      %v1891 = vadd.f32 %v1586, %v1773
      %v1892 = vadd.f32 %v1587, %v1778
      %v1893 = vadd.f32 %v1588, %v1783
      %v1894 = vadd.f32 %v1589, %v1788
      %v1895 = vadd.f32 %v1590, %v1793
      %v1896 = vadd.f32 %v1591, %v1798
      %v1897 = vadd.f32 %v1592, %v1803
      %v1898 = vadd.f32 %v1593, %v1808
      %v1899 = vadd.f32 %v1594, %v1813
      %v1900 = vadd.f32 %v1595, %v1818
      %v1901 = vadd.f32 %v1596, %v1823
      %v1902 = vadd.f32 %v1597, %v1828
      %v1903 = vadd.f32 %v1598, %v1833
      %v1904 = vadd.f32 %v1599, %v1838
      %v1905 = vadd.f32 %v1600, %v1843
      %v1906 = vadd.f32 %v1601, %v1848
      %v1907 = vadd.f32 %v1602, %v1853
      %v1908 = vadd.f32 %v1603, %v1858
      %v1909 = vadd.f32 %v1604, %v1863
      %v1910 = vadd.f32 %v1605, %v1868
      %v1911 = vadd.f32 %v1606, %v1873
      %v1912 = vadd.f32 %v1607, %v1878
      %v1913 = vld [vmem:[%s419 + $0x2] sm:$0xff]
      %v1914 = vld [vmem:[%s419 + $0xa] sm:$0xff]
      %v1915 = vld [vmem:[%s419 + $0x1a] sm:$0xff]
      %v1916 = vld [vmem:[%s419 + $0x22] sm:$0xff]
      %v1917 = vld [vmem:[%s419 + $0x32] sm:$0xff]
      %v1918 = vld [vmem:[%s419 + $0x3a] sm:$0xff]
      %v1919 = vld [vmem:[%s419 + $0x4a] sm:$0xff]
      %v1920 = vld [vmem:[%s419 + $0x52] sm:$0xff]
      %v1921 = vld [vmem:[%s419 + $0x62] sm:$0xff]
      %v1922 = vld [vmem:[%s419 + $0x6a] sm:$0xff]
      %v1923 = vld [vmem:[%s419 + $0x7a] sm:$0xff]
      %v1924 = vld [vmem:[%s419 + $0x82] sm:$0xff]
      %v1925 = vld [vmem:[%s419 + $0x92] sm:$0xff]
      %v1926 = vld [vmem:[%s419 + $0x9a] sm:$0xff]
      %v1927 = vld [vmem:[%s419 + $0xaa] sm:$0xff]
      %v1928 = vld [vmem:[%s419 + $0xb2] sm:$0xff]
      %v1929 = vld [vmem:[%s419 + $0xc2] sm:$0xff]
      %v1930 = vld [vmem:[%s419 + $0xca] sm:$0xff]
      %v1931 = vld [vmem:[%s419 + $0xda] sm:$0xff]
      %v1932 = vld [vmem:[%s419 + $0xe2] sm:$0xff]
      %v1933 = vld [vmem:[%s419 + $0xf2] sm:$0xff]
      %v1934 = vld [vmem:[%s419 + $0xfa] sm:$0xff]
      %v1935 = vld [vmem:[%s419 + $0x10a] sm:$0xff]
      %v1936 = vld [vmem:[%s419 + $0x112] sm:$0xff]
      %v1937 = vld [vmem:[%s419 + $0x122] sm:$0xff]
      %v1938 = vld [vmem:[%s419 + $0x12a] sm:$0xff]
      %v1939 = vld [vmem:[%s419 + $0x13a] sm:$0xff]
      %v1940 = vld [vmem:[%s419 + $0x142] sm:$0xff]
      %v1941 = vld [vmem:[%s419 + $0x152] sm:$0xff]
      %v1942 = vld [vmem:[%s419 + $0x15a] sm:$0xff]
      %v1943 = vld [vmem:[%s419 + $0x16a] sm:$0xff]
      %v1944 = vld [vmem:[%s419 + $0x172] sm:$0xff]
      %v1945 = vld [vmem:[%s3 + $0x280] sm:$0xff]
      %v1946 = vld [vmem:[%s3 + $0x288] sm:$0xff]
      %v1947 = vld [vmem:[%s3 + $0x290] sm:$0xff]
      %v1948 = vld [vmem:[%s3 + $0x298] sm:$0xff]
      %v1949 = vld [vmem:[%s3 + $0x2a0] sm:$0xff]
      %v1950 = vld [vmem:[%s3 + $0x2a8] sm:$0xff]
      %v1951 = vld [vmem:[%s3 + $0x2b0] sm:$0xff]
      %v1952 = vld [vmem:[%s3 + $0x2b8] sm:$0xff]
      %v1953 = vld [vmem:[%s3 + $0x2c0] sm:$0xff]
      %v1954 = vld [vmem:[%s3 + $0x2c8] sm:$0xff]
      %v1955 = vld [vmem:[%s3 + $0x2d0] sm:$0xff]
      %v1956 = vld [vmem:[%s3 + $0x2d8] sm:$0xff]
      %v1957 = vld [vmem:[%s3 + $0x2e0] sm:$0xff]
      %v1958 = vld [vmem:[%s3 + $0x2e8] sm:$0xff]
      %v1959 = vld [vmem:[%s3 + $0x2f0] sm:$0xff]
      %v1960 = vld [vmem:[%s3 + $0x2f8] sm:$0xff]
      %1961 = vmatprep.subr.mxu0 0.0
      %1962 = vmatpush1.msra.mxu0 %v1960
      %1963 = vmatprep.subr.mxu0 0.0
      %1964 = vmatpush1.msra.mxu0 %v1959
      %1965 = vmatprep.subr.mxu0 0.0
      %1966 = vmatpush1.msra.mxu0 %v1958
      %1967 = vmatprep.subr.mxu0 0.0
      %1968 = vmatpush1.msra.mxu0 %v1957
      %1969 = vmatprep.subr.mxu0 0.0
      %1970 = vmatpush1.msra.mxu0 %v1956
      %1971 = vmatprep.subr.mxu0 0.0
      %1972 = vmatpush1.msra.mxu0 %v1955
      %1973 = vmatprep.subr.mxu0 0.0
      %1974 = vmatpush1.msra.mxu0 %v1954
      %1975 = vmatprep.subr.mxu0 0.0
      %1976 = vmatpush1.msra.mxu0 %v1953
      %1977 = vmatprep.subr.mxu0 0.0
      %1978 = vmatpush1.msra.mxu0 %v1952
      %1979 = vmatprep.subr.mxu0 0.0
      %1980 = vmatpush1.msra.mxu0 %v1951
      %1981 = vmatprep.subr.mxu0 0.0
      %1982 = vmatpush1.msra.mxu0 %v1950
      %1983 = vmatprep.subr.mxu0 0.0
      %1984 = vmatpush1.msra.mxu0 %v1949
      %1985 = vmatprep.subr.mxu0 0.0
      %1986 = vmatpush1.msra.mxu0 %v1948
      %1987 = vmatprep.subr.mxu0 0.0
      %1988 = vmatpush1.msra.mxu0 %v1947
      %1989 = vmatprep.subr.mxu0 0.0
      %1990 = vmatpush1.msra.mxu0 %v1946
      %1991 = vmatprep.subr.mxu0 0.0
      %1992 = vmatpush1.msra.mxu0 %v1945
      %1993 = vmatprep.subr.mxu0 0.0
      %1994 = vmatpush2.msra.mxu0 0.0
      %1995 = vmatprep.subr.mxu0 0.0
      %1996 = vmatpush2.msra.mxu0 0.0
      %1997 = vmatprep.subr.mxu0 0.0
      %1998 = vmatpush2.msra.mxu0 0.0
      %1999 = vmatprep.subr.mxu0 0.0
      %2000 = vmatpush2.msra.mxu0 0.0
      %2001 = vmatprep.subr.mxu0 0.0
      %2002 = vmatpush2.msra.mxu0 0.0
      %2003 = vmatprep.subr.mxu0 0.0
      %2004 = vmatpush2.msra.mxu0 0.0
      %2005 = vmatprep.subr.mxu0 0.0
      %2006 = vmatpush2.msra.mxu0 0.0
      %2007 = vmatprep.subr.mxu0 0.0
      %2008 = vmatpush2.msra.mxu0 0.0
      %2009 = vmatprep.subr.mxu0 0.0
      %2010 = vmatpush2.msra.mxu0 0.0
      %2011 = vmatprep.subr.mxu0 0.0
      %2012 = vmatpush2.msra.mxu0 0.0
      %2013 = vmatprep.subr.mxu0 0.0
      %2014 = vmatpush2.msra.mxu0 0.0
      %2015 = vmatprep.subr.mxu0 0.0
      %2016 = vmatpush2.msra.mxu0 0.0
      %2017 = vmatprep.subr.mxu0 0.0
      %2018 = vmatpush2.msra.mxu0 0.0
      %2019 = vmatprep.subr.mxu0 0.0
      %2020 = vmatpush2.msra.mxu0 0.0
      %2021 = vmatprep.subr.mxu0 0.0
      %2022 = vmatpush2.msra.mxu0 0.0
      %2023 = vmatprep.subr.mxu0 0.0
      %2024 = vmatpush2.msra.mxu0 0.0
      %2025 = vmatprep.mubr.f32.mxu0 0.0
      %2026 = vmatmul.mubr.f32.gmra.mxu0 %v1913
      %v2027 = vpop.f32.mrf.mxu0
      %v2028 = vadd.f32 0.0, %v2027
      %v2029 = vpop.f32.mrf.mxu0
      %2030 = vmatprep.mubr.f32.mxu0 0.0
      %2031 = vmatmul.mubr.f32.gmra.mxu0 %v1914
      %v2032 = vpop.f32.mrf.mxu0
      %v2033 = vadd.f32 0.0, %v2032
      %v2034 = vpop.f32.mrf.mxu0
      %2035 = vmatprep.mubr.f32.mxu0 0.0
      %2036 = vmatmul.mubr.f32.gmra.mxu0 %v1915
      %v2037 = vpop.f32.mrf.mxu0
      %v2038 = vadd.f32 0.0, %v2037
      %v2039 = vpop.f32.mrf.mxu0
      %2040 = vmatprep.mubr.f32.mxu0 0.0
      %2041 = vmatmul.mubr.f32.gmra.mxu0 %v1916
      %v2042 = vpop.f32.mrf.mxu0
      %v2043 = vadd.f32 0.0, %v2042
      %v2044 = vpop.f32.mrf.mxu0
      %2045 = vmatprep.mubr.f32.mxu0 0.0
      %2046 = vmatmul.mubr.f32.gmra.mxu0 %v1917
      %v2047 = vpop.f32.mrf.mxu0
      %v2048 = vadd.f32 0.0, %v2047
      %v2049 = vpop.f32.mrf.mxu0
      %2050 = vmatprep.mubr.f32.mxu0 0.0
      %2051 = vmatmul.mubr.f32.gmra.mxu0 %v1918
      %v2052 = vpop.f32.mrf.mxu0
      %v2053 = vadd.f32 0.0, %v2052
      %v2054 = vpop.f32.mrf.mxu0
      %2055 = vmatprep.mubr.f32.mxu0 0.0
      %2056 = vmatmul.mubr.f32.gmra.mxu0 %v1919
      %v2057 = vpop.f32.mrf.mxu0
      %v2058 = vadd.f32 0.0, %v2057
      %v2059 = vpop.f32.mrf.mxu0
      %2060 = vmatprep.mubr.f32.mxu0 0.0
      %2061 = vmatmul.mubr.f32.gmra.mxu0 %v1920
      %v2062 = vpop.f32.mrf.mxu0
      %v2063 = vadd.f32 0.0, %v2062
      %v2064 = vpop.f32.mrf.mxu0
      %2065 = vmatprep.mubr.f32.mxu0 0.0
      %2066 = vmatmul.mubr.f32.gmra.mxu0 %v1921
      %v2067 = vpop.f32.mrf.mxu0
      %v2068 = vadd.f32 0.0, %v2067
      %v2069 = vpop.f32.mrf.mxu0
      %2070 = vmatprep.mubr.f32.mxu0 0.0
      %2071 = vmatmul.mubr.f32.gmra.mxu0 %v1922
      %v2072 = vpop.f32.mrf.mxu0
      %v2073 = vadd.f32 0.0, %v2072
      %v2074 = vpop.f32.mrf.mxu0
      %2075 = vmatprep.mubr.f32.mxu0 0.0
      %2076 = vmatmul.mubr.f32.gmra.mxu0 %v1923
      %v2077 = vpop.f32.mrf.mxu0
      %v2078 = vadd.f32 0.0, %v2077
      %v2079 = vpop.f32.mrf.mxu0
      %2080 = vmatprep.mubr.f32.mxu0 0.0
      %2081 = vmatmul.mubr.f32.gmra.mxu0 %v1924
      %v2082 = vpop.f32.mrf.mxu0
      %v2083 = vadd.f32 0.0, %v2082
      %v2084 = vpop.f32.mrf.mxu0
      %2085 = vmatprep.mubr.f32.mxu0 0.0
      %2086 = vmatmul.mubr.f32.gmra.mxu0 %v1925
      %v2087 = vpop.f32.mrf.mxu0
      %v2088 = vadd.f32 0.0, %v2087
      %v2089 = vpop.f32.mrf.mxu0
      %2090 = vmatprep.mubr.f32.mxu0 0.0
      %2091 = vmatmul.mubr.f32.gmra.mxu0 %v1926
      %v2092 = vpop.f32.mrf.mxu0
      %v2093 = vadd.f32 0.0, %v2092
      %v2094 = vpop.f32.mrf.mxu0
      %2095 = vmatprep.mubr.f32.mxu0 0.0
      %2096 = vmatmul.mubr.f32.gmra.mxu0 %v1927
      %v2097 = vpop.f32.mrf.mxu0
      %v2098 = vadd.f32 0.0, %v2097
      %v2099 = vpop.f32.mrf.mxu0
      %2100 = vmatprep.mubr.f32.mxu0 0.0
      %2101 = vmatmul.mubr.f32.gmra.mxu0 %v1928
      %v2102 = vpop.f32.mrf.mxu0
      %v2103 = vadd.f32 0.0, %v2102
      %v2104 = vpop.f32.mrf.mxu0
      %2105 = vmatprep.mubr.f32.mxu0 0.0
      %2106 = vmatmul.mubr.f32.gmra.mxu0 %v1929
      %v2107 = vpop.f32.mrf.mxu0
      %v2108 = vadd.f32 0.0, %v2107
      %v2109 = vpop.f32.mrf.mxu0
      %2110 = vmatprep.mubr.f32.mxu0 0.0
      %2111 = vmatmul.mubr.f32.gmra.mxu0 %v1930
      %v2112 = vpop.f32.mrf.mxu0
      %v2113 = vadd.f32 0.0, %v2112
      %v2114 = vpop.f32.mrf.mxu0
      %2115 = vmatprep.mubr.f32.mxu0 0.0
      %2116 = vmatmul.mubr.f32.gmra.mxu0 %v1931
      %v2117 = vpop.f32.mrf.mxu0
      %v2118 = vadd.f32 0.0, %v2117
      %v2119 = vpop.f32.mrf.mxu0
      %2120 = vmatprep.mubr.f32.mxu0 0.0
      %2121 = vmatmul.mubr.f32.gmra.mxu0 %v1932
      %v2122 = vpop.f32.mrf.mxu0
      %v2123 = vadd.f32 0.0, %v2122
      %v2124 = vpop.f32.mrf.mxu0
      %2125 = vmatprep.mubr.f32.mxu0 0.0
      %2126 = vmatmul.mubr.f32.gmra.mxu0 %v1933
      %v2127 = vpop.f32.mrf.mxu0
      %v2128 = vadd.f32 0.0, %v2127
      %v2129 = vpop.f32.mrf.mxu0
      %2130 = vmatprep.mubr.f32.mxu0 0.0
      %2131 = vmatmul.mubr.f32.gmra.mxu0 %v1934
      %v2132 = vpop.f32.mrf.mxu0
      %v2133 = vadd.f32 0.0, %v2132
      %v2134 = vpop.f32.mrf.mxu0
      %2135 = vmatprep.mubr.f32.mxu0 0.0
      %2136 = vmatmul.mubr.f32.gmra.mxu0 %v1935
      %v2137 = vpop.f32.mrf.mxu0
      %v2138 = vadd.f32 0.0, %v2137
      %v2139 = vpop.f32.mrf.mxu0
      %2140 = vmatprep.mubr.f32.mxu0 0.0
      %2141 = vmatmul.mubr.f32.gmra.mxu0 %v1936
      %v2142 = vpop.f32.mrf.mxu0
      %v2143 = vadd.f32 0.0, %v2142
      %v2144 = vpop.f32.mrf.mxu0
      %2145 = vmatprep.mubr.f32.mxu0 0.0
      %2146 = vmatmul.mubr.f32.gmra.mxu0 %v1937
      %v2147 = vpop.f32.mrf.mxu0
      %v2148 = vadd.f32 0.0, %v2147
      %v2149 = vpop.f32.mrf.mxu0
      %2150 = vmatprep.mubr.f32.mxu0 0.0
      %2151 = vmatmul.mubr.f32.gmra.mxu0 %v1938
      %v2152 = vpop.f32.mrf.mxu0
      %v2153 = vadd.f32 0.0, %v2152
      %v2154 = vpop.f32.mrf.mxu0
      %2155 = vmatprep.mubr.f32.mxu0 0.0
      %2156 = vmatmul.mubr.f32.gmra.mxu0 %v1939
      %v2157 = vpop.f32.mrf.mxu0
      %v2158 = vadd.f32 0.0, %v2157
      %v2159 = vpop.f32.mrf.mxu0
      %2160 = vmatprep.mubr.f32.mxu0 0.0
      %2161 = vmatmul.mubr.f32.gmra.mxu0 %v1940
      %v2162 = vpop.f32.mrf.mxu0
      %v2163 = vadd.f32 0.0, %v2162
      %v2164 = vpop.f32.mrf.mxu0
      %2165 = vmatprep.mubr.f32.mxu0 0.0
      %2166 = vmatmul.mubr.f32.gmra.mxu0 %v1941
      %v2167 = vpop.f32.mrf.mxu0
      %v2168 = vadd.f32 0.0, %v2167
      %v2169 = vpop.f32.mrf.mxu0
      %2170 = vmatprep.mubr.f32.mxu0 0.0
      %2171 = vmatmul.mubr.f32.gmra.mxu0 %v1942
      %v2172 = vpop.f32.mrf.mxu0
      %v2173 = vadd.f32 0.0, %v2172
      %v2174 = vpop.f32.mrf.mxu0
      %2175 = vmatprep.mubr.f32.mxu0 0.0
      %2176 = vmatmul.mubr.f32.gmra.mxu0 %v1943
      %v2177 = vpop.f32.mrf.mxu0
      %v2178 = vadd.f32 0.0, %v2177
      %v2179 = vpop.f32.mrf.mxu0
      %2180 = vmatprep.mubr.f32.mxu0 0.0
      %2181 = vmatmul.mubr.f32.gmra.mxu0 %v1944
      %v2182 = vpop.f32.mrf.mxu0
      %v2183 = vadd.f32 0.0, %v2182
      %v2184 = vpop.f32.mrf.mxu0
      %2185 = vdwg.mxu0
      %v2186 = vadd.f32 %v1881, %v2028
      %v2187 = vadd.f32 %v1882, %v2033
      %v2188 = vadd.f32 %v1883, %v2038
      %v2189 = vadd.f32 %v1884, %v2043
      %v2190 = vadd.f32 %v1885, %v2048
      %v2191 = vadd.f32 %v1886, %v2053
      %v2192 = vadd.f32 %v1887, %v2058
      %v2193 = vadd.f32 %v1888, %v2063
      %v2194 = vadd.f32 %v1889, %v2068
      %v2195 = vadd.f32 %v1890, %v2073
      %v2196 = vadd.f32 %v1891, %v2078
      %v2197 = vadd.f32 %v1892, %v2083
      %v2198 = vadd.f32 %v1893, %v2088
      %v2199 = vadd.f32 %v1894, %v2093
      %v2200 = vadd.f32 %v1895, %v2098
      %v2201 = vadd.f32 %v1896, %v2103
      %v2202 = vadd.f32 %v1897, %v2108
      %v2203 = vadd.f32 %v1898, %v2113
      %v2204 = vadd.f32 %v1899, %v2118
      %v2205 = vadd.f32 %v1900, %v2123
      %v2206 = vadd.f32 %v1901, %v2128
      %v2207 = vadd.f32 %v1902, %v2133
      %v2208 = vadd.f32 %v1903, %v2138
      %v2209 = vadd.f32 %v1904, %v2143
      %v2210 = vadd.f32 %v1905, %v2148
      %v2211 = vadd.f32 %v1906, %v2153
      %v2212 = vadd.f32 %v1907, %v2158
      %v2213 = vadd.f32 %v1908, %v2163
      %v2214 = vadd.f32 %v1909, %v2168
      %v2215 = vadd.f32 %v1910, %v2173
      %v2216 = vadd.f32 %v1911, %v2178
      %v2217 = vadd.f32 %v1912, %v2183
      %s2218 = scalar_lea.vmem [#allocation2], 48
      %v2219 = vld [vmem:[%s2218] sm:$0xff]
      %v2220 = vld [vmem:[%s2218 + $0x8] sm:$0xff]
      %v2221 = vld [vmem:[%s2218 + $0x18] sm:$0xff]
      %v2222 = vld [vmem:[%s2218 + $0x20] sm:$0xff]
      %v2223 = vld [vmem:[%s2218 + $0x30] sm:$0xff]
      %v2224 = vld [vmem:[%s2218 + $0x38] sm:$0xff]
      %v2225 = vld [vmem:[%s2218 + $0x48] sm:$0xff]
      %v2226 = vld [vmem:[%s2218 + $0x50] sm:$0xff]
      %v2227 = vld [vmem:[%s2218 + $0x60] sm:$0xff]
      %v2228 = vld [vmem:[%s2218 + $0x68] sm:$0xff]
      %v2229 = vld [vmem:[%s2218 + $0x78] sm:$0xff]
      %v2230 = vld [vmem:[%s2218 + $0x80] sm:$0xff]
      %v2231 = vld [vmem:[%s2218 + $0x90] sm:$0xff]
      %v2232 = vld [vmem:[%s2218 + $0x98] sm:$0xff]
      %v2233 = vld [vmem:[%s2218 + $0xa8] sm:$0xff]
      %v2234 = vld [vmem:[%s2218 + $0xb0] sm:$0xff]
      %v2235 = vld [vmem:[%s2218 + $0xc0] sm:$0xff]
      %v2236 = vld [vmem:[%s2218 + $0xc8] sm:$0xff]
      %v2237 = vld [vmem:[%s2218 + $0xd8] sm:$0xff]
      %v2238 = vld [vmem:[%s2218 + $0xe0] sm:$0xff]
      %v2239 = vld [vmem:[%s2218 + $0xf0] sm:$0xff]
      %v2240 = vld [vmem:[%s2218 + $0xf8] sm:$0xff]
      %v2241 = vld [vmem:[%s2218 + $0x108] sm:$0xff]
      %v2242 = vld [vmem:[%s2218 + $0x110] sm:$0xff]
      %v2243 = vld [vmem:[%s2218 + $0x120] sm:$0xff]
      %v2244 = vld [vmem:[%s2218 + $0x128] sm:$0xff]
      %v2245 = vld [vmem:[%s2218 + $0x138] sm:$0xff]
      %v2246 = vld [vmem:[%s2218 + $0x140] sm:$0xff]
      %v2247 = vld [vmem:[%s2218 + $0x150] sm:$0xff]
      %v2248 = vld [vmem:[%s2218 + $0x158] sm:$0xff]
      %v2249 = vld [vmem:[%s2218 + $0x168] sm:$0xff]
      %v2250 = vld [vmem:[%s2218 + $0x170] sm:$0xff]
      %v2251 = vld [vmem:[%s3 + $0x300] sm:$0xff]
      %v2252 = vld [vmem:[%s3 + $0x308] sm:$0xff]
      %v2253 = vld [vmem:[%s3 + $0x310] sm:$0xff]
      %v2254 = vld [vmem:[%s3 + $0x318] sm:$0xff]
      %v2255 = vld [vmem:[%s3 + $0x320] sm:$0xff]
      %v2256 = vld [vmem:[%s3 + $0x328] sm:$0xff]
      %v2257 = vld [vmem:[%s3 + $0x330] sm:$0xff]
      %v2258 = vld [vmem:[%s3 + $0x338] sm:$0xff]
      %v2259 = vld [vmem:[%s3 + $0x340] sm:$0xff]
      %v2260 = vld [vmem:[%s3 + $0x348] sm:$0xff]
      %v2261 = vld [vmem:[%s3 + $0x350] sm:$0xff]
      %v2262 = vld [vmem:[%s3 + $0x358] sm:$0xff]
      %v2263 = vld [vmem:[%s3 + $0x360] sm:$0xff]
      %v2264 = vld [vmem:[%s3 + $0x368] sm:$0xff]
      %v2265 = vld [vmem:[%s3 + $0x370] sm:$0xff]
      %v2266 = vld [vmem:[%s3 + $0x378] sm:$0xff]
      %2267 = vmatprep.subr.mxu0 0.0
      %2268 = vmatpush1.msra.mxu0 %v2266
      %2269 = vmatprep.subr.mxu0 0.0
      %2270 = vmatpush1.msra.mxu0 %v2265
      %2271 = vmatprep.subr.mxu0 0.0
      %2272 = vmatpush1.msra.mxu0 %v2264
      %2273 = vmatprep.subr.mxu0 0.0
      %2274 = vmatpush1.msra.mxu0 %v2263
      %2275 = vmatprep.subr.mxu0 0.0
      %2276 = vmatpush1.msra.mxu0 %v2262
      %2277 = vmatprep.subr.mxu0 0.0
      %2278 = vmatpush1.msra.mxu0 %v2261
      %2279 = vmatprep.subr.mxu0 0.0
      %2280 = vmatpush1.msra.mxu0 %v2260
      %2281 = vmatprep.subr.mxu0 0.0
      %2282 = vmatpush1.msra.mxu0 %v2259
      %2283 = vmatprep.subr.mxu0 0.0
      %2284 = vmatpush1.msra.mxu0 %v2258
      %2285 = vmatprep.subr.mxu0 0.0
      %2286 = vmatpush1.msra.mxu0 %v2257
      %2287 = vmatprep.subr.mxu0 0.0
      %2288 = vmatpush1.msra.mxu0 %v2256
      %2289 = vmatprep.subr.mxu0 0.0
      %2290 = vmatpush1.msra.mxu0 %v2255
      %2291 = vmatprep.subr.mxu0 0.0
      %2292 = vmatpush1.msra.mxu0 %v2254
      %2293 = vmatprep.subr.mxu0 0.0
      %2294 = vmatpush1.msra.mxu0 %v2253
      %2295 = vmatprep.subr.mxu0 0.0
      %2296 = vmatpush1.msra.mxu0 %v2252
      %2297 = vmatprep.subr.mxu0 0.0
      %2298 = vmatpush1.msra.mxu0 %v2251
      %2299 = vmatprep.subr.mxu0 0.0
      %2300 = vmatpush2.msra.mxu0 0.0
      %2301 = vmatprep.subr.mxu0 0.0
      %2302 = vmatpush2.msra.mxu0 0.0
      %2303 = vmatprep.subr.mxu0 0.0
      %2304 = vmatpush2.msra.mxu0 0.0
      %2305 = vmatprep.subr.mxu0 0.0
      %2306 = vmatpush2.msra.mxu0 0.0
      %2307 = vmatprep.subr.mxu0 0.0
      %2308 = vmatpush2.msra.mxu0 0.0
      %2309 = vmatprep.subr.mxu0 0.0
      %2310 = vmatpush2.msra.mxu0 0.0
      %2311 = vmatprep.subr.mxu0 0.0
      %2312 = vmatpush2.msra.mxu0 0.0
      %2313 = vmatprep.subr.mxu0 0.0
      %2314 = vmatpush2.msra.mxu0 0.0
      %2315 = vmatprep.subr.mxu0 0.0
      %2316 = vmatpush2.msra.mxu0 0.0
      %2317 = vmatprep.subr.mxu0 0.0
      %2318 = vmatpush2.msra.mxu0 0.0
      %2319 = vmatprep.subr.mxu0 0.0
      %2320 = vmatpush2.msra.mxu0 0.0
      %2321 = vmatprep.subr.mxu0 0.0
      %2322 = vmatpush2.msra.mxu0 0.0
      %2323 = vmatprep.subr.mxu0 0.0
      %2324 = vmatpush2.msra.mxu0 0.0
      %2325 = vmatprep.subr.mxu0 0.0
      %2326 = vmatpush2.msra.mxu0 0.0
      %2327 = vmatprep.subr.mxu0 0.0
      %2328 = vmatpush2.msra.mxu0 0.0
      %2329 = vmatprep.subr.mxu0 0.0
      %2330 = vmatpush2.msra.mxu0 0.0
      %2331 = vmatprep.mubr.f32.mxu0 0.0
      %2332 = vmatmul.mubr.f32.gmra.mxu0 %v2219
      %v2333 = vpop.f32.mrf.mxu0
      %v2334 = vadd.f32 0.0, %v2333
      %v2335 = vpop.f32.mrf.mxu0
      %2336 = vmatprep.mubr.f32.mxu0 0.0
      %2337 = vmatmul.mubr.f32.gmra.mxu0 %v2220
      %v2338 = vpop.f32.mrf.mxu0
      %v2339 = vadd.f32 0.0, %v2338
      %v2340 = vpop.f32.mrf.mxu0
      %2341 = vmatprep.mubr.f32.mxu0 0.0
      %2342 = vmatmul.mubr.f32.gmra.mxu0 %v2221
      %v2343 = vpop.f32.mrf.mxu0
      %v2344 = vadd.f32 0.0, %v2343
      %v2345 = vpop.f32.mrf.mxu0
      %2346 = vmatprep.mubr.f32.mxu0 0.0
      %2347 = vmatmul.mubr.f32.gmra.mxu0 %v2222
      %v2348 = vpop.f32.mrf.mxu0
      %v2349 = vadd.f32 0.0, %v2348
      %v2350 = vpop.f32.mrf.mxu0
      %2351 = vmatprep.mubr.f32.mxu0 0.0
      %2352 = vmatmul.mubr.f32.gmra.mxu0 %v2223
      %v2353 = vpop.f32.mrf.mxu0
      %v2354 = vadd.f32 0.0, %v2353
      %v2355 = vpop.f32.mrf.mxu0
      %2356 = vmatprep.mubr.f32.mxu0 0.0
      %2357 = vmatmul.mubr.f32.gmra.mxu0 %v2224
      %v2358 = vpop.f32.mrf.mxu0
      %v2359 = vadd.f32 0.0, %v2358
      %v2360 = vpop.f32.mrf.mxu0
      %2361 = vmatprep.mubr.f32.mxu0 0.0
      %2362 = vmatmul.mubr.f32.gmra.mxu0 %v2225
      %v2363 = vpop.f32.mrf.mxu0
      %v2364 = vadd.f32 0.0, %v2363
      %v2365 = vpop.f32.mrf.mxu0
      %2366 = vmatprep.mubr.f32.mxu0 0.0
      %2367 = vmatmul.mubr.f32.gmra.mxu0 %v2226
      %v2368 = vpop.f32.mrf.mxu0
      %v2369 = vadd.f32 0.0, %v2368
      %v2370 = vpop.f32.mrf.mxu0
      %2371 = vmatprep.mubr.f32.mxu0 0.0
      %2372 = vmatmul.mubr.f32.gmra.mxu0 %v2227
      %v2373 = vpop.f32.mrf.mxu0
      %v2374 = vadd.f32 0.0, %v2373
      %v2375 = vpop.f32.mrf.mxu0
      %2376 = vmatprep.mubr.f32.mxu0 0.0
      %2377 = vmatmul.mubr.f32.gmra.mxu0 %v2228
      %v2378 = vpop.f32.mrf.mxu0
      %v2379 = vadd.f32 0.0, %v2378
      %v2380 = vpop.f32.mrf.mxu0
      %2381 = vmatprep.mubr.f32.mxu0 0.0
      %2382 = vmatmul.mubr.f32.gmra.mxu0 %v2229
      %v2383 = vpop.f32.mrf.mxu0
      %v2384 = vadd.f32 0.0, %v2383
      %v2385 = vpop.f32.mrf.mxu0
      %2386 = vmatprep.mubr.f32.mxu0 0.0
      %2387 = vmatmul.mubr.f32.gmra.mxu0 %v2230
      %v2388 = vpop.f32.mrf.mxu0
      %v2389 = vadd.f32 0.0, %v2388
      %v2390 = vpop.f32.mrf.mxu0
      %2391 = vmatprep.mubr.f32.mxu0 0.0
      %2392 = vmatmul.mubr.f32.gmra.mxu0 %v2231
      %v2393 = vpop.f32.mrf.mxu0
      %v2394 = vadd.f32 0.0, %v2393
      %v2395 = vpop.f32.mrf.mxu0
      %2396 = vmatprep.mubr.f32.mxu0 0.0
      %2397 = vmatmul.mubr.f32.gmra.mxu0 %v2232
      %v2398 = vpop.f32.mrf.mxu0
      %v2399 = vadd.f32 0.0, %v2398
      %v2400 = vpop.f32.mrf.mxu0
      %2401 = vmatprep.mubr.f32.mxu0 0.0
      %2402 = vmatmul.mubr.f32.gmra.mxu0 %v2233
      %v2403 = vpop.f32.mrf.mxu0
      %v2404 = vadd.f32 0.0, %v2403
      %v2405 = vpop.f32.mrf.mxu0
      %2406 = vmatprep.mubr.f32.mxu0 0.0
      %2407 = vmatmul.mubr.f32.gmra.mxu0 %v2234
      %v2408 = vpop.f32.mrf.mxu0
      %v2409 = vadd.f32 0.0, %v2408
      %v2410 = vpop.f32.mrf.mxu0
      %2411 = vmatprep.mubr.f32.mxu0 0.0
      %2412 = vmatmul.mubr.f32.gmra.mxu0 %v2235
      %v2413 = vpop.f32.mrf.mxu0
      %v2414 = vadd.f32 0.0, %v2413
      %v2415 = vpop.f32.mrf.mxu0
      %2416 = vmatprep.mubr.f32.mxu0 0.0
      %2417 = vmatmul.mubr.f32.gmra.mxu0 %v2236
      %v2418 = vpop.f32.mrf.mxu0
      %v2419 = vadd.f32 0.0, %v2418
      %v2420 = vpop.f32.mrf.mxu0
      %2421 = vmatprep.mubr.f32.mxu0 0.0
      %2422 = vmatmul.mubr.f32.gmra.mxu0 %v2237
      %v2423 = vpop.f32.mrf.mxu0
      %v2424 = vadd.f32 0.0, %v2423
      %v2425 = vpop.f32.mrf.mxu0
      %2426 = vmatprep.mubr.f32.mxu0 0.0
      %2427 = vmatmul.mubr.f32.gmra.mxu0 %v2238
      %v2428 = vpop.f32.mrf.mxu0
      %v2429 = vadd.f32 0.0, %v2428
      %v2430 = vpop.f32.mrf.mxu0
      %2431 = vmatprep.mubr.f32.mxu0 0.0
      %2432 = vmatmul.mubr.f32.gmra.mxu0 %v2239
      %v2433 = vpop.f32.mrf.mxu0
      %v2434 = vadd.f32 0.0, %v2433
      %v2435 = vpop.f32.mrf.mxu0
      %2436 = vmatprep.mubr.f32.mxu0 0.0
      %2437 = vmatmul.mubr.f32.gmra.mxu0 %v2240
      %v2438 = vpop.f32.mrf.mxu0
      %v2439 = vadd.f32 0.0, %v2438
      %v2440 = vpop.f32.mrf.mxu0
      %2441 = vmatprep.mubr.f32.mxu0 0.0
      %2442 = vmatmul.mubr.f32.gmra.mxu0 %v2241
      %v2443 = vpop.f32.mrf.mxu0
      %v2444 = vadd.f32 0.0, %v2443
      %v2445 = vpop.f32.mrf.mxu0
      %2446 = vmatprep.mubr.f32.mxu0 0.0
      %2447 = vmatmul.mubr.f32.gmra.mxu0 %v2242
      %v2448 = vpop.f32.mrf.mxu0
      %v2449 = vadd.f32 0.0, %v2448
      %v2450 = vpop.f32.mrf.mxu0
      %2451 = vmatprep.mubr.f32.mxu0 0.0
      %2452 = vmatmul.mubr.f32.gmra.mxu0 %v2243
      %v2453 = vpop.f32.mrf.mxu0
      %v2454 = vadd.f32 0.0, %v2453
      %v2455 = vpop.f32.mrf.mxu0
      %2456 = vmatprep.mubr.f32.mxu0 0.0
      %2457 = vmatmul.mubr.f32.gmra.mxu0 %v2244
      %v2458 = vpop.f32.mrf.mxu0
      %v2459 = vadd.f32 0.0, %v2458
      %v2460 = vpop.f32.mrf.mxu0
      %2461 = vmatprep.mubr.f32.mxu0 0.0
      %2462 = vmatmul.mubr.f32.gmra.mxu0 %v2245
      %v2463 = vpop.f32.mrf.mxu0
      %v2464 = vadd.f32 0.0, %v2463
      %v2465 = vpop.f32.mrf.mxu0
      %2466 = vmatprep.mubr.f32.mxu0 0.0
      %2467 = vmatmul.mubr.f32.gmra.mxu0 %v2246
      %v2468 = vpop.f32.mrf.mxu0
      %v2469 = vadd.f32 0.0, %v2468
      %v2470 = vpop.f32.mrf.mxu0
      %2471 = vmatprep.mubr.f32.mxu0 0.0
      %2472 = vmatmul.mubr.f32.gmra.mxu0 %v2247
      %v2473 = vpop.f32.mrf.mxu0
      %v2474 = vadd.f32 0.0, %v2473
      %v2475 = vpop.f32.mrf.mxu0
      %2476 = vmatprep.mubr.f32.mxu0 0.0
      %2477 = vmatmul.mubr.f32.gmra.mxu0 %v2248
      %v2478 = vpop.f32.mrf.mxu0
      %v2479 = vadd.f32 0.0, %v2478
      %v2480 = vpop.f32.mrf.mxu0
      %2481 = vmatprep.mubr.f32.mxu0 0.0
      %2482 = vmatmul.mubr.f32.gmra.mxu0 %v2249
      %v2483 = vpop.f32.mrf.mxu0
      %v2484 = vadd.f32 0.0, %v2483
      %v2485 = vpop.f32.mrf.mxu0
      %2486 = vmatprep.mubr.f32.mxu0 0.0
      %2487 = vmatmul.mubr.f32.gmra.mxu0 %v2250
      %v2488 = vpop.f32.mrf.mxu0
      %v2489 = vadd.f32 0.0, %v2488
      %v2490 = vpop.f32.mrf.mxu0
      %2491 = vdwg.mxu0
      %v2492 = vadd.f32 %v2186, %v2334
      %v2493 = vadd.f32 %v2187, %v2339
      %v2494 = vadd.f32 %v2188, %v2344
      %v2495 = vadd.f32 %v2189, %v2349
      %v2496 = vadd.f32 %v2190, %v2354
      %v2497 = vadd.f32 %v2191, %v2359
      %v2498 = vadd.f32 %v2192, %v2364
      %v2499 = vadd.f32 %v2193, %v2369
      %v2500 = vadd.f32 %v2194, %v2374
      %v2501 = vadd.f32 %v2195, %v2379
      %v2502 = vadd.f32 %v2196, %v2384
      %v2503 = vadd.f32 %v2197, %v2389
      %v2504 = vadd.f32 %v2198, %v2394
      %v2505 = vadd.f32 %v2199, %v2399
      %v2506 = vadd.f32 %v2200, %v2404
      %v2507 = vadd.f32 %v2201, %v2409
      %v2508 = vadd.f32 %v2202, %v2414
      %v2509 = vadd.f32 %v2203, %v2419
      %v2510 = vadd.f32 %v2204, %v2424
      %v2511 = vadd.f32 %v2205, %v2429
      %v2512 = vadd.f32 %v2206, %v2434
      %v2513 = vadd.f32 %v2207, %v2439
      %v2514 = vadd.f32 %v2208, %v2444
      %v2515 = vadd.f32 %v2209, %v2449
      %v2516 = vadd.f32 %v2210, %v2454
      %v2517 = vadd.f32 %v2211, %v2459
      %v2518 = vadd.f32 %v2212, %v2464
      %v2519 = vadd.f32 %v2213, %v2469
      %v2520 = vadd.f32 %v2214, %v2474
      %v2521 = vadd.f32 %v2215, %v2479
      %v2522 = vadd.f32 %v2216, %v2484
      %v2523 = vadd.f32 %v2217, %v2489
      %v2524 = vld [vmem:[%s2218 + $0x1] sm:$0xff]
      %v2525 = vld [vmem:[%s2218 + $0x9] sm:$0xff]
      %v2526 = vld [vmem:[%s2218 + $0x19] sm:$0xff]
      %v2527 = vld [vmem:[%s2218 + $0x21] sm:$0xff]
      %v2528 = vld [vmem:[%s2218 + $0x31] sm:$0xff]
      %v2529 = vld [vmem:[%s2218 + $0x39] sm:$0xff]
      %v2530 = vld [vmem:[%s2218 + $0x49] sm:$0xff]
      %v2531 = vld [vmem:[%s2218 + $0x51] sm:$0xff]
      %v2532 = vld [vmem:[%s2218 + $0x61] sm:$0xff]
      %v2533 = vld [vmem:[%s2218 + $0x69] sm:$0xff]
      %v2534 = vld [vmem:[%s2218 + $0x79] sm:$0xff]
      %v2535 = vld [vmem:[%s2218 + $0x81] sm:$0xff]
      %v2536 = vld [vmem:[%s2218 + $0x91] sm:$0xff]
      %v2537 = vld [vmem:[%s2218 + $0x99] sm:$0xff]
      %v2538 = vld [vmem:[%s2218 + $0xa9] sm:$0xff]
      %v2539 = vld [vmem:[%s2218 + $0xb1] sm:$0xff]
      %v2540 = vld [vmem:[%s2218 + $0xc1] sm:$0xff]
      %v2541 = vld [vmem:[%s2218 + $0xc9] sm:$0xff]
      %v2542 = vld [vmem:[%s2218 + $0xd9] sm:$0xff]
      %v2543 = vld [vmem:[%s2218 + $0xe1] sm:$0xff]
      %v2544 = vld [vmem:[%s2218 + $0xf1] sm:$0xff]
      %v2545 = vld [vmem:[%s2218 + $0xf9] sm:$0xff]
      %v2546 = vld [vmem:[%s2218 + $0x109] sm:$0xff]
      %v2547 = vld [vmem:[%s2218 + $0x111] sm:$0xff]
      %v2548 = vld [vmem:[%s2218 + $0x121] sm:$0xff]
      %v2549 = vld [vmem:[%s2218 + $0x129] sm:$0xff]
      %v2550 = vld [vmem:[%s2218 + $0x139] sm:$0xff]
      %v2551 = vld [vmem:[%s2218 + $0x141] sm:$0xff]
      %v2552 = vld [vmem:[%s2218 + $0x151] sm:$0xff]
      %v2553 = vld [vmem:[%s2218 + $0x159] sm:$0xff]
      %v2554 = vld [vmem:[%s2218 + $0x169] sm:$0xff]
      %v2555 = vld [vmem:[%s2218 + $0x171] sm:$0xff]
      %v2556 = vld [vmem:[%s3 + $0x380] sm:$0xff]
      %v2557 = vld [vmem:[%s3 + $0x388] sm:$0xff]
      %v2558 = vld [vmem:[%s3 + $0x390] sm:$0xff]
      %v2559 = vld [vmem:[%s3 + $0x398] sm:$0xff]
      %v2560 = vld [vmem:[%s3 + $0x3a0] sm:$0xff]
      %v2561 = vld [vmem:[%s3 + $0x3a8] sm:$0xff]
      %v2562 = vld [vmem:[%s3 + $0x3b0] sm:$0xff]
      %v2563 = vld [vmem:[%s3 + $0x3b8] sm:$0xff]
      %v2564 = vld [vmem:[%s3 + $0x3c0] sm:$0xff]
      %v2565 = vld [vmem:[%s3 + $0x3c8] sm:$0xff]
      %v2566 = vld [vmem:[%s3 + $0x3d0] sm:$0xff]
      %v2567 = vld [vmem:[%s3 + $0x3d8] sm:$0xff]
      %v2568 = vld [vmem:[%s3 + $0x3e0] sm:$0xff]
      %v2569 = vld [vmem:[%s3 + $0x3e8] sm:$0xff]
      %v2570 = vld [vmem:[%s3 + $0x3f0] sm:$0xff]
      %v2571 = vld [vmem:[%s3 + $0x3f8] sm:$0xff]
      %2572 = vmatprep.subr.mxu0 0.0
      %2573 = vmatpush1.msra.mxu0 %v2571
      %2574 = vmatprep.subr.mxu0 0.0
      %2575 = vmatpush1.msra.mxu0 %v2570
      %2576 = vmatprep.subr.mxu0 0.0
      %2577 = vmatpush1.msra.mxu0 %v2569
      %2578 = vmatprep.subr.mxu0 0.0
      %2579 = vmatpush1.msra.mxu0 %v2568
      %2580 = vmatprep.subr.mxu0 0.0
      %2581 = vmatpush1.msra.mxu0 %v2567
      %2582 = vmatprep.subr.mxu0 0.0
      %2583 = vmatpush1.msra.mxu0 %v2566
      %2584 = vmatprep.subr.mxu0 0.0
      %2585 = vmatpush1.msra.mxu0 %v2565
      %2586 = vmatprep.subr.mxu0 0.0
      %2587 = vmatpush1.msra.mxu0 %v2564
      %2588 = vmatprep.subr.mxu0 0.0
      %2589 = vmatpush1.msra.mxu0 %v2563
      %2590 = vmatprep.subr.mxu0 0.0
      %2591 = vmatpush1.msra.mxu0 %v2562
      %2592 = vmatprep.subr.mxu0 0.0
      %2593 = vmatpush1.msra.mxu0 %v2561
      %2594 = vmatprep.subr.mxu0 0.0
      %2595 = vmatpush1.msra.mxu0 %v2560
      %2596 = vmatprep.subr.mxu0 0.0
      %2597 = vmatpush1.msra.mxu0 %v2559
      %2598 = vmatprep.subr.mxu0 0.0
      %2599 = vmatpush1.msra.mxu0 %v2558
      %2600 = vmatprep.subr.mxu0 0.0
      %2601 = vmatpush1.msra.mxu0 %v2557
      %2602 = vmatprep.subr.mxu0 0.0
      %2603 = vmatpush1.msra.mxu0 %v2556
      %2604 = vmatprep.subr.mxu0 0.0
      %2605 = vmatpush2.msra.mxu0 0.0
      %2606 = vmatprep.subr.mxu0 0.0
      %2607 = vmatpush2.msra.mxu0 0.0
      %2608 = vmatprep.subr.mxu0 0.0
      %2609 = vmatpush2.msra.mxu0 0.0
      %2610 = vmatprep.subr.mxu0 0.0
      %2611 = vmatpush2.msra.mxu0 0.0
      %2612 = vmatprep.subr.mxu0 0.0
      %2613 = vmatpush2.msra.mxu0 0.0
      %2614 = vmatprep.subr.mxu0 0.0
      %2615 = vmatpush2.msra.mxu0 0.0
      %2616 = vmatprep.subr.mxu0 0.0
      %2617 = vmatpush2.msra.mxu0 0.0
      %2618 = vmatprep.subr.mxu0 0.0
      %2619 = vmatpush2.msra.mxu0 0.0
      %2620 = vmatprep.subr.mxu0 0.0
      %2621 = vmatpush2.msra.mxu0 0.0
      %2622 = vmatprep.subr.mxu0 0.0
      %2623 = vmatpush2.msra.mxu0 0.0
      %2624 = vmatprep.subr.mxu0 0.0
      %2625 = vmatpush2.msra.mxu0 0.0
      %2626 = vmatprep.subr.mxu0 0.0
      %2627 = vmatpush2.msra.mxu0 0.0
      %2628 = vmatprep.subr.mxu0 0.0
      %2629 = vmatpush2.msra.mxu0 0.0
      %2630 = vmatprep.subr.mxu0 0.0
      %2631 = vmatpush2.msra.mxu0 0.0
      %2632 = vmatprep.subr.mxu0 0.0
      %2633 = vmatpush2.msra.mxu0 0.0
      %2634 = vmatprep.subr.mxu0 0.0
      %2635 = vmatpush2.msra.mxu0 0.0
      %2636 = vmatprep.mubr.f32.mxu0 0.0
      %2637 = vmatmul.mubr.f32.gmra.mxu0 %v2524
      %v2638 = vpop.f32.mrf.mxu0
      %v2639 = vadd.f32 0.0, %v2638
      %v2640 = vpop.f32.mrf.mxu0
      %2641 = vmatprep.mubr.f32.mxu0 0.0
      %2642 = vmatmul.mubr.f32.gmra.mxu0 %v2525
      %v2643 = vpop.f32.mrf.mxu0
      %v2644 = vadd.f32 0.0, %v2643
      %v2645 = vpop.f32.mrf.mxu0
      %2646 = vmatprep.mubr.f32.mxu0 0.0
      %2647 = vmatmul.mubr.f32.gmra.mxu0 %v2526
      %v2648 = vpop.f32.mrf.mxu0
      %v2649 = vadd.f32 0.0, %v2648
      %v2650 = vpop.f32.mrf.mxu0
      %2651 = vmatprep.mubr.f32.mxu0 0.0
      %2652 = vmatmul.mubr.f32.gmra.mxu0 %v2527
      %v2653 = vpop.f32.mrf.mxu0
      %v2654 = vadd.f32 0.0, %v2653
      %v2655 = vpop.f32.mrf.mxu0
      %2656 = vmatprep.mubr.f32.mxu0 0.0
      %2657 = vmatmul.mubr.f32.gmra.mxu0 %v2528
      %v2658 = vpop.f32.mrf.mxu0
      %v2659 = vadd.f32 0.0, %v2658
      %v2660 = vpop.f32.mrf.mxu0
      %2661 = vmatprep.mubr.f32.mxu0 0.0
      %2662 = vmatmul.mubr.f32.gmra.mxu0 %v2529
      %v2663 = vpop.f32.mrf.mxu0
      %v2664 = vadd.f32 0.0, %v2663
      %v2665 = vpop.f32.mrf.mxu0
      %2666 = vmatprep.mubr.f32.mxu0 0.0
      %2667 = vmatmul.mubr.f32.gmra.mxu0 %v2530
      %v2668 = vpop.f32.mrf.mxu0
      %v2669 = vadd.f32 0.0, %v2668
      %v2670 = vpop.f32.mrf.mxu0
      %2671 = vmatprep.mubr.f32.mxu0 0.0
      %2672 = vmatmul.mubr.f32.gmra.mxu0 %v2531
      %v2673 = vpop.f32.mrf.mxu0
      %v2674 = vadd.f32 0.0, %v2673
      %v2675 = vpop.f32.mrf.mxu0
      %2676 = vmatprep.mubr.f32.mxu0 0.0
      %2677 = vmatmul.mubr.f32.gmra.mxu0 %v2532
      %v2678 = vpop.f32.mrf.mxu0
      %v2679 = vadd.f32 0.0, %v2678
      %v2680 = vpop.f32.mrf.mxu0
      %2681 = vmatprep.mubr.f32.mxu0 0.0
      %2682 = vmatmul.mubr.f32.gmra.mxu0 %v2533
      %v2683 = vpop.f32.mrf.mxu0
      %v2684 = vadd.f32 0.0, %v2683
      %v2685 = vpop.f32.mrf.mxu0
      %2686 = vmatprep.mubr.f32.mxu0 0.0
      %2687 = vmatmul.mubr.f32.gmra.mxu0 %v2534
      %v2688 = vpop.f32.mrf.mxu0
      %v2689 = vadd.f32 0.0, %v2688
      %v2690 = vpop.f32.mrf.mxu0
      %2691 = vmatprep.mubr.f32.mxu0 0.0
      %2692 = vmatmul.mubr.f32.gmra.mxu0 %v2535
      %v2693 = vpop.f32.mrf.mxu0
      %v2694 = vadd.f32 0.0, %v2693
      %v2695 = vpop.f32.mrf.mxu0
      %2696 = vmatprep.mubr.f32.mxu0 0.0
      %2697 = vmatmul.mubr.f32.gmra.mxu0 %v2536
      %v2698 = vpop.f32.mrf.mxu0
      %v2699 = vadd.f32 0.0, %v2698
      %v2700 = vpop.f32.mrf.mxu0
      %2701 = vmatprep.mubr.f32.mxu0 0.0
      %2702 = vmatmul.mubr.f32.gmra.mxu0 %v2537
      %v2703 = vpop.f32.mrf.mxu0
      %v2704 = vadd.f32 0.0, %v2703
      %v2705 = vpop.f32.mrf.mxu0
      %2706 = vmatprep.mubr.f32.mxu0 0.0
      %2707 = vmatmul.mubr.f32.gmra.mxu0 %v2538
      %v2708 = vpop.f32.mrf.mxu0
      %v2709 = vadd.f32 0.0, %v2708
      %v2710 = vpop.f32.mrf.mxu0
      %2711 = vmatprep.mubr.f32.mxu0 0.0
      %2712 = vmatmul.mubr.f32.gmra.mxu0 %v2539
      %v2713 = vpop.f32.mrf.mxu0
      %v2714 = vadd.f32 0.0, %v2713
      %v2715 = vpop.f32.mrf.mxu0
      %2716 = vmatprep.mubr.f32.mxu0 0.0
      %2717 = vmatmul.mubr.f32.gmra.mxu0 %v2540
      %v2718 = vpop.f32.mrf.mxu0
      %v2719 = vadd.f32 0.0, %v2718
      %v2720 = vpop.f32.mrf.mxu0
      %2721 = vmatprep.mubr.f32.mxu0 0.0
      %2722 = vmatmul.mubr.f32.gmra.mxu0 %v2541
      %v2723 = vpop.f32.mrf.mxu0
      %v2724 = vadd.f32 0.0, %v2723
      %v2725 = vpop.f32.mrf.mxu0
      %2726 = vmatprep.mubr.f32.mxu0 0.0
      %2727 = vmatmul.mubr.f32.gmra.mxu0 %v2542
      %v2728 = vpop.f32.mrf.mxu0
      %v2729 = vadd.f32 0.0, %v2728
      %v2730 = vpop.f32.mrf.mxu0
      %2731 = vmatprep.mubr.f32.mxu0 0.0
      %2732 = vmatmul.mubr.f32.gmra.mxu0 %v2543
      %v2733 = vpop.f32.mrf.mxu0
      %v2734 = vadd.f32 0.0, %v2733
      %v2735 = vpop.f32.mrf.mxu0
      %2736 = vmatprep.mubr.f32.mxu0 0.0
      %2737 = vmatmul.mubr.f32.gmra.mxu0 %v2544
      %v2738 = vpop.f32.mrf.mxu0
      %v2739 = vadd.f32 0.0, %v2738
      %v2740 = vpop.f32.mrf.mxu0
      %2741 = vmatprep.mubr.f32.mxu0 0.0
      %2742 = vmatmul.mubr.f32.gmra.mxu0 %v2545
      %v2743 = vpop.f32.mrf.mxu0
      %v2744 = vadd.f32 0.0, %v2743
      %v2745 = vpop.f32.mrf.mxu0
      %2746 = vmatprep.mubr.f32.mxu0 0.0
      %2747 = vmatmul.mubr.f32.gmra.mxu0 %v2546
      %v2748 = vpop.f32.mrf.mxu0
      %v2749 = vadd.f32 0.0, %v2748
      %v2750 = vpop.f32.mrf.mxu0
      %2751 = vmatprep.mubr.f32.mxu0 0.0
      %2752 = vmatmul.mubr.f32.gmra.mxu0 %v2547
      %v2753 = vpop.f32.mrf.mxu0
      %v2754 = vadd.f32 0.0, %v2753
      %v2755 = vpop.f32.mrf.mxu0
      %2756 = vmatprep.mubr.f32.mxu0 0.0
      %2757 = vmatmul.mubr.f32.gmra.mxu0 %v2548
      %v2758 = vpop.f32.mrf.mxu0
      %v2759 = vadd.f32 0.0, %v2758
      %v2760 = vpop.f32.mrf.mxu0
      %2761 = vmatprep.mubr.f32.mxu0 0.0
      %2762 = vmatmul.mubr.f32.gmra.mxu0 %v2549
      %v2763 = vpop.f32.mrf.mxu0
      %v2764 = vadd.f32 0.0, %v2763
      %v2765 = vpop.f32.mrf.mxu0
      %2766 = vmatprep.mubr.f32.mxu0 0.0
      %2767 = vmatmul.mubr.f32.gmra.mxu0 %v2550
      %v2768 = vpop.f32.mrf.mxu0
      %v2769 = vadd.f32 0.0, %v2768
      %v2770 = vpop.f32.mrf.mxu0
      %2771 = vmatprep.mubr.f32.mxu0 0.0
      %2772 = vmatmul.mubr.f32.gmra.mxu0 %v2551
      %v2773 = vpop.f32.mrf.mxu0
      %v2774 = vadd.f32 0.0, %v2773
      %v2775 = vpop.f32.mrf.mxu0
      %2776 = vmatprep.mubr.f32.mxu0 0.0
      %2777 = vmatmul.mubr.f32.gmra.mxu0 %v2552
      %v2778 = vpop.f32.mrf.mxu0
      %v2779 = vadd.f32 0.0, %v2778
      %v2780 = vpop.f32.mrf.mxu0
      %2781 = vmatprep.mubr.f32.mxu0 0.0
      %2782 = vmatmul.mubr.f32.gmra.mxu0 %v2553
      %v2783 = vpop.f32.mrf.mxu0
      %v2784 = vadd.f32 0.0, %v2783
      %v2785 = vpop.f32.mrf.mxu0
      %2786 = vmatprep.mubr.f32.mxu0 0.0
      %2787 = vmatmul.mubr.f32.gmra.mxu0 %v2554
      %v2788 = vpop.f32.mrf.mxu0
      %v2789 = vadd.f32 0.0, %v2788
      %v2790 = vpop.f32.mrf.mxu0
      %2791 = vmatprep.mubr.f32.mxu0 0.0
      %2792 = vmatmul.mubr.f32.gmra.mxu0 %v2555
      %v2793 = vpop.f32.mrf.mxu0
      %v2794 = vadd.f32 0.0, %v2793
      %v2795 = vpop.f32.mrf.mxu0
      %2796 = vdwg.mxu0
      %v2797 = vadd.f32 %v2492, %v2639
      %v2798 = vadd.f32 %v2493, %v2644
      %v2799 = vadd.f32 %v2494, %v2649
      %v2800 = vadd.f32 %v2495, %v2654
      %v2801 = vadd.f32 %v2496, %v2659
      %v2802 = vadd.f32 %v2497, %v2664
      %v2803 = vadd.f32 %v2498, %v2669
      %v2804 = vadd.f32 %v2499, %v2674
      %v2805 = vadd.f32 %v2500, %v2679
      %v2806 = vadd.f32 %v2501, %v2684
      %v2807 = vadd.f32 %v2502, %v2689
      %v2808 = vadd.f32 %v2503, %v2694
      %v2809 = vadd.f32 %v2504, %v2699
      %v2810 = vadd.f32 %v2505, %v2704
      %v2811 = vadd.f32 %v2506, %v2709
      %v2812 = vadd.f32 %v2507, %v2714
      %v2813 = vadd.f32 %v2508, %v2719
      %v2814 = vadd.f32 %v2509, %v2724
      %v2815 = vadd.f32 %v2510, %v2729
      %v2816 = vadd.f32 %v2511, %v2734
      %v2817 = vadd.f32 %v2512, %v2739
      %v2818 = vadd.f32 %v2513, %v2744
      %v2819 = vadd.f32 %v2514, %v2749
      %v2820 = vadd.f32 %v2515, %v2754
      %v2821 = vadd.f32 %v2516, %v2759
      %v2822 = vadd.f32 %v2517, %v2764
      %v2823 = vadd.f32 %v2518, %v2769
      %v2824 = vadd.f32 %v2519, %v2774
      %v2825 = vadd.f32 %v2520, %v2779
      %v2826 = vadd.f32 %v2521, %v2784
      %v2827 = vadd.f32 %v2522, %v2789
      %v2828 = vadd.f32 %v2523, %v2794
      %v2829 = vld [vmem:[%s2218 + $0x2] sm:$0xff]
      %v2830 = vld [vmem:[%s2218 + $0xa] sm:$0xff]
      %v2831 = vld [vmem:[%s2218 + $0x1a] sm:$0xff]
      %v2832 = vld [vmem:[%s2218 + $0x22] sm:$0xff]
      %v2833 = vld [vmem:[%s2218 + $0x32] sm:$0xff]
      %v2834 = vld [vmem:[%s2218 + $0x3a] sm:$0xff]
      %v2835 = vld [vmem:[%s2218 + $0x4a] sm:$0xff]
      %v2836 = vld [vmem:[%s2218 + $0x52] sm:$0xff]
      %v2837 = vld [vmem:[%s2218 + $0x62] sm:$0xff]
      %v2838 = vld [vmem:[%s2218 + $0x6a] sm:$0xff]
      %v2839 = vld [vmem:[%s2218 + $0x7a] sm:$0xff]
      %v2840 = vld [vmem:[%s2218 + $0x82] sm:$0xff]
      %v2841 = vld [vmem:[%s2218 + $0x92] sm:$0xff]
      %v2842 = vld [vmem:[%s2218 + $0x9a] sm:$0xff]
      %v2843 = vld [vmem:[%s2218 + $0xaa] sm:$0xff]
      %v2844 = vld [vmem:[%s2218 + $0xb2] sm:$0xff]
      %v2845 = vld [vmem:[%s2218 + $0xc2] sm:$0xff]
      %v2846 = vld [vmem:[%s2218 + $0xca] sm:$0xff]
      %v2847 = vld [vmem:[%s2218 + $0xda] sm:$0xff]
      %v2848 = vld [vmem:[%s2218 + $0xe2] sm:$0xff]
      %v2849 = vld [vmem:[%s2218 + $0xf2] sm:$0xff]
      %v2850 = vld [vmem:[%s2218 + $0xfa] sm:$0xff]
      %v2851 = vld [vmem:[%s2218 + $0x10a] sm:$0xff]
      %v2852 = vld [vmem:[%s2218 + $0x112] sm:$0xff]
      %v2853 = vld [vmem:[%s2218 + $0x122] sm:$0xff]
      %v2854 = vld [vmem:[%s2218 + $0x12a] sm:$0xff]
      %v2855 = vld [vmem:[%s2218 + $0x13a] sm:$0xff]
      %v2856 = vld [vmem:[%s2218 + $0x142] sm:$0xff]
      %v2857 = vld [vmem:[%s2218 + $0x152] sm:$0xff]
      %v2858 = vld [vmem:[%s2218 + $0x15a] sm:$0xff]
      %v2859 = vld [vmem:[%s2218 + $0x16a] sm:$0xff]
      %v2860 = vld [vmem:[%s2218 + $0x172] sm:$0xff]
      %v2861 = vld [vmem:[%s3 + $0x400] sm:$0xff]
      %v2862 = vld [vmem:[%s3 + $0x408] sm:$0xff]
      %v2863 = vld [vmem:[%s3 + $0x410] sm:$0xff]
      %v2864 = vld [vmem:[%s3 + $0x418] sm:$0xff]
      %v2865 = vld [vmem:[%s3 + $0x420] sm:$0xff]
      %v2866 = vld [vmem:[%s3 + $0x428] sm:$0xff]
      %v2867 = vld [vmem:[%s3 + $0x430] sm:$0xff]
      %v2868 = vld [vmem:[%s3 + $0x438] sm:$0xff]
      %v2869 = vld [vmem:[%s3 + $0x440] sm:$0xff]
      %v2870 = vld [vmem:[%s3 + $0x448] sm:$0xff]
      %v2871 = vld [vmem:[%s3 + $0x450] sm:$0xff]
      %v2872 = vld [vmem:[%s3 + $0x458] sm:$0xff]
      %v2873 = vld [vmem:[%s3 + $0x460] sm:$0xff]
      %v2874 = vld [vmem:[%s3 + $0x468] sm:$0xff]
      %v2875 = vld [vmem:[%s3 + $0x470] sm:$0xff]
      %v2876 = vld [vmem:[%s3 + $0x478] sm:$0xff]
      %2877 = vmatprep.subr.mxu0 0.0
      %2878 = vmatpush1.msra.mxu0 %v2876
      %2879 = vmatprep.subr.mxu0 0.0
      %2880 = vmatpush1.msra.mxu0 %v2875
      %2881 = vmatprep.subr.mxu0 0.0
      %2882 = vmatpush1.msra.mxu0 %v2874
      %2883 = vmatprep.subr.mxu0 0.0
      %2884 = vmatpush1.msra.mxu0 %v2873
      %2885 = vmatprep.subr.mxu0 0.0
      %2886 = vmatpush1.msra.mxu0 %v2872
      %2887 = vmatprep.subr.mxu0 0.0
      %2888 = vmatpush1.msra.mxu0 %v2871
      %2889 = vmatprep.subr.mxu0 0.0
      %2890 = vmatpush1.msra.mxu0 %v2870
      %2891 = vmatprep.subr.mxu0 0.0
      %2892 = vmatpush1.msra.mxu0 %v2869
      %2893 = vmatprep.subr.mxu0 0.0
      %2894 = vmatpush1.msra.mxu0 %v2868
      %2895 = vmatprep.subr.mxu0 0.0
      %2896 = vmatpush1.msra.mxu0 %v2867
      %2897 = vmatprep.subr.mxu0 0.0
      %2898 = vmatpush1.msra.mxu0 %v2866
      %2899 = vmatprep.subr.mxu0 0.0
      %2900 = vmatpush1.msra.mxu0 %v2865
      %2901 = vmatprep.subr.mxu0 0.0
      %2902 = vmatpush1.msra.mxu0 %v2864
      %2903 = vmatprep.subr.mxu0 0.0
      %2904 = vmatpush1.msra.mxu0 %v2863
      %2905 = vmatprep.subr.mxu0 0.0
      %2906 = vmatpush1.msra.mxu0 %v2862
      %2907 = vmatprep.subr.mxu0 0.0
      %2908 = vmatpush1.msra.mxu0 %v2861
      %2909 = vmatprep.subr.mxu0 0.0
      %2910 = vmatpush2.msra.mxu0 0.0
      %2911 = vmatprep.subr.mxu0 0.0
      %2912 = vmatpush2.msra.mxu0 0.0
      %2913 = vmatprep.subr.mxu0 0.0
      %2914 = vmatpush2.msra.mxu0 0.0
      %2915 = vmatprep.subr.mxu0 0.0
      %2916 = vmatpush2.msra.mxu0 0.0
      %2917 = vmatprep.subr.mxu0 0.0
      %2918 = vmatpush2.msra.mxu0 0.0
      %2919 = vmatprep.subr.mxu0 0.0
      %2920 = vmatpush2.msra.mxu0 0.0
      %2921 = vmatprep.subr.mxu0 0.0
      %2922 = vmatpush2.msra.mxu0 0.0
      %2923 = vmatprep.subr.mxu0 0.0
      %2924 = vmatpush2.msra.mxu0 0.0
      %2925 = vmatprep.subr.mxu0 0.0
      %2926 = vmatpush2.msra.mxu0 0.0
      %2927 = vmatprep.subr.mxu0 0.0
      %2928 = vmatpush2.msra.mxu0 0.0
      %2929 = vmatprep.subr.mxu0 0.0
      %2930 = vmatpush2.msra.mxu0 0.0
      %2931 = vmatprep.subr.mxu0 0.0
      %2932 = vmatpush2.msra.mxu0 0.0
      %2933 = vmatprep.subr.mxu0 0.0
      %2934 = vmatpush2.msra.mxu0 0.0
      %2935 = vmatprep.subr.mxu0 0.0
      %2936 = vmatpush2.msra.mxu0 0.0
      %2937 = vmatprep.subr.mxu0 0.0
      %2938 = vmatpush2.msra.mxu0 0.0
      %2939 = vmatprep.subr.mxu0 0.0
      %2940 = vmatpush2.msra.mxu0 0.0
      %2941 = vmatprep.mubr.f32.mxu0 0.0
      %2942 = vmatmul.mubr.f32.gmra.mxu0 %v2829
      %v2943 = vpop.f32.mrf.mxu0
      %v2944 = vadd.f32 0.0, %v2943
      %v2945 = vpop.f32.mrf.mxu0
      %2946 = vmatprep.mubr.f32.mxu0 0.0
      %2947 = vmatmul.mubr.f32.gmra.mxu0 %v2830
      %v2948 = vpop.f32.mrf.mxu0
      %v2949 = vadd.f32 0.0, %v2948
      %v2950 = vpop.f32.mrf.mxu0
      %2951 = vmatprep.mubr.f32.mxu0 0.0
      %2952 = vmatmul.mubr.f32.gmra.mxu0 %v2831
      %v2953 = vpop.f32.mrf.mxu0
      %v2954 = vadd.f32 0.0, %v2953
      %v2955 = vpop.f32.mrf.mxu0
      %2956 = vmatprep.mubr.f32.mxu0 0.0
      %2957 = vmatmul.mubr.f32.gmra.mxu0 %v2832
      %v2958 = vpop.f32.mrf.mxu0
      %v2959 = vadd.f32 0.0, %v2958
      %v2960 = vpop.f32.mrf.mxu0
      %2961 = vmatprep.mubr.f32.mxu0 0.0
      %2962 = vmatmul.mubr.f32.gmra.mxu0 %v2833
      %v2963 = vpop.f32.mrf.mxu0
      %v2964 = vadd.f32 0.0, %v2963
      %v2965 = vpop.f32.mrf.mxu0
      %2966 = vmatprep.mubr.f32.mxu0 0.0
      %2967 = vmatmul.mubr.f32.gmra.mxu0 %v2834
      %v2968 = vpop.f32.mrf.mxu0
      %v2969 = vadd.f32 0.0, %v2968
      %v2970 = vpop.f32.mrf.mxu0
      %2971 = vmatprep.mubr.f32.mxu0 0.0
      %2972 = vmatmul.mubr.f32.gmra.mxu0 %v2835
      %v2973 = vpop.f32.mrf.mxu0
      %v2974 = vadd.f32 0.0, %v2973
      %v2975 = vpop.f32.mrf.mxu0
      %2976 = vmatprep.mubr.f32.mxu0 0.0
      %2977 = vmatmul.mubr.f32.gmra.mxu0 %v2836
      %v2978 = vpop.f32.mrf.mxu0
      %v2979 = vadd.f32 0.0, %v2978
      %v2980 = vpop.f32.mrf.mxu0
      %2981 = vmatprep.mubr.f32.mxu0 0.0
      %2982 = vmatmul.mubr.f32.gmra.mxu0 %v2837
      %v2983 = vpop.f32.mrf.mxu0
      %v2984 = vadd.f32 0.0, %v2983
      %v2985 = vpop.f32.mrf.mxu0
      %2986 = vmatprep.mubr.f32.mxu0 0.0
      %2987 = vmatmul.mubr.f32.gmra.mxu0 %v2838
      %v2988 = vpop.f32.mrf.mxu0
      %v2989 = vadd.f32 0.0, %v2988
      %v2990 = vpop.f32.mrf.mxu0
      %2991 = vmatprep.mubr.f32.mxu0 0.0
      %2992 = vmatmul.mubr.f32.gmra.mxu0 %v2839
      %v2993 = vpop.f32.mrf.mxu0
      %v2994 = vadd.f32 0.0, %v2993
      %v2995 = vpop.f32.mrf.mxu0
      %2996 = vmatprep.mubr.f32.mxu0 0.0
      %2997 = vmatmul.mubr.f32.gmra.mxu0 %v2840
      %v2998 = vpop.f32.mrf.mxu0
      %v2999 = vadd.f32 0.0, %v2998
      %v3000 = vpop.f32.mrf.mxu0
      %3001 = vmatprep.mubr.f32.mxu0 0.0
      %3002 = vmatmul.mubr.f32.gmra.mxu0 %v2841
      %v3003 = vpop.f32.mrf.mxu0
      %v3004 = vadd.f32 0.0, %v3003
      %v3005 = vpop.f32.mrf.mxu0
      %3006 = vmatprep.mubr.f32.mxu0 0.0
      %3007 = vmatmul.mubr.f32.gmra.mxu0 %v2842
      %v3008 = vpop.f32.mrf.mxu0
      %v3009 = vadd.f32 0.0, %v3008
      %v3010 = vpop.f32.mrf.mxu0
      %3011 = vmatprep.mubr.f32.mxu0 0.0
      %3012 = vmatmul.mubr.f32.gmra.mxu0 %v2843
      %v3013 = vpop.f32.mrf.mxu0
      %v3014 = vadd.f32 0.0, %v3013
      %v3015 = vpop.f32.mrf.mxu0
      %3016 = vmatprep.mubr.f32.mxu0 0.0
      %3017 = vmatmul.mubr.f32.gmra.mxu0 %v2844
      %v3018 = vpop.f32.mrf.mxu0
      %v3019 = vadd.f32 0.0, %v3018
      %v3020 = vpop.f32.mrf.mxu0
      %3021 = vmatprep.mubr.f32.mxu0 0.0
      %3022 = vmatmul.mubr.f32.gmra.mxu0 %v2845
      %v3023 = vpop.f32.mrf.mxu0
      %v3024 = vadd.f32 0.0, %v3023
      %v3025 = vpop.f32.mrf.mxu0
      %3026 = vmatprep.mubr.f32.mxu0 0.0
      %3027 = vmatmul.mubr.f32.gmra.mxu0 %v2846
      %v3028 = vpop.f32.mrf.mxu0
      %v3029 = vadd.f32 0.0, %v3028
      %v3030 = vpop.f32.mrf.mxu0
      %3031 = vmatprep.mubr.f32.mxu0 0.0
      %3032 = vmatmul.mubr.f32.gmra.mxu0 %v2847
      %v3033 = vpop.f32.mrf.mxu0
      %v3034 = vadd.f32 0.0, %v3033
      %v3035 = vpop.f32.mrf.mxu0
      %3036 = vmatprep.mubr.f32.mxu0 0.0
      %3037 = vmatmul.mubr.f32.gmra.mxu0 %v2848
      %v3038 = vpop.f32.mrf.mxu0
      %v3039 = vadd.f32 0.0, %v3038
      %v3040 = vpop.f32.mrf.mxu0
      %3041 = vmatprep.mubr.f32.mxu0 0.0
      %3042 = vmatmul.mubr.f32.gmra.mxu0 %v2849
      %v3043 = vpop.f32.mrf.mxu0
      %v3044 = vadd.f32 0.0, %v3043
      %v3045 = vpop.f32.mrf.mxu0
      %3046 = vmatprep.mubr.f32.mxu0 0.0
      %3047 = vmatmul.mubr.f32.gmra.mxu0 %v2850
      %v3048 = vpop.f32.mrf.mxu0
      %v3049 = vadd.f32 0.0, %v3048
      %v3050 = vpop.f32.mrf.mxu0
      %3051 = vmatprep.mubr.f32.mxu0 0.0
      %3052 = vmatmul.mubr.f32.gmra.mxu0 %v2851
      %v3053 = vpop.f32.mrf.mxu0
      %v3054 = vadd.f32 0.0, %v3053
      %v3055 = vpop.f32.mrf.mxu0
      %3056 = vmatprep.mubr.f32.mxu0 0.0
      %3057 = vmatmul.mubr.f32.gmra.mxu0 %v2852
      %v3058 = vpop.f32.mrf.mxu0
      %v3059 = vadd.f32 0.0, %v3058
      %v3060 = vpop.f32.mrf.mxu0
      %3061 = vmatprep.mubr.f32.mxu0 0.0
      %3062 = vmatmul.mubr.f32.gmra.mxu0 %v2853
      %v3063 = vpop.f32.mrf.mxu0
      %v3064 = vadd.f32 0.0, %v3063
      %v3065 = vpop.f32.mrf.mxu0
      %3066 = vmatprep.mubr.f32.mxu0 0.0
      %3067 = vmatmul.mubr.f32.gmra.mxu0 %v2854
      %v3068 = vpop.f32.mrf.mxu0
      %v3069 = vadd.f32 0.0, %v3068
      %v3070 = vpop.f32.mrf.mxu0
      %3071 = vmatprep.mubr.f32.mxu0 0.0
      %3072 = vmatmul.mubr.f32.gmra.mxu0 %v2855
      %v3073 = vpop.f32.mrf.mxu0
      %v3074 = vadd.f32 0.0, %v3073
      %v3075 = vpop.f32.mrf.mxu0
      %3076 = vmatprep.mubr.f32.mxu0 0.0
      %3077 = vmatmul.mubr.f32.gmra.mxu0 %v2856
      %v3078 = vpop.f32.mrf.mxu0
      %v3079 = vadd.f32 0.0, %v3078
      %v3080 = vpop.f32.mrf.mxu0
      %3081 = vmatprep.mubr.f32.mxu0 0.0
      %3082 = vmatmul.mubr.f32.gmra.mxu0 %v2857
      %v3083 = vpop.f32.mrf.mxu0
      %v3084 = vadd.f32 0.0, %v3083
      %v3085 = vpop.f32.mrf.mxu0
      %3086 = vmatprep.mubr.f32.mxu0 0.0
      %3087 = vmatmul.mubr.f32.gmra.mxu0 %v2858
      %v3088 = vpop.f32.mrf.mxu0
      %v3089 = vadd.f32 0.0, %v3088
      %v3090 = vpop.f32.mrf.mxu0
      %3091 = vmatprep.mubr.f32.mxu0 0.0
      %3092 = vmatmul.mubr.f32.gmra.mxu0 %v2859
      %v3093 = vpop.f32.mrf.mxu0
      %v3094 = vadd.f32 0.0, %v3093
      %v3095 = vpop.f32.mrf.mxu0
      %3096 = vmatprep.mubr.f32.mxu0 0.0
      %3097 = vmatmul.mubr.f32.gmra.mxu0 %v2860
      %v3098 = vpop.f32.mrf.mxu0
      %v3099 = vadd.f32 0.0, %v3098
      %v3100 = vpop.f32.mrf.mxu0
      %3101 = vdwg.mxu0
      %v3102 = vadd.f32 %v2797, %v2944
      %v3103 = vadd.f32 %v2798, %v2949
      %v3104 = vadd.f32 %v2799, %v2954
      %v3105 = vadd.f32 %v2800, %v2959
      %v3106 = vadd.f32 %v2801, %v2964
      %v3107 = vadd.f32 %v2802, %v2969
      %v3108 = vadd.f32 %v2803, %v2974
      %v3109 = vadd.f32 %v2804, %v2979
      %v3110 = vadd.f32 %v2805, %v2984
      %v3111 = vadd.f32 %v2806, %v2989
      %v3112 = vadd.f32 %v2807, %v2994
      %v3113 = vadd.f32 %v2808, %v2999
      %v3114 = vadd.f32 %v2809, %v3004
      %v3115 = vadd.f32 %v2810, %v3009
      %v3116 = vadd.f32 %v2811, %v3014
      %v3117 = vadd.f32 %v2812, %v3019
      %v3118 = vadd.f32 %v2813, %v3024
      %v3119 = vadd.f32 %v2814, %v3029
      %v3120 = vadd.f32 %v2815, %v3034
      %v3121 = vadd.f32 %v2816, %v3039
      %v3122 = vadd.f32 %v2817, %v3044
      %v3123 = vadd.f32 %v2818, %v3049
      %v3124 = vadd.f32 %v2819, %v3054
      %v3125 = vadd.f32 %v2820, %v3059
      %v3126 = vadd.f32 %v2821, %v3064
      %v3127 = vadd.f32 %v2822, %v3069
      %v3128 = vadd.f32 %v2823, %v3074
      %v3129 = vadd.f32 %v2824, %v3079
      %v3130 = vadd.f32 %v2825, %v3084
      %v3131 = vadd.f32 %v2826, %v3089
      %v3132 = vadd.f32 %v2827, %v3094
      %v3133 = vadd.f32 %v2828, %v3099
      %3134 = vst [vmem:[%s222] sm:$0xff] %v3102
      %3135 = vst [vmem:[%s222 + $0x8] sm:$0xff] %v3103
      %3136 = vst [vmem:[%s222 + $0x10] sm:$0xff] %v3104
      %3137 = vst [vmem:[%s222 + $0x18] sm:$0xff] %v3105
      %3138 = vst [vmem:[%s222 + $0x20] sm:$0xff] %v3106
      %3139 = vst [vmem:[%s222 + $0x28] sm:$0xff] %v3107
      %3140 = vst [vmem:[%s222 + $0x30] sm:$0xff] %v3108
      %3141 = vst [vmem:[%s222 + $0x38] sm:$0xff] %v3109
      %3142 = vst [vmem:[%s222 + $0x40] sm:$0xff] %v3110
      %3143 = vst [vmem:[%s222 + $0x48] sm:$0xff] %v3111
      %3144 = vst [vmem:[%s222 + $0x50] sm:$0xff] %v3112
      %3145 = vst [vmem:[%s222 + $0x58] sm:$0xff] %v3113
      %3146 = vst [vmem:[%s222 + $0x60] sm:$0xff] %v3114
      %3147 = vst [vmem:[%s222 + $0x68] sm:$0xff] %v3115
      %3148 = vst [vmem:[%s222 + $0x70] sm:$0xff] %v3116
      %3149 = vst [vmem:[%s222 + $0x78] sm:$0xff] %v3117
      %3150 = vst [vmem:[%s222 + $0x80] sm:$0xff] %v3118
      %3151 = vst [vmem:[%s222 + $0x88] sm:$0xff] %v3119
      %3152 = vst [vmem:[%s222 + $0x90] sm:$0xff] %v3120
      %3153 = vst [vmem:[%s222 + $0x98] sm:$0xff] %v3121
      %3154 = vst [vmem:[%s222 + $0xa0] sm:$0xff] %v3122
      %3155 = vst [vmem:[%s222 + $0xa8] sm:$0xff] %v3123
      %3156 = vst [vmem:[%s222 + $0xb0] sm:$0xff] %v3124
      %3157 = vst [vmem:[%s222 + $0xb8] sm:$0xff] %v3125
      %3158 = vst [vmem:[%s222 + $0xc0] sm:$0xff] %v3126
      %3159 = vst [vmem:[%s222 + $0xc8] sm:$0xff] %v3127
      %3160 = vst [vmem:[%s222 + $0xd0] sm:$0xff] %v3128
      %3161 = vst [vmem:[%s222 + $0xd8] sm:$0xff] %v3129
      %3162 = vst [vmem:[%s222 + $0xe0] sm:$0xff] %v3130
      %3163 = vst [vmem:[%s222 + $0xe8] sm:$0xff] %v3131
      %3164 = vst [vmem:[%s222 + $0xf0] sm:$0xff] %v3132
      %3165 = vst [vmem:[%s222 + $0xf8] sm:$0xff] %v3133
      %p3166 = scmp.eq.s32.totalorder %s17, 0
      // Predicated region
      $region37: #{residual_forward.4} parent=35 // pred_check
        %p3167 = pneg %p3166
      $region38: #{residual_forward.4} parent=35 // pred_check_branch
        %3169 = sbr.rel (%p3167) target = $region40
      $region39: #{residual_forward.4} parent=35 // pred_region
        %3170 = vst [vmem:[%s5] sm:$0x3] 0.0
      $region40: #{residual_forward.4} parent=35 // pred_fallthru
        _
      %v3171 = vadd.f32 %v3102, %v3103
      %v3172 = vadd.f32 %v3171, %v3104
      %v3173 = vadd.f32 %v3172, %v3105
      %v3174 = vadd.f32 %v3173, %v3106
      %v3175 = vadd.f32 %v3174, %v3107
      %v3176 = vadd.f32 %v3175, %v3108
      %v3177 = vadd.f32 %v3176, %v3109
      %v3178 = vadd.f32 %v3177, %v3110
      %v3179 = vadd.f32 %v3178, %v3111
      %v3180 = vadd.f32 %v3179, %v3112
      %v3181 = vadd.f32 %v3180, %v3113
      %v3182 = vadd.f32 %v3181, %v3114
      %v3183 = vadd.f32 %v3182, %v3115
      %v3184 = vadd.f32 %v3183, %v3116
      %v3185 = vadd.f32 %v3184, %v3117
      %v3186 = vadd.f32 %v3185, %v3118
      %v3187 = vadd.f32 %v3186, %v3119
      %v3188 = vadd.f32 %v3187, %v3120
      %v3189 = vadd.f32 %v3188, %v3121
      %v3190 = vadd.f32 %v3189, %v3122
      %v3191 = vadd.f32 %v3190, %v3123
      %v3192 = vadd.f32 %v3191, %v3124
      %v3193 = vadd.f32 %v3192, %v3125
      %v3194 = vadd.f32 %v3193, %v3126
      %v3195 = vadd.f32 %v3194, %v3127
      %v3196 = vadd.f32 %v3195, %v3128
      %v3197 = vadd.f32 %v3196, %v3129
      %v3198 = vadd.f32 %v3197, %v3130
      %v3199 = vadd.f32 %v3198, %v3131
      %v3200 = vadd.f32 %v3199, %v3132
      %v3201 = vadd.f32 %v3200, %v3133
      %v3202 = vrot.slane %v3201, 4
      %v3203 = vadd.f32 %v3201, %v3202
      %v3204 = vrot.slane %v3203, 2
      %v3205 = vadd.f32 %v3203, %v3204
      %v3206 = vrot.slane %v3205, 1
      %v3207 = vadd.f32 %v3205, %v3206
      %v3208 = vmul.f32 %v3102, %v3102
      %v3209 = vmul.f32 %v3103, %v3103
      %v3210 = vmul.f32 %v3104, %v3104
      %v3211 = vmul.f32 %v3105, %v3105
      %v3212 = vmul.f32 %v3106, %v3106
      %v3213 = vmul.f32 %v3107, %v3107
      %v3214 = vmul.f32 %v3108, %v3108
      %v3215 = vmul.f32 %v3109, %v3109
      %v3216 = vmul.f32 %v3110, %v3110
      %v3217 = vmul.f32 %v3111, %v3111
      %v3218 = vmul.f32 %v3112, %v3112
      %v3219 = vmul.f32 %v3113, %v3113
      %v3220 = vmul.f32 %v3114, %v3114
      %v3221 = vmul.f32 %v3115, %v3115
      %v3222 = vmul.f32 %v3116, %v3116
      %v3223 = vmul.f32 %v3117, %v3117
      %v3224 = vmul.f32 %v3118, %v3118
      %v3225 = vmul.f32 %v3119, %v3119
      %v3226 = vmul.f32 %v3120, %v3120
      %v3227 = vmul.f32 %v3121, %v3121
      %v3228 = vmul.f32 %v3122, %v3122
      %v3229 = vmul.f32 %v3123, %v3123
      %v3230 = vmul.f32 %v3124, %v3124
      %v3231 = vmul.f32 %v3125, %v3125
      %v3232 = vmul.f32 %v3126, %v3126
      %v3233 = vmul.f32 %v3127, %v3127
      %v3234 = vmul.f32 %v3128, %v3128
      %v3235 = vmul.f32 %v3129, %v3129
      %v3236 = vmul.f32 %v3130, %v3130
      %v3237 = vmul.f32 %v3131, %v3131
      %v3238 = vmul.f32 %v3132, %v3132
      %v3239 = vmul.f32 %v3133, %v3133
      %v3240 = vadd.f32 %v3208, %v3209
      %v3241 = vadd.f32 %v3240, %v3210
      %v3242 = vadd.f32 %v3241, %v3211
      %v3243 = vadd.f32 %v3242, %v3212
      %v3244 = vadd.f32 %v3243, %v3213
      %v3245 = vadd.f32 %v3244, %v3214
      %v3246 = vadd.f32 %v3245, %v3215
      %v3247 = vadd.f32 %v3246, %v3216
      %v3248 = vadd.f32 %v3247, %v3217
      %v3249 = vadd.f32 %v3248, %v3218
      %v3250 = vadd.f32 %v3249, %v3219
      %v3251 = vadd.f32 %v3250, %v3220
      %v3252 = vadd.f32 %v3251, %v3221
      %v3253 = vadd.f32 %v3252, %v3222
      %v3254 = vadd.f32 %v3253, %v3223
      %v3255 = vadd.f32 %v3254, %v3224
      %v3256 = vadd.f32 %v3255, %v3225
      %v3257 = vadd.f32 %v3256, %v3226
      %v3258 = vadd.f32 %v3257, %v3227
      %v3259 = vadd.f32 %v3258, %v3228
      %v3260 = vadd.f32 %v3259, %v3229
      %v3261 = vadd.f32 %v3260, %v3230
      %v3262 = vadd.f32 %v3261, %v3231
      %v3263 = vadd.f32 %v3262, %v3232
      %v3264 = vadd.f32 %v3263, %v3233
      %v3265 = vadd.f32 %v3264, %v3234
      %v3266 = vadd.f32 %v3265, %v3235
      %v3267 = vadd.f32 %v3266, %v3236
      %v3268 = vadd.f32 %v3267, %v3237
      %v3269 = vadd.f32 %v3268, %v3238
      %v3270 = vadd.f32 %v3269, %v3239
      %v3271 = vrot.slane %v3270, 4
      %v3272 = vadd.f32 %v3270, %v3271
      %v3273 = vrot.slane %v3272, 2
      %v3274 = vadd.f32 %v3272, %v3273
      %v3275 = vrot.slane %v3274, 1
      %v3276 = vadd.f32 %v3274, %v3275
      %v3277 = vld [vmem:[%s5] sm:$0x3]
      %vm3278 = vcmask 1040384
      %v3279 = vsel %vm3278, %v3207, %v3276
      %v3280 = vadd.f32 %v3277, %v3279
      %3281 = vst [vmem:[%s5] sm:$0x3] %v3280
      %p3282 = scmp.lt.s32.totalorder %s17, 1
      %s3283 = scalar_select %p3282, %s17, 1
      %s3284 = smul.addr %s3283, 32
      %s3285 = smul.addr %s3284, 8
      %s3286 = scalar_lea.vmem %s4, %s3285
      // Predicated region
      $region41: #{residual_forward.4} parent=35 // pred_check
        %p3287 = pneg %p124
      $region42: #{residual_forward.4} parent=35 // pred_check_branch
        %3289 = sbr.rel (%p3287) target = $region44
      $region43: #{residual_forward.4} parent=35 // pred_region
        _
      $region44: #{residual_forward.4} parent=35 // pred_fallthru
        _
      // Predicated region
      $region45: #{residual_forward.4} parent=35 // pred_check
        %p3290 = pneg %p145
      $region46: #{residual_forward.4} parent=35 // pred_check_branch
        %3292 = sbr.rel (%p3290) target = $region48
      $region47: #{residual_forward.4} parent=35 // pred_region
        _
      $region48: #{residual_forward.4} parent=35 // pred_fallthru
        _
      // Predicated region
      $region49: #{residual_forward.4} parent=35 // pred_check
        %p3293 = pneg %p145
      $region50: #{residual_forward.4} parent=35 // pred_check_branch
        %3295 = sbr.rel (%p3293) target = $region52
      $region51: #{residual_forward.4} parent=35 // pred_region
        _
      $region52: #{residual_forward.4} parent=35 // pred_fallthru
        _
    $region36: #{residual_forward.4} parent=5 // pred_fallthru
      _
    %p3296 = scmp.le.s32.totalorder 2, %s12
    // Predicated region
    $region53: #{residual_forward.4} parent=5 // pred_check
      %p3297 = pneg %p3296
    $region54: #{residual_forward.4} parent=5 // pred_check_branch
      %3299 = sbr.rel (%p3297) target = $region56
    $region55: #{residual_forward.4} parent=5 // pred_region
      %s3300 = ssub.s32 %s12, 2
      // Predicated region
      $region57: #{residual_forward.4} parent=55 // pred_check
        %p3301 = pneg %p130
      $region58: #{residual_forward.4} parent=55 // pred_check_branch
        %3303 = sbr.rel (%p3301) target = $region60
      $region59: #{residual_forward.4} parent=55 // pred_region
        %p3304 = scmp.lt.s32.totalorder %s18, 1
        %s3305 = scalar_select %p3304, %s18, 1
        %s3306 = smul.addr %s3305, 32
        %s3307 = smul.addr %s3306, 8
        %s3308 = scalar_lea.vmem %s4, %s3307
      $region60: #{residual_forward.4} parent=55 // pred_fallthru
        _
    $region56: #{residual_forward.4} parent=5 // pred_fallthru
      _
  $region6: #{residual_forward.4} parent=0 // loop_footer
    %s16 = sadd.s32 1, %s12
  $region7: #{residual_forward.4} parent=0 // loop_footer_branch
    %11 = sbr.rel target = $region3
  $region8: #{residual_forward.4} parent=0 // loop_exit
    _

</llo_original>
